<compile_context>
chip_gen: v7x
topology: tpu7x:2x2x1
jax: 0.10.0
libtpu: 0.0.40
codegen_flags: <defaults>
</compile_context>

<pallas_src>
import functools
import math

import numpy as np

import jax
import jax.numpy as jnp
from jax.experimental import pallas as pl
from jax.experimental.pallas import tpu as pltpu


# ----------------------------------------------------------------------------
# Small shared helpers
# ----------------------------------------------------------------------------

def _layernorm(x, g, b, eps=1e-5):
    mean = jnp.mean(x, axis=-1, keepdims=True)
    xc = x - mean
    var = jnp.mean(xc * xc, axis=-1, keepdims=True)
    return xc * jax.lax.rsqrt(var + eps) * g + b


@functools.lru_cache(maxsize=None)
def _conv1_gather_indices(oh1):
    """Index arrays for conv1's im2col, rows grouped by output parity quadrant.

    The group order (s,t) = (1,1),(1,0),(0,1),(0,0) matches qpos = 3-(2s+t)
    used inside _cnn_kernel, so every conv2 tap becomes a contiguous slice.
    """
    oh2 = oh1 // 2
    pos = []
    for s, t in ((1, 1), (1, 0), (0, 1), (0, 0)):
        for av in range(oh2):
            for bv in range(oh2):
                pos.append((2 * av + 1 - s, 2 * bv + 1 - t))
    pos = np.asarray(pos, dtype=np.int32)                       # (oh1*oh1, 2)
    di = np.repeat(np.arange(3, dtype=np.int32), 3)
    dj = np.tile(np.arange(3, dtype=np.int32), 3)
    rows = pos[:, 0:1] * 2 + di[None, :]                        # (n1, 9)
    cols = pos[:, 1:2] * 2 + dj[None, :]                        # (n1, 9)
    return rows, cols


# ----------------------------------------------------------------------------
# Fused CNN front-end kernel: conv1(3x3,s2)+ReLU -> conv2(3x3,s2)+ReLU
# ----------------------------------------------------------------------------

def _cnn_kernel(cols_ref, w1_ref, b1_ref, w2_ref, b2_ref, o_ref, h1_sc,
                *, frames, oh2, c2):
    """Processes `frames` frames per grid step, everything resident in VMEM.

    cols_ref: (1, frames*n1, 9*C) bf16 -- conv1 im2col patches (raw pixel
              values; the /255 preprocessing is folded into w1), rows grouped
              per frame by output-parity quadrant.
    o_ref:    (1, frames*n2, c2) f32 -- conv2 features, row = spatial position.
    """
    n2 = oh2 * oh2
    n1 = 4 * n2

    # conv1 as a single bf16 matmul over all frames/positions.
    h1 = jnp.dot(cols_ref[0], w1_ref[...], preferred_element_type=jnp.float32)
    h1_sc[...] = jnp.maximum(h1 + b1_ref[...], 0.0)             # (frames*n1, c1)

    row = jax.lax.broadcasted_iota(jnp.int32, (n2, 1), 0)
    acc = jnp.zeros((frames * n2, c2), jnp.float32) + b2_ref[...]

    # conv2 = sum over 9 taps; each tap is a contiguous (shifted + masked)
    # slice of the quadrant-ordered conv1 output -- no strided access needed.
    for dr in range(3):
        for dc in range(3):
            s, t = dr % 2, dc % 2
            qpos = 3 - (2 * s + t)                  # quadrant block inside h1
            shift = (oh2 if dr == 0 else 0) + (1 if dc == 0 else 0)
            keep = None
            if shift:
                keep = row >= shift
                if dc == 0:
                    keep = jnp.logical_and(keep, (row % oh2) != 0)
            taps = []
            for f in range(frames):
                start = f * n1 + qpos * n2 - shift   # >= 0 by group ordering
                v = h1_sc[start:start + n2, :]
                if keep is not None:
                    v = jnp.where(keep, v, 0.0)
                taps.append(v)
            tap = taps[0] if frames == 1 else jnp.concatenate(taps, axis=0)
            acc = acc + jnp.dot(tap.astype(jnp.bfloat16), w2_ref[dr * 3 + dc],
                                preferred_element_type=jnp.float32)
    o_ref[0] = jnp.maximum(acc, 0.0)


def cnn_forward(params, cols_grouped, frames, oh2):
    """cols_grouped: (BT//frames, frames*n1, 9*C) bf16 -> (BT//frames, frames*n2, c2) f32."""
    groups, rows, feat = cols_grouped.shape
    c1 = params["conv1_w"].shape[-1]
    c2 = params["conv2_w"].shape[-1]
    n2 = oh2 * oh2
    kernel = functools.partial(_cnn_kernel, frames=frames, oh2=oh2, c2=c2)
    return pl.pallas_call(
        kernel,
        out_shape=jax.ShapeDtypeStruct((groups, frames * n2, c2), jnp.float32),
        grid=(groups,),
        in_specs=[
            pl.BlockSpec((1, rows, feat), lambda i: (i, 0, 0)),
            pl.BlockSpec(params["conv1_w"].shape, lambda i: (0, 0)),
            pl.BlockSpec(params["conv1_b"].shape, lambda i: (0, 0)),
            pl.BlockSpec(params["conv2_w"].shape, lambda i: (0, 0, 0)),
            pl.BlockSpec(params["conv2_b"].shape, lambda i: (0, 0)),
        ],
        out_specs=pl.BlockSpec((1, frames * n2, c2), lambda i: (i, 0, 0)),
        scratch_shapes=[pltpu.VMEM((rows, c1), jnp.float32)],
        compiler_params=pltpu.CompilerParams(dimension_semantics=("parallel",)),
    )(cols_grouped, params["conv1_w"], params["conv1_b"],
      params["conv2_w"], params["conv2_b"])


# ----------------------------------------------------------------------------
# Fused sequence-path kernel: dense head + pre-LN + transformer blocks + tail
# ----------------------------------------------------------------------------

def _core_kernel(flat_ref, dw_ref, db_ref, pg_ref, pb_ref,
                 lng_ref, lnb_ref, qkvw_ref, qkvb_ref, pjw_ref, pjb_ref,
                 mlg_ref, mlb_ref, m0w_ref, m0b_ref, m1w_ref, m1b_ref,
                 lw_ref, lb_ref, fg_ref, fb_ref, stin_ref,
                 vi_ref, tf_ref, pi_ref, stout_ref, x_sc,
                 *, heads, hid, t, memory, scale):
    blk = pl.program_id(1)
    n_blk = pl.num_programs(1)
    dh = hid // heads
    bf16 = jnp.bfloat16

    @pl.when(blk == 0)
    def _init():
        # img_process dense head: flatten(conv feats) -> hidsize, ReLU.
        vi = jnp.dot(flat_ref[0].astype(bf16), dw_ref[...],
                     preferred_element_type=jnp.float32) + db_ref[...]
        vi = jnp.maximum(vi, 0.0)
        vi_ref[0] = vi
        # pre_lstm_ln
        x_sc[...] = _layernorm(vi, pg_ref[...], pb_ref[...])

    x = x_sc[...]

    # ---- attention sub-block ------------------------------------------------
    xh = _layernorm(x, lng_ref[0], lnb_ref[0])
    # TODO(synk): VPT's clipped-causal MaskedAttention over the cached keys in
    # state_in (with `first`-based resets and relative-position bias) is not
    # reproduced; we run plain causal attention over the current window and
    # roll the post-LN activations into the cache as state_out.
    if memory > t:
        stout_ref[0, 0, :memory - t, :] = stin_ref[0, 0, t:, :]
        stout_ref[0, 0, memory - t:, :] = xh
    else:
        stout_ref[0, 0, :, :] = xh[t - memory:, :]

    qkv = jnp.dot(xh.astype(bf16), qkvw_ref[0],
                  preferred_element_type=jnp.float32) + qkvb_ref[0]
    r_ix = jax.lax.broadcasted_iota(jnp.int32, (t, t), 0)
    c_ix = jax.lax.broadcasted_iota(jnp.int32, (t, t), 1)
    causal = c_ix <= r_ix
    head_out = []
    for h in range(heads):
        q = qkv[:, h * dh:(h + 1) * dh] * scale               # scale folded in q
        k = qkv[:, hid + h * dh:hid + (h + 1) * dh]
        v = qkv[:, 2 * hid + h * dh:2 * hid + (h + 1) * dh]
        s = jnp.dot(q.astype(bf16), k.T.astype(bf16),
                    preferred_element_type=jnp.float32)        # (t, t)
        s = jnp.where(causal, s, -1e30)
        m = jnp.max(s, axis=-1, keepdims=True)
        p = jnp.exp(s - m)
        p = p * pl.reciprocal(jnp.sum(p, axis=-1, keepdims=True), approx=True)
        head_out.append(jnp.dot(p.astype(bf16), v.astype(bf16),
                                preferred_element_type=jnp.float32))
    a = jnp.concatenate(head_out, axis=-1)                     # (t, hid)
    a = jnp.dot(a.astype(bf16), pjw_ref[0],
                preferred_element_type=jnp.float32) + pjb_ref[0]
    x = x + a                                                  # is_residual

    # ---- pointwise (MLP) sub-block -------------------------------------------
    h_mid = _layernorm(x, mlg_ref[0], mlb_ref[0])
    h_mid = jnp.dot(h_mid.astype(bf16), m0w_ref[0],
                    preferred_element_type=jnp.float32) + m0b_ref[0]
    h_mid = jnp.maximum(h_mid, 0.0)
    h_mid = jnp.dot(h_mid.astype(bf16), m1w_ref[0],
                    preferred_element_type=jnp.float32) + m1b_ref[0]
    x = x + h_mid                                              # no act on 2nd layer
    x_sc[...] = x
    tf_ref[0] = x

    @pl.when(blk == n_blk - 1)
    def _tail():
        # F.relu -> lastlayer (FanInInitReLULayer: linear + ReLU) -> final_ln.
        y = jnp.maximum(x, 0.0)
        y = jnp.dot(y.astype(bf16), lw_ref[...],
                    preferred_element_type=jnp.float32) + lb_ref[...]
        y = jnp.maximum(y, 0.0)
        pi_ref[0] = _layernorm(y, fg_ref[...], fb_ref[...])


def core_forward(params, flat, state_in, cfg):
    """flat: (B, T, FLAT) f32, state_in: (L, B, memory, hid) f32."""
    B, T, FLAT = flat.shape
    hid = cfg["hidsize"]
    heads = cfg["heads"]
    memory = cfg["memory"]
    L = params["qkv_w"].shape[0]
    hid3 = params["qkv_w"].shape[-1]
    mlp = params["mlp0_w"].shape[-1]
    dh = hid // heads

    rep2 = lambda b, l: (0, 0)
    per_b = lambda b, l: (b, 0, 0)
    per_l3 = lambda b, l: (l, 0, 0)
    per_lb = lambda b, l: (l, b, 0, 0)

    inputs = (
        (flat,                 pl.BlockSpec((1, T, FLAT), per_b)),
        (params["dense_w"],    pl.BlockSpec((FLAT, hid), rep2)),
        (params["dense_b"],    pl.BlockSpec((1, hid), rep2)),
        (params["pre_ln_g"],   pl.BlockSpec((1, hid), rep2)),
        (params["pre_ln_b"],   pl.BlockSpec((1, hid), rep2)),
        (params["ln_g"],       pl.BlockSpec((1, 1, hid), per_l3)),
        (params["ln_b"],       pl.BlockSpec((1, 1, hid), per_l3)),
        (params["qkv_w"],      pl.BlockSpec((1, hid, hid3), per_l3)),
        (params["qkv_b"],      pl.BlockSpec((1, 1, hid3), per_l3)),
        (params["proj_w"],     pl.BlockSpec((1, hid, hid), per_l3)),
        (params["proj_b"],     pl.BlockSpec((1, 1, hid), per_l3)),
        (params["mlp_ln_g"],   pl.BlockSpec((1, 1, hid), per_l3)),
        (params["mlp_ln_b"],   pl.BlockSpec((1, 1, hid), per_l3)),
        (params["mlp0_w"],     pl.BlockSpec((1, hid, mlp), per_l3)),
        (params["mlp0_b"],     pl.BlockSpec((1, 1, mlp), per_l3)),
        (params["mlp1_w"],     pl.BlockSpec((1, mlp, hid), per_l3)),
        (params["mlp1_b"],     pl.BlockSpec((1, 1, hid), per_l3)),
        (params["last_w"],     pl.BlockSpec((hid, hid), rep2)),
        (params["last_b"],     pl.BlockSpec((1, hid), rep2)),
        (params["final_ln_g"], pl.BlockSpec((1, hid), rep2)),
        (params["final_ln_b"], pl.BlockSpec((1, hid), rep2)),
        (state_in,             pl.BlockSpec((1, 1, memory, hid), per_lb)),
    )
    arrays = [a for a, _ in inputs]
    in_specs = [s for _, s in inputs]

    kernel = functools.partial(_core_kernel, heads=heads, hid=hid, t=T,
                               memory=memory, scale=1.0 / math.sqrt(dh))
    # NOTE: at real VPT widths (hidsize 2048+) the per-block weight BlockSpecs
    # should additionally be tiled over N/K (with an explicit vmem_limit_bytes)
    # to fit v7x's 64 MiB VMEM; at this config all block weights fit trivially.
    vi, tf, pi, state_out = pl.pallas_call(
        kernel,
        out_shape=(
            jax.ShapeDtypeStruct((B, T, hid), jnp.float32),
            jax.ShapeDtypeStruct((B, T, hid), jnp.float32),
            jax.ShapeDtypeStruct((B, T, hid), jnp.float32),
            jax.ShapeDtypeStruct((L, B, memory, hid), jnp.float32),
        ),
        grid=(B, L),
        in_specs=in_specs,
        out_specs=(
            pl.BlockSpec((1, T, hid), per_b),
            pl.BlockSpec((1, T, hid), per_b),
            pl.BlockSpec((1, T, hid), per_b),
            pl.BlockSpec((1, 1, memory, hid), per_lb),
        ),
        scratch_shapes=[pltpu.VMEM((T, hid), jnp.float32)],
        compiler_params=pltpu.CompilerParams(
            dimension_semantics=("parallel", "arbitrary")),
    )(*arrays)
    return vi, tf, pi, state_out


# ----------------------------------------------------------------------------
# Parameters (deterministic synthetic init -- fan-in scaled normal, bf16 weights)
# ----------------------------------------------------------------------------

def init_params(key, cfg):
    hid, L = cfg["hidsize"], cfg["n_blocks"]
    c1, c2 = cfg["conv_chans"]
    img_c, hw = cfg["img_c"], cfg["img_hw"]
    pr = cfg["pointwise_ratio"]
    flat = (hw // 4) * (hw // 4) * c2

    def w(k, shape, fan_in):
        return (jax.random.normal(k, shape, jnp.float32)
                / math.sqrt(fan_in)).astype(jnp.bfloat16)

    ks = iter(jax.random.split(key, 16))
    params = {
        # ImgPreprocessing's x/255 is folded into conv1_w (x/255 @ W == x @ W/255).
        "conv1_w": (jax.random.normal(next(ks), (9 * img_c, c1), jnp.float32)
                    / math.sqrt(9 * img_c) / 255.0).astype(jnp.bfloat16),
        "conv1_b": jnp.zeros((1, c1), jnp.float32),
        "conv2_w": w(next(ks), (9, c1, c2), 9 * c1),
        "conv2_b": jnp.zeros((1, c2), jnp.float32),
        "dense_w": w(next(ks), (flat, hid), flat),
        "dense_b": jnp.zeros((1, hid), jnp.float32),
        "pre_ln_g": jnp.ones((1, hid), jnp.float32),
        "pre_ln_b": jnp.zeros((1, hid), jnp.float32),
        "last_w": w(next(ks), (hid, hid), hid),
        "last_b": jnp.zeros((1, hid), jnp.float32),
        "final_ln_g": jnp.ones((1, hid), jnp.float32),
        "final_ln_b": jnp.zeros((1, hid), jnp.float32),
        # transformer blocks, stacked along a leading block axis.
        "ln_g": jnp.ones((L, 1, hid), jnp.float32),
        "ln_b": jnp.zeros((L, 1, hid), jnp.float32),
        "qkv_w": w(next(ks), (L, hid, 3 * hid), hid),
        "qkv_b": jnp.zeros((L, 1, 3 * hid), jnp.float32),
        "proj_w": w(next(ks), (L, hid, hid), hid),
        "proj_b": jnp.zeros((L, 1, hid), jnp.float32),
        "mlp_ln_g": jnp.ones((L, 1, hid), jnp.float32),
        "mlp_ln_b": jnp.zeros((L, 1, hid), jnp.float32),
        "mlp0_w": w(next(ks), (L, hid, pr * hid), hid),
        "mlp0_b": jnp.zeros((L, 1, pr * hid), jnp.float32),
        "mlp1_w": w(next(ks), (L, pr * hid, hid), pr * hid),
        "mlp1_b": jnp.zeros((L, 1, hid), jnp.float32),
    }
    return params


# ----------------------------------------------------------------------------
# Forward pass (mirrors ScalableMinecraftPolicy.forward with default options)
# ----------------------------------------------------------------------------

def policy_forward(params, img, first, state_in, cfg):
    del first  # TODO(synk): `first`-based recurrence resets are not modelled.
    hid = cfg["hidsize"]
    B, T, C, H, W = img.shape
    BT = B * T
    oh1, oh2 = H // 2, H // 4
    n1, n2 = oh1 * oh1, oh2 * oh2
    c2 = cfg["conv_chans"][1]

    # ---- ImgPreprocessing + simplified conv backbone ------------------------
    # TODO(synk): the full ImpalaCNN residual stacks of build_backbone are not
    # reproduced; the backbone is two stride-2 3x3 conv+ReLU stages + dense.
    x = img.reshape(BT, C, H, W).transpose(0, 2, 3, 1)          # uint8 NHWC
    x = jnp.pad(x, ((0, 0), (1, 1), (1, 1), (0, 0)))            # zero-pad H, W
    r_idx, c_idx = _conv1_gather_indices(oh1)
    patches = x[:, r_idx, c_idx, :]                              # (BT, n1, 9, C) uint8
    frames = 4 if BT % 4 == 0 else (2 if BT % 2 == 0 else 1)
    # raw pixel values are exact in bf16; /255 is folded into conv1_w.
    cols = patches.reshape(BT // frames, frames * n1, 9 * C).astype(jnp.bfloat16)
    feats = cnn_forward(params, cols, frames, oh2)               # f32 conv2 features
    flat = feats.reshape(B, T, n2 * c2)

    # ---- dense head + pre_lstm_ln + ResidualRecurrentBlocks + last/final ----
    state_stacked = jnp.stack(state_in, axis=0)                  # (L, B, memory, hid)
    vi, tf, pi, st_out = core_forward(params, flat, state_stacked, cfg)

    result_latents = {
        "vi_latent": vi, "ov_latent": vi,
        "av_latent": None, "oa_latent": None,
        "pi_latent": pi, "vf_latent": pi,
        "tf_latent": tf, "ce_latent": None,
    }
    state_out = [st_out[l] for l in range(st_out.shape[0])]
    return result_latents, state_out


# ----------------------------------------------------------------------------
# Main
# ----------------------------------------------------------------------------

if __name__ == "__main__":
    cfg = dict(hidsize=128, heads=4, n_blocks=2, pointwise_ratio=4,
               conv_chans=(16, 32), img_c=3, img_hw=32, memory=16)

    key = jax.random.PRNGKey(0)
    k_param, k_img = jax.random.split(key)
    params = init_params(k_param, cfg)

    B, T = 2, 8
    img = jax.random.randint(
        k_img, (B, T, cfg["img_c"], cfg["img_hw"], cfg["img_hw"]),
        0, 256, dtype=jnp.int32).astype(jnp.uint8)
    first = jnp.ones((B, T), dtype=jnp.bool_)                    # context['first']
    state_in = [jnp.zeros((B, cfg["memory"], cfg["hidsize"]), jnp.float32)
                for _ in range(cfg["n_blocks"])]

    fwd = jax.jit(lambda p, im, fi, st: policy_forward(p, im, fi, st, cfg))
    latents, state_out = fwd(params, img, first, state_in)
    jax.block_until_ready(latents["pi_latent"])
    jax.block_until_ready(state_out)

    hid = cfg["hidsize"]
    assert latents["pi_latent"].shape == (B, T, hid)
    assert latents["vf_latent"].shape == (B, T, hid)
    assert latents["tf_latent"].shape == (B, T, hid)
    assert latents["vi_latent"].shape == (B, T, hid)
    assert len(state_out) == cfg["n_blocks"]
    assert state_out[0].shape == (B, cfg["memory"], hid)
    assert bool(jnp.isfinite(latents["pi_latent"]).all())
    print("KERNEL_OK")
</pallas_src>

<mosaic_0001>
module attributes {stable_mosaic.version = 11 : i64} {
  func.func @_cnn_kernel(%arg0: i32, %arg1: memref<1x1024x27xbf16, #tpu.memory_space<vmem>>, %arg2: memref<27x16xbf16, #tpu.memory_space<vmem>>, %arg3: memref<1x16xf32, #tpu.memory_space<vmem>>, %arg4: memref<9x16x32xbf16, #tpu.memory_space<vmem>>, %arg5: memref<1x32xf32, #tpu.memory_space<vmem>>, %arg6: memref<1x256x32xf32, #tpu.memory_space<vmem>>, %arg7: memref<1024x16xf32, #tpu.memory_space<vmem>>) attributes {dimension_semantics = [#tpu.dimension_semantics<parallel>], iteration_bounds = array<i64: 4>, scalar_prefetch = 0 : i64, scratch_operands = 1 : i64, tpu.core_type = #tpu.core_type<tc>, window_params = [{transform_indices = @transform_0, window_bounds = array<i64: 1, 1024, 27>}, {pipeline_mode = #tpu.pipeline_mode<synchronous>, transform_indices = @transform_1, window_bounds = array<i64: 27, 16>}, {pipeline_mode = #tpu.pipeline_mode<synchronous>, transform_indices = @transform_2, window_bounds = array<i64: 1, 16>}, {pipeline_mode = #tpu.pipeline_mode<synchronous>, transform_indices = @transform_3, window_bounds = array<i64: 9, 16, 32>}, {pipeline_mode = #tpu.pipeline_mode<synchronous>, transform_indices = @transform_4, window_bounds = array<i64: 1, 32>}, {transform_indices = @transform_5, window_bounds = array<i64: 1, 256, 32>}]} {
    %c0 = arith.constant 0 : index
    %c0_0 = arith.constant 0 : index
    %c0_1 = arith.constant 0 : index
    %0 = vector.load %arg1[%c0, %c0_0, %c0_1] : memref<1x1024x27xbf16, #tpu.memory_space<vmem>>, vector<1x1024x27xbf16>
    %1 = vector.shape_cast %0 : vector<1x1024x27xbf16> to vector<1024x27xbf16>
    %c0_2 = arith.constant 0 : index
    %c0_3 = arith.constant 0 : index
    %2 = vector.load %arg2[%c0_2, %c0_3] : memref<27x16xbf16, #tpu.memory_space<vmem>>, vector<27x16xbf16>
    %cst = arith.constant dense<0.000000e+00> : vector<1024x16xf32>
    %3 = tpu.matmul %1, %2, %cst {dimension_numbers = #tpu.dot_dimension_numbers<[1], [0], [0], [1], [0, 0, 1, 1], [], []>} : vector<1024x27xbf16>, vector<27x16xbf16>, vector<1024x16xf32> -> vector<1024x16xf32>
    %c0_4 = arith.constant 0 : index
    %c0_5 = arith.constant 0 : index
    %4 = vector.load %arg3[%c0_4, %c0_5] : memref<1x16xf32, #tpu.memory_space<vmem>>, vector<1x16xf32>
    %5 = vector.broadcast %4 : vector<1x16xf32> to vector<1024x16xf32>
    %6 = arith.addf %3, %5 : vector<1024x16xf32>
    %cst_6 = arith.constant 0.000000e+00 : f32
    %7 = vector.broadcast %cst_6 : f32 to vector<1024x16xf32>
    %8 = arith.maximumf %6, %7 : vector<1024x16xf32>
    %c0_7 = arith.constant 0 : index
    %c0_8 = arith.constant 0 : index
    %9 = vector.load %arg7[%c0_7, %c0_8] : memref<1024x16xf32, #tpu.memory_space<vmem>>, vector<1024x16xf32>
    tpu.vector_store %arg7[%c0_7, %c0_8], %8 {strides = array<i32>} : memref<1024x16xf32, #tpu.memory_space<vmem>>, vector<1024x16xf32>,
    %10 = tpu.iota {dimensions = array<i32: 0>} : vector<64x1xi32>
    %cst_9 = arith.constant 0.000000e+00 : f32
    %11 = vector.broadcast %cst_9 : f32 to vector<256x32xf32>
    %c0_10 = arith.constant 0 : index
    %c0_11 = arith.constant 0 : index
    %12 = vector.load %arg5[%c0_10, %c0_11] : memref<1x32xf32, #tpu.memory_space<vmem>>, vector<1x32xf32>
    %13 = vector.broadcast %12 : vector<1x32xf32> to vector<256x32xf32>
    %14 = arith.addf %11, %13 : vector<256x32xf32>
    %c9_i32 = arith.constant 9 : i32
    %15 = vector.broadcast %c9_i32 : i32 to vector<64x1xi32>
    %16 = arith.cmpi sge, %10, %15 : vector<64x1xi32>
    %c8_i32 = arith.constant 8 : i32
    %c0_i32 = arith.constant 0 : i32
    %17 = arith.cmpi eq, %c8_i32, %c0_i32 : i32
    %c1_i32 = arith.constant 1 : i32
    %18 = arith.select %17, %c1_i32, %c8_i32 : i32
    %19 = vector.broadcast %18 : i32 to vector<64x1xi32>
    %20 = arith.remsi %10, %19 : vector<64x1xi32>
    %c0_i32_12 = arith.constant 0 : i32
    %21 = vector.broadcast %c0_i32_12 : i32 to vector<64x1xi32>
    %22 = arith.cmpi ne, %20, %21 : vector<64x1xi32>
    %c0_i32_13 = arith.constant 0 : i32
    %23 = vector.broadcast %c0_i32_13 : i32 to vector<64x1xi32>
    %24 = arith.cmpi slt, %20, %23 : vector<64x1xi32>
    %c0_i32_14 = arith.constant 0 : i32
    %25 = arith.cmpi slt, %18, %c0_i32_14 : i32
    %26 = vector.broadcast %25 : i1 to vector<64x1xi1>
    %27 = vector.broadcast %26 : vector<64x1xi1> to vector<64x1xi1>
    %28 = arith.xori %24, %27 : vector<64x1xi1>
    %29 = arith.andi %28, %22 : vector<64x1xi1>
    %30 = vector.broadcast %18 : i32 to vector<64x1xi32>
    %31 = arith.addi %20, %30 : vector<64x1xi32>
    %32 = arith.select %29, %31, %20 : vector<64x1xi1>, vector<64x1xi32>
    %c0_i32_15 = arith.constant 0 : i32
    %33 = vector.broadcast %c0_i32_15 : i32 to vector<64x1xi32>
    %34 = arith.cmpi ne, %32, %33 : vector<64x1xi32>
    %35 = arith.andi %16, %34 : vector<64x1xi1>
    %c183 = arith.constant 183 : index
    %c0_16 = arith.constant 0 : index
    %36 = vector.load %arg7[%c183, %c0_16] : memref<1024x16xf32, #tpu.memory_space<vmem>>, vector<64x16xf32>
    %cst_17 = arith.constant 0.000000e+00 : f32
    %37 = vector.shape_cast %35 : vector<64x1xi1> to vector<64x1xi1>
    %38 = vector.broadcast %37 : vector<64x1xi1> to vector<64x16xi1>
    %39 = vector.broadcast %cst_17 : f32 to vector<64x16xf32>
    %40 = arith.select %38, %36, %39 : vector<64x16xi1>, vector<64x16xf32>
    %c439 = arith.constant 439 : index
    %c0_18 = arith.constant 0 : index
    %41 = vector.load %arg7[%c439, %c0_18] : memref<1024x16xf32, #tpu.memory_space<vmem>>, vector<64x16xf32>
    %cst_19 = arith.constant 0.000000e+00 : f32
    %42 = vector.shape_cast %35 : vector<64x1xi1> to vector<64x1xi1>
    %43 = vector.broadcast %42 : vector<64x1xi1> to vector<64x16xi1>
    %44 = vector.broadcast %cst_19 : f32 to vector<64x16xf32>
    %45 = arith.select %43, %41, %44 : vector<64x16xi1>, vector<64x16xf32>
    %c695 = arith.constant 695 : index
    %c0_20 = arith.constant 0 : index
    %46 = vector.load %arg7[%c695, %c0_20] : memref<1024x16xf32, #tpu.memory_space<vmem>>, vector<64x16xf32>
    %cst_21 = arith.constant 0.000000e+00 : f32
    %47 = vector.shape_cast %35 : vector<64x1xi1> to vector<64x1xi1>
    %48 = vector.broadcast %47 : vector<64x1xi1> to vector<64x16xi1>
    %49 = vector.broadcast %cst_21 : f32 to vector<64x16xf32>
    %50 = arith.select %48, %46, %49 : vector<64x16xi1>, vector<64x16xf32>
    %c951 = arith.constant 951 : index
    %c0_22 = arith.constant 0 : index
    %51 = vector.load %arg7[%c951, %c0_22] : memref<1024x16xf32, #tpu.memory_space<vmem>>, vector<64x16xf32>
    %cst_23 = arith.constant 0.000000e+00 : f32
    %52 = vector.shape_cast %35 : vector<64x1xi1> to vector<64x1xi1>
    %53 = vector.broadcast %52 : vector<64x1xi1> to vector<64x16xi1>
    %54 = vector.broadcast %cst_23 : f32 to vector<64x16xf32>
    %55 = arith.select %53, %51, %54 : vector<64x16xi1>, vector<64x16xf32>
    %56 = tpu.concatenate %40, %45, %50, %55 in 0 : vector<64x16xf32>, vector<64x16xf32>, vector<64x16xf32>, vector<64x16xf32> -> vector<256x16xf32>
    %57 = arith.truncf %56 : vector<256x16xf32> to vector<256x16xbf16>
    %c0_24 = arith.constant 0 : index
    %c0_25 = arith.constant 0 : index
    %c0_26 = arith.constant 0 : index
    %58 = vector.load %arg4[%c0_24, %c0_25, %c0_26] : memref<9x16x32xbf16, #tpu.memory_space<vmem>>, vector<1x16x32xbf16>
    %59 = vector.shape_cast %58 : vector<1x16x32xbf16> to vector<16x32xbf16>
    %cst_27 = arith.constant dense<0.000000e+00> : vector<256x32xf32>
    %60 = tpu.matmul %57, %59, %cst_27 {dimension_numbers = #tpu.dot_dimension_numbers<[1], [0], [0], [1], [0, 0, 1, 1], [], []>} : vector<256x16xbf16>, vector<16x32xbf16>, vector<256x32xf32> -> vector<256x32xf32>
    %61 = arith.addf %14, %60 : vector<256x32xf32>
    %c8_i32_28 = arith.constant 8 : i32
    %62 = vector.broadcast %c8_i32_28 : i32 to vector<64x1xi32>
    %63 = arith.cmpi sge, %10, %62 : vector<64x1xi32>
    %c120 = arith.constant 120 : index
    %c0_29 = arith.constant 0 : index
    %64 = vector.load %arg7[%c120, %c0_29] : memref<1024x16xf32, #tpu.memory_space<vmem>>, vector<64x16xf32>
    %cst_30 = arith.constant 0.000000e+00 : f32
    %65 = vector.shape_cast %63 : vector<64x1xi1> to vector<64x1xi1>
    %66 = vector.broadcast %65 : vector<64x1xi1> to vector<64x16xi1>
    %67 = vector.broadcast %cst_30 : f32 to vector<64x16xf32>
    %68 = arith.select %66, %64, %67 : vector<64x16xi1>, vector<64x16xf32>
    %c376 = arith.constant 376 : index
    %c0_31 = arith.constant 0 : index
    %69 = vector.load %arg7[%c376, %c0_31] : memref<1024x16xf32, #tpu.memory_space<vmem>>, vector<64x16xf32>
    %cst_32 = arith.constant 0.000000e+00 : f32
    %70 = vector.shape_cast %63 : vector<64x1xi1> to vector<64x1xi1>
    %71 = vector.broadcast %70 : vector<64x1xi1> to vector<64x16xi1>
    %72 = vector.broadcast %cst_32 : f32 to vector<64x16xf32>
    %73 = arith.select %71, %69, %72 : vector<64x16xi1>, vector<64x16xf32>
    %c632 = arith.constant 632 : index
    %c0_33 = arith.constant 0 : index
    %74 = vector.load %arg7[%c632, %c0_33] : memref<1024x16xf32, #tpu.memory_space<vmem>>, vector<64x16xf32>
    %cst_34 = arith.constant 0.000000e+00 : f32
    %75 = vector.shape_cast %63 : vector<64x1xi1> to vector<64x1xi1>
    %76 = vector.broadcast %75 : vector<64x1xi1> to vector<64x16xi1>
    %77 = vector.broadcast %cst_34 : f32 to vector<64x16xf32>
    %78 = arith.select %76, %74, %77 : vector<64x16xi1>, vector<64x16xf32>
    %c888 = arith.constant 888 : index
    %c0_35 = arith.constant 0 : index
    %79 = vector.load %arg7[%c888, %c0_35] : memref<1024x16xf32, #tpu.memory_space<vmem>>, vector<64x16xf32>
    %cst_36 = arith.constant 0.000000e+00 : f32
    %80 = vector.shape_cast %63 : vector<64x1xi1> to vector<64x1xi1>
    %81 = vector.broadcast %80 : vector<64x1xi1> to vector<64x16xi1>
    %82 = vector.broadcast %cst_36 : f32 to vector<64x16xf32>
    %83 = arith.select %81, %79, %82 : vector<64x16xi1>, vector<64x16xf32>
    %84 = tpu.concatenate %68, %73, %78, %83 in 0 : vector<64x16xf32>, vector<64x16xf32>, vector<64x16xf32>, vector<64x16xf32> -> vector<256x16xf32>
    %85 = arith.truncf %84 : vector<256x16xf32> to vector<256x16xbf16>
    %c1 = arith.constant 1 : index
    %c0_37 = arith.constant 0 : index
    %c0_38 = arith.constant 0 : index
    %86 = vector.load %arg4[%c1, %c0_37, %c0_38] : memref<9x16x32xbf16, #tpu.memory_space<vmem>>, vector<1x16x32xbf16>
    %87 = vector.shape_cast %86 : vector<1x16x32xbf16> to vector<16x32xbf16>
    %cst_39 = arith.constant dense<0.000000e+00> : vector<256x32xf32>
    %88 = tpu.matmul %85, %87, %cst_39 {dimension_numbers = #tpu.dot_dimension_numbers<[1], [0], [0], [1], [0, 0, 1, 1], [], []>} : vector<256x16xbf16>, vector<16x32xbf16>, vector<256x32xf32> -> vector<256x32xf32>
    %89 = arith.addf %61, %88 : vector<256x32xf32>
    %c8_i32_40 = arith.constant 8 : i32
    %90 = vector.broadcast %c8_i32_40 : i32 to vector<64x1xi32>
    %91 = arith.cmpi sge, %10, %90 : vector<64x1xi32>
    %c184 = arith.constant 184 : index
    %c0_41 = arith.constant 0 : index
    %92 = vector.load %arg7[%c184, %c0_41] : memref<1024x16xf32, #tpu.memory_space<vmem>>, vector<64x16xf32>
    %cst_42 = arith.constant 0.000000e+00 : f32
    %93 = vector.shape_cast %91 : vector<64x1xi1> to vector<64x1xi1>
    %94 = vector.broadcast %93 : vector<64x1xi1> to vector<64x16xi1>
    %95 = vector.broadcast %cst_42 : f32 to vector<64x16xf32>
    %96 = arith.select %94, %92, %95 : vector<64x16xi1>, vector<64x16xf32>
    %c440 = arith.constant 440 : index
    %c0_43 = arith.constant 0 : index
    %97 = vector.load %arg7[%c440, %c0_43] : memref<1024x16xf32, #tpu.memory_space<vmem>>, vector<64x16xf32>
    %cst_44 = arith.constant 0.000000e+00 : f32
    %98 = vector.shape_cast %91 : vector<64x1xi1> to vector<64x1xi1>
    %99 = vector.broadcast %98 : vector<64x1xi1> to vector<64x16xi1>
    %100 = vector.broadcast %cst_44 : f32 to vector<64x16xf32>
    %101 = arith.select %99, %97, %100 : vector<64x16xi1>, vector<64x16xf32>
    %c696 = arith.constant 696 : index
    %c0_45 = arith.constant 0 : index
    %102 = vector.load %arg7[%c696, %c0_45] : memref<1024x16xf32, #tpu.memory_space<vmem>>, vector<64x16xf32>
    %cst_46 = arith.constant 0.000000e+00 : f32
    %103 = vector.shape_cast %91 : vector<64x1xi1> to vector<64x1xi1>
    %104 = vector.broadcast %103 : vector<64x1xi1> to vector<64x16xi1>
    %105 = vector.broadcast %cst_46 : f32 to vector<64x16xf32>
    %106 = arith.select %104, %102, %105 : vector<64x16xi1>, vector<64x16xf32>
    %c952 = arith.constant 952 : index
    %c0_47 = arith.constant 0 : index
    %107 = vector.load %arg7[%c952, %c0_47] : memref<1024x16xf32, #tpu.memory_space<vmem>>, vector<64x16xf32>
    %cst_48 = arith.constant 0.000000e+00 : f32
    %108 = vector.shape_cast %91 : vector<64x1xi1> to vector<64x1xi1>
    %109 = vector.broadcast %108 : vector<64x1xi1> to vector<64x16xi1>
    %110 = vector.broadcast %cst_48 : f32 to vector<64x16xf32>
    %111 = arith.select %109, %107, %110 : vector<64x16xi1>, vector<64x16xf32>
    %112 = tpu.concatenate %96, %101, %106, %111 in 0 : vector<64x16xf32>, vector<64x16xf32>, vector<64x16xf32>, vector<64x16xf32> -> vector<256x16xf32>
    %113 = arith.truncf %112 : vector<256x16xf32> to vector<256x16xbf16>
    %c2 = arith.constant 2 : index
    %c0_49 = arith.constant 0 : index
    %c0_50 = arith.constant 0 : index
    %114 = vector.load %arg4[%c2, %c0_49, %c0_50] : memref<9x16x32xbf16, #tpu.memory_space<vmem>>, vector<1x16x32xbf16>
    %115 = vector.shape_cast %114 : vector<1x16x32xbf16> to vector<16x32xbf16>
    %cst_51 = arith.constant dense<0.000000e+00> : vector<256x32xf32>
    %116 = tpu.matmul %113, %115, %cst_51 {dimension_numbers = #tpu.dot_dimension_numbers<[1], [0], [0], [1], [0, 0, 1, 1], [], []>} : vector<256x16xbf16>, vector<16x32xbf16>, vector<256x32xf32> -> vector<256x32xf32>
    %117 = arith.addf %89, %116 : vector<256x32xf32>
    %c1_i32_52 = arith.constant 1 : i32
    %118 = vector.broadcast %c1_i32_52 : i32 to vector<64x1xi32>
    %119 = arith.cmpi sge, %10, %118 : vector<64x1xi32>
    %c8_i32_53 = arith.constant 8 : i32
    %c0_i32_54 = arith.constant 0 : i32
    %120 = arith.cmpi eq, %c8_i32_53, %c0_i32_54 : i32
    %c1_i32_55 = arith.constant 1 : i32
    %121 = arith.select %120, %c1_i32_55, %c8_i32_53 : i32
    %122 = vector.broadcast %121 : i32 to vector<64x1xi32>
    %123 = arith.remsi %10, %122 : vector<64x1xi32>
    %c0_i32_56 = arith.constant 0 : i32
    %124 = vector.broadcast %c0_i32_56 : i32 to vector<64x1xi32>
    %125 = arith.cmpi ne, %123, %124 : vector<64x1xi32>
    %c0_i32_57 = arith.constant 0 : i32
    %126 = vector.broadcast %c0_i32_57 : i32 to vector<64x1xi32>
    %127 = arith.cmpi slt, %123, %126 : vector<64x1xi32>
    %c0_i32_58 = arith.constant 0 : i32
    %128 = arith.cmpi slt, %121, %c0_i32_58 : i32
    %129 = vector.broadcast %128 : i1 to vector<64x1xi1>
    %130 = vector.broadcast %129 : vector<64x1xi1> to vector<64x1xi1>
    %131 = arith.xori %127, %130 : vector<64x1xi1>
    %132 = arith.andi %131, %125 : vector<64x1xi1>
    %133 = vector.broadcast %121 : i32 to vector<64x1xi32>
    %134 = arith.addi %123, %133 : vector<64x1xi32>
    %135 = arith.select %132, %134, %123 : vector<64x1xi1>, vector<64x1xi32>
    %c0_i32_59 = arith.constant 0 : i32
    %136 = vector.broadcast %c0_i32_59 : i32 to vector<64x1xi32>
    %137 = arith.cmpi ne, %135, %136 : vector<64x1xi32>
    %138 = arith.andi %119, %137 : vector<64x1xi1>
    %c63 = arith.constant 63 : index
    %c0_60 = arith.constant 0 : index
    %139 = vector.load %arg7[%c63, %c0_60] : memref<1024x16xf32, #tpu.memory_space<vmem>>, vector<64x16xf32>
    %cst_61 = arith.constant 0.000000e+00 : f32
    %140 = vector.shape_cast %138 : vector<64x1xi1> to vector<64x1xi1>
    %141 = vector.broadcast %140 : vector<64x1xi1> to vector<64x16xi1>
    %142 = vector.broadcast %cst_61 : f32 to vector<64x16xf32>
    %143 = arith.select %141, %139, %142 : vector<64x16xi1>, vector<64x16xf32>
    %c319 = arith.constant 319 : index
    %c0_62 = arith.constant 0 : index
    %144 = vector.load %arg7[%c319, %c0_62] : memref<1024x16xf32, #tpu.memory_space<vmem>>, vector<64x16xf32>
    %cst_63 = arith.constant 0.000000e+00 : f32
    %145 = vector.shape_cast %138 : vector<64x1xi1> to vector<64x1xi1>
    %146 = vector.broadcast %145 : vector<64x1xi1> to vector<64x16xi1>
    %147 = vector.broadcast %cst_63 : f32 to vector<64x16xf32>
    %148 = arith.select %146, %144, %147 : vector<64x16xi1>, vector<64x16xf32>
    %c575 = arith.constant 575 : index
    %c0_64 = arith.constant 0 : index
    %149 = vector.load %arg7[%c575, %c0_64] : memref<1024x16xf32, #tpu.memory_space<vmem>>, vector<64x16xf32>
    %cst_65 = arith.constant 0.000000e+00 : f32
    %150 = vector.shape_cast %138 : vector<64x1xi1> to vector<64x1xi1>
    %151 = vector.broadcast %150 : vector<64x1xi1> to vector<64x16xi1>
    %152 = vector.broadcast %cst_65 : f32 to vector<64x16xf32>
    %153 = arith.select %151, %149, %152 : vector<64x16xi1>, vector<64x16xf32>
    %c831 = arith.constant 831 : index
    %c0_66 = arith.constant 0 : index
    %154 = vector.load %arg7[%c831, %c0_66] : memref<1024x16xf32, #tpu.memory_space<vmem>>, vector<64x16xf32>
    %cst_67 = arith.constant 0.000000e+00 : f32
    %155 = vector.shape_cast %138 : vector<64x1xi1> to vector<64x1xi1>
    %156 = vector.broadcast %155 : vector<64x1xi1> to vector<64x16xi1>
    %157 = vector.broadcast %cst_67 : f32 to vector<64x16xf32>
    %158 = arith.select %156, %154, %157 : vector<64x16xi1>, vector<64x16xf32>
    %159 = tpu.concatenate %143, %148, %153, %158 in 0 : vector<64x16xf32>, vector<64x16xf32>, vector<64x16xf32>, vector<64x16xf32> -> vector<256x16xf32>
    %160 = arith.truncf %159 : vector<256x16xf32> to vector<256x16xbf16>
    %c3 = arith.constant 3 : index
    %c0_68 = arith.constant 0 : index
    %c0_69 = arith.constant 0 : index
    %161 = vector.load %arg4[%c3, %c0_68, %c0_69] : memref<9x16x32xbf16, #tpu.memory_space<vmem>>, vector<1x16x32xbf16>
    %162 = vector.shape_cast %161 : vector<1x16x32xbf16> to vector<16x32xbf16>
    %cst_70 = arith.constant dense<0.000000e+00> : vector<256x32xf32>
    %163 = tpu.matmul %160, %162, %cst_70 {dimension_numbers = #tpu.dot_dimension_numbers<[1], [0], [0], [1], [0, 0, 1, 1], [], []>} : vector<256x16xbf16>, vector<16x32xbf16>, vector<256x32xf32> -> vector<256x32xf32>
    %164 = arith.addf %117, %163 : vector<256x32xf32>
    %c0_71 = arith.constant 0 : index
    %c0_72 = arith.constant 0 : index
    %165 = vector.load %arg7[%c0_71, %c0_72] : memref<1024x16xf32, #tpu.memory_space<vmem>>, vector<64x16xf32>
    %c256 = arith.constant 256 : index
    %c0_73 = arith.constant 0 : index
    %166 = vector.load %arg7[%c256, %c0_73] : memref<1024x16xf32, #tpu.memory_space<vmem>>, vector<64x16xf32>
    %c512 = arith.constant 512 : index
    %c0_74 = arith.constant 0 : index
    %167 = vector.load %arg7[%c512, %c0_74] : memref<1024x16xf32, #tpu.memory_space<vmem>>, vector<64x16xf32>
    %c768 = arith.constant 768 : index
    %c0_75 = arith.constant 0 : index
    %168 = vector.load %arg7[%c768, %c0_75] : memref<1024x16xf32, #tpu.memory_space<vmem>>, vector<64x16xf32>
    %169 = tpu.concatenate %165, %166, %167, %168 in 0 : vector<64x16xf32>, vector<64x16xf32>, vector<64x16xf32>, vector<64x16xf32> -> vector<256x16xf32>
    %170 = arith.truncf %169 : vector<256x16xf32> to vector<256x16xbf16>
    %c4 = arith.constant 4 : index
    %c0_76 = arith.constant 0 : index
    %c0_77 = arith.constant 0 : index
    %171 = vector.load %arg4[%c4, %c0_76, %c0_77] : memref<9x16x32xbf16, #tpu.memory_space<vmem>>, vector<1x16x32xbf16>
    %172 = vector.shape_cast %171 : vector<1x16x32xbf16> to vector<16x32xbf16>
    %cst_78 = arith.constant dense<0.000000e+00> : vector<256x32xf32>
    %173 = tpu.matmul %170, %172, %cst_78 {dimension_numbers = #tpu.dot_dimension_numbers<[1], [0], [0], [1], [0, 0, 1, 1], [], []>} : vector<256x16xbf16>, vector<16x32xbf16>, vector<256x32xf32> -> vector<256x32xf32>
    %174 = arith.addf %164, %173 : vector<256x32xf32>
    %c64 = arith.constant 64 : index
    %c0_79 = arith.constant 0 : index
    %175 = vector.load %arg7[%c64, %c0_79] : memref<1024x16xf32, #tpu.memory_space<vmem>>, vector<64x16xf32>
    %c320 = arith.constant 320 : index
    %c0_80 = arith.constant 0 : index
    %176 = vector.load %arg7[%c320, %c0_80] : memref<1024x16xf32, #tpu.memory_space<vmem>>, vector<64x16xf32>
    %c576 = arith.constant 576 : index
    %c0_81 = arith.constant 0 : index
    %177 = vector.load %arg7[%c576, %c0_81] : memref<1024x16xf32, #tpu.memory_space<vmem>>, vector<64x16xf32>
    %c832 = arith.constant 832 : index
    %c0_82 = arith.constant 0 : index
    %178 = vector.load %arg7[%c832, %c0_82] : memref<1024x16xf32, #tpu.memory_space<vmem>>, vector<64x16xf32>
    %179 = tpu.concatenate %175, %176, %177, %178 in 0 : vector<64x16xf32>, vector<64x16xf32>, vector<64x16xf32>, vector<64x16xf32> -> vector<256x16xf32>
    %180 = arith.truncf %179 : vector<256x16xf32> to vector<256x16xbf16>
    %c5 = arith.constant 5 : index
    %c0_83 = arith.constant 0 : index
    %c0_84 = arith.constant 0 : index
    %181 = vector.load %arg4[%c5, %c0_83, %c0_84] : memref<9x16x32xbf16, #tpu.memory_space<vmem>>, vector<1x16x32xbf16>
    %182 = vector.shape_cast %181 : vector<1x16x32xbf16> to vector<16x32xbf16>
    %cst_85 = arith.constant dense<0.000000e+00> : vector<256x32xf32>
    %183 = tpu.matmul %180, %182, %cst_85 {dimension_numbers = #tpu.dot_dimension_numbers<[1], [0], [0], [1], [0, 0, 1, 1], [], []>} : vector<256x16xbf16>, vector<16x32xbf16>, vector<256x32xf32> -> vector<256x32xf32>
    %184 = arith.addf %174, %183 : vector<256x32xf32>
    %c1_i32_86 = arith.constant 1 : i32
    %185 = vector.broadcast %c1_i32_86 : i32 to vector<64x1xi32>
    %186 = arith.cmpi sge, %10, %185 : vector<64x1xi32>
    %c8_i32_87 = arith.constant 8 : i32
    %c0_i32_88 = arith.constant 0 : i32
    %187 = arith.cmpi eq, %c8_i32_87, %c0_i32_88 : i32
    %c1_i32_89 = arith.constant 1 : i32
    %188 = arith.select %187, %c1_i32_89, %c8_i32_87 : i32
    %189 = vector.broadcast %188 : i32 to vector<64x1xi32>
    %190 = arith.remsi %10, %189 : vector<64x1xi32>
    %c0_i32_90 = arith.constant 0 : i32
    %191 = vector.broadcast %c0_i32_90 : i32 to vector<64x1xi32>
    %192 = arith.cmpi ne, %190, %191 : vector<64x1xi32>
    %c0_i32_91 = arith.constant 0 : i32
    %193 = vector.broadcast %c0_i32_91 : i32 to vector<64x1xi32>
    %194 = arith.cmpi slt, %190, %193 : vector<64x1xi32>
    %c0_i32_92 = arith.constant 0 : i32
    %195 = arith.cmpi slt, %188, %c0_i32_92 : i32
    %196 = vector.broadcast %195 : i1 to vector<64x1xi1>
    %197 = vector.broadcast %196 : vector<64x1xi1> to vector<64x1xi1>
    %198 = arith.xori %194, %197 : vector<64x1xi1>
    %199 = arith.andi %198, %192 : vector<64x1xi1>
    %200 = vector.broadcast %188 : i32 to vector<64x1xi32>
    %201 = arith.addi %190, %200 : vector<64x1xi32>
    %202 = arith.select %199, %201, %190 : vector<64x1xi1>, vector<64x1xi32>
    %c0_i32_93 = arith.constant 0 : i32
    %203 = vector.broadcast %c0_i32_93 : i32 to vector<64x1xi32>
    %204 = arith.cmpi ne, %202, %203 : vector<64x1xi32>
    %205 = arith.andi %186, %204 : vector<64x1xi1>
    %c191 = arith.constant 191 : index
    %c0_94 = arith.constant 0 : index
    %206 = vector.load %arg7[%c191, %c0_94] : memref<1024x16xf32, #tpu.memory_space<vmem>>, vector<64x16xf32>
    %cst_95 = arith.constant 0.000000e+00 : f32
    %207 = vector.shape_cast %205 : vector<64x1xi1> to vector<64x1xi1>
    %208 = vector.broadcast %207 : vector<64x1xi1> to vector<64x16xi1>
    %209 = vector.broadcast %cst_95 : f32 to vector<64x16xf32>
    %210 = arith.select %208, %206, %209 : vector<64x16xi1>, vector<64x16xf32>
    %c447 = arith.constant 447 : index
    %c0_96 = arith.constant 0 : index
    %211 = vector.load %arg7[%c447, %c0_96] : memref<1024x16xf32, #tpu.memory_space<vmem>>, vector<64x16xf32>
    %cst_97 = arith.constant 0.000000e+00 : f32
    %212 = vector.shape_cast %205 : vector<64x1xi1> to vector<64x1xi1>
    %213 = vector.broadcast %212 : vector<64x1xi1> to vector<64x16xi1>
    %214 = vector.broadcast %cst_97 : f32 to vector<64x16xf32>
    %215 = arith.select %213, %211, %214 : vector<64x16xi1>, vector<64x16xf32>
    %c703 = arith.constant 703 : index
    %c0_98 = arith.constant 0 : index
    %216 = vector.load %arg7[%c703, %c0_98] : memref<1024x16xf32, #tpu.memory_space<vmem>>, vector<64x16xf32>
    %cst_99 = arith.constant 0.000000e+00 : f32
    %217 = vector.shape_cast %205 : vector<64x1xi1> to vector<64x1xi1>
    %218 = vector.broadcast %217 : vector<64x1xi1> to vector<64x16xi1>
    %219 = vector.broadcast %cst_99 : f32 to vector<64x16xf32>
    %220 = arith.select %218, %216, %219 : vector<64x16xi1>, vector<64x16xf32>
    %c959 = arith.constant 959 : index
    %c0_100 = arith.constant 0 : index
    %221 = vector.load %arg7[%c959, %c0_100] : memref<1024x16xf32, #tpu.memory_space<vmem>>, vector<64x16xf32>
    %cst_101 = arith.constant 0.000000e+00 : f32
    %222 = vector.shape_cast %205 : vector<64x1xi1> to vector<64x1xi1>
    %223 = vector.broadcast %222 : vector<64x1xi1> to vector<64x16xi1>
    %224 = vector.broadcast %cst_101 : f32 to vector<64x16xf32>
    %225 = arith.select %223, %221, %224 : vector<64x16xi1>, vector<64x16xf32>
    %226 = tpu.concatenate %210, %215, %220, %225 in 0 : vector<64x16xf32>, vector<64x16xf32>, vector<64x16xf32>, vector<64x16xf32> -> vector<256x16xf32>
    %227 = arith.truncf %226 : vector<256x16xf32> to vector<256x16xbf16>
    %c6 = arith.constant 6 : index
    %c0_102 = arith.constant 0 : index
    %c0_103 = arith.constant 0 : index
    %228 = vector.load %arg4[%c6, %c0_102, %c0_103] : memref<9x16x32xbf16, #tpu.memory_space<vmem>>, vector<1x16x32xbf16>
    %229 = vector.shape_cast %228 : vector<1x16x32xbf16> to vector<16x32xbf16>
    %cst_104 = arith.constant dense<0.000000e+00> : vector<256x32xf32>
    %230 = tpu.matmul %227, %229, %cst_104 {dimension_numbers = #tpu.dot_dimension_numbers<[1], [0], [0], [1], [0, 0, 1, 1], [], []>} : vector<256x16xbf16>, vector<16x32xbf16>, vector<256x32xf32> -> vector<256x32xf32>
    %231 = arith.addf %184, %230 : vector<256x32xf32>
    %c128 = arith.constant 128 : index
    %c0_105 = arith.constant 0 : index
    %232 = vector.load %arg7[%c128, %c0_105] : memref<1024x16xf32, #tpu.memory_space<vmem>>, vector<64x16xf32>
    %c384 = arith.constant 384 : index
    %c0_106 = arith.constant 0 : index
    %233 = vector.load %arg7[%c384, %c0_106] : memref<1024x16xf32, #tpu.memory_space<vmem>>, vector<64x16xf32>
    %c640 = arith.constant 640 : index
    %c0_107 = arith.constant 0 : index
    %234 = vector.load %arg7[%c640, %c0_107] : memref<1024x16xf32, #tpu.memory_space<vmem>>, vector<64x16xf32>
    %c896 = arith.constant 896 : index
    %c0_108 = arith.constant 0 : index
    %235 = vector.load %arg7[%c896, %c0_108] : memref<1024x16xf32, #tpu.memory_space<vmem>>, vector<64x16xf32>
    %236 = tpu.concatenate %232, %233, %234, %235 in 0 : vector<64x16xf32>, vector<64x16xf32>, vector<64x16xf32>, vector<64x16xf32> -> vector<256x16xf32>
    %237 = arith.truncf %236 : vector<256x16xf32> to vector<256x16xbf16>
    %c7 = arith.constant 7 : index
    %c0_109 = arith.constant 0 : index
    %c0_110 = arith.constant 0 : index
    %238 = vector.load %arg4[%c7, %c0_109, %c0_110] : memref<9x16x32xbf16, #tpu.memory_space<vmem>>, vector<1x16x32xbf16>
    %239 = vector.shape_cast %238 : vector<1x16x32xbf16> to vector<16x32xbf16>
    %cst_111 = arith.constant dense<0.000000e+00> : vector<256x32xf32>
    %240 = tpu.matmul %237, %239, %cst_111 {dimension_numbers = #tpu.dot_dimension_numbers<[1], [0], [0], [1], [0, 0, 1, 1], [], []>} : vector<256x16xbf16>, vector<16x32xbf16>, vector<256x32xf32> -> vector<256x32xf32>
    %241 = arith.addf %231, %240 : vector<256x32xf32>
    %c192 = arith.constant 192 : index
    %c0_112 = arith.constant 0 : index
    %242 = vector.load %arg7[%c192, %c0_112] : memref<1024x16xf32, #tpu.memory_space<vmem>>, vector<64x16xf32>
    %c448 = arith.constant 448 : index
    %c0_113 = arith.constant 0 : index
    %243 = vector.load %arg7[%c448, %c0_113] : memref<1024x16xf32, #tpu.memory_space<vmem>>, vector<64x16xf32>
    %c704 = arith.constant 704 : index
    %c0_114 = arith.constant 0 : index
    %244 = vector.load %arg7[%c704, %c0_114] : memref<1024x16xf32, #tpu.memory_space<vmem>>, vector<64x16xf32>
    %c960 = arith.constant 960 : index
    %c0_115 = arith.constant 0 : index
    %245 = vector.load %arg7[%c960, %c0_115] : memref<1024x16xf32, #tpu.memory_space<vmem>>, vector<64x16xf32>
    %246 = tpu.concatenate %242, %243, %244, %245 in 0 : vector<64x16xf32>, vector<64x16xf32>, vector<64x16xf32>, vector<64x16xf32> -> vector<256x16xf32>
    %247 = arith.truncf %246 : vector<256x16xf32> to vector<256x16xbf16>
    %c8 = arith.constant 8 : index
    %c0_116 = arith.constant 0 : index
    %c0_117 = arith.constant 0 : index
    %248 = vector.load %arg4[%c8, %c0_116, %c0_117] : memref<9x16x32xbf16, #tpu.memory_space<vmem>>, vector<1x16x32xbf16>
    %249 = vector.shape_cast %248 : vector<1x16x32xbf16> to vector<16x32xbf16>
    %cst_118 = arith.constant dense<0.000000e+00> : vector<256x32xf32>
    %250 = tpu.matmul %247, %249, %cst_118 {dimension_numbers = #tpu.dot_dimension_numbers<[1], [0], [0], [1], [0, 0, 1, 1], [], []>} : vector<256x16xbf16>, vector<16x32xbf16>, vector<256x32xf32> -> vector<256x32xf32>
    %251 = arith.addf %241, %250 : vector<256x32xf32>
    %cst_119 = arith.constant 0.000000e+00 : f32
    %252 = vector.broadcast %cst_119 : f32 to vector<256x32xf32>
    %253 = arith.maximumf %251, %252 : vector<256x32xf32>
    %c0_120 = arith.constant 0 : index
    %c0_121 = arith.constant 0 : index
    %c0_122 = arith.constant 0 : index
    %254 = vector.load %arg6[%c0_120, %c0_121, %c0_122] : memref<1x256x32xf32, #tpu.memory_space<vmem>>, vector<1x256x32xf32>
    %255 = vector.shape_cast %254 : vector<1x256x32xf32> to vector<256x32xf32>
    %256 = vector.shape_cast %253 : vector<256x32xf32> to vector<1x256x32xf32>
    tpu.vector_store %arg6[%c0_120, %c0_121, %c0_122], %256 {strides = array<i32>} : memref<1x256x32xf32, #tpu.memory_space<vmem>>, vector<1x256x32xf32>,
    return
  }
  func.func @transform_0(%arg0: i32) -> (i32, i32, i32) {
    %c0_i32 = arith.constant 0 : i32
    %c0_i32_0 = arith.constant 0 : i32
    %c0_i32_1 = arith.constant 0 : i32
    return %arg0, %c0_i32, %c0_i32_0 : i32, i32, i32
  }
  func.func @transform_1(%arg0: i32) -> (i32, i32) {
    %c0_i32 = arith.constant 0 : i32
    %c0_i32_0 = arith.constant 0 : i32
    %c0_i32_1 = arith.constant 0 : i32
    return %c0_i32, %c0_i32_0 : i32, i32
  }
  func.func @transform_2(%arg0: i32) -> (i32, i32) {
    %c0_i32 = arith.constant 0 : i32
    %c0_i32_0 = arith.constant 0 : i32
    %c0_i32_1 = arith.constant 0 : i32
    return %c0_i32, %c0_i32_0 : i32, i32
  }
  func.func @transform_3(%arg0: i32) -> (i32, i32, i32) {
    %c0_i32 = arith.constant 0 : i32
    %c0_i32_0 = arith.constant 0 : i32
    %c0_i32_1 = arith.constant 0 : i32
    %c0_i32_2 = arith.constant 0 : i32
    return %c0_i32, %c0_i32_0, %c0_i32_1 : i32, i32, i32
  }
  func.func @transform_4(%arg0: i32) -> (i32, i32) {
    %c0_i32 = arith.constant 0 : i32
    %c0_i32_0 = arith.constant 0 : i32
    %c0_i32_1 = arith.constant 0 : i32
    return %c0_i32, %c0_i32_0 : i32, i32
  }
  func.func @transform_5(%arg0: i32) -> (i32, i32, i32) {
    %c0_i32 = arith.constant 0 : i32
    %c0_i32_0 = arith.constant 0 : i32
    %c0_i32_1 = arith.constant 0 : i32
    return %arg0, %c0_i32, %c0_i32_0 : i32, i32, i32
  }
}

module attributes {stable_mosaic.version = 11 : i64} {
  func.func @_core_kernel(%arg0: i32, %arg1: i32, %arg2: memref<1x8x2048xf32, #tpu.memory_space<vmem>>, %arg3: memref<2048x128xbf16, #tpu.memory_space<vmem>>, %arg4: memref<1x128xf32, #tpu.memory_space<vmem>>, %arg5: memref<1x128xf32, #tpu.memory_space<vmem>>, %arg6: memref<1x128xf32, #tpu.memory_space<vmem>>, %arg7: memref<1x1x128xf32, #tpu.memory_space<vmem>>, %arg8: memref<1x1x128xf32, #tpu.memory_space<vmem>>, %arg9: memref<1x128x384xbf16, #tpu.memory_space<vmem>>, %arg10: memref<1x1x384xf32, #tpu.memory_space<vmem>>, %arg11: memref<1x128x128xbf16, #tpu.memory_space<vmem>>, %arg12: memref<1x1x128xf32, #tpu.memory_space<vmem>>, %arg13: memref<1x1x128xf32, #tpu.memory_space<vmem>>, %arg14: memref<1x1x128xf32, #tpu.memory_space<vmem>>, %arg15: memref<1x128x512xbf16, #tpu.memory_space<vmem>>, %arg16: memref<1x1x512xf32, #tpu.memory_space<vmem>>, %arg17: memref<1x512x128xbf16, #tpu.memory_space<vmem>>, %arg18: memref<1x1x128xf32, #tpu.memory_space<vmem>>, %arg19: memref<128x128xbf16, #tpu.memory_space<vmem>>, %arg20: memref<1x128xf32, #tpu.memory_space<vmem>>, %arg21: memref<1x128xf32, #tpu.memory_space<vmem>>, %arg22: memref<1x128xf32, #tpu.memory_space<vmem>>, %arg23: memref<1x1x16x128xf32, #tpu.memory_space<vmem>>, %arg24: memref<1x8x128xf32, #tpu.memory_space<vmem>>, %arg25: memref<1x8x128xf32, #tpu.memory_space<vmem>>, %arg26: memref<1x8x128xf32, #tpu.memory_space<vmem>>, %arg27: memref<1x1x16x128xf32, #tpu.memory_space<vmem>>, %arg28: memref<8x128xf32, #tpu.memory_space<vmem>>) attributes {dimension_semantics = [#tpu.dimension_semantics<parallel>, #tpu.dimension_semantics<arbitrary>], iteration_bounds = array<i64: 2, 2>, scalar_prefetch = 0 : i64, scratch_operands = 1 : i64, tpu.core_type = #tpu.core_type<tc>, window_params = [{transform_indices = @transform_0, window_bounds = array<i64: 1, 8, 2048>}, {pipeline_mode = #tpu.pipeline_mode<synchronous>, transform_indices = @transform_1, window_bounds = array<i64: 2048, 128>}, {pipeline_mode = #tpu.pipeline_mode<synchronous>, transform_indices = @transform_2, window_bounds = array<i64: 1, 128>}, {pipeline_mode = #tpu.pipeline_mode<synchronous>, transform_indices = @transform_3, window_bounds = array<i64: 1, 128>}, {pipeline_mode = #tpu.pipeline_mode<synchronous>, transform_indices = @transform_4, window_bounds = array<i64: 1, 128>}, {transform_indices = @transform_5, window_bounds = array<i64: 1, 1, 128>}, {transform_indices = @transform_6, window_bounds = array<i64: 1, 1, 128>}, {transform_indices = @transform_7, window_bounds = array<i64: 1, 128, 384>}, {transform_indices = @transform_8, window_bounds = array<i64: 1, 1, 384>}, {transform_indices = @transform_9, window_bounds = array<i64: 1, 128, 128>}, {transform_indices = @transform_10, window_bounds = array<i64: 1, 1, 128>}, {transform_indices = @transform_11, window_bounds = array<i64: 1, 1, 128>}, {transform_indices = @transform_12, window_bounds = array<i64: 1, 1, 128>}, {transform_indices = @transform_13, window_bounds = array<i64: 1, 128, 512>}, {transform_indices = @transform_14, window_bounds = array<i64: 1, 1, 512>}, {transform_indices = @transform_15, window_bounds = array<i64: 1, 512, 128>}, {transform_indices = @transform_16, window_bounds = array<i64: 1, 1, 128>}, {pipeline_mode = #tpu.pipeline_mode<synchronous>, transform_indices = @transform_17, window_bounds = array<i64: 128, 128>}, {pipeline_mode = #tpu.pipeline_mode<synchronous>, transform_indices = @transform_18, window_bounds = array<i64: 1, 128>}, {pipeline_mode = #tpu.pipeline_mode<synchronous>, transform_indices = @transform_19, window_bounds = array<i64: 1, 128>}, {pipeline_mode = #tpu.pipeline_mode<synchronous>, transform_indices = @transform_20, window_bounds = array<i64: 1, 128>}, {transform_indices = @transform_21, window_bounds = array<i64: 1, 1, 16, 128>}, {transform_indices = @transform_22, window_bounds = array<i64: 1, 8, 128>}, {transform_indices = @transform_23, window_bounds = array<i64: 1, 8, 128>}, {transform_indices = @transform_24, window_bounds = array<i64: 1, 8, 128>}, {transform_indices = @transform_25, window_bounds = array<i64: 1, 1, 16, 128>}]} {
    %c0_i32 = arith.constant 0 : i32
    %0 = arith.cmpi eq, %arg1, %c0_i32 : i32
    %1 = arith.extui %0 : i1 to i32
    %c0_i32_0 = arith.constant 0 : i32
    %2 = arith.cmpi ne, %1, %c0_i32_0 : i32
    scf.if %2 {
      %c0_93 = arith.constant 0 : index
      %c0_94 = arith.constant 0 : index
      %c0_95 = arith.constant 0 : index
      %203 = vector.load %arg2[%c0_93, %c0_94, %c0_95] : memref<1x8x2048xf32, #tpu.memory_space<vmem>>, vector<1x8x2048xf32>
      %204 = vector.shape_cast %203 : vector<1x8x2048xf32> to vector<8x2048xf32>
      %205 = arith.truncf %204 : vector<8x2048xf32> to vector<8x2048xbf16>
      %c0_96 = arith.constant 0 : index
      %c0_97 = arith.constant 0 : index
      %206 = vector.load %arg3[%c0_96, %c0_97] : memref<2048x128xbf16, #tpu.memory_space<vmem>>, vector<2048x128xbf16>
      %cst_98 = arith.constant dense<0.000000e+00> : vector<8x128xf32>
      %207 = tpu.matmul %205, %206, %cst_98 {dimension_numbers = #tpu.dot_dimension_numbers<[1], [0], [0], [1], [0, 0, 1, 1], [], []>} : vector<8x2048xbf16>, vector<2048x128xbf16>, vector<8x128xf32> -> vector<8x128xf32>
      %c0_99 = arith.constant 0 : index
      %c0_100 = arith.constant 0 : index
      %208 = vector.load %arg4[%c0_99, %c0_100] : memref<1x128xf32, #tpu.memory_space<vmem>>, vector<1x128xf32>
      %209 = vector.broadcast %208 : vector<1x128xf32> to vector<8x128xf32>
      %210 = arith.addf %207, %209 : vector<8x128xf32>
      %cst_101 = arith.constant 0.000000e+00 : f32
      %211 = vector.broadcast %cst_101 : f32 to vector<8x128xf32>
      %212 = arith.maximumf %210, %211 : vector<8x128xf32>
      %c0_102 = arith.constant 0 : index
      %c0_103 = arith.constant 0 : index
      %c0_104 = arith.constant 0 : index
      %213 = vector.load %arg24[%c0_102, %c0_103, %c0_104] : memref<1x8x128xf32, #tpu.memory_space<vmem>>, vector<1x8x128xf32>
      %214 = vector.shape_cast %213 : vector<1x8x128xf32> to vector<8x128xf32>
      %215 = vector.shape_cast %212 : vector<8x128xf32> to vector<1x8x128xf32>
      tpu.vector_store %arg24[%c0_102, %c0_103, %c0_104], %215 {strides = array<i32>} : memref<1x8x128xf32, #tpu.memory_space<vmem>>, vector<1x8x128xf32>,
      %c0_105 = arith.constant 0 : index
      %c0_106 = arith.constant 0 : index
      %216 = vector.load %arg5[%c0_105, %c0_106] : memref<1x128xf32, #tpu.memory_space<vmem>>, vector<1x128xf32>
      %c0_107 = arith.constant 0 : index
      %c0_108 = arith.constant 0 : index
      %217 = vector.load %arg6[%c0_107, %c0_108] : memref<1x128xf32, #tpu.memory_space<vmem>>, vector<1x128xf32>
      %cst_109 = arith.constant dense<0.000000e+00> : vector<8xf32>
      %218 = vector.multi_reduction <add>, %212, %cst_109 [1] : vector<8x128xf32> to vector<8xf32>
      %219 = vector.shape_cast %218 : vector<8xf32> to vector<8x1xf32>
      %cst_110 = arith.constant 1.280000e+02 : f32
      %220 = vector.broadcast %cst_110 : f32 to vector<8x1xf32>
      %221 = arith.divf %219, %220 : vector<8x1xf32>
      %222 = vector.broadcast %221 : vector<8x1xf32> to vector<8x128xf32>
      %223 = arith.subf %212, %222 : vector<8x128xf32>
      %224 = arith.mulf %223, %223 : vector<8x128xf32>
      %cst_111 = arith.constant dense<0.000000e+00> : vector<8xf32>
      %225 = vector.multi_reduction <add>, %224, %cst_111 [1] : vector<8x128xf32> to vector<8xf32>
      %226 = vector.shape_cast %225 : vector<8xf32> to vector<8x1xf32>
      %cst_112 = arith.constant 1.280000e+02 : f32
      %227 = vector.broadcast %cst_112 : f32 to vector<8x1xf32>
      %228 = arith.divf %226, %227 : vector<8x1xf32>
      %cst_113 = arith.constant 9.99999974E-6 : f32
      %229 = vector.broadcast %cst_113 : f32 to vector<8x1xf32>
      %230 = arith.addf %228, %229 : vector<8x1xf32>
      %231 = math.rsqrt %230 : vector<8x1xf32>
      %232 = vector.broadcast %231 : vector<8x1xf32> to vector<8x128xf32>
      %233 = arith.mulf %223, %232 : vector<8x128xf32>
      %234 = vector.broadcast %216 : vector<1x128xf32> to vector<8x128xf32>
      %235 = arith.mulf %233, %234 : vector<8x128xf32>
      %236 = vector.broadcast %217 : vector<1x128xf32> to vector<8x128xf32>
      %237 = arith.addf %235, %236 : vector<8x128xf32>
      %c0_114 = arith.constant 0 : index
      %c0_115 = arith.constant 0 : index
      %238 = vector.load %arg28[%c0_114, %c0_115] : memref<8x128xf32, #tpu.memory_space<vmem>>, vector<8x128xf32>
      tpu.vector_store %arg28[%c0_114, %c0_115], %237 {strides = array<i32>} : memref<8x128xf32, #tpu.memory_space<vmem>>, vector<8x128xf32>,
    } else {
    }
    %c0 = arith.constant 0 : index
    %c0_1 = arith.constant 0 : index
    %3 = vector.load %arg28[%c0, %c0_1] : memref<8x128xf32, #tpu.memory_space<vmem>>, vector<8x128xf32>
    %c0_2 = arith.constant 0 : index
    %c0_3 = arith.constant 0 : index
    %c0_4 = arith.constant 0 : index
    %4 = vector.load %arg7[%c0_2, %c0_3, %c0_4] : memref<1x1x128xf32, #tpu.memory_space<vmem>>, vector<1x1x128xf32>
    %5 = vector.shape_cast %4 : vector<1x1x128xf32> to vector<1x128xf32>
    %c0_5 = arith.constant 0 : index
    %c0_6 = arith.constant 0 : index
    %c0_7 = arith.constant 0 : index
    %6 = vector.load %arg8[%c0_5, %c0_6, %c0_7] : memref<1x1x128xf32, #tpu.memory_space<vmem>>, vector<1x1x128xf32>
    %7 = vector.shape_cast %6 : vector<1x1x128xf32> to vector<1x128xf32>
    %cst = arith.constant dense<0.000000e+00> : vector<8xf32>
    %8 = vector.multi_reduction <add>, %3, %cst [1] : vector<8x128xf32> to vector<8xf32>
    %9 = vector.shape_cast %8 : vector<8xf32> to vector<8x1xf32>
    %cst_8 = arith.constant 1.280000e+02 : f32
    %10 = vector.broadcast %cst_8 : f32 to vector<8x1xf32>
    %11 = arith.divf %9, %10 : vector<8x1xf32>
    %12 = vector.broadcast %11 : vector<8x1xf32> to vector<8x128xf32>
    %13 = arith.subf %3, %12 : vector<8x128xf32>
    %14 = arith.mulf %13, %13 : vector<8x128xf32>
    %cst_9 = arith.constant dense<0.000000e+00> : vector<8xf32>
    %15 = vector.multi_reduction <add>, %14, %cst_9 [1] : vector<8x128xf32> to vector<8xf32>
    %16 = vector.shape_cast %15 : vector<8xf32> to vector<8x1xf32>
    %cst_10 = arith.constant 1.280000e+02 : f32
    %17 = vector.broadcast %cst_10 : f32 to vector<8x1xf32>
    %18 = arith.divf %16, %17 : vector<8x1xf32>
    %cst_11 = arith.constant 9.99999974E-6 : f32
    %19 = vector.broadcast %cst_11 : f32 to vector<8x1xf32>
    %20 = arith.addf %18, %19 : vector<8x1xf32>
    %21 = math.rsqrt %20 : vector<8x1xf32>
    %22 = vector.broadcast %21 : vector<8x1xf32> to vector<8x128xf32>
    %23 = arith.mulf %13, %22 : vector<8x128xf32>
    %24 = vector.broadcast %5 : vector<1x128xf32> to vector<8x128xf32>
    %25 = arith.mulf %23, %24 : vector<8x128xf32>
    %26 = vector.broadcast %7 : vector<1x128xf32> to vector<8x128xf32>
    %27 = arith.addf %25, %26 : vector<8x128xf32>
    %c0_12 = arith.constant 0 : index
    %c0_13 = arith.constant 0 : index
    %c8 = arith.constant 8 : index
    %c0_14 = arith.constant 0 : index
    %28 = vector.load %arg23[%c0_12, %c0_13, %c8, %c0_14] : memref<1x1x16x128xf32, #tpu.memory_space<vmem>>, vector<1x1x8x128xf32>
    %29 = vector.shape_cast %28 : vector<1x1x8x128xf32> to vector<8x128xf32>
    %c0_15 = arith.constant 0 : index
    %c0_16 = arith.constant 0 : index
    %c0_17 = arith.constant 0 : index
    %c0_18 = arith.constant 0 : index
    %30 = vector.load %arg27[%c0_15, %c0_16, %c0_17, %c0_18] : memref<1x1x16x128xf32, #tpu.memory_space<vmem>>, vector<1x1x8x128xf32>
    %31 = vector.shape_cast %30 : vector<1x1x8x128xf32> to vector<8x128xf32>
    %32 = vector.shape_cast %29 : vector<8x128xf32> to vector<1x1x8x128xf32>
    tpu.vector_store %arg27[%c0_15, %c0_16, %c0_17, %c0_18], %32 {strides = array<i32>} : memref<1x1x16x128xf32, #tpu.memory_space<vmem>>, vector<1x1x8x128xf32>,
    %c0_19 = arith.constant 0 : index
    %c0_20 = arith.constant 0 : index
    %c8_21 = arith.constant 8 : index
    %c0_22 = arith.constant 0 : index
    %33 = vector.load %arg27[%c0_19, %c0_20, %c8_21, %c0_22] : memref<1x1x16x128xf32, #tpu.memory_space<vmem>>, vector<1x1x8x128xf32>
    %34 = vector.shape_cast %33 : vector<1x1x8x128xf32> to vector<8x128xf32>
    %35 = vector.shape_cast %27 : vector<8x128xf32> to vector<1x1x8x128xf32>
    tpu.vector_store %arg27[%c0_19, %c0_20, %c8_21, %c0_22], %35 {strides = array<i32>} : memref<1x1x16x128xf32, #tpu.memory_space<vmem>>, vector<1x1x8x128xf32>,
    %36 = arith.truncf %27 : vector<8x128xf32> to vector<8x128xbf16>
    %c0_23 = arith.constant 0 : index
    %c0_24 = arith.constant 0 : index
    %c0_25 = arith.constant 0 : index
    %37 = vector.load %arg9[%c0_23, %c0_24, %c0_25] : memref<1x128x384xbf16, #tpu.memory_space<vmem>>, vector<1x128x384xbf16>
    %38 = vector.shape_cast %37 : vector<1x128x384xbf16> to vector<128x384xbf16>
    %cst_26 = arith.constant dense<0.000000e+00> : vector<8x384xf32>
    %39 = tpu.matmul %36, %38, %cst_26 {dimension_numbers = #tpu.dot_dimension_numbers<[1], [0], [0], [1], [0, 0, 1, 1], [], []>} : vector<8x128xbf16>, vector<128x384xbf16>, vector<8x384xf32> -> vector<8x384xf32>
    %c0_27 = arith.constant 0 : index
    %c0_28 = arith.constant 0 : index
    %c0_29 = arith.constant 0 : index
    %40 = vector.load %arg10[%c0_27, %c0_28, %c0_29] : memref<1x1x384xf32, #tpu.memory_space<vmem>>, vector<1x1x384xf32>
    %41 = vector.shape_cast %40 : vector<1x1x384xf32> to vector<1x384xf32>
    %42 = vector.broadcast %41 : vector<1x384xf32> to vector<8x384xf32>
    %43 = arith.addf %39, %42 : vector<8x384xf32>
    %44 = tpu.iota {dimensions = array<i32: 0>} : vector<8x8xi32>
    %45 = tpu.iota {dimensions = array<i32: 1>} : vector<8x8xi32>
    %46 = arith.cmpi sle, %45, %44 : vector<8x8xi32>
    %47 = vector.extract_strided_slice %43 {offsets = [0, 0], sizes = [8, 32], strides = [1, 1]} : vector<8x384xf32> to vector<8x32xf32>
    %cst_30 = arith.constant 0.176776692 : f32
    %48 = vector.broadcast %cst_30 : f32 to vector<8x32xf32>
    %49 = arith.mulf %47, %48 : vector<8x32xf32>
    %50 = vector.extract_strided_slice %43 {offsets = [0, 128], sizes = [8, 32], strides = [1, 1]} : vector<8x384xf32> to vector<8x32xf32>
    %51 = vector.extract_strided_slice %43 {offsets = [0, 256], sizes = [8, 32], strides = [1, 1]} : vector<8x384xf32> to vector<8x32xf32>
    %52 = arith.truncf %49 : vector<8x32xf32> to vector<8x32xbf16>
    %53 = tpu.transpose %50, [1, 0] : vector<8x32xf32> -> vector<32x8xf32>
    %54 = arith.truncf %53 : vector<32x8xf32> to vector<32x8xbf16>
    %cst_31 = arith.constant dense<0.000000e+00> : vector<8x8xf32>
    %55 = tpu.matmul %52, %54, %cst_31 {dimension_numbers = #tpu.dot_dimension_numbers<[1], [0], [0], [1], [0, 0, 1, 1], [], []>} : vector<8x32xbf16>, vector<32x8xbf16>, vector<8x8xf32> -> vector<8x8xf32>
    %cst_32 = arith.constant -1.000000e+30 : f32
    %56 = vector.broadcast %cst_32 : f32 to vector<8x8xf32>
    %57 = arith.select %46, %55, %56 : vector<8x8xi1>, vector<8x8xf32>
    %cst_33 = arith.constant dense<0xFF800000> : vector<8xf32>
    %58 = vector.multi_reduction <maximumf>, %57, %cst_33 [1] : vector<8x8xf32> to vector<8xf32>
    %59 = vector.shape_cast %58 : vector<8xf32> to vector<8x1xf32>
    %60 = vector.broadcast %59 : vector<8x1xf32> to vector<8x8xf32>
    %61 = arith.subf %57, %60 : vector<8x8xf32>
    %62 = math.exp %61 : vector<8x8xf32>
    %cst_34 = arith.constant dense<0.000000e+00> : vector<8xf32>
    %63 = vector.multi_reduction <add>, %62, %cst_34 [1] : vector<8x8xf32> to vector<8xf32>
    %64 = vector.shape_cast %63 : vector<8xf32> to vector<8x1xf32>
    %65 = tpu.reciprocal %64 {approx = true} : vector<8x1xf32> -> vector<8x1xf32>
    %66 = vector.broadcast %65 : vector<8x1xf32> to vector<8x8xf32>
    %67 = arith.mulf %62, %66 : vector<8x8xf32>
    %68 = arith.truncf %67 : vector<8x8xf32> to vector<8x8xbf16>
    %69 = arith.truncf %51 : vector<8x32xf32> to vector<8x32xbf16>
    %cst_35 = arith.constant dense<0.000000e+00> : vector<8x32xf32>
    %70 = tpu.matmul %68, %69, %cst_35 {dimension_numbers = #tpu.dot_dimension_numbers<[1], [0], [0], [1], [0, 0, 1, 1], [], []>} : vector<8x8xbf16>, vector<8x32xbf16>, vector<8x32xf32> -> vector<8x32xf32>
    %71 = vector.extract_strided_slice %43 {offsets = [0, 32], sizes = [8, 32], strides = [1, 1]} : vector<8x384xf32> to vector<8x32xf32>
    %cst_36 = arith.constant 0.176776692 : f32
    %72 = vector.broadcast %cst_36 : f32 to vector<8x32xf32>
    %73 = arith.mulf %71, %72 : vector<8x32xf32>
    %74 = vector.extract_strided_slice %43 {offsets = [0, 160], sizes = [8, 32], strides = [1, 1]} : vector<8x384xf32> to vector<8x32xf32>
    %75 = vector.extract_strided_slice %43 {offsets = [0, 288], sizes = [8, 32], strides = [1, 1]} : vector<8x384xf32> to vector<8x32xf32>
    %76 = arith.truncf %73 : vector<8x32xf32> to vector<8x32xbf16>
    %77 = tpu.transpose %74, [1, 0] : vector<8x32xf32> -> vector<32x8xf32>
    %78 = arith.truncf %77 : vector<32x8xf32> to vector<32x8xbf16>
    %cst_37 = arith.constant dense<0.000000e+00> : vector<8x8xf32>
    %79 = tpu.matmul %76, %78, %cst_37 {dimension_numbers = #tpu.dot_dimension_numbers<[1], [0], [0], [1], [0, 0, 1, 1], [], []>} : vector<8x32xbf16>, vector<32x8xbf16>, vector<8x8xf32> -> vector<8x8xf32>
    %cst_38 = arith.constant -1.000000e+30 : f32
    %80 = vector.broadcast %cst_38 : f32 to vector<8x8xf32>
    %81 = arith.select %46, %79, %80 : vector<8x8xi1>, vector<8x8xf32>
    %cst_39 = arith.constant dense<0xFF800000> : vector<8xf32>
    %82 = vector.multi_reduction <maximumf>, %81, %cst_39 [1] : vector<8x8xf32> to vector<8xf32>
    %83 = vector.shape_cast %82 : vector<8xf32> to vector<8x1xf32>
    %84 = vector.broadcast %83 : vector<8x1xf32> to vector<8x8xf32>
    %85 = arith.subf %81, %84 : vector<8x8xf32>
    %86 = math.exp %85 : vector<8x8xf32>
    %cst_40 = arith.constant dense<0.000000e+00> : vector<8xf32>
    %87 = vector.multi_reduction <add>, %86, %cst_40 [1] : vector<8x8xf32> to vector<8xf32>
    %88 = vector.shape_cast %87 : vector<8xf32> to vector<8x1xf32>
    %89 = tpu.reciprocal %88 {approx = true} : vector<8x1xf32> -> vector<8x1xf32>
    %90 = vector.broadcast %89 : vector<8x1xf32> to vector<8x8xf32>
    %91 = arith.mulf %86, %90 : vector<8x8xf32>
    %92 = arith.truncf %91 : vector<8x8xf32> to vector<8x8xbf16>
    %93 = arith.truncf %75 : vector<8x32xf32> to vector<8x32xbf16>
    %cst_41 = arith.constant dense<0.000000e+00> : vector<8x32xf32>
    %94 = tpu.matmul %92, %93, %cst_41 {dimension_numbers = #tpu.dot_dimension_numbers<[1], [0], [0], [1], [0, 0, 1, 1], [], []>} : vector<8x8xbf16>, vector<8x32xbf16>, vector<8x32xf32> -> vector<8x32xf32>
    %95 = vector.extract_strided_slice %43 {offsets = [0, 64], sizes = [8, 32], strides = [1, 1]} : vector<8x384xf32> to vector<8x32xf32>
    %cst_42 = arith.constant 0.176776692 : f32
    %96 = vector.broadcast %cst_42 : f32 to vector<8x32xf32>
    %97 = arith.mulf %95, %96 : vector<8x32xf32>
    %98 = vector.extract_strided_slice %43 {offsets = [0, 192], sizes = [8, 32], strides = [1, 1]} : vector<8x384xf32> to vector<8x32xf32>
    %99 = vector.extract_strided_slice %43 {offsets = [0, 320], sizes = [8, 32], strides = [1, 1]} : vector<8x384xf32> to vector<8x32xf32>
    %100 = arith.truncf %97 : vector<8x32xf32> to vector<8x32xbf16>
    %101 = tpu.transpose %98, [1, 0] : vector<8x32xf32> -> vector<32x8xf32>
    %102 = arith.truncf %101 : vector<32x8xf32> to vector<32x8xbf16>
    %cst_43 = arith.constant dense<0.000000e+00> : vector<8x8xf32>
    %103 = tpu.matmul %100, %102, %cst_43 {dimension_numbers = #tpu.dot_dimension_numbers<[1], [0], [0], [1], [0, 0, 1, 1], [], []>} : vector<8x32xbf16>, vector<32x8xbf16>, vector<8x8xf32> -> vector<8x8xf32>
    %cst_44 = arith.constant -1.000000e+30 : f32
    %104 = vector.broadcast %cst_44 : f32 to vector<8x8xf32>
    %105 = arith.select %46, %103, %104 : vector<8x8xi1>, vector<8x8xf32>
    %cst_45 = arith.constant dense<0xFF800000> : vector<8xf32>
    %106 = vector.multi_reduction <maximumf>, %105, %cst_45 [1] : vector<8x8xf32> to vector<8xf32>
    %107 = vector.shape_cast %106 : vector<8xf32> to vector<8x1xf32>
    %108 = vector.broadcast %107 : vector<8x1xf32> to vector<8x8xf32>
    %109 = arith.subf %105, %108 : vector<8x8xf32>
    %110 = math.exp %109 : vector<8x8xf32>
    %cst_46 = arith.constant dense<0.000000e+00> : vector<8xf32>
    %111 = vector.multi_reduction <add>, %110, %cst_46 [1] : vector<8x8xf32> to vector<8xf32>
    %112 = vector.shape_cast %111 : vector<8xf32> to vector<8x1xf32>
    %113 = tpu.reciprocal %112 {approx = true} : vector<8x1xf32> -> vector<8x1xf32>
    %114 = vector.broadcast %113 : vector<8x1xf32> to vector<8x8xf32>
    %115 = arith.mulf %110, %114 : vector<8x8xf32>
    %116 = arith.truncf %115 : vector<8x8xf32> to vector<8x8xbf16>
    %117 = arith.truncf %99 : vector<8x32xf32> to vector<8x32xbf16>
    %cst_47 = arith.constant dense<0.000000e+00> : vector<8x32xf32>
    %118 = tpu.matmul %116, %117, %cst_47 {dimension_numbers = #tpu.dot_dimension_numbers<[1], [0], [0], [1], [0, 0, 1, 1], [], []>} : vector<8x8xbf16>, vector<8x32xbf16>, vector<8x32xf32> -> vector<8x32xf32>
    %119 = vector.extract_strided_slice %43 {offsets = [0, 96], sizes = [8, 32], strides = [1, 1]} : vector<8x384xf32> to vector<8x32xf32>
    %cst_48 = arith.constant 0.176776692 : f32
    %120 = vector.broadcast %cst_48 : f32 to vector<8x32xf32>
    %121 = arith.mulf %119, %120 : vector<8x32xf32>
    %122 = vector.extract_strided_slice %43 {offsets = [0, 224], sizes = [8, 32], strides = [1, 1]} : vector<8x384xf32> to vector<8x32xf32>
    %123 = vector.extract_strided_slice %43 {offsets = [0, 352], sizes = [8, 32], strides = [1, 1]} : vector<8x384xf32> to vector<8x32xf32>
    %124 = arith.truncf %121 : vector<8x32xf32> to vector<8x32xbf16>
    %125 = tpu.transpose %122, [1, 0] : vector<8x32xf32> -> vector<32x8xf32>
    %126 = arith.truncf %125 : vector<32x8xf32> to vector<32x8xbf16>
    %cst_49 = arith.constant dense<0.000000e+00> : vector<8x8xf32>
    %127 = tpu.matmul %124, %126, %cst_49 {dimension_numbers = #tpu.dot_dimension_numbers<[1], [0], [0], [1], [0, 0, 1, 1], [], []>} : vector<8x32xbf16>, vector<32x8xbf16>, vector<8x8xf32> -> vector<8x8xf32>
    %cst_50 = arith.constant -1.000000e+30 : f32
    %128 = vector.broadcast %cst_50 : f32 to vector<8x8xf32>
    %129 = arith.select %46, %127, %128 : vector<8x8xi1>, vector<8x8xf32>
    %cst_51 = arith.constant dense<0xFF800000> : vector<8xf32>
    %130 = vector.multi_reduction <maximumf>, %129, %cst_51 [1] : vector<8x8xf32> to vector<8xf32>
    %131 = vector.shape_cast %130 : vector<8xf32> to vector<8x1xf32>
    %132 = vector.broadcast %131 : vector<8x1xf32> to vector<8x8xf32>
    %133 = arith.subf %129, %132 : vector<8x8xf32>
    %134 = math.exp %133 : vector<8x8xf32>
    %cst_52 = arith.constant dense<0.000000e+00> : vector<8xf32>
    %135 = vector.multi_reduction <add>, %134, %cst_52 [1] : vector<8x8xf32> to vector<8xf32>
    %136 = vector.shape_cast %135 : vector<8xf32> to vector<8x1xf32>
    %137 = tpu.reciprocal %136 {approx = true} : vector<8x1xf32> -> vector<8x1xf32>
    %138 = vector.broadcast %137 : vector<8x1xf32> to vector<8x8xf32>
    %139 = arith.mulf %134, %138 : vector<8x8xf32>
    %140 = arith.truncf %139 : vector<8x8xf32> to vector<8x8xbf16>
    %141 = arith.truncf %123 : vector<8x32xf32> to vector<8x32xbf16>
    %cst_53 = arith.constant dense<0.000000e+00> : vector<8x32xf32>
    %142 = tpu.matmul %140, %141, %cst_53 {dimension_numbers = #tpu.dot_dimension_numbers<[1], [0], [0], [1], [0, 0, 1, 1], [], []>} : vector<8x8xbf16>, vector<8x32xbf16>, vector<8x32xf32> -> vector<8x32xf32>
    %143 = tpu.concatenate %70, %94, %118, %142 in 1 : vector<8x32xf32>, vector<8x32xf32>, vector<8x32xf32>, vector<8x32xf32> -> vector<8x128xf32>
    %144 = arith.truncf %143 : vector<8x128xf32> to vector<8x128xbf16>
    %c0_54 = arith.constant 0 : index
    %c0_55 = arith.constant 0 : index
    %c0_56 = arith.constant 0 : index
    %145 = vector.load %arg11[%c0_54, %c0_55, %c0_56] : memref<1x128x128xbf16, #tpu.memory_space<vmem>>, vector<1x128x128xbf16>
    %146 = vector.shape_cast %145 : vector<1x128x128xbf16> to vector<128x128xbf16>
    %cst_57 = arith.constant dense<0.000000e+00> : vector<8x128xf32>
    %147 = tpu.matmul %144, %146, %cst_57 {dimension_numbers = #tpu.dot_dimension_numbers<[1], [0], [0], [1], [0, 0, 1, 1], [], []>} : vector<8x128xbf16>, vector<128x128xbf16>, vector<8x128xf32> -> vector<8x128xf32>
    %c0_58 = arith.constant 0 : index
    %c0_59 = arith.constant 0 : index
    %c0_60 = arith.constant 0 : index
    %148 = vector.load %arg12[%c0_58, %c0_59, %c0_60] : memref<1x1x128xf32, #tpu.memory_space<vmem>>, vector<1x1x128xf32>
    %149 = vector.shape_cast %148 : vector<1x1x128xf32> to vector<1x128xf32>
    %150 = vector.broadcast %149 : vector<1x128xf32> to vector<8x128xf32>
    %151 = arith.addf %147, %150 : vector<8x128xf32>
    %152 = arith.addf %3, %151 : vector<8x128xf32>
    %c0_61 = arith.constant 0 : index
    %c0_62 = arith.constant 0 : index
    %c0_63 = arith.constant 0 : index
    %153 = vector.load %arg13[%c0_61, %c0_62, %c0_63] : memref<1x1x128xf32, #tpu.memory_space<vmem>>, vector<1x1x128xf32>
    %154 = vector.shape_cast %153 : vector<1x1x128xf32> to vector<1x128xf32>
    %c0_64 = arith.constant 0 : index
    %c0_65 = arith.constant 0 : index
    %c0_66 = arith.constant 0 : index
    %155 = vector.load %arg14[%c0_64, %c0_65, %c0_66] : memref<1x1x128xf32, #tpu.memory_space<vmem>>, vector<1x1x128xf32>
    %156 = vector.shape_cast %155 : vector<1x1x128xf32> to vector<1x128xf32>
    %cst_67 = arith.constant dense<0.000000e+00> : vector<8xf32>
    %157 = vector.multi_reduction <add>, %152, %cst_67 [1] : vector<8x128xf32> to vector<8xf32>
    %158 = vector.shape_cast %157 : vector<8xf32> to vector<8x1xf32>
    %cst_68 = arith.constant 1.280000e+02 : f32
    %159 = vector.broadcast %cst_68 : f32 to vector<8x1xf32>
    %160 = arith.divf %158, %159 : vector<8x1xf32>
    %161 = vector.broadcast %160 : vector<8x1xf32> to vector<8x128xf32>
    %162 = arith.subf %152, %161 : vector<8x128xf32>
    %163 = arith.mulf %162, %162 : vector<8x128xf32>
    %cst_69 = arith.constant dense<0.000000e+00> : vector<8xf32>
    %164 = vector.multi_reduction <add>, %163, %cst_69 [1] : vector<8x128xf32> to vector<8xf32>
    %165 = vector.shape_cast %164 : vector<8xf32> to vector<8x1xf32>
    %cst_70 = arith.constant 1.280000e+02 : f32
    %166 = vector.broadcast %cst_70 : f32 to vector<8x1xf32>
    %167 = arith.divf %165, %166 : vector<8x1xf32>
    %cst_71 = arith.constant 9.99999974E-6 : f32
    %168 = vector.broadcast %cst_71 : f32 to vector<8x1xf32>
    %169 = arith.addf %167, %168 : vector<8x1xf32>
    %170 = math.rsqrt %169 : vector<8x1xf32>
    %171 = vector.broadcast %170 : vector<8x1xf32> to vector<8x128xf32>
    %172 = arith.mulf %162, %171 : vector<8x128xf32>
    %173 = vector.broadcast %154 : vector<1x128xf32> to vector<8x128xf32>
    %174 = arith.mulf %172, %173 : vector<8x128xf32>
    %175 = vector.broadcast %156 : vector<1x128xf32> to vector<8x128xf32>
    %176 = arith.addf %174, %175 : vector<8x128xf32>
    %177 = arith.truncf %176 : vector<8x128xf32> to vector<8x128xbf16>
    %c0_72 = arith.constant 0 : index
    %c0_73 = arith.constant 0 : index
    %c0_74 = arith.constant 0 : index
    %178 = vector.load %arg15[%c0_72, %c0_73, %c0_74] : memref<1x128x512xbf16, #tpu.memory_space<vmem>>, vector<1x128x512xbf16>
    %179 = vector.shape_cast %178 : vector<1x128x512xbf16> to vector<128x512xbf16>
    %cst_75 = arith.constant dense<0.000000e+00> : vector<8x512xf32>
    %180 = tpu.matmul %177, %179, %cst_75 {dimension_numbers = #tpu.dot_dimension_numbers<[1], [0], [0], [1], [0, 0, 1, 1], [], []>} : vector<8x128xbf16>, vector<128x512xbf16>, vector<8x512xf32> -> vector<8x512xf32>
    %c0_76 = arith.constant 0 : index
    %c0_77 = arith.constant 0 : index
    %c0_78 = arith.constant 0 : index
    %181 = vector.load %arg16[%c0_76, %c0_77, %c0_78] : memref<1x1x512xf32, #tpu.memory_space<vmem>>, vector<1x1x512xf32>
    %182 = vector.shape_cast %181 : vector<1x1x512xf32> to vector<1x512xf32>
    %183 = vector.broadcast %182 : vector<1x512xf32> to vector<8x512xf32>
    %184 = arith.addf %180, %183 : vector<8x512xf32>
    %cst_79 = arith.constant 0.000000e+00 : f32
    %185 = vector.broadcast %cst_79 : f32 to vector<8x512xf32>
    %186 = arith.maximumf %184, %185 : vector<8x512xf32>
    %187 = arith.truncf %186 : vector<8x512xf32> to vector<8x512xbf16>
    %c0_80 = arith.constant 0 : index
    %c0_81 = arith.constant 0 : index
    %c0_82 = arith.constant 0 : index
    %188 = vector.load %arg17[%c0_80, %c0_81, %c0_82] : memref<1x512x128xbf16, #tpu.memory_space<vmem>>, vector<1x512x128xbf16>
    %189 = vector.shape_cast %188 : vector<1x512x128xbf16> to vector<512x128xbf16>
    %cst_83 = arith.constant dense<0.000000e+00> : vector<8x128xf32>
    %190 = tpu.matmul %187, %189, %cst_83 {dimension_numbers = #tpu.dot_dimension_numbers<[1], [0], [0], [1], [0, 0, 1, 1], [], []>} : vector<8x512xbf16>, vector<512x128xbf16>, vector<8x128xf32> -> vector<8x128xf32>
    %c0_84 = arith.constant 0 : index
    %c0_85 = arith.constant 0 : index
    %c0_86 = arith.constant 0 : index
    %191 = vector.load %arg18[%c0_84, %c0_85, %c0_86] : memref<1x1x128xf32, #tpu.memory_space<vmem>>, vector<1x1x128xf32>
    %192 = vector.shape_cast %191 : vector<1x1x128xf32> to vector<1x128xf32>
    %193 = vector.broadcast %192 : vector<1x128xf32> to vector<8x128xf32>
    %194 = arith.addf %190, %193 : vector<8x128xf32>
    %195 = arith.addf %152, %194 : vector<8x128xf32>
    %c0_87 = arith.constant 0 : index
    %c0_88 = arith.constant 0 : index
    %196 = vector.load %arg28[%c0_87, %c0_88] : memref<8x128xf32, #tpu.memory_space<vmem>>, vector<8x128xf32>
    tpu.vector_store %arg28[%c0_87, %c0_88], %195 {strides = array<i32>} : memref<8x128xf32, #tpu.memory_space<vmem>>, vector<8x128xf32>,
    %c0_89 = arith.constant 0 : index
    %c0_90 = arith.constant 0 : index
    %c0_91 = arith.constant 0 : index
    %197 = vector.load %arg25[%c0_89, %c0_90, %c0_91] : memref<1x8x128xf32, #tpu.memory_space<vmem>>, vector<1x8x128xf32>
    %198 = vector.shape_cast %197 : vector<1x8x128xf32> to vector<8x128xf32>
    %199 = vector.shape_cast %195 : vector<8x128xf32> to vector<1x8x128xf32>
    tpu.vector_store %arg25[%c0_89, %c0_90, %c0_91], %199 {strides = array<i32>} : memref<1x8x128xf32, #tpu.memory_space<vmem>>, vector<1x8x128xf32>,
    %c1_i32 = arith.constant 1 : i32
    %200 = arith.cmpi eq, %arg1, %c1_i32 : i32
    %201 = arith.extui %200 : i1 to i32
    %c0_i32_92 = arith.constant 0 : i32
    %202 = arith.cmpi ne, %201, %c0_i32_92 : i32
    scf.if %202 {
      %cst_93 = arith.constant 0.000000e+00 : f32
      %203 = vector.broadcast %cst_93 : f32 to vector<8x128xf32>
      %204 = arith.maximumf %195, %203 : vector<8x128xf32>
      %205 = arith.truncf %204 : vector<8x128xf32> to vector<8x128xbf16>
      %c0_94 = arith.constant 0 : index
      %c0_95 = arith.constant 0 : index
      %206 = vector.load %arg19[%c0_94, %c0_95] : memref<128x128xbf16, #tpu.memory_space<vmem>>, vector<128x128xbf16>
      %cst_96 = arith.constant dense<0.000000e+00> : vector<8x128xf32>
      %207 = tpu.matmul %205, %206, %cst_96 {dimension_numbers = #tpu.dot_dimension_numbers<[1], [0], [0], [1], [0, 0, 1, 1], [], []>} : vector<8x128xbf16>, vector<128x128xbf16>, vector<8x128xf32> -> vector<8x128xf32>
      %c0_97 = arith.constant 0 : index
      %c0_98 = arith.constant 0 : index
      %208 = vector.load %arg20[%c0_97, %c0_98] : memref<1x128xf32, #tpu.memory_space<vmem>>, vector<1x128xf32>
      %209 = vector.broadcast %208 : vector<1x128xf32> to vector<8x128xf32>
      %210 = arith.addf %207, %209 : vector<8x128xf32>
      %cst_99 = arith.constant 0.000000e+00 : f32
      %211 = vector.broadcast %cst_99 : f32 to vector<8x128xf32>
      %212 = arith.maximumf %210, %211 : vector<8x128xf32>
      %c0_100 = arith.constant 0 : index
      %c0_101 = arith.constant 0 : index
      %213 = vector.load %arg21[%c0_100, %c0_101] : memref<1x128xf32, #tpu.memory_space<vmem>>, vector<1x128xf32>
      %c0_102 = arith.constant 0 : index
      %c0_103 = arith.constant 0 : index
      %214 = vector.load %arg22[%c0_102, %c0_103] : memref<1x128xf32, #tpu.memory_space<vmem>>, vector<1x128xf32>
      %cst_104 = arith.constant dense<0.000000e+00> : vector<8xf32>
      %215 = vector.multi_reduction <add>, %212, %cst_104 [1] : vector<8x128xf32> to vector<8xf32>
      %216 = vector.shape_cast %215 : vector<8xf32> to vector<8x1xf32>
      %cst_105 = arith.constant 1.280000e+02 : f32
      %217 = vector.broadcast %cst_105 : f32 to vector<8x1xf32>
      %218 = arith.divf %216, %217 : vector<8x1xf32>
      %219 = vector.broadcast %218 : vector<8x1xf32> to vector<8x128xf32>
      %220 = arith.subf %212, %219 : vector<8x128xf32>
      %221 = arith.mulf %220, %220 : vector<8x128xf32>
      %cst_106 = arith.constant dense<0.000000e+00> : vector<8xf32>
      %222 = vector.multi_reduction <add>, %221, %cst_106 [1] : vector<8x128xf32> to vector<8xf32>
      %223 = vector.shape_cast %222 : vector<8xf32> to vector<8x1xf32>
      %cst_107 = arith.constant 1.280000e+02 : f32
      %224 = vector.broadcast %cst_107 : f32 to vector<8x1xf32>
      %225 = arith.divf %223, %224 : vector<8x1xf32>
      %cst_108 = arith.constant 9.99999974E-6 : f32
      %226 = vector.broadcast %cst_108 : f32 to vector<8x1xf32>
      %227 = arith.addf %225, %226 : vector<8x1xf32>
      %228 = math.rsqrt %227 : vector<8x1xf32>
      %229 = vector.broadcast %228 : vector<8x1xf32> to vector<8x128xf32>
      %230 = arith.mulf %220, %229 : vector<8x128xf32>
      %231 = vector.broadcast %213 : vector<1x128xf32> to vector<8x128xf32>
      %232 = arith.mulf %230, %231 : vector<8x128xf32>
      %233 = vector.broadcast %214 : vector<1x128xf32> to vector<8x128xf32>
      %234 = arith.addf %232, %233 : vector<8x128xf32>
      %c0_109 = arith.constant 0 : index
      %c0_110 = arith.constant 0 : index
      %c0_111 = arith.constant 0 : index
      %235 = vector.load %arg26[%c0_109, %c0_110, %c0_111] : memref<1x8x128xf32, #tpu.memory_space<vmem>>, vector<1x8x128xf32>
      %236 = vector.shape_cast %235 : vector<1x8x128xf32> to vector<8x128xf32>
      %237 = vector.shape_cast %234 : vector<8x128xf32> to vector<1x8x128xf32>
      tpu.vector_store %arg26[%c0_109, %c0_110, %c0_111], %237 {strides = array<i32>} : memref<1x8x128xf32, #tpu.memory_space<vmem>>, vector<1x8x128xf32>,
    } else {
    }
    return
  }
  func.func @transform_0(%arg0: i32, %arg1: i32) -> (i32, i32, i32) {
    %c0_i32 = arith.constant 0 : i32
    %c0_i32_0 = arith.constant 0 : i32
    %c0_i32_1 = arith.constant 0 : i32
    return %arg0, %c0_i32, %c0_i32_0 : i32, i32, i32
  }
  func.func @transform_1(%arg0: i32, %arg1: i32) -> (i32, i32) {
    %c0_i32 = arith.constant 0 : i32
    %c0_i32_0 = arith.constant 0 : i32
    %c0_i32_1 = arith.constant 0 : i32
    return %c0_i32, %c0_i32_0 : i32, i32
  }
  func.func @transform_2(%arg0: i32, %arg1: i32) -> (i32, i32) {
    %c0_i32 = arith.constant 0 : i32
    %c0_i32_0 = arith.constant 0 : i32
    %c0_i32_1 = arith.constant 0 : i32
    return %c0_i32, %c0_i32_0 : i32, i32
  }
  func.func @transform_3(%arg0: i32, %arg1: i32) -> (i32, i32) {
    %c0_i32 = arith.constant 0 : i32
    %c0_i32_0 = arith.constant 0 : i32
    %c0_i32_1 = arith.constant 0 : i32
    return %c0_i32, %c0_i32_0 : i32, i32
  }
  func.func @transform_4(%arg0: i32, %arg1: i32) -> (i32, i32) {
    %c0_i32 = arith.constant 0 : i32
    %c0_i32_0 = arith.constant 0 : i32
    %c0_i32_1 = arith.constant 0 : i32
    return %c0_i32, %c0_i32_0 : i32, i32
  }
  func.func @transform_5(%arg0: i32, %arg1: i32) -> (i32, i32, i32) {
    %c0_i32 = arith.constant 0 : i32
    %c0_i32_0 = arith.constant 0 : i32
    %c0_i32_1 = arith.constant 0 : i32
    return %arg1, %c0_i32, %c0_i32_0 : i32, i32, i32
  }
  func.func @transform_6(%arg0: i32, %arg1: i32) -> (i32, i32, i32) {
    %c0_i32 = arith.constant 0 : i32
    %c0_i32_0 = arith.constant 0 : i32
    %c0_i32_1 = arith.constant 0 : i32
    return %arg1, %c0_i32, %c0_i32_0 : i32, i32, i32
  }
  func.func @transform_7(%arg0: i32, %arg1: i32) -> (i32, i32, i32) {
    %c0_i32 = arith.constant 0 : i32
    %c0_i32_0 = arith.constant 0 : i32
    %c0_i32_1 = arith.constant 0 : i32
    return %arg1, %c0_i32, %c0_i32_0 : i32, i32, i32
  }
  func.func @transform_8(%arg0: i32, %arg1: i32) -> (i32, i32, i32) {
    %c0_i32 = arith.constant 0 : i32
    %c0_i32_0 = arith.constant 0 : i32
    %c0_i32_1 = arith.constant 0 : i32
    return %arg1, %c0_i32, %c0_i32_0 : i32, i32, i32
  }
  func.func @transform_9(%arg0: i32, %arg1: i32) -> (i32, i32, i32) {
    %c0_i32 = arith.constant 0 : i32
    %c0_i32_0 = arith.constant 0 : i32
    %c0_i32_1 = arith.constant 0 : i32
    return %arg1, %c0_i32, %c0_i32_0 : i32, i32, i32
  }
  func.func @transform_10(%arg0: i32, %arg1: i32) -> (i32, i32, i32) {
    %c0_i32 = arith.constant 0 : i32
    %c0_i32_0 = arith.constant 0 : i32
    %c0_i32_1 = arith.constant 0 : i32
    return %arg1, %c0_i32, %c0_i32_0 : i32, i32, i32
  }
  func.func @transform_11(%arg0: i32, %arg1: i32) -> (i32, i32, i32) {
    %c0_i32 = arith.constant 0 : i32
    %c0_i32_0 = arith.constant 0 : i32
    %c0_i32_1 = arith.constant 0 : i32
    return %arg1, %c0_i32, %c0_i32_0 : i32, i32, i32
  }
  func.func @transform_12(%arg0: i32, %arg1: i32) -> (i32, i32, i32) {
    %c0_i32 = arith.constant 0 : i32
    %c0_i32_0 = arith.constant 0 : i32
    %c0_i32_1 = arith.constant 0 : i32
    return %arg1, %c0_i32, %c0_i32_0 : i32, i32, i32
  }
  func.func @transform_13(%arg0: i32, %arg1: i32) -> (i32, i32, i32) {
    %c0_i32 = arith.constant 0 : i32
    %c0_i32_0 = arith.constant 0 : i32
    %c0_i32_1 = arith.constant 0 : i32
    return %arg1, %c0_i32, %c0_i32_0 : i32, i32, i32
  }
  func.func @transform_14(%arg0: i32, %arg1: i32) -> (i32, i32, i32) {
    %c0_i32 = arith.constant 0 : i32
    %c0_i32_0 = arith.constant 0 : i32
    %c0_i32_1 = arith.constant 0 : i32
    return %arg1, %c0_i32, %c0_i32_0 : i32, i32, i32
  }
  func.func @transform_15(%arg0: i32, %arg1: i32) -> (i32, i32, i32) {
    %c0_i32 = arith.constant 0 : i32
    %c0_i32_0 = arith.constant 0 : i32
    %c0_i32_1 = arith.constant 0 : i32
    return %arg1, %c0_i32, %c0_i32_0 : i32, i32, i32
  }
  func.func @transform_16(%arg0: i32, %arg1: i32) -> (i32, i32, i32) {
    %c0_i32 = arith.constant 0 : i32
    %c0_i32_0 = arith.constant 0 : i32
    %c0_i32_1 = arith.constant 0 : i32
    return %arg1, %c0_i32, %c0_i32_0 : i32, i32, i32
  }
  func.func @transform_17(%arg0: i32, %arg1: i32) -> (i32, i32) {
    %c0_i32 = arith.constant 0 : i32
    %c0_i32_0 = arith.constant 0 : i32
    %c0_i32_1 = arith.constant 0 : i32
    return %c0_i32, %c0_i32_0 : i32, i32
  }
  func.func @transform_18(%arg0: i32, %arg1: i32) -> (i32, i32) {
    %c0_i32 = arith.constant 0 : i32
    %c0_i32_0 = arith.constant 0 : i32
    %c0_i32_1 = arith.constant 0 : i32
    return %c0_i32, %c0_i32_0 : i32, i32
  }
  func.func @transform_19(%arg0: i32, %arg1: i32) -> (i32, i32) {
    %c0_i32 = arith.constant 0 : i32
    %c0_i32_0 = arith.constant 0 : i32
    %c0_i32_1 = arith.constant 0 : i32
    return %c0_i32, %c0_i32_0 : i32, i32
  }
  func.func @transform_20(%arg0: i32, %arg1: i32) -> (i32, i32) {
    %c0_i32 = arith.constant 0 : i32
    %c0_i32_0 = arith.constant 0 : i32
    %c0_i32_1 = arith.constant 0 : i32
    return %c0_i32, %c0_i32_0 : i32, i32
  }
  func.func @transform_21(%arg0: i32, %arg1: i32) -> (i32, i32, i32, i32) {
    %c0_i32 = arith.constant 0 : i32
    %c0_i32_0 = arith.constant 0 : i32
    %c0_i32_1 = arith.constant 0 : i32
    return %arg1, %arg0, %c0_i32, %c0_i32_0 : i32, i32, i32, i32
  }
  func.func @transform_22(%arg0: i32, %arg1: i32) -> (i32, i32, i32) {
    %c0_i32 = arith.constant 0 : i32
    %c0_i32_0 = arith.constant 0 : i32
    %c0_i32_1 = arith.constant 0 : i32
    return %arg0, %c0_i32, %c0_i32_0 : i32, i32, i32
  }
  func.func @transform_23(%arg0: i32, %arg1: i32) -> (i32, i32, i32) {
    %c0_i32 = arith.constant 0 : i32
    %c0_i32_0 = arith.constant 0 : i32
    %c0_i32_1 = arith.constant 0 : i32
    return %arg0, %c0_i32, %c0_i32_0 : i32, i32, i32
  }
  func.func @transform_24(%arg0: i32, %arg1: i32) -> (i32, i32, i32) {
    %c0_i32 = arith.constant 0 : i32
    %c0_i32_0 = arith.constant 0 : i32
    %c0_i32_1 = arith.constant 0 : i32
    return %arg0, %c0_i32, %c0_i32_0 : i32, i32, i32
  }
  func.func @transform_25(%arg0: i32, %arg1: i32) -> (i32, i32, i32, i32) {
    %c0_i32 = arith.constant 0 : i32
    %c0_i32_0 = arith.constant 0 : i32
    %c0_i32_1 = arith.constant 0 : i32
    return %arg1, %arg0, %c0_i32, %c0_i32_0 : i32, i32, i32, i32
  }
}

</mosaic_0001>

<llo_original>
// kernel: _lambda_.2
$region0: #{_lambda_.2}
  #allocation0 [shape = 'u32[]', space=smem, size = 0x4, offset = 0x4, fixed_abs, tag = 'smem constant byte address 0x4 - core index']
  #allocation1 [shape = 'u32[144,128]{1,0:T(1,128)}', space=vmem, size = 0x12000, scoped, tag = 'internal scratch']
  #allocation2 [shape = 'f32[1024,16]{1,0:T(8,128)}', space=vmem, size = 0x80000, scoped, tag = 'scratch operand']
  %s0 = inlined_call_operand.vmem [shape: bf16[4,1024,27], index: 0, kind: input, shape index: {}]
  %s1 = inlined_call_operand.vmem [shape: bf16[27,16], index: 1, kind: input, shape index: {}]
  %s2 = inlined_call_operand.vmem [shape: f32[1,16], index: 2, kind: input, shape index: {}]
  %s3 = inlined_call_operand.vmem [shape: bf16[9,16,32], index: 3, kind: input, shape index: {}]
  %s4 = inlined_call_operand.vmem [shape: f32[1,32], index: 4, kind: input, shape index: {}]
  %s5 = inlined_call_operand.vmem [shape: f32[4,256,32], index: 5, kind: output, shape index: {}]
  %s6 = sld [smem:[#allocation0]]
  $region53: #{_lambda_.2} parent=0
    _
  %s8 = ssub.s32 1, %s6
  %s9 = scalar_select 0, %s8, %s6
  loop: start=0, step=1, limit=6
  $region2: #{_lambda_.2} parent=0 // loop_pre_header
    _
  $region3: #{_lambda_.2} parent=0 // loop_header
    %s11 = sphi 0, %s15
    %p12 = scmp.ge.s32.totalorder %s11, 6
    %s21 = sphi 0, %s23
    %s24 = sphi 0, %s21
    %s25 = sphi 0, %s24
    %s41 = sphi 0, %s25
    %s45 = sphi 0, %s45
    %s47 = sphi 0, %s45
    %s48 = sphi 0, %s47
    %s62 = sphi 0, %s48
    %s66 = sphi 0, %s66
    %s68 = sphi 0, %s66
    %s69 = sphi 0, %s68
    %s83 = sphi 0, %s69
    %s87 = sphi 0, %s87
    %s89 = sphi 0, %s87
    %s90 = sphi 0, %s89
    %s104 = sphi 0, %s90
    %s108 = sphi 0, %s108
    %s110 = sphi 0, %s108
    %s111 = sphi 0, %s110
    %s125 = sphi 0, %s111
    %s131 = sphi 0, %s133
    %s134 = sphi 0, %s131
    %s135 = sphi 0, %s134
    %s151 = sphi 0, %s135
  $region4: #{_lambda_.2} parent=0 // loop_header_branch
    %14 = sbr.rel (%p12) target = $region8
  $region5: #{_lambda_.2} parent=0 // loop_body
    %s16 = ssub.s32 %s11, 1
    %s17 = ssub.s32 %s11, 2
    %s18 = sadd.s32 %s11, 1
    %s19 = ssub.s32 %s11, %s18
    %p20 = scmp.eq.s32.totalorder %s19, 0
    %s22 = sadd.s32 %s21, 1
    %s23 = scalar_select %p20, %s21, %s22
    %p26 = pneg %p20
    %p27 = scmp.eq.s32.totalorder %s11, 3
    %p28 = por %p26, %p27
    %p29 = scmp.ne.s32.totalorder %s21, %s24
    %p30 = scmp.eq.s32.totalorder %s11, 0
    %p31 = por %p29, %p30
    %p32 = scmp.ne.s32.totalorder %s21, %s24
    %p33 = scmp.eq.s32.totalorder %s16, 3
    %p34 = por %p32, %p33
    %p35 = scmp.ne.s32.totalorder %s24, %s25
    %p36 = scmp.eq.s32.totalorder %s16, 0
    %p37 = por %p35, %p36
    %p38 = scmp.ne.s32.totalorder %s24, %s25
    %p39 = scmp.eq.s32.totalorder %s17, 3
    %p40 = por %p38, %p39
    %p42 = scmp.ne.s32.totalorder %s25, %s41
    %p43 = scmp.eq.s32.totalorder %s17, 0
    %p44 = por %p42, %p43
    %s46 = sadd.s32 %s45, 1
    %p49 = scmp.eq.s32.totalorder %s11, 3
    %p50 = scmp.ne.s32.totalorder %s45, %s47
    %p51 = scmp.eq.s32.totalorder %s11, 0
    %p52 = por %p50, %p51
    %p53 = scmp.ne.s32.totalorder %s45, %s47
    %p54 = scmp.eq.s32.totalorder %s16, 3
    %p55 = por %p53, %p54
    %p56 = scmp.ne.s32.totalorder %s47, %s48
    %p57 = scmp.eq.s32.totalorder %s16, 0
    %p58 = por %p56, %p57
    %p59 = scmp.ne.s32.totalorder %s47, %s48
    %p60 = scmp.eq.s32.totalorder %s17, 3
    %p61 = por %p59, %p60
    %p63 = scmp.ne.s32.totalorder %s48, %s62
    %p64 = scmp.eq.s32.totalorder %s17, 0
    %p65 = por %p63, %p64
    %s67 = sadd.s32 %s66, 1
    %p70 = scmp.eq.s32.totalorder %s11, 3
    %p71 = scmp.ne.s32.totalorder %s66, %s68
    %p72 = scmp.eq.s32.totalorder %s11, 0
    %p73 = por %p71, %p72
    %p74 = scmp.ne.s32.totalorder %s66, %s68
    %p75 = scmp.eq.s32.totalorder %s16, 3
    %p76 = por %p74, %p75
    %p77 = scmp.ne.s32.totalorder %s68, %s69
    %p78 = scmp.eq.s32.totalorder %s16, 0
    %p79 = por %p77, %p78
    %p80 = scmp.ne.s32.totalorder %s68, %s69
    %p81 = scmp.eq.s32.totalorder %s17, 3
    %p82 = por %p80, %p81
    %p84 = scmp.ne.s32.totalorder %s69, %s83
    %p85 = scmp.eq.s32.totalorder %s17, 0
    %p86 = por %p84, %p85
    %s88 = sadd.s32 %s87, 1
    %p91 = scmp.eq.s32.totalorder %s11, 3
    %p92 = scmp.ne.s32.totalorder %s87, %s89
    %p93 = scmp.eq.s32.totalorder %s11, 0
    %p94 = por %p92, %p93
    %p95 = scmp.ne.s32.totalorder %s87, %s89
    %p96 = scmp.eq.s32.totalorder %s16, 3
    %p97 = por %p95, %p96
    %p98 = scmp.ne.s32.totalorder %s89, %s90
    %p99 = scmp.eq.s32.totalorder %s16, 0
    %p100 = por %p98, %p99
    %p101 = scmp.ne.s32.totalorder %s89, %s90
    %p102 = scmp.eq.s32.totalorder %s17, 3
    %p103 = por %p101, %p102
    %p105 = scmp.ne.s32.totalorder %s90, %s104
    %p106 = scmp.eq.s32.totalorder %s17, 0
    %p107 = por %p105, %p106
    %s109 = sadd.s32 %s108, 1
    %p112 = scmp.eq.s32.totalorder %s11, 3
    %p113 = scmp.ne.s32.totalorder %s108, %s110
    %p114 = scmp.eq.s32.totalorder %s11, 0
    %p115 = por %p113, %p114
    %p116 = scmp.ne.s32.totalorder %s108, %s110
    %p117 = scmp.eq.s32.totalorder %s16, 3
    %p118 = por %p116, %p117
    %p119 = scmp.ne.s32.totalorder %s110, %s111
    %p120 = scmp.eq.s32.totalorder %s16, 0
    %p121 = por %p119, %p120
    %p122 = scmp.ne.s32.totalorder %s110, %s111
    %p123 = scmp.eq.s32.totalorder %s17, 3
    %p124 = por %p122, %p123
    %p126 = scmp.ne.s32.totalorder %s111, %s125
    %p127 = scmp.eq.s32.totalorder %s17, 0
    %p128 = por %p126, %p127
    %s129 = ssub.s32 %s11, %s18
    %p130 = scmp.eq.s32.totalorder %s129, 0
    %s132 = sadd.s32 %s131, 1
    %s133 = scalar_select %p130, %s131, %s132
    %p136 = pneg %p130
    %p137 = scmp.eq.s32.totalorder %s11, 3
    %p138 = por %p136, %p137
    %p139 = scmp.ne.s32.totalorder %s131, %s134
    %p140 = scmp.eq.s32.totalorder %s11, 0
    %p141 = por %p139, %p140
    %p142 = scmp.ne.s32.totalorder %s131, %s134
    %p143 = scmp.eq.s32.totalorder %s16, 3
    %p144 = por %p142, %p143
    %p145 = scmp.ne.s32.totalorder %s134, %s135
    %p146 = scmp.eq.s32.totalorder %s16, 0
    %p147 = por %p145, %p146
    %p148 = scmp.ne.s32.totalorder %s134, %s135
    %p149 = scmp.eq.s32.totalorder %s17, 3
    %p150 = por %p148, %p149
    %p152 = scmp.ne.s32.totalorder %s135, %s151
    %p153 = scmp.eq.s32.totalorder %s17, 0
    %p154 = por %p152, %p153
    %p155 = scmp.le.s32.totalorder 1, %s11
    %p156 = scmp.lt.s32.totalorder %s11, 5
    %p157 = pnand %p155, %p156
    %p158 = pneg %p157
    // Predicated region
    $region9: #{_lambda_.2} parent=5 // pred_check
      _
    $region10: #{_lambda_.2} parent=5 // pred_check_branch
      %160 = sbr.rel (%p157) target = $region12
    $region11: #{_lambda_.2} parent=5 // pred_region
      %s161 = ssub.s32 %s11, 1
      // Predicated region
      $region13: #{_lambda_.2} parent=11 // pred_check
        %p162 = pneg %p58
      $region14: #{_lambda_.2} parent=11 // pred_check_branch
        %164 = sbr.rel (%p162) target = $region16
      $region15: #{_lambda_.2} parent=11 // pred_region
        _
      $region16: #{_lambda_.2} parent=11 // pred_fallthru
        _
      // Predicated region
      $region17: #{_lambda_.2} parent=11 // pred_check
        %p165 = pneg %p79
      $region18: #{_lambda_.2} parent=11 // pred_check_branch
        %167 = sbr.rel (%p165) target = $region20
      $region19: #{_lambda_.2} parent=11 // pred_region
        _
      $region20: #{_lambda_.2} parent=11 // pred_fallthru
        _
      // Predicated region
      $region21: #{_lambda_.2} parent=11 // pred_check
        %p168 = pneg %p100
      $region22: #{_lambda_.2} parent=11 // pred_check_branch
        %170 = sbr.rel (%p168) target = $region24
      $region23: #{_lambda_.2} parent=11 // pred_region
        _
      $region24: #{_lambda_.2} parent=11 // pred_fallthru
        _
      // Predicated region
      $region25: #{_lambda_.2} parent=11 // pred_check
        %p171 = pneg %p121
      $region26: #{_lambda_.2} parent=11 // pred_check_branch
        %173 = sbr.rel (%p171) target = $region28
      $region27: #{_lambda_.2} parent=11 // pred_region
        _
      $region28: #{_lambda_.2} parent=11 // pred_fallthru
        _
    $region12: #{_lambda_.2} parent=5 // pred_fallthru
      _
    %p174 = scmp.lt.s32.totalorder %s11, 4
    // Predicated region
    $region29: #{_lambda_.2} parent=5 // pred_check
      %p175 = pneg %p174
    $region30: #{_lambda_.2} parent=5 // pred_check_branch
      %177 = sbr.rel (%p175) target = $region32
    $region31: #{_lambda_.2} parent=5 // pred_region
      // Predicated region
      $region33: #{_lambda_.2} parent=31 // pred_check
        %p178 = pneg %p31
      $region34: #{_lambda_.2} parent=31 // pred_check_branch
        %180 = sbr.rel (%p178) target = $region36
      $region35: #{_lambda_.2} parent=31 // pred_region
        %p181 = scmp.lt.s32.totalorder %s11, 3
        %s182 = scalar_select %p181, %s11, 3
        %s183 = smul.addr %s182, 128
        %s184 = smul.addr %s183, 4
        %s185 = scalar_lea.vmem %s0, %s184
      $region36: #{_lambda_.2} parent=31 // pred_fallthru
        _
    $region32: #{_lambda_.2} parent=5 // pred_fallthru
      _
    %p186 = scmp.le.s32.totalorder 1, %s11
    %p187 = scmp.lt.s32.totalorder %s11, 5
    %p188 = pnand %p186, %p187
    %p189 = pneg %p188
    // Predicated region
    $region37: #{_lambda_.2} parent=5 // pred_check
      _
    $region38: #{_lambda_.2} parent=5 // pred_check_branch
      %191 = sbr.rel (%p188) target = $region40
    $region39: #{_lambda_.2} parent=5 // pred_region
      %s192 = ssub.s32 %s11, 1
      %p193 = scmp.lt.s32.totalorder %s16, 3
      %s194 = scalar_select %p193, %s16, 3
      %s195 = smul.addr %s194, 128
      %s196 = smul.addr %s195, 4
      %s197 = scalar_lea.vmem %s0, %s196
      %p198 = pneg %p37
      %p199 = pneg %p34
      %p200 = pneg %p58
      %p201 = pneg %p55
      %p202 = pneg %p79
      %p203 = pneg %p76
      %p204 = pneg %p100
      %p205 = pneg %p97
      %p206 = pneg %p121
      %p207 = pneg %p118
      %p208 = pneg %p147
      %p209 = pneg %p144
      %p210 = scmp.lt.s32.totalorder %s16, 3
      %s211 = scalar_select %p210, %s16, 3
      %s212 = smul.addr %s211, 32
      %s213 = smul.addr %s212, 8
      %s214 = scalar_lea.vmem %s5, %s213
      %p215 = scmp.lt.s32.totalorder %s16, 3
      %s216 = scalar_select %p215, %s16, 3
      %s217 = smul.addr %s216, 128
      %s218 = smul.addr %s217, 4
      %s219 = scalar_lea.vmem %s0, %s218
      %p220 = scmp.lt.s32.totalorder %s16, 3
      %s221 = scalar_select %p220, %s16, 3
      %s222 = smul.addr %s221, 32
      %s223 = smul.addr %s222, 8
      %s224 = scalar_lea.vmem %s5, %s223
      %v226 = vld [vmem:[%s219] sm:$0xf]
      %v227 = vld [vmem:[%s219 + $0x4] sm:$0xf]
      %v228 = vld [vmem:[%s219 + $0x8] sm:$0xf]
      %v229 = vld [vmem:[%s219 + $0xc] sm:$0xf]
      %v230 = vld [vmem:[%s219 + $0x10] sm:$0xf]
      %v231 = vld [vmem:[%s219 + $0x14] sm:$0xf]
      %v232 = vld [vmem:[%s219 + $0x18] sm:$0xf]
      %v233 = vld [vmem:[%s219 + $0x1c] sm:$0xf]
      %v234 = vld [vmem:[%s219 + $0x20] sm:$0xf]
      %v235 = vld [vmem:[%s219 + $0x24] sm:$0xf]
      %v236 = vld [vmem:[%s219 + $0x28] sm:$0xf]
      %v237 = vld [vmem:[%s219 + $0x2c] sm:$0xf]
      %v238 = vld [vmem:[%s219 + $0x30] sm:$0xf]
      %v239 = vld [vmem:[%s219 + $0x34] sm:$0xf]
      %v240 = vld [vmem:[%s219 + $0x38] sm:$0xf]
      %v241 = vld [vmem:[%s219 + $0x3c] sm:$0xf]
      %v242 = vld [vmem:[%s219 + $0x40] sm:$0xf]
      %v243 = vld [vmem:[%s219 + $0x44] sm:$0xf]
      %v244 = vld [vmem:[%s219 + $0x48] sm:$0xf]
      %v245 = vld [vmem:[%s219 + $0x4c] sm:$0xf]
      %v246 = vld [vmem:[%s219 + $0x50] sm:$0xf]
      %v247 = vld [vmem:[%s219 + $0x54] sm:$0xf]
      %v248 = vld [vmem:[%s219 + $0x58] sm:$0xf]
      %v249 = vld [vmem:[%s219 + $0x5c] sm:$0xf]
      %v250 = vld [vmem:[%s219 + $0x60] sm:$0xf]
      %v251 = vld [vmem:[%s219 + $0x64] sm:$0xf]
      %v252 = vld [vmem:[%s219 + $0x68] sm:$0xf]
      %v253 = vld [vmem:[%s219 + $0x6c] sm:$0xf]
      %v254 = vld [vmem:[%s219 + $0x70] sm:$0xf]
      %v255 = vld [vmem:[%s219 + $0x74] sm:$0xf]
      %v256 = vld [vmem:[%s219 + $0x78] sm:$0xf]
      %v257 = vld [vmem:[%s219 + $0x7c] sm:$0xf]
      %v258 = vld [vmem:[%s219 + $0x80] sm:$0xf]
      %v259 = vld [vmem:[%s219 + $0x84] sm:$0xf]
      %v260 = vld [vmem:[%s219 + $0x88] sm:$0xf]
      %v261 = vld [vmem:[%s219 + $0x8c] sm:$0xf]
      %v262 = vld [vmem:[%s219 + $0x90] sm:$0xf]
      %v263 = vld [vmem:[%s219 + $0x94] sm:$0xf]
      %v264 = vld [vmem:[%s219 + $0x98] sm:$0xf]
      %v265 = vld [vmem:[%s219 + $0x9c] sm:$0xf]
      %v266 = vld [vmem:[%s219 + $0xa0] sm:$0xf]
      %v267 = vld [vmem:[%s219 + $0xa4] sm:$0xf]
      %v268 = vld [vmem:[%s219 + $0xa8] sm:$0xf]
      %v269 = vld [vmem:[%s219 + $0xac] sm:$0xf]
      %v270 = vld [vmem:[%s219 + $0xb0] sm:$0xf]
      %v271 = vld [vmem:[%s219 + $0xb4] sm:$0xf]
      %v272 = vld [vmem:[%s219 + $0xb8] sm:$0xf]
      %v273 = vld [vmem:[%s219 + $0xbc] sm:$0xf]
      %v274 = vld [vmem:[%s219 + $0xc0] sm:$0xf]
      %v275 = vld [vmem:[%s219 + $0xc4] sm:$0xf]
      %v276 = vld [vmem:[%s219 + $0xc8] sm:$0xf]
      %v277 = vld [vmem:[%s219 + $0xcc] sm:$0xf]
      %v278 = vld [vmem:[%s219 + $0xd0] sm:$0xf]
      %v279 = vld [vmem:[%s219 + $0xd4] sm:$0xf]
      %v280 = vld [vmem:[%s219 + $0xd8] sm:$0xf]
      %v281 = vld [vmem:[%s219 + $0xdc] sm:$0xf]
      %v282 = vld [vmem:[%s219 + $0xe0] sm:$0xf]
      %v283 = vld [vmem:[%s219 + $0xe4] sm:$0xf]
      %v284 = vld [vmem:[%s219 + $0xe8] sm:$0xf]
      %v285 = vld [vmem:[%s219 + $0xec] sm:$0xf]
      %v286 = vld [vmem:[%s219 + $0xf0] sm:$0xf]
      %v287 = vld [vmem:[%s219 + $0xf4] sm:$0xf]
      %v288 = vld [vmem:[%s219 + $0xf8] sm:$0xf]
      %v289 = vld [vmem:[%s219 + $0xfc] sm:$0xf]
      %v290 = vld [vmem:[%s219 + $0x100] sm:$0xf]
      %v291 = vld [vmem:[%s219 + $0x104] sm:$0xf]
      %v292 = vld [vmem:[%s219 + $0x108] sm:$0xf]
      %v293 = vld [vmem:[%s219 + $0x10c] sm:$0xf]
      %v294 = vld [vmem:[%s219 + $0x110] sm:$0xf]
      %v295 = vld [vmem:[%s219 + $0x114] sm:$0xf]
      %v296 = vld [vmem:[%s219 + $0x118] sm:$0xf]
      %v297 = vld [vmem:[%s219 + $0x11c] sm:$0xf]
      %v298 = vld [vmem:[%s219 + $0x120] sm:$0xf]
      %v299 = vld [vmem:[%s219 + $0x124] sm:$0xf]
      %v300 = vld [vmem:[%s219 + $0x128] sm:$0xf]
      %v301 = vld [vmem:[%s219 + $0x12c] sm:$0xf]
      %v302 = vld [vmem:[%s219 + $0x130] sm:$0xf]
      %v303 = vld [vmem:[%s219 + $0x134] sm:$0xf]
      %v304 = vld [vmem:[%s219 + $0x138] sm:$0xf]
      %v305 = vld [vmem:[%s219 + $0x13c] sm:$0xf]
      %v306 = vld [vmem:[%s219 + $0x140] sm:$0xf]
      %v307 = vld [vmem:[%s219 + $0x144] sm:$0xf]
      %v308 = vld [vmem:[%s219 + $0x148] sm:$0xf]
      %v309 = vld [vmem:[%s219 + $0x14c] sm:$0xf]
      %v310 = vld [vmem:[%s219 + $0x150] sm:$0xf]
      %v311 = vld [vmem:[%s219 + $0x154] sm:$0xf]
      %v312 = vld [vmem:[%s219 + $0x158] sm:$0xf]
      %v313 = vld [vmem:[%s219 + $0x15c] sm:$0xf]
      %v314 = vld [vmem:[%s219 + $0x160] sm:$0xf]
      %v315 = vld [vmem:[%s219 + $0x164] sm:$0xf]
      %v316 = vld [vmem:[%s219 + $0x168] sm:$0xf]
      %v317 = vld [vmem:[%s219 + $0x16c] sm:$0xf]
      %v318 = vld [vmem:[%s219 + $0x170] sm:$0xf]
      %v319 = vld [vmem:[%s219 + $0x174] sm:$0xf]
      %v320 = vld [vmem:[%s219 + $0x178] sm:$0xf]
      %v321 = vld [vmem:[%s219 + $0x17c] sm:$0xf]
      %v322 = vld [vmem:[%s219 + $0x180] sm:$0xf]
      %v323 = vld [vmem:[%s219 + $0x184] sm:$0xf]
      %v324 = vld [vmem:[%s219 + $0x188] sm:$0xf]
      %v325 = vld [vmem:[%s219 + $0x18c] sm:$0xf]
      %v326 = vld [vmem:[%s219 + $0x190] sm:$0xf]
      %v327 = vld [vmem:[%s219 + $0x194] sm:$0xf]
      %v328 = vld [vmem:[%s219 + $0x198] sm:$0xf]
      %v329 = vld [vmem:[%s219 + $0x19c] sm:$0xf]
      %v330 = vld [vmem:[%s219 + $0x1a0] sm:$0xf]
      %v331 = vld [vmem:[%s219 + $0x1a4] sm:$0xf]
      %v332 = vld [vmem:[%s219 + $0x1a8] sm:$0xf]
      %v333 = vld [vmem:[%s219 + $0x1ac] sm:$0xf]
      %v334 = vld [vmem:[%s219 + $0x1b0] sm:$0xf]
      %v335 = vld [vmem:[%s219 + $0x1b4] sm:$0xf]
      %v336 = vld [vmem:[%s219 + $0x1b8] sm:$0xf]
      %v337 = vld [vmem:[%s219 + $0x1bc] sm:$0xf]
      %v338 = vld [vmem:[%s219 + $0x1c0] sm:$0xf]
      %v339 = vld [vmem:[%s219 + $0x1c4] sm:$0xf]
      %v340 = vld [vmem:[%s219 + $0x1c8] sm:$0xf]
      %v341 = vld [vmem:[%s219 + $0x1cc] sm:$0xf]
      %v342 = vld [vmem:[%s219 + $0x1d0] sm:$0xf]
      %v343 = vld [vmem:[%s219 + $0x1d4] sm:$0xf]
      %v344 = vld [vmem:[%s219 + $0x1d8] sm:$0xf]
      %v345 = vld [vmem:[%s219 + $0x1dc] sm:$0xf]
      %v346 = vld [vmem:[%s219 + $0x1e0] sm:$0xf]
      %v347 = vld [vmem:[%s219 + $0x1e4] sm:$0xf]
      %v348 = vld [vmem:[%s219 + $0x1e8] sm:$0xf]
      %v349 = vld [vmem:[%s219 + $0x1ec] sm:$0xf]
      %v350 = vld [vmem:[%s219 + $0x1f0] sm:$0xf]
      %v351 = vld [vmem:[%s219 + $0x1f4] sm:$0xf]
      %v352 = vld [vmem:[%s219 + $0x1f8] sm:$0xf]
      %v353 = vld [vmem:[%s219 + $0x1fc] sm:$0xf]
      %v354 = vld [vmem:[%s1] sm:$0xf]
      %v355 = vld [vmem:[%s1 + $0x4] sm:$0xf]
      %v356 = vld [vmem:[%s1 + $0x8] sm:$0xf]
      %v357 = vld [vmem:[%s1 + $0xc] sm:$0x3]
      %v358 = vld [vmem:[%s2] sm:$0x1]
      %v360 = vlaneseq
      %v361 = vshrl.u32 %v360, 7
      %v362 = vsub.s32 0, %v361
      %v363 = vrot.slane %v358, %v362
      %v493 = vunpack.c.l.b16 %v226
      %v494 = vunpack.c.l.b16 %v227
      %v495 = vunpack.c.l.b16 %v228
      %v496 = vunpack.c.l.b16 %v229
      %v497 = vunpack.c.l.b16 %v230
      %v498 = vunpack.c.l.b16 %v231
      %v499 = vunpack.c.l.b16 %v232
      %v500 = vunpack.c.l.b16 %v233
      %v501 = vunpack.c.l.b16 %v234
      %v502 = vunpack.c.l.b16 %v235
      %v503 = vunpack.c.l.b16 %v236
      %v504 = vunpack.c.l.b16 %v237
      %v505 = vunpack.c.l.b16 %v238
      %v506 = vunpack.c.l.b16 %v239
      %v507 = vunpack.c.l.b16 %v240
      %v508 = vunpack.c.l.b16 %v241
      %v509 = vunpack.c.l.b16 %v242
      %v510 = vunpack.c.l.b16 %v243
      %v511 = vunpack.c.l.b16 %v244
      %v512 = vunpack.c.l.b16 %v245
      %v513 = vunpack.c.l.b16 %v246
      %v514 = vunpack.c.l.b16 %v247
      %v515 = vunpack.c.l.b16 %v248
      %v516 = vunpack.c.l.b16 %v249
      %v517 = vunpack.c.l.b16 %v250
      %v518 = vunpack.c.l.b16 %v251
      %v519 = vunpack.c.l.b16 %v252
      %v520 = vunpack.c.l.b16 %v253
      %v521 = vunpack.c.l.b16 %v254
      %v522 = vunpack.c.l.b16 %v255
      %v523 = vunpack.c.l.b16 %v256
      %v524 = vunpack.c.l.b16 %v257
      %v525 = vunpack.c.l.b16 %v258
      %v526 = vunpack.c.l.b16 %v259
      %v527 = vunpack.c.l.b16 %v260
      %v528 = vunpack.c.l.b16 %v261
      %v529 = vunpack.c.l.b16 %v262
      %v530 = vunpack.c.l.b16 %v263
      %v531 = vunpack.c.l.b16 %v264
      %v532 = vunpack.c.l.b16 %v265
      %v533 = vunpack.c.l.b16 %v266
      %v534 = vunpack.c.l.b16 %v267
      %v535 = vunpack.c.l.b16 %v268
      %v536 = vunpack.c.l.b16 %v269
      %v537 = vunpack.c.l.b16 %v270
      %v538 = vunpack.c.l.b16 %v271
      %v539 = vunpack.c.l.b16 %v272
      %v540 = vunpack.c.l.b16 %v273
      %v541 = vunpack.c.l.b16 %v274
      %v542 = vunpack.c.l.b16 %v275
      %v543 = vunpack.c.l.b16 %v276
      %v544 = vunpack.c.l.b16 %v277
      %v545 = vunpack.c.l.b16 %v278
      %v546 = vunpack.c.l.b16 %v279
      %v547 = vunpack.c.l.b16 %v280
      %v548 = vunpack.c.l.b16 %v281
      %v549 = vunpack.c.l.b16 %v282
      %v550 = vunpack.c.l.b16 %v283
      %v551 = vunpack.c.l.b16 %v284
      %v552 = vunpack.c.l.b16 %v285
      %v553 = vunpack.c.l.b16 %v286
      %v554 = vunpack.c.l.b16 %v287
      %v555 = vunpack.c.l.b16 %v288
      %v556 = vunpack.c.l.b16 %v289
      %v557 = vunpack.c.l.b16 %v290
      %v558 = vunpack.c.l.b16 %v291
      %v559 = vunpack.c.l.b16 %v292
      %v560 = vunpack.c.l.b16 %v293
      %v561 = vunpack.c.l.b16 %v294
      %v562 = vunpack.c.l.b16 %v295
      %v563 = vunpack.c.l.b16 %v296
      %v564 = vunpack.c.l.b16 %v297
      %v565 = vunpack.c.l.b16 %v298
      %v566 = vunpack.c.l.b16 %v299
      %v567 = vunpack.c.l.b16 %v300
      %v568 = vunpack.c.l.b16 %v301
      %v569 = vunpack.c.l.b16 %v302
      %v570 = vunpack.c.l.b16 %v303
      %v571 = vunpack.c.l.b16 %v304
      %v572 = vunpack.c.l.b16 %v305
      %v573 = vunpack.c.l.b16 %v306
      %v574 = vunpack.c.l.b16 %v307
      %v575 = vunpack.c.l.b16 %v308
      %v576 = vunpack.c.l.b16 %v309
      %v577 = vunpack.c.l.b16 %v310
      %v578 = vunpack.c.l.b16 %v311
      %v579 = vunpack.c.l.b16 %v312
      %v580 = vunpack.c.l.b16 %v313
      %v581 = vunpack.c.l.b16 %v314
      %v582 = vunpack.c.l.b16 %v315
      %v583 = vunpack.c.l.b16 %v316
      %v584 = vunpack.c.l.b16 %v317
      %v585 = vunpack.c.l.b16 %v318
      %v586 = vunpack.c.l.b16 %v319
      %v587 = vunpack.c.l.b16 %v320
      %v588 = vunpack.c.l.b16 %v321
      %v589 = vunpack.c.l.b16 %v322
      %v590 = vunpack.c.l.b16 %v323
      %v591 = vunpack.c.l.b16 %v324
      %v592 = vunpack.c.l.b16 %v325
      %v593 = vunpack.c.l.b16 %v326
      %v594 = vunpack.c.l.b16 %v327
      %v595 = vunpack.c.l.b16 %v328
      %v596 = vunpack.c.l.b16 %v329
      %v597 = vunpack.c.l.b16 %v330
      %v598 = vunpack.c.l.b16 %v331
      %v599 = vunpack.c.l.b16 %v332
      %v600 = vunpack.c.l.b16 %v333
      %v601 = vunpack.c.l.b16 %v334
      %v602 = vunpack.c.l.b16 %v335
      %v603 = vunpack.c.l.b16 %v336
      %v604 = vunpack.c.l.b16 %v337
      %v605 = vunpack.c.l.b16 %v338
      %v606 = vunpack.c.l.b16 %v339
      %v607 = vunpack.c.l.b16 %v340
      %v608 = vunpack.c.l.b16 %v341
      %v609 = vunpack.c.l.b16 %v342
      %v610 = vunpack.c.l.b16 %v343
      %v611 = vunpack.c.l.b16 %v344
      %v612 = vunpack.c.l.b16 %v345
      %v613 = vunpack.c.l.b16 %v346
      %v614 = vunpack.c.l.b16 %v347
      %v615 = vunpack.c.l.b16 %v348
      %v616 = vunpack.c.l.b16 %v349
      %v617 = vunpack.c.l.b16 %v350
      %v618 = vunpack.c.l.b16 %v351
      %v619 = vunpack.c.l.b16 %v352
      %v620 = vunpack.c.l.b16 %v353
      %v621 = vpack.c.b16 %v494, %v493
      %v622 = vpack.c.b16 %v496, %v495
      %v623 = vpack.c.b16 %v498, %v497
      %v624 = vpack.c.b16 %v500, %v499
      %v625 = vpack.c.b16 %v502, %v501
      %v626 = vpack.c.b16 %v504, %v503
      %v627 = vpack.c.b16 %v506, %v505
      %v628 = vpack.c.b16 %v508, %v507
      %v629 = vpack.c.b16 %v510, %v509
      %v630 = vpack.c.b16 %v512, %v511
      %v631 = vpack.c.b16 %v514, %v513
      %v632 = vpack.c.b16 %v516, %v515
      %v633 = vpack.c.b16 %v518, %v517
      %v634 = vpack.c.b16 %v520, %v519
      %v635 = vpack.c.b16 %v522, %v521
      %v636 = vpack.c.b16 %v524, %v523
      %v637 = vpack.c.b16 %v526, %v525
      %v638 = vpack.c.b16 %v528, %v527
      %v639 = vpack.c.b16 %v530, %v529
      %v640 = vpack.c.b16 %v532, %v531
      %v641 = vpack.c.b16 %v534, %v533
      %v642 = vpack.c.b16 %v536, %v535
      %v643 = vpack.c.b16 %v538, %v537
      %v644 = vpack.c.b16 %v540, %v539
      %v645 = vpack.c.b16 %v542, %v541
      %v646 = vpack.c.b16 %v544, %v543
      %v647 = vpack.c.b16 %v546, %v545
      %v648 = vpack.c.b16 %v548, %v547
      %v649 = vpack.c.b16 %v550, %v549
      %v650 = vpack.c.b16 %v552, %v551
      %v651 = vpack.c.b16 %v554, %v553
      %v652 = vpack.c.b16 %v556, %v555
      %v653 = vpack.c.b16 %v558, %v557
      %v654 = vpack.c.b16 %v560, %v559
      %v655 = vpack.c.b16 %v562, %v561
      %v656 = vpack.c.b16 %v564, %v563
      %v657 = vpack.c.b16 %v566, %v565
      %v658 = vpack.c.b16 %v568, %v567
      %v659 = vpack.c.b16 %v570, %v569
      %v660 = vpack.c.b16 %v572, %v571
      %v661 = vpack.c.b16 %v574, %v573
      %v662 = vpack.c.b16 %v576, %v575
      %v663 = vpack.c.b16 %v578, %v577
      %v664 = vpack.c.b16 %v580, %v579
      %v665 = vpack.c.b16 %v582, %v581
      %v666 = vpack.c.b16 %v584, %v583
      %v667 = vpack.c.b16 %v586, %v585
      %v668 = vpack.c.b16 %v588, %v587
      %v669 = vpack.c.b16 %v590, %v589
      %v670 = vpack.c.b16 %v592, %v591
      %v671 = vpack.c.b16 %v594, %v593
      %v672 = vpack.c.b16 %v596, %v595
      %v673 = vpack.c.b16 %v598, %v597
      %v674 = vpack.c.b16 %v600, %v599
      %v675 = vpack.c.b16 %v602, %v601
      %v676 = vpack.c.b16 %v604, %v603
      %v677 = vpack.c.b16 %v606, %v605
      %v678 = vpack.c.b16 %v608, %v607
      %v679 = vpack.c.b16 %v610, %v609
      %v680 = vpack.c.b16 %v612, %v611
      %v681 = vpack.c.b16 %v614, %v613
      %v682 = vpack.c.b16 %v616, %v615
      %v683 = vpack.c.b16 %v618, %v617
      %v684 = vpack.c.b16 %v620, %v619
      %v689 = vunpack.c.l.b16 %v354
      %v690 = vunpack.c.l.b16 %v355
      %v691 = vunpack.c.l.b16 %v356
      %v692 = vunpack.c.l.b16 %v357
      %v693 = vpack.c.b16 %v690, %v689
      %v694 = vpack.c.b16 %v692, %v691
      %vm696 = vcmask 220160
      %v698 = vsel %vm696, %v621, 0
      %v701 = vsel %vm696, %v622, 0
      %v704 = vsel %vm696, %v623, 0
      %v707 = vsel %vm696, %v624, 0
      %v710 = vsel %vm696, %v625, 0
      %v713 = vsel %vm696, %v626, 0
      %v716 = vsel %vm696, %v627, 0
      %v719 = vsel %vm696, %v628, 0
      %v722 = vsel %vm696, %v629, 0
      %v725 = vsel %vm696, %v630, 0
      %v728 = vsel %vm696, %v631, 0
      %v731 = vsel %vm696, %v632, 0
      %v734 = vsel %vm696, %v633, 0
      %v737 = vsel %vm696, %v634, 0
      %v740 = vsel %vm696, %v635, 0
      %v743 = vsel %vm696, %v636, 0
      %v746 = vsel %vm696, %v637, 0
      %v749 = vsel %vm696, %v638, 0
      %v752 = vsel %vm696, %v639, 0
      %v755 = vsel %vm696, %v640, 0
      %v758 = vsel %vm696, %v641, 0
      %v761 = vsel %vm696, %v642, 0
      %v764 = vsel %vm696, %v643, 0
      %v767 = vsel %vm696, %v644, 0
      %v770 = vsel %vm696, %v645, 0
      %v773 = vsel %vm696, %v646, 0
      %v776 = vsel %vm696, %v647, 0
      %v779 = vsel %vm696, %v648, 0
      %v782 = vsel %vm696, %v649, 0
      %v785 = vsel %vm696, %v650, 0
      %v788 = vsel %vm696, %v651, 0
      %v791 = vsel %vm696, %v652, 0
      %v794 = vsel %vm696, %v653, 0
      %v797 = vsel %vm696, %v654, 0
      %v800 = vsel %vm696, %v655, 0
      %v803 = vsel %vm696, %v656, 0
      %v806 = vsel %vm696, %v657, 0
      %v809 = vsel %vm696, %v658, 0
      %v812 = vsel %vm696, %v659, 0
      %v815 = vsel %vm696, %v660, 0
      %v818 = vsel %vm696, %v661, 0
      %v821 = vsel %vm696, %v662, 0
      %v824 = vsel %vm696, %v663, 0
      %v827 = vsel %vm696, %v664, 0
      %v830 = vsel %vm696, %v665, 0
      %v833 = vsel %vm696, %v666, 0
      %v836 = vsel %vm696, %v667, 0
      %v839 = vsel %vm696, %v668, 0
      %v842 = vsel %vm696, %v669, 0
      %v845 = vsel %vm696, %v670, 0
      %v848 = vsel %vm696, %v671, 0
      %v851 = vsel %vm696, %v672, 0
      %v854 = vsel %vm696, %v673, 0
      %v857 = vsel %vm696, %v674, 0
      %v860 = vsel %vm696, %v675, 0
      %v863 = vsel %vm696, %v676, 0
      %v866 = vsel %vm696, %v677, 0
      %v869 = vsel %vm696, %v678, 0
      %v872 = vsel %vm696, %v679, 0
      %v875 = vsel %vm696, %v680, 0
      %v878 = vsel %vm696, %v681, 0
      %v881 = vsel %vm696, %v682, 0
      %v884 = vsel %vm696, %v683, 0
      %v887 = vsel %vm696, %v684, 0
      %vm889 = vcmask 1044480
      %vm890 = vcmask 1045504
      %v891 = vsel %vm889, 4294967295, 65535
      %v892 = vsel %vm890, %v891, 0
      %v894 = vand.u32 %v694, %v892
      %896 = vmatprep.subr.bf16.mxu0 0
      %897 = vmatpush1.bf16.msra.mxu0 %v693
      %898 = vmatprep.subr.bf16.mxu0 0
      %899 = vmatpush1.bf16.msra.mxu0 %v894
      %900 = vmatprep.subr.bf16.mxu0 0
      %901 = vmatpush1.bf16.msra.mxu0 0
      %902 = vmatprep.subr.bf16.mxu0 0
      %903 = vmatpush1.bf16.msra.mxu0 0
      %904 = vmatprep.subr.bf16.mxu0 0
      %905 = vmatpush1.bf16.msra.mxu0 0
      %906 = vmatprep.subr.bf16.mxu0 0
      %907 = vmatpush1.bf16.msra.mxu0 0
      %908 = vmatprep.subr.bf16.mxu0 0
      %909 = vmatpush1.bf16.msra.mxu0 0
      %910 = vmatprep.subr.bf16.mxu0 0
      %911 = vmatpush1.bf16.msra.mxu0 0
      %912 = vmatprep.subr.bf16.mxu0 0
      %913 = vmatpush1.bf16.msra.mxu0 0
      %914 = vmatprep.subr.bf16.mxu0 0
      %915 = vmatpush1.bf16.msra.mxu0 0
      %916 = vmatprep.subr.bf16.mxu0 0
      %917 = vmatpush1.bf16.msra.mxu0 0
      %918 = vmatprep.subr.bf16.mxu0 0
      %919 = vmatpush1.bf16.msra.mxu0 0
      %920 = vmatprep.subr.bf16.mxu0 0
      %921 = vmatpush1.bf16.msra.mxu0 0
      %922 = vmatprep.subr.bf16.mxu0 0
      %923 = vmatpush1.bf16.msra.mxu0 0
      %924 = vmatprep.subr.bf16.mxu0 0
      %925 = vmatpush1.bf16.msra.mxu0 0
      %926 = vmatprep.subr.bf16.mxu0 0
      %927 = vmatpush1.bf16.msra.mxu0 0
      %928 = vmatprep.mubr.bf16.mxu0 0
      %929 = vmatmul.mubr.bf16.gmra.mrb[0].mxu0 %v698
      %v930 = vpop.f32.mrb[0].mxu0
      %v931 = vadd.f32 %v363, %v930
      %v932 = vpop.f32.mrb[0].mxu0
      %v933 = vpop.f32.mrb[0].mxu0
      %v934 = vadd.f32 %v363, %v933
      %v935 = vpop.f32.mrb[0].mxu0
      %936 = vmatprep.mubr.bf16.mxu0 0
      %937 = vmatmul.mubr.bf16.gmra.mrb[0].mxu0 %v701
      %v938 = vpop.f32.mrb[0].mxu0
      %v939 = vadd.f32 %v363, %v938
      %v940 = vpop.f32.mrb[0].mxu0
      %v941 = vpop.f32.mrb[0].mxu0
      %v942 = vadd.f32 %v363, %v941
      %v943 = vpop.f32.mrb[0].mxu0
      %944 = vmatprep.mubr.bf16.mxu0 0
      %945 = vmatmul.mubr.bf16.gmra.mrb[0].mxu0 %v704
      %v946 = vpop.f32.mrb[0].mxu0
      %v947 = vadd.f32 %v363, %v946
      %v948 = vpop.f32.mrb[0].mxu0
      %v949 = vpop.f32.mrb[0].mxu0
      %v950 = vadd.f32 %v363, %v949
      %v951 = vpop.f32.mrb[0].mxu0
      %952 = vmatprep.mubr.bf16.mxu0 0
      %953 = vmatmul.mubr.bf16.gmra.mrb[0].mxu0 %v707
      %v954 = vpop.f32.mrb[0].mxu0
      %v955 = vadd.f32 %v363, %v954
      %v956 = vpop.f32.mrb[0].mxu0
      %v957 = vpop.f32.mrb[0].mxu0
      %v958 = vadd.f32 %v363, %v957
      %v959 = vpop.f32.mrb[0].mxu0
      %960 = vmatprep.mubr.bf16.mxu0 0
      %961 = vmatmul.mubr.bf16.gmra.mrb[0].mxu0 %v710
      %v962 = vpop.f32.mrb[0].mxu0
      %v963 = vadd.f32 %v363, %v962
      %v964 = vpop.f32.mrb[0].mxu0
      %v965 = vpop.f32.mrb[0].mxu0
      %v966 = vadd.f32 %v363, %v965
      %v967 = vpop.f32.mrb[0].mxu0
      %968 = vmatprep.mubr.bf16.mxu0 0
      %969 = vmatmul.mubr.bf16.gmra.mrb[0].mxu0 %v713
      %v970 = vpop.f32.mrb[0].mxu0
      %v971 = vadd.f32 %v363, %v970
      %v972 = vpop.f32.mrb[0].mxu0
      %v973 = vpop.f32.mrb[0].mxu0
      %v974 = vadd.f32 %v363, %v973
      %v975 = vpop.f32.mrb[0].mxu0
      %976 = vmatprep.mubr.bf16.mxu0 0
      %977 = vmatmul.mubr.bf16.gmra.mrb[0].mxu0 %v716
      %v978 = vpop.f32.mrb[0].mxu0
      %v979 = vadd.f32 %v363, %v978
      %v980 = vpop.f32.mrb[0].mxu0
      %v981 = vpop.f32.mrb[0].mxu0
      %v982 = vadd.f32 %v363, %v981
      %v983 = vpop.f32.mrb[0].mxu0
      %984 = vmatprep.mubr.bf16.mxu0 0
      %985 = vmatmul.mubr.bf16.gmra.mrb[0].mxu0 %v719
      %v986 = vpop.f32.mrb[0].mxu0
      %v987 = vadd.f32 %v363, %v986
      %v988 = vpop.f32.mrb[0].mxu0
      %v989 = vpop.f32.mrb[0].mxu0
      %v990 = vadd.f32 %v363, %v989
      %v991 = vpop.f32.mrb[0].mxu0
      %992 = vmatprep.mubr.bf16.mxu0 0
      %993 = vmatmul.mubr.bf16.gmra.mrb[0].mxu0 %v722
      %v994 = vpop.f32.mrb[0].mxu0
      %v995 = vadd.f32 %v363, %v994
      %v996 = vpop.f32.mrb[0].mxu0
      %v997 = vpop.f32.mrb[0].mxu0
      %v998 = vadd.f32 %v363, %v997
      %v999 = vpop.f32.mrb[0].mxu0
      %1000 = vmatprep.mubr.bf16.mxu0 0
      %1001 = vmatmul.mubr.bf16.gmra.mrb[0].mxu0 %v725
      %v1002 = vpop.f32.mrb[0].mxu0
      %v1003 = vadd.f32 %v363, %v1002
      %v1004 = vpop.f32.mrb[0].mxu0
      %v1005 = vpop.f32.mrb[0].mxu0
      %v1006 = vadd.f32 %v363, %v1005
      %v1007 = vpop.f32.mrb[0].mxu0
      %1008 = vmatprep.mubr.bf16.mxu0 0
      %1009 = vmatmul.mubr.bf16.gmra.mrb[0].mxu0 %v728
      %v1010 = vpop.f32.mrb[0].mxu0
      %v1011 = vadd.f32 %v363, %v1010
      %v1012 = vpop.f32.mrb[0].mxu0
      %v1013 = vpop.f32.mrb[0].mxu0
      %v1014 = vadd.f32 %v363, %v1013
      %v1015 = vpop.f32.mrb[0].mxu0
      %1016 = vmatprep.mubr.bf16.mxu0 0
      %1017 = vmatmul.mubr.bf16.gmra.mrb[0].mxu0 %v731
      %v1018 = vpop.f32.mrb[0].mxu0
      %v1019 = vadd.f32 %v363, %v1018
      %v1020 = vpop.f32.mrb[0].mxu0
      %v1021 = vpop.f32.mrb[0].mxu0
      %v1022 = vadd.f32 %v363, %v1021
      %v1023 = vpop.f32.mrb[0].mxu0
      %1024 = vmatprep.mubr.bf16.mxu0 0
      %1025 = vmatmul.mubr.bf16.gmra.mrb[0].mxu0 %v734
      %v1026 = vpop.f32.mrb[0].mxu0
      %v1027 = vadd.f32 %v363, %v1026
      %v1028 = vpop.f32.mrb[0].mxu0
      %v1029 = vpop.f32.mrb[0].mxu0
      %v1030 = vadd.f32 %v363, %v1029
      %v1031 = vpop.f32.mrb[0].mxu0
      %1032 = vmatprep.mubr.bf16.mxu0 0
      %1033 = vmatmul.mubr.bf16.gmra.mrb[0].mxu0 %v737
      %v1034 = vpop.f32.mrb[0].mxu0
      %v1035 = vadd.f32 %v363, %v1034
      %v1036 = vpop.f32.mrb[0].mxu0
      %v1037 = vpop.f32.mrb[0].mxu0
      %v1038 = vadd.f32 %v363, %v1037
      %v1039 = vpop.f32.mrb[0].mxu0
      %1040 = vmatprep.mubr.bf16.mxu0 0
      %1041 = vmatmul.mubr.bf16.gmra.mrb[0].mxu0 %v740
      %v1042 = vpop.f32.mrb[0].mxu0
      %v1043 = vadd.f32 %v363, %v1042
      %v1044 = vpop.f32.mrb[0].mxu0
      %v1045 = vpop.f32.mrb[0].mxu0
      %v1046 = vadd.f32 %v363, %v1045
      %v1047 = vpop.f32.mrb[0].mxu0
      %1048 = vmatprep.mubr.bf16.mxu0 0
      %1049 = vmatmul.mubr.bf16.gmra.mrb[0].mxu0 %v743
      %v1050 = vpop.f32.mrb[0].mxu0
      %v1051 = vadd.f32 %v363, %v1050
      %v1052 = vpop.f32.mrb[0].mxu0
      %v1053 = vpop.f32.mrb[0].mxu0
      %v1054 = vadd.f32 %v363, %v1053
      %v1055 = vpop.f32.mrb[0].mxu0
      %1056 = vmatprep.mubr.bf16.mxu0 0
      %1057 = vmatmul.mubr.bf16.gmra.mrb[0].mxu0 %v746
      %v1058 = vpop.f32.mrb[0].mxu0
      %v1059 = vadd.f32 %v363, %v1058
      %v1060 = vpop.f32.mrb[0].mxu0
      %v1061 = vpop.f32.mrb[0].mxu0
      %v1062 = vadd.f32 %v363, %v1061
      %v1063 = vpop.f32.mrb[0].mxu0
      %1064 = vmatprep.mubr.bf16.mxu0 0
      %1065 = vmatmul.mubr.bf16.gmra.mrb[0].mxu0 %v749
      %v1066 = vpop.f32.mrb[0].mxu0
      %v1067 = vadd.f32 %v363, %v1066
      %v1068 = vpop.f32.mrb[0].mxu0
      %v1069 = vpop.f32.mrb[0].mxu0
      %v1070 = vadd.f32 %v363, %v1069
      %v1071 = vpop.f32.mrb[0].mxu0
      %1072 = vmatprep.mubr.bf16.mxu0 0
      %1073 = vmatmul.mubr.bf16.gmra.mrb[0].mxu0 %v752
      %v1074 = vpop.f32.mrb[0].mxu0
      %v1075 = vadd.f32 %v363, %v1074
      %v1076 = vpop.f32.mrb[0].mxu0
      %v1077 = vpop.f32.mrb[0].mxu0
      %v1078 = vadd.f32 %v363, %v1077
      %v1079 = vpop.f32.mrb[0].mxu0
      %1080 = vmatprep.mubr.bf16.mxu0 0
      %1081 = vmatmul.mubr.bf16.gmra.mrb[0].mxu0 %v755
      %v1082 = vpop.f32.mrb[0].mxu0
      %v1083 = vadd.f32 %v363, %v1082
      %v1084 = vpop.f32.mrb[0].mxu0
      %v1085 = vpop.f32.mrb[0].mxu0
      %v1086 = vadd.f32 %v363, %v1085
      %v1087 = vpop.f32.mrb[0].mxu0
      %1088 = vmatprep.mubr.bf16.mxu0 0
      %1089 = vmatmul.mubr.bf16.gmra.mrb[0].mxu0 %v758
      %v1090 = vpop.f32.mrb[0].mxu0
      %v1091 = vadd.f32 %v363, %v1090
      %v1092 = vpop.f32.mrb[0].mxu0
      %v1093 = vpop.f32.mrb[0].mxu0
      %v1094 = vadd.f32 %v363, %v1093
      %v1095 = vpop.f32.mrb[0].mxu0
      %1096 = vmatprep.mubr.bf16.mxu0 0
      %1097 = vmatmul.mubr.bf16.gmra.mrb[0].mxu0 %v761
      %v1098 = vpop.f32.mrb[0].mxu0
      %v1099 = vadd.f32 %v363, %v1098
      %v1100 = vpop.f32.mrb[0].mxu0
      %v1101 = vpop.f32.mrb[0].mxu0
      %v1102 = vadd.f32 %v363, %v1101
      %v1103 = vpop.f32.mrb[0].mxu0
      %1104 = vmatprep.mubr.bf16.mxu0 0
      %1105 = vmatmul.mubr.bf16.gmra.mrb[0].mxu0 %v764
      %v1106 = vpop.f32.mrb[0].mxu0
      %v1107 = vadd.f32 %v363, %v1106
      %v1108 = vpop.f32.mrb[0].mxu0
      %v1109 = vpop.f32.mrb[0].mxu0
      %v1110 = vadd.f32 %v363, %v1109
      %v1111 = vpop.f32.mrb[0].mxu0
      %1112 = vmatprep.mubr.bf16.mxu0 0
      %1113 = vmatmul.mubr.bf16.gmra.mrb[0].mxu0 %v767
      %v1114 = vpop.f32.mrb[0].mxu0
      %v1115 = vadd.f32 %v363, %v1114
      %v1116 = vpop.f32.mrb[0].mxu0
      %v1117 = vpop.f32.mrb[0].mxu0
      %v1118 = vadd.f32 %v363, %v1117
      %v1119 = vpop.f32.mrb[0].mxu0
      %1120 = vmatprep.mubr.bf16.mxu0 0
      %1121 = vmatmul.mubr.bf16.gmra.mrb[0].mxu0 %v770
      %v1122 = vpop.f32.mrb[0].mxu0
      %v1123 = vadd.f32 %v363, %v1122
      %v1124 = vpop.f32.mrb[0].mxu0
      %v1125 = vpop.f32.mrb[0].mxu0
      %v1126 = vadd.f32 %v363, %v1125
      %v1127 = vpop.f32.mrb[0].mxu0
      %1128 = vmatprep.mubr.bf16.mxu0 0
      %1129 = vmatmul.mubr.bf16.gmra.mrb[0].mxu0 %v773
      %v1130 = vpop.f32.mrb[0].mxu0
      %v1131 = vadd.f32 %v363, %v1130
      %v1132 = vpop.f32.mrb[0].mxu0
      %v1133 = vpop.f32.mrb[0].mxu0
      %v1134 = vadd.f32 %v363, %v1133
      %v1135 = vpop.f32.mrb[0].mxu0
      %1136 = vmatprep.mubr.bf16.mxu0 0
      %1137 = vmatmul.mubr.bf16.gmra.mrb[0].mxu0 %v776
      %v1138 = vpop.f32.mrb[0].mxu0
      %v1139 = vadd.f32 %v363, %v1138
      %v1140 = vpop.f32.mrb[0].mxu0
      %v1141 = vpop.f32.mrb[0].mxu0
      %v1142 = vadd.f32 %v363, %v1141
      %v1143 = vpop.f32.mrb[0].mxu0
      %1144 = vmatprep.mubr.bf16.mxu0 0
      %1145 = vmatmul.mubr.bf16.gmra.mrb[0].mxu0 %v779
      %v1146 = vpop.f32.mrb[0].mxu0
      %v1147 = vadd.f32 %v363, %v1146
      %v1148 = vpop.f32.mrb[0].mxu0
      %v1149 = vpop.f32.mrb[0].mxu0
      %v1150 = vadd.f32 %v363, %v1149
      %v1151 = vpop.f32.mrb[0].mxu0
      %1152 = vmatprep.mubr.bf16.mxu0 0
      %1153 = vmatmul.mubr.bf16.gmra.mrb[0].mxu0 %v782
      %v1154 = vpop.f32.mrb[0].mxu0
      %v1155 = vadd.f32 %v363, %v1154
      %v1156 = vpop.f32.mrb[0].mxu0
      %v1157 = vpop.f32.mrb[0].mxu0
      %v1158 = vadd.f32 %v363, %v1157
      %v1159 = vpop.f32.mrb[0].mxu0
      %1160 = vmatprep.mubr.bf16.mxu0 0
      %1161 = vmatmul.mubr.bf16.gmra.mrb[0].mxu0 %v785
      %v1162 = vpop.f32.mrb[0].mxu0
      %v1163 = vadd.f32 %v363, %v1162
      %v1164 = vpop.f32.mrb[0].mxu0
      %v1165 = vpop.f32.mrb[0].mxu0
      %v1166 = vadd.f32 %v363, %v1165
      %v1167 = vpop.f32.mrb[0].mxu0
      %1168 = vmatprep.mubr.bf16.mxu0 0
      %1169 = vmatmul.mubr.bf16.gmra.mrb[0].mxu0 %v788
      %v1170 = vpop.f32.mrb[0].mxu0
      %v1171 = vadd.f32 %v363, %v1170
      %v1172 = vpop.f32.mrb[0].mxu0
      %v1173 = vpop.f32.mrb[0].mxu0
      %v1174 = vadd.f32 %v363, %v1173
      %v1175 = vpop.f32.mrb[0].mxu0
      %1176 = vmatprep.mubr.bf16.mxu0 0
      %1177 = vmatmul.mubr.bf16.gmra.mrb[0].mxu0 %v791
      %v1178 = vpop.f32.mrb[0].mxu0
      %v1179 = vadd.f32 %v363, %v1178
      %v1180 = vpop.f32.mrb[0].mxu0
      %v1181 = vpop.f32.mrb[0].mxu0
      %v1182 = vadd.f32 %v363, %v1181
      %v1183 = vpop.f32.mrb[0].mxu0
      %1184 = vmatprep.mubr.bf16.mxu0 0
      %1185 = vmatmul.mubr.bf16.gmra.mrb[0].mxu0 %v794
      %v1186 = vpop.f32.mrb[0].mxu0
      %v1187 = vadd.f32 %v363, %v1186
      %v1188 = vpop.f32.mrb[0].mxu0
      %v1189 = vpop.f32.mrb[0].mxu0
      %v1190 = vadd.f32 %v363, %v1189
      %v1191 = vpop.f32.mrb[0].mxu0
      %1192 = vmatprep.mubr.bf16.mxu0 0
      %1193 = vmatmul.mubr.bf16.gmra.mrb[0].mxu0 %v797
      %v1194 = vpop.f32.mrb[0].mxu0
      %v1195 = vadd.f32 %v363, %v1194
      %v1196 = vpop.f32.mrb[0].mxu0
      %v1197 = vpop.f32.mrb[0].mxu0
      %v1198 = vadd.f32 %v363, %v1197
      %v1199 = vpop.f32.mrb[0].mxu0
      %1200 = vmatprep.mubr.bf16.mxu0 0
      %1201 = vmatmul.mubr.bf16.gmra.mrb[0].mxu0 %v800
      %v1202 = vpop.f32.mrb[0].mxu0
      %v1203 = vadd.f32 %v363, %v1202
      %v1204 = vpop.f32.mrb[0].mxu0
      %v1205 = vpop.f32.mrb[0].mxu0
      %v1206 = vadd.f32 %v363, %v1205
      %v1207 = vpop.f32.mrb[0].mxu0
      %1208 = vmatprep.mubr.bf16.mxu0 0
      %1209 = vmatmul.mubr.bf16.gmra.mrb[0].mxu0 %v803
      %v1210 = vpop.f32.mrb[0].mxu0
      %v1211 = vadd.f32 %v363, %v1210
      %v1212 = vpop.f32.mrb[0].mxu0
      %v1213 = vpop.f32.mrb[0].mxu0
      %v1214 = vadd.f32 %v363, %v1213
      %v1215 = vpop.f32.mrb[0].mxu0
      %1216 = vmatprep.mubr.bf16.mxu0 0
      %1217 = vmatmul.mubr.bf16.gmra.mrb[0].mxu0 %v806
      %v1218 = vpop.f32.mrb[0].mxu0
      %v1219 = vadd.f32 %v363, %v1218
      %v1220 = vpop.f32.mrb[0].mxu0
      %v1221 = vpop.f32.mrb[0].mxu0
      %v1222 = vadd.f32 %v363, %v1221
      %v1223 = vpop.f32.mrb[0].mxu0
      %1224 = vmatprep.mubr.bf16.mxu0 0
      %1225 = vmatmul.mubr.bf16.gmra.mrb[0].mxu0 %v809
      %v1226 = vpop.f32.mrb[0].mxu0
      %v1227 = vadd.f32 %v363, %v1226
      %v1228 = vpop.f32.mrb[0].mxu0
      %v1229 = vpop.f32.mrb[0].mxu0
      %v1230 = vadd.f32 %v363, %v1229
      %v1231 = vpop.f32.mrb[0].mxu0
      %1232 = vmatprep.mubr.bf16.mxu0 0
      %1233 = vmatmul.mubr.bf16.gmra.mrb[0].mxu0 %v812
      %v1234 = vpop.f32.mrb[0].mxu0
      %v1235 = vadd.f32 %v363, %v1234
      %v1236 = vpop.f32.mrb[0].mxu0
      %v1237 = vpop.f32.mrb[0].mxu0
      %v1238 = vadd.f32 %v363, %v1237
      %v1239 = vpop.f32.mrb[0].mxu0
      %1240 = vmatprep.mubr.bf16.mxu0 0
      %1241 = vmatmul.mubr.bf16.gmra.mrb[0].mxu0 %v815
      %v1242 = vpop.f32.mrb[0].mxu0
      %v1243 = vadd.f32 %v363, %v1242
      %v1244 = vpop.f32.mrb[0].mxu0
      %v1245 = vpop.f32.mrb[0].mxu0
      %v1246 = vadd.f32 %v363, %v1245
      %v1247 = vpop.f32.mrb[0].mxu0
      %1248 = vmatprep.mubr.bf16.mxu0 0
      %1249 = vmatmul.mubr.bf16.gmra.mrb[0].mxu0 %v818
      %v1250 = vpop.f32.mrb[0].mxu0
      %v1251 = vadd.f32 %v363, %v1250
      %v1252 = vpop.f32.mrb[0].mxu0
      %v1253 = vpop.f32.mrb[0].mxu0
      %v1254 = vadd.f32 %v363, %v1253
      %v1255 = vpop.f32.mrb[0].mxu0
      %1256 = vmatprep.mubr.bf16.mxu0 0
      %1257 = vmatmul.mubr.bf16.gmra.mrb[0].mxu0 %v821
      %v1258 = vpop.f32.mrb[0].mxu0
      %v1259 = vadd.f32 %v363, %v1258
      %v1260 = vpop.f32.mrb[0].mxu0
      %v1261 = vpop.f32.mrb[0].mxu0
      %v1262 = vadd.f32 %v363, %v1261
      %v1263 = vpop.f32.mrb[0].mxu0
      %1264 = vmatprep.mubr.bf16.mxu0 0
      %1265 = vmatmul.mubr.bf16.gmra.mrb[0].mxu0 %v824
      %v1266 = vpop.f32.mrb[0].mxu0
      %v1267 = vadd.f32 %v363, %v1266
      %v1268 = vpop.f32.mrb[0].mxu0
      %v1269 = vpop.f32.mrb[0].mxu0
      %v1270 = vadd.f32 %v363, %v1269
      %v1271 = vpop.f32.mrb[0].mxu0
      %1272 = vmatprep.mubr.bf16.mxu0 0
      %1273 = vmatmul.mubr.bf16.gmra.mrb[0].mxu0 %v827
      %v1274 = vpop.f32.mrb[0].mxu0
      %v1275 = vadd.f32 %v363, %v1274
      %v1276 = vpop.f32.mrb[0].mxu0
      %v1277 = vpop.f32.mrb[0].mxu0
      %v1278 = vadd.f32 %v363, %v1277
      %v1279 = vpop.f32.mrb[0].mxu0
      %1280 = vmatprep.mubr.bf16.mxu0 0
      %1281 = vmatmul.mubr.bf16.gmra.mrb[0].mxu0 %v830
      %v1282 = vpop.f32.mrb[0].mxu0
      %v1283 = vadd.f32 %v363, %v1282
      %v1284 = vpop.f32.mrb[0].mxu0
      %v1285 = vpop.f32.mrb[0].mxu0
      %v1286 = vadd.f32 %v363, %v1285
      %v1287 = vpop.f32.mrb[0].mxu0
      %1288 = vmatprep.mubr.bf16.mxu0 0
      %1289 = vmatmul.mubr.bf16.gmra.mrb[0].mxu0 %v833
      %v1290 = vpop.f32.mrb[0].mxu0
      %v1291 = vadd.f32 %v363, %v1290
      %v1292 = vpop.f32.mrb[0].mxu0
      %v1293 = vpop.f32.mrb[0].mxu0
      %v1294 = vadd.f32 %v363, %v1293
      %v1295 = vpop.f32.mrb[0].mxu0
      %1296 = vmatprep.mubr.bf16.mxu0 0
      %1297 = vmatmul.mubr.bf16.gmra.mrb[0].mxu0 %v836
      %v1298 = vpop.f32.mrb[0].mxu0
      %v1299 = vadd.f32 %v363, %v1298
      %v1300 = vpop.f32.mrb[0].mxu0
      %v1301 = vpop.f32.mrb[0].mxu0
      %v1302 = vadd.f32 %v363, %v1301
      %v1303 = vpop.f32.mrb[0].mxu0
      %1304 = vmatprep.mubr.bf16.mxu0 0
      %1305 = vmatmul.mubr.bf16.gmra.mrb[0].mxu0 %v839
      %v1306 = vpop.f32.mrb[0].mxu0
      %v1307 = vadd.f32 %v363, %v1306
      %v1308 = vpop.f32.mrb[0].mxu0
      %v1309 = vpop.f32.mrb[0].mxu0
      %v1310 = vadd.f32 %v363, %v1309
      %v1311 = vpop.f32.mrb[0].mxu0
      %1312 = vmatprep.mubr.bf16.mxu0 0
      %1313 = vmatmul.mubr.bf16.gmra.mrb[0].mxu0 %v842
      %v1314 = vpop.f32.mrb[0].mxu0
      %v1315 = vadd.f32 %v363, %v1314
      %v1316 = vpop.f32.mrb[0].mxu0
      %v1317 = vpop.f32.mrb[0].mxu0
      %v1318 = vadd.f32 %v363, %v1317
      %v1319 = vpop.f32.mrb[0].mxu0
      %1320 = vmatprep.mubr.bf16.mxu0 0
      %1321 = vmatmul.mubr.bf16.gmra.mrb[0].mxu0 %v845
      %v1322 = vpop.f32.mrb[0].mxu0
      %v1323 = vadd.f32 %v363, %v1322
      %v1324 = vpop.f32.mrb[0].mxu0
      %v1325 = vpop.f32.mrb[0].mxu0
      %v1326 = vadd.f32 %v363, %v1325
      %v1327 = vpop.f32.mrb[0].mxu0
      %1328 = vmatprep.mubr.bf16.mxu0 0
      %1329 = vmatmul.mubr.bf16.gmra.mrb[0].mxu0 %v848
      %v1330 = vpop.f32.mrb[0].mxu0
      %v1331 = vadd.f32 %v363, %v1330
      %v1332 = vpop.f32.mrb[0].mxu0
      %v1333 = vpop.f32.mrb[0].mxu0
      %v1334 = vadd.f32 %v363, %v1333
      %v1335 = vpop.f32.mrb[0].mxu0
      %1336 = vmatprep.mubr.bf16.mxu0 0
      %1337 = vmatmul.mubr.bf16.gmra.mrb[0].mxu0 %v851
      %v1338 = vpop.f32.mrb[0].mxu0
      %v1339 = vadd.f32 %v363, %v1338
      %v1340 = vpop.f32.mrb[0].mxu0
      %v1341 = vpop.f32.mrb[0].mxu0
      %v1342 = vadd.f32 %v363, %v1341
      %v1343 = vpop.f32.mrb[0].mxu0
      %1344 = vmatprep.mubr.bf16.mxu0 0
      %1345 = vmatmul.mubr.bf16.gmra.mrb[0].mxu0 %v854
      %v1346 = vpop.f32.mrb[0].mxu0
      %v1347 = vadd.f32 %v363, %v1346
      %v1348 = vpop.f32.mrb[0].mxu0
      %v1349 = vpop.f32.mrb[0].mxu0
      %v1350 = vadd.f32 %v363, %v1349
      %v1351 = vpop.f32.mrb[0].mxu0
      %1352 = vmatprep.mubr.bf16.mxu0 0
      %1353 = vmatmul.mubr.bf16.gmra.mrb[0].mxu0 %v857
      %v1354 = vpop.f32.mrb[0].mxu0
      %v1355 = vadd.f32 %v363, %v1354
      %v1356 = vpop.f32.mrb[0].mxu0
      %v1357 = vpop.f32.mrb[0].mxu0
      %v1358 = vadd.f32 %v363, %v1357
      %v1359 = vpop.f32.mrb[0].mxu0
      %1360 = vmatprep.mubr.bf16.mxu0 0
      %1361 = vmatmul.mubr.bf16.gmra.mrb[0].mxu0 %v860
      %v1362 = vpop.f32.mrb[0].mxu0
      %v1363 = vadd.f32 %v363, %v1362
      %v1364 = vpop.f32.mrb[0].mxu0
      %v1365 = vpop.f32.mrb[0].mxu0
      %v1366 = vadd.f32 %v363, %v1365
      %v1367 = vpop.f32.mrb[0].mxu0
      %1368 = vmatprep.mubr.bf16.mxu0 0
      %1369 = vmatmul.mubr.bf16.gmra.mrb[0].mxu0 %v863
      %v1370 = vpop.f32.mrb[0].mxu0
      %v1371 = vadd.f32 %v363, %v1370
      %v1372 = vpop.f32.mrb[0].mxu0
      %v1373 = vpop.f32.mrb[0].mxu0
      %v1374 = vadd.f32 %v363, %v1373
      %v1375 = vpop.f32.mrb[0].mxu0
      %1376 = vmatprep.mubr.bf16.mxu0 0
      %1377 = vmatmul.mubr.bf16.gmra.mrb[0].mxu0 %v866
      %v1378 = vpop.f32.mrb[0].mxu0
      %v1379 = vadd.f32 %v363, %v1378
      %v1380 = vpop.f32.mrb[0].mxu0
      %v1381 = vpop.f32.mrb[0].mxu0
      %v1382 = vadd.f32 %v363, %v1381
      %v1383 = vpop.f32.mrb[0].mxu0
      %1384 = vmatprep.mubr.bf16.mxu0 0
      %1385 = vmatmul.mubr.bf16.gmra.mrb[0].mxu0 %v869
      %v1386 = vpop.f32.mrb[0].mxu0
      %v1387 = vadd.f32 %v363, %v1386
      %v1388 = vpop.f32.mrb[0].mxu0
      %v1389 = vpop.f32.mrb[0].mxu0
      %v1390 = vadd.f32 %v363, %v1389
      %v1391 = vpop.f32.mrb[0].mxu0
      %1392 = vmatprep.mubr.bf16.mxu0 0
      %1393 = vmatmul.mubr.bf16.gmra.mrb[0].mxu0 %v872
      %v1394 = vpop.f32.mrb[0].mxu0
      %v1395 = vadd.f32 %v363, %v1394
      %v1396 = vpop.f32.mrb[0].mxu0
      %v1397 = vpop.f32.mrb[0].mxu0
      %v1398 = vadd.f32 %v363, %v1397
      %v1399 = vpop.f32.mrb[0].mxu0
      %1400 = vmatprep.mubr.bf16.mxu0 0
      %1401 = vmatmul.mubr.bf16.gmra.mrb[0].mxu0 %v875
      %v1402 = vpop.f32.mrb[0].mxu0
      %v1403 = vadd.f32 %v363, %v1402
      %v1404 = vpop.f32.mrb[0].mxu0
      %v1405 = vpop.f32.mrb[0].mxu0
      %v1406 = vadd.f32 %v363, %v1405
      %v1407 = vpop.f32.mrb[0].mxu0
      %1408 = vmatprep.mubr.bf16.mxu0 0
      %1409 = vmatmul.mubr.bf16.gmra.mrb[0].mxu0 %v878
      %v1410 = vpop.f32.mrb[0].mxu0
      %v1411 = vadd.f32 %v363, %v1410
      %v1412 = vpop.f32.mrb[0].mxu0
      %v1413 = vpop.f32.mrb[0].mxu0
      %v1414 = vadd.f32 %v363, %v1413
      %v1415 = vpop.f32.mrb[0].mxu0
      %1416 = vmatprep.mubr.bf16.mxu0 0
      %1417 = vmatmul.mubr.bf16.gmra.mrb[0].mxu0 %v881
      %v1418 = vpop.f32.mrb[0].mxu0
      %v1419 = vadd.f32 %v363, %v1418
      %v1420 = vpop.f32.mrb[0].mxu0
      %v1421 = vpop.f32.mrb[0].mxu0
      %v1422 = vadd.f32 %v363, %v1421
      %v1423 = vpop.f32.mrb[0].mxu0
      %1424 = vmatprep.mubr.bf16.mxu0 0
      %1425 = vmatmul.mubr.bf16.gmra.mrb[0].mxu0 %v884
      %v1426 = vpop.f32.mrb[0].mxu0
      %v1427 = vadd.f32 %v363, %v1426
      %v1428 = vpop.f32.mrb[0].mxu0
      %v1429 = vpop.f32.mrb[0].mxu0
      %v1430 = vadd.f32 %v363, %v1429
      %v1431 = vpop.f32.mrb[0].mxu0
      %1432 = vmatprep.mubr.bf16.mxu0 0
      %1433 = vmatmul.mubr.bf16.gmra.mrb[0].mxu0 %v887
      %v1434 = vpop.f32.mrb[0].mxu0
      %v1435 = vadd.f32 %v363, %v1434
      %v1436 = vpop.f32.mrb[0].mxu0
      %v1437 = vpop.f32.mrb[0].mxu0
      %v1438 = vadd.f32 %v363, %v1437
      %v1439 = vpop.f32.mrb[0].mxu0
      %1440 = vdwg.mxu0
      %v1441 = vmax.f32 %v931, 0.0
      %v1442 = vmax.f32 %v934, 0.0
      %v1443 = vmax.f32 %v939, 0.0
      %v1444 = vmax.f32 %v942, 0.0
      %v1445 = vmax.f32 %v947, 0.0
      %v1446 = vmax.f32 %v950, 0.0
      %v1447 = vmax.f32 %v955, 0.0
      %v1448 = vmax.f32 %v958, 0.0
      %v1449 = vmax.f32 %v963, 0.0
      %v1450 = vmax.f32 %v966, 0.0
      %v1451 = vmax.f32 %v971, 0.0
      %v1452 = vmax.f32 %v974, 0.0
      %v1453 = vmax.f32 %v979, 0.0
      %v1454 = vmax.f32 %v982, 0.0
      %v1455 = vmax.f32 %v987, 0.0
      %v1456 = vmax.f32 %v990, 0.0
      %v1457 = vmax.f32 %v995, 0.0
      %v1458 = vmax.f32 %v998, 0.0
      %v1459 = vmax.f32 %v1003, 0.0
      %v1460 = vmax.f32 %v1006, 0.0
      %v1461 = vmax.f32 %v1011, 0.0
      %v1462 = vmax.f32 %v1014, 0.0
      %v1463 = vmax.f32 %v1019, 0.0
      %v1464 = vmax.f32 %v1022, 0.0
      %v1465 = vmax.f32 %v1027, 0.0
      %v1466 = vmax.f32 %v1030, 0.0
      %v1467 = vmax.f32 %v1035, 0.0
      %v1468 = vmax.f32 %v1038, 0.0
      %v1469 = vmax.f32 %v1043, 0.0
      %v1470 = vmax.f32 %v1046, 0.0
      %v1471 = vmax.f32 %v1051, 0.0
      %v1472 = vmax.f32 %v1054, 0.0
      %v1473 = vmax.f32 %v1059, 0.0
      %v1474 = vmax.f32 %v1062, 0.0
      %v1475 = vmax.f32 %v1067, 0.0
      %v1476 = vmax.f32 %v1070, 0.0
      %v1477 = vmax.f32 %v1075, 0.0
      %v1478 = vmax.f32 %v1078, 0.0
      %v1479 = vmax.f32 %v1083, 0.0
      %v1480 = vmax.f32 %v1086, 0.0
      %v1481 = vmax.f32 %v1091, 0.0
      %v1482 = vmax.f32 %v1094, 0.0
      %v1483 = vmax.f32 %v1099, 0.0
      %v1484 = vmax.f32 %v1102, 0.0
      %v1485 = vmax.f32 %v1107, 0.0
      %v1486 = vmax.f32 %v1110, 0.0
      %v1487 = vmax.f32 %v1115, 0.0
      %v1488 = vmax.f32 %v1118, 0.0
      %v1489 = vmax.f32 %v1123, 0.0
      %v1490 = vmax.f32 %v1126, 0.0
      %v1491 = vmax.f32 %v1131, 0.0
      %v1492 = vmax.f32 %v1134, 0.0
      %v1493 = vmax.f32 %v1139, 0.0
      %v1494 = vmax.f32 %v1142, 0.0
      %v1495 = vmax.f32 %v1147, 0.0
      %v1496 = vmax.f32 %v1150, 0.0
      %v1497 = vmax.f32 %v1155, 0.0
      %v1498 = vmax.f32 %v1158, 0.0
      %v1499 = vmax.f32 %v1163, 0.0
      %v1500 = vmax.f32 %v1166, 0.0
      %v1501 = vmax.f32 %v1171, 0.0
      %v1502 = vmax.f32 %v1174, 0.0
      %v1503 = vmax.f32 %v1179, 0.0
      %v1504 = vmax.f32 %v1182, 0.0
      %v1505 = vmax.f32 %v1187, 0.0
      %v1506 = vmax.f32 %v1190, 0.0
      %v1507 = vmax.f32 %v1195, 0.0
      %v1508 = vmax.f32 %v1198, 0.0
      %v1509 = vmax.f32 %v1203, 0.0
      %v1510 = vmax.f32 %v1206, 0.0
      %v1511 = vmax.f32 %v1211, 0.0
      %v1512 = vmax.f32 %v1214, 0.0
      %v1513 = vmax.f32 %v1219, 0.0
      %v1514 = vmax.f32 %v1222, 0.0
      %v1515 = vmax.f32 %v1227, 0.0
      %v1516 = vmax.f32 %v1230, 0.0
      %v1517 = vmax.f32 %v1235, 0.0
      %v1518 = vmax.f32 %v1238, 0.0
      %v1519 = vmax.f32 %v1243, 0.0
      %v1520 = vmax.f32 %v1246, 0.0
      %v1521 = vmax.f32 %v1251, 0.0
      %v1522 = vmax.f32 %v1254, 0.0
      %v1523 = vmax.f32 %v1259, 0.0
      %v1524 = vmax.f32 %v1262, 0.0
      %v1525 = vmax.f32 %v1267, 0.0
      %v1526 = vmax.f32 %v1270, 0.0
      %v1527 = vmax.f32 %v1275, 0.0
      %v1528 = vmax.f32 %v1278, 0.0
      %v1529 = vmax.f32 %v1283, 0.0
      %v1530 = vmax.f32 %v1286, 0.0
      %v1531 = vmax.f32 %v1291, 0.0
      %v1532 = vmax.f32 %v1294, 0.0
      %v1533 = vmax.f32 %v1299, 0.0
      %v1534 = vmax.f32 %v1302, 0.0
      %v1535 = vmax.f32 %v1307, 0.0
      %v1536 = vmax.f32 %v1310, 0.0
      %v1537 = vmax.f32 %v1315, 0.0
      %v1538 = vmax.f32 %v1318, 0.0
      %v1539 = vmax.f32 %v1323, 0.0
      %v1540 = vmax.f32 %v1326, 0.0
      %v1541 = vmax.f32 %v1331, 0.0
      %v1542 = vmax.f32 %v1334, 0.0
      %v1543 = vmax.f32 %v1339, 0.0
      %v1544 = vmax.f32 %v1342, 0.0
      %v1545 = vmax.f32 %v1347, 0.0
      %v1546 = vmax.f32 %v1350, 0.0
      %v1547 = vmax.f32 %v1355, 0.0
      %v1548 = vmax.f32 %v1358, 0.0
      %v1549 = vmax.f32 %v1363, 0.0
      %v1550 = vmax.f32 %v1366, 0.0
      %v1551 = vmax.f32 %v1371, 0.0
      %v1552 = vmax.f32 %v1374, 0.0
      %v1553 = vmax.f32 %v1379, 0.0
      %v1554 = vmax.f32 %v1382, 0.0
      %v1555 = vmax.f32 %v1387, 0.0
      %v1556 = vmax.f32 %v1390, 0.0
      %v1557 = vmax.f32 %v1395, 0.0
      %v1558 = vmax.f32 %v1398, 0.0
      %v1559 = vmax.f32 %v1403, 0.0
      %v1560 = vmax.f32 %v1406, 0.0
      %v1561 = vmax.f32 %v1411, 0.0
      %v1562 = vmax.f32 %v1414, 0.0
      %v1563 = vmax.f32 %v1419, 0.0
      %v1564 = vmax.f32 %v1422, 0.0
      %v1565 = vmax.f32 %v1427, 0.0
      %v1566 = vmax.f32 %v1430, 0.0
      %v1567 = vmax.f32 %v1435, 0.0
      %v1568 = vmax.f32 %v1438, 0.0
      %vm1569 = vcmask 130048
      %1570 = vst.msk [vmem:[#allocation2] sm:$0xff] %vm1569, %v1441
      %1571 = vst.msk [vmem:[#allocation2 + $0x8] sm:$0xff] %vm1569, %v1442
      %1572 = vst.msk [vmem:[#allocation2 + $0x10] sm:$0xff] %vm1569, %v1443
      %1573 = vst.msk [vmem:[#allocation2 + $0x18] sm:$0xff] %vm1569, %v1444
      %1574 = vst.msk [vmem:[#allocation2 + $0x20] sm:$0xff] %vm1569, %v1445
      %1575 = vst.msk [vmem:[#allocation2 + $0x28] sm:$0xff] %vm1569, %v1446
      %1576 = vst.msk [vmem:[#allocation2 + $0x30] sm:$0xff] %vm1569, %v1447
      %1577 = vst.msk [vmem:[#allocation2 + $0x38] sm:$0xff] %vm1569, %v1448
      %1578 = vst.msk [vmem:[#allocation2 + $0x40] sm:$0xff] %vm1569, %v1449
      %1579 = vst.msk [vmem:[#allocation2 + $0x48] sm:$0xff] %vm1569, %v1450
      %1580 = vst.msk [vmem:[#allocation2 + $0x50] sm:$0xff] %vm1569, %v1451
      %1581 = vst.msk [vmem:[#allocation2 + $0x58] sm:$0xff] %vm1569, %v1452
      %1582 = vst.msk [vmem:[#allocation2 + $0x60] sm:$0xff] %vm1569, %v1453
      %1583 = vst.msk [vmem:[#allocation2 + $0x68] sm:$0xff] %vm1569, %v1454
      %1584 = vst.msk [vmem:[#allocation2 + $0x70] sm:$0xff] %vm1569, %v1455
      %1585 = vst.msk [vmem:[#allocation2 + $0x78] sm:$0xff] %vm1569, %v1456
      %1586 = vst.msk [vmem:[#allocation2 + $0x80] sm:$0xff] %vm1569, %v1457
      %1587 = vst.msk [vmem:[#allocation2 + $0x88] sm:$0xff] %vm1569, %v1458
      %1588 = vst.msk [vmem:[#allocation2 + $0x90] sm:$0xff] %vm1569, %v1459
      %1589 = vst.msk [vmem:[#allocation2 + $0x98] sm:$0xff] %vm1569, %v1460
      %1590 = vst.msk [vmem:[#allocation2 + $0xa0] sm:$0xff] %vm1569, %v1461
      %1591 = vst.msk [vmem:[#allocation2 + $0xa8] sm:$0xff] %vm1569, %v1462
      %1592 = vst.msk [vmem:[#allocation2 + $0xb0] sm:$0xff] %vm1569, %v1463
      %1593 = vst.msk [vmem:[#allocation2 + $0xb8] sm:$0xff] %vm1569, %v1464
      %1594 = vst.msk [vmem:[#allocation2 + $0xc0] sm:$0xff] %vm1569, %v1465
      %1595 = vst.msk [vmem:[#allocation2 + $0xc8] sm:$0xff] %vm1569, %v1466
      %1596 = vst.msk [vmem:[#allocation2 + $0xd0] sm:$0xff] %vm1569, %v1467
      %1597 = vst.msk [vmem:[#allocation2 + $0xd8] sm:$0xff] %vm1569, %v1468
      %1598 = vst.msk [vmem:[#allocation2 + $0xe0] sm:$0xff] %vm1569, %v1469
      %1599 = vst.msk [vmem:[#allocation2 + $0xe8] sm:$0xff] %vm1569, %v1470
      %1600 = vst.msk [vmem:[#allocation2 + $0xf0] sm:$0xff] %vm1569, %v1471
      %1601 = vst.msk [vmem:[#allocation2 + $0xf8] sm:$0xff] %vm1569, %v1472
      %1602 = vst.msk [vmem:[#allocation2 + $0x100] sm:$0xff] %vm1569, %v1473
      %1603 = vst.msk [vmem:[#allocation2 + $0x108] sm:$0xff] %vm1569, %v1474
      %1604 = vst.msk [vmem:[#allocation2 + $0x110] sm:$0xff] %vm1569, %v1475
      %1605 = vst.msk [vmem:[#allocation2 + $0x118] sm:$0xff] %vm1569, %v1476
      %1606 = vst.msk [vmem:[#allocation2 + $0x120] sm:$0xff] %vm1569, %v1477
      %1607 = vst.msk [vmem:[#allocation2 + $0x128] sm:$0xff] %vm1569, %v1478
      %1608 = vst.msk [vmem:[#allocation2 + $0x130] sm:$0xff] %vm1569, %v1479
      %1609 = vst.msk [vmem:[#allocation2 + $0x138] sm:$0xff] %vm1569, %v1480
      %1610 = vst.msk [vmem:[#allocation2 + $0x140] sm:$0xff] %vm1569, %v1481
      %1611 = vst.msk [vmem:[#allocation2 + $0x148] sm:$0xff] %vm1569, %v1482
      %1612 = vst.msk [vmem:[#allocation2 + $0x150] sm:$0xff] %vm1569, %v1483
      %1613 = vst.msk [vmem:[#allocation2 + $0x158] sm:$0xff] %vm1569, %v1484
      %1614 = vst.msk [vmem:[#allocation2 + $0x160] sm:$0xff] %vm1569, %v1485
      %1615 = vst.msk [vmem:[#allocation2 + $0x168] sm:$0xff] %vm1569, %v1486
      %1616 = vst.msk [vmem:[#allocation2 + $0x170] sm:$0xff] %vm1569, %v1487
      %1617 = vst.msk [vmem:[#allocation2 + $0x178] sm:$0xff] %vm1569, %v1488
      %1618 = vst.msk [vmem:[#allocation2 + $0x180] sm:$0xff] %vm1569, %v1489
      %1619 = vst.msk [vmem:[#allocation2 + $0x188] sm:$0xff] %vm1569, %v1490
      %1620 = vst.msk [vmem:[#allocation2 + $0x190] sm:$0xff] %vm1569, %v1491
      %1621 = vst.msk [vmem:[#allocation2 + $0x198] sm:$0xff] %vm1569, %v1492
      %1622 = vst.msk [vmem:[#allocation2 + $0x1a0] sm:$0xff] %vm1569, %v1493
      %1623 = vst.msk [vmem:[#allocation2 + $0x1a8] sm:$0xff] %vm1569, %v1494
      %1624 = vst.msk [vmem:[#allocation2 + $0x1b0] sm:$0xff] %vm1569, %v1495
      %1625 = vst.msk [vmem:[#allocation2 + $0x1b8] sm:$0xff] %vm1569, %v1496
      %1626 = vst.msk [vmem:[#allocation2 + $0x1c0] sm:$0xff] %vm1569, %v1497
      %1627 = vst.msk [vmem:[#allocation2 + $0x1c8] sm:$0xff] %vm1569, %v1498
      %1628 = vst.msk [vmem:[#allocation2 + $0x1d0] sm:$0xff] %vm1569, %v1499
      %1629 = vst.msk [vmem:[#allocation2 + $0x1d8] sm:$0xff] %vm1569, %v1500
      %1630 = vst.msk [vmem:[#allocation2 + $0x1e0] sm:$0xff] %vm1569, %v1501
      %1631 = vst.msk [vmem:[#allocation2 + $0x1e8] sm:$0xff] %vm1569, %v1502
      %1632 = vst.msk [vmem:[#allocation2 + $0x1f0] sm:$0xff] %vm1569, %v1503
      %1633 = vst.msk [vmem:[#allocation2 + $0x1f8] sm:$0xff] %vm1569, %v1504
      %1634 = vst.msk [vmem:[#allocation2 + $0x200] sm:$0xff] %vm1569, %v1505
      %1635 = vst.msk [vmem:[#allocation2 + $0x208] sm:$0xff] %vm1569, %v1506
      %1636 = vst.msk [vmem:[#allocation2 + $0x210] sm:$0xff] %vm1569, %v1507
      %1637 = vst.msk [vmem:[#allocation2 + $0x218] sm:$0xff] %vm1569, %v1508
      %1638 = vst.msk [vmem:[#allocation2 + $0x220] sm:$0xff] %vm1569, %v1509
      %1639 = vst.msk [vmem:[#allocation2 + $0x228] sm:$0xff] %vm1569, %v1510
      %1640 = vst.msk [vmem:[#allocation2 + $0x230] sm:$0xff] %vm1569, %v1511
      %1641 = vst.msk [vmem:[#allocation2 + $0x238] sm:$0xff] %vm1569, %v1512
      %1642 = vst.msk [vmem:[#allocation2 + $0x240] sm:$0xff] %vm1569, %v1513
      %1643 = vst.msk [vmem:[#allocation2 + $0x248] sm:$0xff] %vm1569, %v1514
      %1644 = vst.msk [vmem:[#allocation2 + $0x250] sm:$0xff] %vm1569, %v1515
      %1645 = vst.msk [vmem:[#allocation2 + $0x258] sm:$0xff] %vm1569, %v1516
      %1646 = vst.msk [vmem:[#allocation2 + $0x260] sm:$0xff] %vm1569, %v1517
      %1647 = vst.msk [vmem:[#allocation2 + $0x268] sm:$0xff] %vm1569, %v1518
      %1648 = vst.msk [vmem:[#allocation2 + $0x270] sm:$0xff] %vm1569, %v1519
      %1649 = vst.msk [vmem:[#allocation2 + $0x278] sm:$0xff] %vm1569, %v1520
      %1650 = vst.msk [vmem:[#allocation2 + $0x280] sm:$0xff] %vm1569, %v1521
      %1651 = vst.msk [vmem:[#allocation2 + $0x288] sm:$0xff] %vm1569, %v1522
      %1652 = vst.msk [vmem:[#allocation2 + $0x290] sm:$0xff] %vm1569, %v1523
      %1653 = vst.msk [vmem:[#allocation2 + $0x298] sm:$0xff] %vm1569, %v1524
      %1654 = vst.msk [vmem:[#allocation2 + $0x2a0] sm:$0xff] %vm1569, %v1525
      %1655 = vst.msk [vmem:[#allocation2 + $0x2a8] sm:$0xff] %vm1569, %v1526
      %1656 = vst.msk [vmem:[#allocation2 + $0x2b0] sm:$0xff] %vm1569, %v1527
      %1657 = vst.msk [vmem:[#allocation2 + $0x2b8] sm:$0xff] %vm1569, %v1528
      %1658 = vst.msk [vmem:[#allocation2 + $0x2c0] sm:$0xff] %vm1569, %v1529
      %1659 = vst.msk [vmem:[#allocation2 + $0x2c8] sm:$0xff] %vm1569, %v1530
      %1660 = vst.msk [vmem:[#allocation2 + $0x2d0] sm:$0xff] %vm1569, %v1531
      %1661 = vst.msk [vmem:[#allocation2 + $0x2d8] sm:$0xff] %vm1569, %v1532
      %1662 = vst.msk [vmem:[#allocation2 + $0x2e0] sm:$0xff] %vm1569, %v1533
      %1663 = vst.msk [vmem:[#allocation2 + $0x2e8] sm:$0xff] %vm1569, %v1534
      %1664 = vst.msk [vmem:[#allocation2 + $0x2f0] sm:$0xff] %vm1569, %v1535
      %1665 = vst.msk [vmem:[#allocation2 + $0x2f8] sm:$0xff] %vm1569, %v1536
      %1666 = vst.msk [vmem:[#allocation2 + $0x300] sm:$0xff] %vm1569, %v1537
      %1667 = vst.msk [vmem:[#allocation2 + $0x308] sm:$0xff] %vm1569, %v1538
      %1668 = vst.msk [vmem:[#allocation2 + $0x310] sm:$0xff] %vm1569, %v1539
      %1669 = vst.msk [vmem:[#allocation2 + $0x318] sm:$0xff] %vm1569, %v1540
      %1670 = vst.msk [vmem:[#allocation2 + $0x320] sm:$0xff] %vm1569, %v1541
      %1671 = vst.msk [vmem:[#allocation2 + $0x328] sm:$0xff] %vm1569, %v1542
      %1672 = vst.msk [vmem:[#allocation2 + $0x330] sm:$0xff] %vm1569, %v1543
      %1673 = vst.msk [vmem:[#allocation2 + $0x338] sm:$0xff] %vm1569, %v1544
      %1674 = vst.msk [vmem:[#allocation2 + $0x340] sm:$0xff] %vm1569, %v1545
      %1675 = vst.msk [vmem:[#allocation2 + $0x348] sm:$0xff] %vm1569, %v1546
      %1676 = vst.msk [vmem:[#allocation2 + $0x350] sm:$0xff] %vm1569, %v1547
      %1677 = vst.msk [vmem:[#allocation2 + $0x358] sm:$0xff] %vm1569, %v1548
      %1678 = vst.msk [vmem:[#allocation2 + $0x360] sm:$0xff] %vm1569, %v1549
      %1679 = vst.msk [vmem:[#allocation2 + $0x368] sm:$0xff] %vm1569, %v1550
      %1680 = vst.msk [vmem:[#allocation2 + $0x370] sm:$0xff] %vm1569, %v1551
      %1681 = vst.msk [vmem:[#allocation2 + $0x378] sm:$0xff] %vm1569, %v1552
      %1682 = vst.msk [vmem:[#allocation2 + $0x380] sm:$0xff] %vm1569, %v1553
      %1683 = vst.msk [vmem:[#allocation2 + $0x388] sm:$0xff] %vm1569, %v1554
      %1684 = vst.msk [vmem:[#allocation2 + $0x390] sm:$0xff] %vm1569, %v1555
      %1685 = vst.msk [vmem:[#allocation2 + $0x398] sm:$0xff] %vm1569, %v1556
      %1686 = vst.msk [vmem:[#allocation2 + $0x3a0] sm:$0xff] %vm1569, %v1557
      %1687 = vst.msk [vmem:[#allocation2 + $0x3a8] sm:$0xff] %vm1569, %v1558
      %1688 = vst.msk [vmem:[#allocation2 + $0x3b0] sm:$0xff] %vm1569, %v1559
      %1689 = vst.msk [vmem:[#allocation2 + $0x3b8] sm:$0xff] %vm1569, %v1560
      %1690 = vst.msk [vmem:[#allocation2 + $0x3c0] sm:$0xff] %vm1569, %v1561
      %1691 = vst.msk [vmem:[#allocation2 + $0x3c8] sm:$0xff] %vm1569, %v1562
      %1692 = vst.msk [vmem:[#allocation2 + $0x3d0] sm:$0xff] %vm1569, %v1563
      %1693 = vst.msk [vmem:[#allocation2 + $0x3d8] sm:$0xff] %vm1569, %v1564
      %1694 = vst.msk [vmem:[#allocation2 + $0x3e0] sm:$0xff] %vm1569, %v1565
      %1695 = vst.msk [vmem:[#allocation2 + $0x3e8] sm:$0xff] %vm1569, %v1566
      %1696 = vst.msk [vmem:[#allocation2 + $0x3f0] sm:$0xff] %vm1569, %v1567
      %1697 = vst.msk [vmem:[#allocation2 + $0x3f8] sm:$0xff] %vm1569, %v1568
      %v1698 = vlaneseq
      %v1699 = vshrl.u32 %v1698, 7
      %v1700 = vadd.s32 %v1699, 8
      %v1701 = vadd.s32 %v1699, 16
      %v1702 = vadd.s32 %v1699, 24
      %v1703 = vadd.s32 %v1699, 32
      %v1704 = vadd.s32 %v1699, 40
      %v1705 = vadd.s32 %v1699, 48
      %v1706 = vadd.s32 %v1699, 56
      %v1707 = vld [vmem:[%s4] sm:$0x1]
      %v1709 = vlaneseq
      %v1710 = vshrl.u32 %v1709, 7
      %v1711 = vsub.s32 0, %v1710
      %v1712 = vrot.slane %v1707, %v1711
      %v1714 = vadd.f32 %v1712, 0.0
      %vm1715 = vcmp.ge.s32.totalorder %v1699, 9
      %vm1716 = vcmp.ge.s32.totalorder %v1700, 9
      %vm1717 = vcmp.ge.s32.totalorder %v1701, 9
      %vm1718 = vcmp.ge.s32.totalorder %v1702, 9
      %vm1719 = vcmp.ge.s32.totalorder %v1703, 9
      %vm1720 = vcmp.ge.s32.totalorder %v1704, 9
      %vm1721 = vcmp.ge.s32.totalorder %v1705, 9
      %vm1722 = vcmp.ge.s32.totalorder %v1706, 9
      %vm1723 = vcmp.lt.s32.totalorder %v1699, 0
      %v1724 = vsub.s32 0, %v1699
      %v1725 = vsel %vm1723, %v1724, %v1699
      %v1726 = vshrl.u32 %v1725, 3
      %v1727 = vand.u32 %v1725, 7
      %v1728 = vsub.s32 0, %v1727
      %v1729 = vsel %vm1723, %v1728, %v1727
      %vm1730 = vcmp.lt.s32.totalorder %v1700, 0
      %v1731 = vsub.s32 0, %v1700
      %v1732 = vsel %vm1730, %v1731, %v1700
      %v1733 = vshrl.u32 %v1732, 3
      %v1734 = vand.u32 %v1732, 7
      %v1735 = vsub.s32 0, %v1734
      %v1736 = vsel %vm1730, %v1735, %v1734
      %vm1737 = vcmp.lt.s32.totalorder %v1701, 0
      %v1738 = vsub.s32 0, %v1701
      %v1739 = vsel %vm1737, %v1738, %v1701
      %v1740 = vshrl.u32 %v1739, 3
      %v1741 = vand.u32 %v1739, 7
      %v1742 = vsub.s32 0, %v1741
      %v1743 = vsel %vm1737, %v1742, %v1741
      %vm1744 = vcmp.lt.s32.totalorder %v1702, 0
      %v1745 = vsub.s32 0, %v1702
      %v1746 = vsel %vm1744, %v1745, %v1702
      %v1747 = vshrl.u32 %v1746, 3
      %v1748 = vand.u32 %v1746, 7
      %v1749 = vsub.s32 0, %v1748
      %v1750 = vsel %vm1744, %v1749, %v1748
      %vm1751 = vcmp.lt.s32.totalorder %v1703, 0
      %v1752 = vsub.s32 0, %v1703
      %v1753 = vsel %vm1751, %v1752, %v1703
      %v1754 = vshrl.u32 %v1753, 3
      %v1755 = vand.u32 %v1753, 7
      %v1756 = vsub.s32 0, %v1755
      %v1757 = vsel %vm1751, %v1756, %v1755
      %vm1758 = vcmp.lt.s32.totalorder %v1704, 0
      %v1759 = vsub.s32 0, %v1704
      %v1760 = vsel %vm1758, %v1759, %v1704
      %v1761 = vshrl.u32 %v1760, 3
      %v1762 = vand.u32 %v1760, 7
      %v1763 = vsub.s32 0, %v1762
      %v1764 = vsel %vm1758, %v1763, %v1762
      %vm1765 = vcmp.lt.s32.totalorder %v1705, 0
      %v1766 = vsub.s32 0, %v1705
      %v1767 = vsel %vm1765, %v1766, %v1705
      %v1768 = vshrl.u32 %v1767, 3
      %v1769 = vand.u32 %v1767, 7
      %v1770 = vsub.s32 0, %v1769
      %v1771 = vsel %vm1765, %v1770, %v1769
      %vm1772 = vcmp.lt.s32.totalorder %v1706, 0
      %v1773 = vsub.s32 0, %v1706
      %v1774 = vsel %vm1772, %v1773, %v1706
      %v1775 = vshrl.u32 %v1774, 3
      %v1776 = vand.u32 %v1774, 7
      %v1777 = vsub.s32 0, %v1776
      %v1778 = vsel %vm1772, %v1777, %v1776
      %vm1779 = vcmp.ne.s32.totalorder %v1729, 0
      %vm1780 = vcmp.ne.s32.totalorder %v1736, 0
      %vm1781 = vcmp.ne.s32.totalorder %v1743, 0
      %vm1782 = vcmp.ne.s32.totalorder %v1750, 0
      %vm1783 = vcmp.ne.s32.totalorder %v1757, 0
      %vm1784 = vcmp.ne.s32.totalorder %v1764, 0
      %vm1785 = vcmp.ne.s32.totalorder %v1771, 0
      %vm1786 = vcmp.ne.s32.totalorder %v1778, 0
      %vm1787 = vcmp.lt.s32.totalorder %v1729, 0
      %vm1788 = vcmp.lt.s32.totalorder %v1736, 0
      %vm1789 = vcmp.lt.s32.totalorder %v1743, 0
      %vm1790 = vcmp.lt.s32.totalorder %v1750, 0
      %vm1791 = vcmp.lt.s32.totalorder %v1757, 0
      %vm1792 = vcmp.lt.s32.totalorder %v1764, 0
      %vm1793 = vcmp.lt.s32.totalorder %v1771, 0
      %vm1794 = vcmp.lt.s32.totalorder %v1778, 0
      %vm1795 = vmand %vm1787, %vm1779
      %vm1796 = vmand %vm1788, %vm1780
      %vm1797 = vmand %vm1789, %vm1781
      %vm1798 = vmand %vm1790, %vm1782
      %vm1799 = vmand %vm1791, %vm1783
      %vm1800 = vmand %vm1792, %vm1784
      %vm1801 = vmand %vm1793, %vm1785
      %vm1802 = vmand %vm1794, %vm1786
      %v1803 = vadd.s32 %v1729, 8
      %v1804 = vadd.s32 %v1736, 8
      %v1805 = vadd.s32 %v1743, 8
      %v1806 = vadd.s32 %v1750, 8
      %v1807 = vadd.s32 %v1757, 8
      %v1808 = vadd.s32 %v1764, 8
      %v1809 = vadd.s32 %v1771, 8
      %v1810 = vadd.s32 %v1778, 8
      %v1811 = vsel %vm1795, %v1803, %v1729
      %v1812 = vsel %vm1796, %v1804, %v1736
      %v1813 = vsel %vm1797, %v1805, %v1743
      %v1814 = vsel %vm1798, %v1806, %v1750
      %v1815 = vsel %vm1799, %v1807, %v1757
      %v1816 = vsel %vm1800, %v1808, %v1764
      %v1817 = vsel %vm1801, %v1809, %v1771
      %v1818 = vsel %vm1802, %v1810, %v1778
      %vm1819 = vcmp.ne.s32.totalorder %v1811, 0
      %vm1820 = vcmp.ne.s32.totalorder %v1812, 0
      %vm1821 = vcmp.ne.s32.totalorder %v1813, 0
      %vm1822 = vcmp.ne.s32.totalorder %v1814, 0
      %vm1823 = vcmp.ne.s32.totalorder %v1815, 0
      %vm1824 = vcmp.ne.s32.totalorder %v1816, 0
      %vm1825 = vcmp.ne.s32.totalorder %v1817, 0
      %vm1826 = vcmp.ne.s32.totalorder %v1818, 0
      %vm1827 = vmand %vm1715, %vm1819
      %vm1828 = vmand %vm1716, %vm1820
      %vm1829 = vmand %vm1717, %vm1821
      %vm1830 = vmand %vm1718, %vm1822
      %vm1831 = vmand %vm1719, %vm1823
      %vm1832 = vmand %vm1720, %vm1824
      %vm1833 = vmand %vm1721, %vm1825
      %vm1834 = vmand %vm1722, %vm1826
      %v1835 = vld [vmem:[#allocation2 + $0xb7] sm:$0xff]
      %v1836 = vld [vmem:[#allocation2 + $0xbf] sm:$0xff]
      %v1837 = vld [vmem:[#allocation2 + $0xc7] sm:$0xff]
      %v1838 = vld [vmem:[#allocation2 + $0xcf] sm:$0xff]
      %v1839 = vld [vmem:[#allocation2 + $0xd7] sm:$0xff]
      %v1840 = vld [vmem:[#allocation2 + $0xdf] sm:$0xff]
      %v1841 = vld [vmem:[#allocation2 + $0xe7] sm:$0xff]
      %v1842 = vld [vmem:[#allocation2 + $0xef] sm:$0xff]
      %v1843 = vsel %vm1827, 1, 0
      %v1844 = vsel %vm1828, 1, 0
      %v1845 = vsel %vm1829, 1, 0
      %v1846 = vsel %vm1830, 1, 0
      %v1847 = vsel %vm1831, 1, 0
      %v1848 = vsel %vm1832, 1, 0
      %v1849 = vsel %vm1833, 1, 0
      %v1850 = vsel %vm1834, 1, 0
      %vm1851 = vcmp.eq.s32.totalorder %v1843, 1
      %vm1852 = vcmp.eq.s32.totalorder %v1844, 1
      %vm1853 = vcmp.eq.s32.totalorder %v1845, 1
      %vm1854 = vcmp.eq.s32.totalorder %v1846, 1
      %vm1855 = vcmp.eq.s32.totalorder %v1847, 1
      %vm1856 = vcmp.eq.s32.totalorder %v1848, 1
      %vm1857 = vcmp.eq.s32.totalorder %v1849, 1
      %vm1858 = vcmp.eq.s32.totalorder %v1850, 1
      %v1859 = vsel %vm1851, %v1835, 0.0
      %v1860 = vsel %vm1852, %v1836, 0.0
      %v1861 = vsel %vm1853, %v1837, 0.0
      %v1862 = vsel %vm1854, %v1838, 0.0
      %v1863 = vsel %vm1855, %v1839, 0.0
      %v1864 = vsel %vm1856, %v1840, 0.0
      %v1865 = vsel %vm1857, %v1841, 0.0
      %v1866 = vsel %vm1858, %v1842, 0.0
      %v1867 = vld [vmem:[#allocation2 + $0x1b7] sm:$0xff]
      %v1868 = vld [vmem:[#allocation2 + $0x1bf] sm:$0xff]
      %v1869 = vld [vmem:[#allocation2 + $0x1c7] sm:$0xff]
      %v1870 = vld [vmem:[#allocation2 + $0x1cf] sm:$0xff]
      %v1871 = vld [vmem:[#allocation2 + $0x1d7] sm:$0xff]
      %v1872 = vld [vmem:[#allocation2 + $0x1df] sm:$0xff]
      %v1873 = vld [vmem:[#allocation2 + $0x1e7] sm:$0xff]
      %v1874 = vld [vmem:[#allocation2 + $0x1ef] sm:$0xff]
      %v1875 = vsel %vm1851, %v1867, 0.0
      %v1876 = vsel %vm1852, %v1868, 0.0
      %v1877 = vsel %vm1853, %v1869, 0.0
      %v1878 = vsel %vm1854, %v1870, 0.0
      %v1879 = vsel %vm1855, %v1871, 0.0
      %v1880 = vsel %vm1856, %v1872, 0.0
      %v1881 = vsel %vm1857, %v1873, 0.0
      %v1882 = vsel %vm1858, %v1874, 0.0
      %v1883 = vld [vmem:[#allocation2 + $0x2b7] sm:$0xff]
      %v1884 = vld [vmem:[#allocation2 + $0x2bf] sm:$0xff]
      %v1885 = vld [vmem:[#allocation2 + $0x2c7] sm:$0xff]
      %v1886 = vld [vmem:[#allocation2 + $0x2cf] sm:$0xff]
      %v1887 = vld [vmem:[#allocation2 + $0x2d7] sm:$0xff]
      %v1888 = vld [vmem:[#allocation2 + $0x2df] sm:$0xff]
      %v1889 = vld [vmem:[#allocation2 + $0x2e7] sm:$0xff]
      %v1890 = vld [vmem:[#allocation2 + $0x2ef] sm:$0xff]
      %v1891 = vsel %vm1851, %v1883, 0.0
      %v1892 = vsel %vm1852, %v1884, 0.0
      %v1893 = vsel %vm1853, %v1885, 0.0
      %v1894 = vsel %vm1854, %v1886, 0.0
      %v1895 = vsel %vm1855, %v1887, 0.0
      %v1896 = vsel %vm1856, %v1888, 0.0
      %v1897 = vsel %vm1857, %v1889, 0.0
      %v1898 = vsel %vm1858, %v1890, 0.0
      %v1899 = vld [vmem:[#allocation2 + $0x3b7] sm:$0xff]
      %v1900 = vld [vmem:[#allocation2 + $0x3bf] sm:$0xff]
      %v1901 = vld [vmem:[#allocation2 + $0x3c7] sm:$0xff]
      %v1902 = vld [vmem:[#allocation2 + $0x3cf] sm:$0xff]
      %v1903 = vld [vmem:[#allocation2 + $0x3d7] sm:$0xff]
      %v1904 = vld [vmem:[#allocation2 + $0x3df] sm:$0xff]
      %v1905 = vld [vmem:[#allocation2 + $0x3e7] sm:$0xff]
      %v1906 = vld [vmem:[#allocation2 + $0x3ef] sm:$0xff]
      %v1907 = vsel %vm1851, %v1899, 0.0
      %v1908 = vsel %vm1852, %v1900, 0.0
      %v1909 = vsel %vm1853, %v1901, 0.0
      %v1910 = vsel %vm1854, %v1902, 0.0
      %v1911 = vsel %vm1855, %v1903, 0.0
      %v1912 = vsel %vm1856, %v1904, 0.0
      %v1913 = vsel %vm1857, %v1905, 0.0
      %v1914 = vsel %vm1858, %v1906, 0.0
      %v1915 = vpack.c.bf16 %v1860, %v1859
      %v1916 = vpack.c.bf16 %v1862, %v1861
      %v1917 = vpack.c.bf16 %v1864, %v1863
      %v1918 = vpack.c.bf16 %v1866, %v1865
      %v1919 = vpack.c.bf16 %v1876, %v1875
      %v1920 = vpack.c.bf16 %v1878, %v1877
      %v1921 = vpack.c.bf16 %v1880, %v1879
      %v1922 = vpack.c.bf16 %v1882, %v1881
      %v1923 = vpack.c.bf16 %v1892, %v1891
      %v1924 = vpack.c.bf16 %v1894, %v1893
      %v1925 = vpack.c.bf16 %v1896, %v1895
      %v1926 = vpack.c.bf16 %v1898, %v1897
      %v1927 = vpack.c.bf16 %v1908, %v1907
      %v1928 = vpack.c.bf16 %v1910, %v1909
      %v1929 = vpack.c.bf16 %v1912, %v1911
      %v1930 = vpack.c.bf16 %v1914, %v1913
      %v1931 = vld [vmem:[%s3] sm:$0xf]
      %v1932 = vld [vmem:[%s3 + $0x4] sm:$0xf]
      %v1935 = vunpack.c.l.b16 %v1931
      %v1936 = vunpack.c.l.b16 %v1932
      %v1937 = vpack.c.b16 %v1936, %v1935
      %v1940 = vsel %vm1569, %v1915, 0
      %v1943 = vsel %vm1569, %v1916, 0
      %v1946 = vsel %vm1569, %v1917, 0
      %v1949 = vsel %vm1569, %v1918, 0
      %v1952 = vsel %vm1569, %v1919, 0
      %v1955 = vsel %vm1569, %v1920, 0
      %v1958 = vsel %vm1569, %v1921, 0
      %v1961 = vsel %vm1569, %v1922, 0
      %v1964 = vsel %vm1569, %v1923, 0
      %v1967 = vsel %vm1569, %v1924, 0
      %v1970 = vsel %vm1569, %v1925, 0
      %v1973 = vsel %vm1569, %v1926, 0
      %v1976 = vsel %vm1569, %v1927, 0
      %v1979 = vsel %vm1569, %v1928, 0
      %v1982 = vsel %vm1569, %v1929, 0
      %v1985 = vsel %vm1569, %v1930, 0
      %1987 = vmatprep.subr.bf16.mxu0 0
      %1988 = vmatpush1.bf16.msra.mxu0 %v1937
      %1989 = vmatprep.subr.bf16.mxu0 0
      %1990 = vmatpush1.bf16.msra.mxu0 0
      %1991 = vmatprep.subr.bf16.mxu0 0
      %1992 = vmatpush1.bf16.msra.mxu0 0
      %1993 = vmatprep.subr.bf16.mxu0 0
      %1994 = vmatpush1.bf16.msra.mxu0 0
      %1995 = vmatprep.subr.bf16.mxu0 0
      %1996 = vmatpush1.bf16.msra.mxu0 0
      %1997 = vmatprep.subr.bf16.mxu0 0
      %1998 = vmatpush1.bf16.msra.mxu0 0
      %1999 = vmatprep.subr.bf16.mxu0 0
      %2000 = vmatpush1.bf16.msra.mxu0 0
      %2001 = vmatprep.subr.bf16.mxu0 0
      %2002 = vmatpush1.bf16.msra.mxu0 0
      %2003 = vmatprep.subr.bf16.mxu0 0
      %2004 = vmatpush1.bf16.msra.mxu0 0
      %2005 = vmatprep.subr.bf16.mxu0 0
      %2006 = vmatpush1.bf16.msra.mxu0 0
      %2007 = vmatprep.subr.bf16.mxu0 0
      %2008 = vmatpush1.bf16.msra.mxu0 0
      %2009 = vmatprep.subr.bf16.mxu0 0
      %2010 = vmatpush1.bf16.msra.mxu0 0
      %2011 = vmatprep.subr.bf16.mxu0 0
      %2012 = vmatpush1.bf16.msra.mxu0 0
      %2013 = vmatprep.subr.bf16.mxu0 0
      %2014 = vmatpush1.bf16.msra.mxu0 0
      %2015 = vmatprep.subr.bf16.mxu0 0
      %2016 = vmatpush1.bf16.msra.mxu0 0
      %2017 = vmatprep.subr.bf16.mxu0 0
      %2018 = vmatpush1.bf16.msra.mxu0 0
      %2019 = vmatprep.mubr.bf16.mxu0 0
      %2020 = vmatmul.mubr.bf16.gmra.mrb[0].mxu0 %v1940
      %v2021 = vpop.f32.mrb[0].mxu0
      %v2022 = vadd.f32 0.0, %v2021
      %v2023 = vpop.f32.mrb[0].mxu0
      %v2024 = vpop.f32.mrb[0].mxu0
      %v2025 = vadd.f32 0.0, %v2024
      %v2026 = vpop.f32.mrb[0].mxu0
      %2027 = vmatprep.mubr.bf16.mxu0 0
      %2028 = vmatmul.mubr.bf16.gmra.mrb[0].mxu0 %v1943
      %v2029 = vpop.f32.mrb[0].mxu0
      %v2030 = vadd.f32 0.0, %v2029
      %v2031 = vpop.f32.mrb[0].mxu0
      %v2032 = vpop.f32.mrb[0].mxu0
      %v2033 = vadd.f32 0.0, %v2032
      %v2034 = vpop.f32.mrb[0].mxu0
      %2035 = vmatprep.mubr.bf16.mxu0 0
      %2036 = vmatmul.mubr.bf16.gmra.mrb[0].mxu0 %v1946
      %v2037 = vpop.f32.mrb[0].mxu0
      %v2038 = vadd.f32 0.0, %v2037
      %v2039 = vpop.f32.mrb[0].mxu0
      %v2040 = vpop.f32.mrb[0].mxu0
      %v2041 = vadd.f32 0.0, %v2040
      %v2042 = vpop.f32.mrb[0].mxu0
      %2043 = vmatprep.mubr.bf16.mxu0 0
      %2044 = vmatmul.mubr.bf16.gmra.mrb[0].mxu0 %v1949
      %v2045 = vpop.f32.mrb[0].mxu0
      %v2046 = vadd.f32 0.0, %v2045
      %v2047 = vpop.f32.mrb[0].mxu0
      %v2048 = vpop.f32.mrb[0].mxu0
      %v2049 = vadd.f32 0.0, %v2048
      %v2050 = vpop.f32.mrb[0].mxu0
      %2051 = vmatprep.mubr.bf16.mxu0 0
      %2052 = vmatmul.mubr.bf16.gmra.mrb[0].mxu0 %v1952
      %v2053 = vpop.f32.mrb[0].mxu0
      %v2054 = vadd.f32 0.0, %v2053
      %v2055 = vpop.f32.mrb[0].mxu0
      %v2056 = vpop.f32.mrb[0].mxu0
      %v2057 = vadd.f32 0.0, %v2056
      %v2058 = vpop.f32.mrb[0].mxu0
      %2059 = vmatprep.mubr.bf16.mxu0 0
      %2060 = vmatmul.mubr.bf16.gmra.mrb[0].mxu0 %v1955
      %v2061 = vpop.f32.mrb[0].mxu0
      %v2062 = vadd.f32 0.0, %v2061
      %v2063 = vpop.f32.mrb[0].mxu0
      %v2064 = vpop.f32.mrb[0].mxu0
      %v2065 = vadd.f32 0.0, %v2064
      %v2066 = vpop.f32.mrb[0].mxu0
      %2067 = vmatprep.mubr.bf16.mxu0 0
      %2068 = vmatmul.mubr.bf16.gmra.mrb[0].mxu0 %v1958
      %v2069 = vpop.f32.mrb[0].mxu0
      %v2070 = vadd.f32 0.0, %v2069
      %v2071 = vpop.f32.mrb[0].mxu0
      %v2072 = vpop.f32.mrb[0].mxu0
      %v2073 = vadd.f32 0.0, %v2072
      %v2074 = vpop.f32.mrb[0].mxu0
      %2075 = vmatprep.mubr.bf16.mxu0 0
      %2076 = vmatmul.mubr.bf16.gmra.mrb[0].mxu0 %v1961
      %v2077 = vpop.f32.mrb[0].mxu0
      %v2078 = vadd.f32 0.0, %v2077
      %v2079 = vpop.f32.mrb[0].mxu0
      %v2080 = vpop.f32.mrb[0].mxu0
      %v2081 = vadd.f32 0.0, %v2080
      %v2082 = vpop.f32.mrb[0].mxu0
      %2083 = vmatprep.mubr.bf16.mxu0 0
      %2084 = vmatmul.mubr.bf16.gmra.mrb[0].mxu0 %v1964
      %v2085 = vpop.f32.mrb[0].mxu0
      %v2086 = vadd.f32 0.0, %v2085
      %v2087 = vpop.f32.mrb[0].mxu0
      %v2088 = vpop.f32.mrb[0].mxu0
      %v2089 = vadd.f32 0.0, %v2088
      %v2090 = vpop.f32.mrb[0].mxu0
      %2091 = vmatprep.mubr.bf16.mxu0 0
      %2092 = vmatmul.mubr.bf16.gmra.mrb[0].mxu0 %v1967
      %v2093 = vpop.f32.mrb[0].mxu0
      %v2094 = vadd.f32 0.0, %v2093
      %v2095 = vpop.f32.mrb[0].mxu0
      %v2096 = vpop.f32.mrb[0].mxu0
      %v2097 = vadd.f32 0.0, %v2096
      %v2098 = vpop.f32.mrb[0].mxu0
      %2099 = vmatprep.mubr.bf16.mxu0 0
      %2100 = vmatmul.mubr.bf16.gmra.mrb[0].mxu0 %v1970
      %v2101 = vpop.f32.mrb[0].mxu0
      %v2102 = vadd.f32 0.0, %v2101
      %v2103 = vpop.f32.mrb[0].mxu0
      %v2104 = vpop.f32.mrb[0].mxu0
      %v2105 = vadd.f32 0.0, %v2104
      %v2106 = vpop.f32.mrb[0].mxu0
      %2107 = vmatprep.mubr.bf16.mxu0 0
      %2108 = vmatmul.mubr.bf16.gmra.mrb[0].mxu0 %v1973
      %v2109 = vpop.f32.mrb[0].mxu0
      %v2110 = vadd.f32 0.0, %v2109
      %v2111 = vpop.f32.mrb[0].mxu0
      %v2112 = vpop.f32.mrb[0].mxu0
      %v2113 = vadd.f32 0.0, %v2112
      %v2114 = vpop.f32.mrb[0].mxu0
      %2115 = vmatprep.mubr.bf16.mxu0 0
      %2116 = vmatmul.mubr.bf16.gmra.mrb[0].mxu0 %v1976
      %v2117 = vpop.f32.mrb[0].mxu0
      %v2118 = vadd.f32 0.0, %v2117
      %v2119 = vpop.f32.mrb[0].mxu0
      %v2120 = vpop.f32.mrb[0].mxu0
      %v2121 = vadd.f32 0.0, %v2120
      %v2122 = vpop.f32.mrb[0].mxu0
      %2123 = vmatprep.mubr.bf16.mxu0 0
      %2124 = vmatmul.mubr.bf16.gmra.mrb[0].mxu0 %v1979
      %v2125 = vpop.f32.mrb[0].mxu0
      %v2126 = vadd.f32 0.0, %v2125
      %v2127 = vpop.f32.mrb[0].mxu0
      %v2128 = vpop.f32.mrb[0].mxu0
      %v2129 = vadd.f32 0.0, %v2128
      %v2130 = vpop.f32.mrb[0].mxu0
      %2131 = vmatprep.mubr.bf16.mxu0 0
      %2132 = vmatmul.mubr.bf16.gmra.mrb[0].mxu0 %v1982
      %v2133 = vpop.f32.mrb[0].mxu0
      %v2134 = vadd.f32 0.0, %v2133
      %v2135 = vpop.f32.mrb[0].mxu0
      %v2136 = vpop.f32.mrb[0].mxu0
      %v2137 = vadd.f32 0.0, %v2136
      %v2138 = vpop.f32.mrb[0].mxu0
      %2139 = vmatprep.mubr.bf16.mxu0 0
      %2140 = vmatmul.mubr.bf16.gmra.mrb[0].mxu0 %v1985
      %v2141 = vpop.f32.mrb[0].mxu0
      %v2142 = vadd.f32 0.0, %v2141
      %v2143 = vpop.f32.mrb[0].mxu0
      %v2144 = vpop.f32.mrb[0].mxu0
      %v2145 = vadd.f32 0.0, %v2144
      %v2146 = vpop.f32.mrb[0].mxu0
      %2147 = vdwg.mxu0
      %v2148 = vadd.f32 %v1714, %v2022
      %v2149 = vadd.f32 %v1714, %v2025
      %v2150 = vadd.f32 %v1714, %v2030
      %v2151 = vadd.f32 %v1714, %v2033
      %v2152 = vadd.f32 %v1714, %v2038
      %v2153 = vadd.f32 %v1714, %v2041
      %v2154 = vadd.f32 %v1714, %v2046
      %v2155 = vadd.f32 %v1714, %v2049
      %v2156 = vadd.f32 %v1714, %v2054
      %v2157 = vadd.f32 %v1714, %v2057
      %v2158 = vadd.f32 %v1714, %v2062
      %v2159 = vadd.f32 %v1714, %v2065
      %v2160 = vadd.f32 %v1714, %v2070
      %v2161 = vadd.f32 %v1714, %v2073
      %v2162 = vadd.f32 %v1714, %v2078
      %v2163 = vadd.f32 %v1714, %v2081
      %v2164 = vadd.f32 %v1714, %v2086
      %v2165 = vadd.f32 %v1714, %v2089
      %v2166 = vadd.f32 %v1714, %v2094
      %v2167 = vadd.f32 %v1714, %v2097
      %v2168 = vadd.f32 %v1714, %v2102
      %v2169 = vadd.f32 %v1714, %v2105
      %v2170 = vadd.f32 %v1714, %v2110
      %v2171 = vadd.f32 %v1714, %v2113
      %v2172 = vadd.f32 %v1714, %v2118
      %v2173 = vadd.f32 %v1714, %v2121
      %v2174 = vadd.f32 %v1714, %v2126
      %v2175 = vadd.f32 %v1714, %v2129
      %v2176 = vadd.f32 %v1714, %v2134
      %v2177 = vadd.f32 %v1714, %v2137
      %v2178 = vadd.f32 %v1714, %v2142
      %v2179 = vadd.f32 %v1714, %v2145
      %vm2180 = vcmp.ge.s32.totalorder %v1699, 8
      %vm2181 = vcmp.ge.s32.totalorder %v1700, 8
      %vm2182 = vcmp.ge.s32.totalorder %v1701, 8
      %vm2183 = vcmp.ge.s32.totalorder %v1702, 8
      %vm2184 = vcmp.ge.s32.totalorder %v1703, 8
      %vm2185 = vcmp.ge.s32.totalorder %v1704, 8
      %vm2186 = vcmp.ge.s32.totalorder %v1705, 8
      %vm2187 = vcmp.ge.s32.totalorder %v1706, 8
      %v2188 = vld [vmem:[#allocation2 + $0x78] sm:$0xff]
      %v2189 = vld [vmem:[#allocation2 + $0x80] sm:$0xff]
      %v2190 = vld [vmem:[#allocation2 + $0x88] sm:$0xff]
      %v2191 = vld [vmem:[#allocation2 + $0x90] sm:$0xff]
      %v2192 = vld [vmem:[#allocation2 + $0x98] sm:$0xff]
      %v2193 = vld [vmem:[#allocation2 + $0xa0] sm:$0xff]
      %v2194 = vld [vmem:[#allocation2 + $0xa8] sm:$0xff]
      %v2195 = vld [vmem:[#allocation2 + $0xb0] sm:$0xff]
      %v2196 = vsel %vm2180, 1, 0
      %v2197 = vsel %vm2181, 1, 0
      %v2198 = vsel %vm2182, 1, 0
      %v2199 = vsel %vm2183, 1, 0
      %v2200 = vsel %vm2184, 1, 0
      %v2201 = vsel %vm2185, 1, 0
      %v2202 = vsel %vm2186, 1, 0
      %v2203 = vsel %vm2187, 1, 0
      %vm2204 = vcmp.eq.s32.totalorder %v2196, 1
      %vm2205 = vcmp.eq.s32.totalorder %v2197, 1
      %vm2206 = vcmp.eq.s32.totalorder %v2198, 1
      %vm2207 = vcmp.eq.s32.totalorder %v2199, 1
      %vm2208 = vcmp.eq.s32.totalorder %v2200, 1
      %vm2209 = vcmp.eq.s32.totalorder %v2201, 1
      %vm2210 = vcmp.eq.s32.totalorder %v2202, 1
      %vm2211 = vcmp.eq.s32.totalorder %v2203, 1
      %v2212 = vsel %vm2204, %v2188, 0.0
      %v2213 = vsel %vm2205, %v2189, 0.0
      %v2214 = vsel %vm2206, %v2190, 0.0
      %v2215 = vsel %vm2207, %v2191, 0.0
      %v2216 = vsel %vm2208, %v2192, 0.0
      %v2217 = vsel %vm2209, %v2193, 0.0
      %v2218 = vsel %vm2210, %v2194, 0.0
      %v2219 = vsel %vm2211, %v2195, 0.0
      %v2220 = vld [vmem:[#allocation2 + $0x178] sm:$0xff]
      %v2221 = vld [vmem:[#allocation2 + $0x180] sm:$0xff]
      %v2222 = vld [vmem:[#allocation2 + $0x188] sm:$0xff]
      %v2223 = vld [vmem:[#allocation2 + $0x190] sm:$0xff]
      %v2224 = vld [vmem:[#allocation2 + $0x198] sm:$0xff]
      %v2225 = vld [vmem:[#allocation2 + $0x1a0] sm:$0xff]
      %v2226 = vld [vmem:[#allocation2 + $0x1a8] sm:$0xff]
      %v2227 = vld [vmem:[#allocation2 + $0x1b0] sm:$0xff]
      %v2228 = vsel %vm2204, %v2220, 0.0
      %v2229 = vsel %vm2205, %v2221, 0.0
      %v2230 = vsel %vm2206, %v2222, 0.0
      %v2231 = vsel %vm2207, %v2223, 0.0
      %v2232 = vsel %vm2208, %v2224, 0.0
      %v2233 = vsel %vm2209, %v2225, 0.0
      %v2234 = vsel %vm2210, %v2226, 0.0
      %v2235 = vsel %vm2211, %v2227, 0.0
      %v2236 = vld [vmem:[#allocation2 + $0x278] sm:$0xff]
      %v2237 = vld [vmem:[#allocation2 + $0x280] sm:$0xff]
      %v2238 = vld [vmem:[#allocation2 + $0x288] sm:$0xff]
      %v2239 = vld [vmem:[#allocation2 + $0x290] sm:$0xff]
      %v2240 = vld [vmem:[#allocation2 + $0x298] sm:$0xff]
      %v2241 = vld [vmem:[#allocation2 + $0x2a0] sm:$0xff]
      %v2242 = vld [vmem:[#allocation2 + $0x2a8] sm:$0xff]
      %v2243 = vld [vmem:[#allocation2 + $0x2b0] sm:$0xff]
      %v2244 = vsel %vm2204, %v2236, 0.0
      %v2245 = vsel %vm2205, %v2237, 0.0
      %v2246 = vsel %vm2206, %v2238, 0.0
      %v2247 = vsel %vm2207, %v2239, 0.0
      %v2248 = vsel %vm2208, %v2240, 0.0
      %v2249 = vsel %vm2209, %v2241, 0.0
      %v2250 = vsel %vm2210, %v2242, 0.0
      %v2251 = vsel %vm2211, %v2243, 0.0
      %v2252 = vld [vmem:[#allocation2 + $0x378] sm:$0xff]
      %v2253 = vld [vmem:[#allocation2 + $0x380] sm:$0xff]
      %v2254 = vld [vmem:[#allocation2 + $0x388] sm:$0xff]
      %v2255 = vld [vmem:[#allocation2 + $0x390] sm:$0xff]
      %v2256 = vld [vmem:[#allocation2 + $0x398] sm:$0xff]
      %v2257 = vld [vmem:[#allocation2 + $0x3a0] sm:$0xff]
      %v2258 = vld [vmem:[#allocation2 + $0x3a8] sm:$0xff]
      %v2259 = vld [vmem:[#allocation2 + $0x3b0] sm:$0xff]
      %v2260 = vsel %vm2204, %v2252, 0.0
      %v2261 = vsel %vm2205, %v2253, 0.0
      %v2262 = vsel %vm2206, %v2254, 0.0
      %v2263 = vsel %vm2207, %v2255, 0.0
      %v2264 = vsel %vm2208, %v2256, 0.0
      %v2265 = vsel %vm2209, %v2257, 0.0
      %v2266 = vsel %vm2210, %v2258, 0.0
      %v2267 = vsel %vm2211, %v2259, 0.0
      %v2268 = vpack.c.bf16 %v2213, %v2212
      %v2269 = vpack.c.bf16 %v2215, %v2214
      %v2270 = vpack.c.bf16 %v2217, %v2216
      %v2271 = vpack.c.bf16 %v2219, %v2218
      %v2272 = vpack.c.bf16 %v2229, %v2228
      %v2273 = vpack.c.bf16 %v2231, %v2230
      %v2274 = vpack.c.bf16 %v2233, %v2232
      %v2275 = vpack.c.bf16 %v2235, %v2234
      %v2276 = vpack.c.bf16 %v2245, %v2244
      %v2277 = vpack.c.bf16 %v2247, %v2246
      %v2278 = vpack.c.bf16 %v2249, %v2248
      %v2279 = vpack.c.bf16 %v2251, %v2250
      %v2280 = vpack.c.bf16 %v2261, %v2260
      %v2281 = vpack.c.bf16 %v2263, %v2262
      %v2282 = vpack.c.bf16 %v2265, %v2264
      %v2283 = vpack.c.bf16 %v2267, %v2266
      %s2284 = scalar_lea.vmem %s3, 8
      %v2285 = vld [vmem:[%s2284] sm:$0xf]
      %v2286 = vld [vmem:[%s2284 + $0x4] sm:$0xf]
      %v2289 = vunpack.c.l.b16 %v2285
      %v2290 = vunpack.c.l.b16 %v2286
      %v2291 = vpack.c.b16 %v2290, %v2289
      %v2294 = vsel %vm1569, %v2268, 0
      %v2297 = vsel %vm1569, %v2269, 0
      %v2300 = vsel %vm1569, %v2270, 0
      %v2303 = vsel %vm1569, %v2271, 0
      %v2306 = vsel %vm1569, %v2272, 0
      %v2309 = vsel %vm1569, %v2273, 0
      %v2312 = vsel %vm1569, %v2274, 0
      %v2315 = vsel %vm1569, %v2275, 0
      %v2318 = vsel %vm1569, %v2276, 0
      %v2321 = vsel %vm1569, %v2277, 0
      %v2324 = vsel %vm1569, %v2278, 0
      %v2327 = vsel %vm1569, %v2279, 0
      %v2330 = vsel %vm1569, %v2280, 0
      %v2333 = vsel %vm1569, %v2281, 0
      %v2336 = vsel %vm1569, %v2282, 0
      %v2339 = vsel %vm1569, %v2283, 0
      %2341 = vmatprep.subr.bf16.mxu0 0
      %2342 = vmatpush1.bf16.msra.mxu0 %v2291
      %2343 = vmatprep.subr.bf16.mxu0 0
      %2344 = vmatpush1.bf16.msra.mxu0 0
      %2345 = vmatprep.subr.bf16.mxu0 0
      %2346 = vmatpush1.bf16.msra.mxu0 0
      %2347 = vmatprep.subr.bf16.mxu0 0
      %2348 = vmatpush1.bf16.msra.mxu0 0
      %2349 = vmatprep.subr.bf16.mxu0 0
      %2350 = vmatpush1.bf16.msra.mxu0 0
      %2351 = vmatprep.subr.bf16.mxu0 0
      %2352 = vmatpush1.bf16.msra.mxu0 0
      %2353 = vmatprep.subr.bf16.mxu0 0
      %2354 = vmatpush1.bf16.msra.mxu0 0
      %2355 = vmatprep.subr.bf16.mxu0 0
      %2356 = vmatpush1.bf16.msra.mxu0 0
      %2357 = vmatprep.subr.bf16.mxu0 0
      %2358 = vmatpush1.bf16.msra.mxu0 0
      %2359 = vmatprep.subr.bf16.mxu0 0
      %2360 = vmatpush1.bf16.msra.mxu0 0
      %2361 = vmatprep.subr.bf16.mxu0 0
      %2362 = vmatpush1.bf16.msra.mxu0 0
      %2363 = vmatprep.subr.bf16.mxu0 0
      %2364 = vmatpush1.bf16.msra.mxu0 0
      %2365 = vmatprep.subr.bf16.mxu0 0
      %2366 = vmatpush1.bf16.msra.mxu0 0
      %2367 = vmatprep.subr.bf16.mxu0 0
      %2368 = vmatpush1.bf16.msra.mxu0 0
      %2369 = vmatprep.subr.bf16.mxu0 0
      %2370 = vmatpush1.bf16.msra.mxu0 0
      %2371 = vmatprep.subr.bf16.mxu0 0
      %2372 = vmatpush1.bf16.msra.mxu0 0
      %2373 = vmatprep.mubr.bf16.mxu0 0
      %2374 = vmatmul.mubr.bf16.gmra.mrb[0].mxu0 %v2294
      %v2375 = vpop.f32.mrb[0].mxu0
      %v2376 = vadd.f32 0.0, %v2375
      %v2377 = vpop.f32.mrb[0].mxu0
      %v2378 = vpop.f32.mrb[0].mxu0
      %v2379 = vadd.f32 0.0, %v2378
      %v2380 = vpop.f32.mrb[0].mxu0
      %2381 = vmatprep.mubr.bf16.mxu0 0
      %2382 = vmatmul.mubr.bf16.gmra.mrb[0].mxu0 %v2297
      %v2383 = vpop.f32.mrb[0].mxu0
      %v2384 = vadd.f32 0.0, %v2383
      %v2385 = vpop.f32.mrb[0].mxu0
      %v2386 = vpop.f32.mrb[0].mxu0
      %v2387 = vadd.f32 0.0, %v2386
      %v2388 = vpop.f32.mrb[0].mxu0
      %2389 = vmatprep.mubr.bf16.mxu0 0
      %2390 = vmatmul.mubr.bf16.gmra.mrb[0].mxu0 %v2300
      %v2391 = vpop.f32.mrb[0].mxu0
      %v2392 = vadd.f32 0.0, %v2391
      %v2393 = vpop.f32.mrb[0].mxu0
      %v2394 = vpop.f32.mrb[0].mxu0
      %v2395 = vadd.f32 0.0, %v2394
      %v2396 = vpop.f32.mrb[0].mxu0
      %2397 = vmatprep.mubr.bf16.mxu0 0
      %2398 = vmatmul.mubr.bf16.gmra.mrb[0].mxu0 %v2303
      %v2399 = vpop.f32.mrb[0].mxu0
      %v2400 = vadd.f32 0.0, %v2399
      %v2401 = vpop.f32.mrb[0].mxu0
      %v2402 = vpop.f32.mrb[0].mxu0
      %v2403 = vadd.f32 0.0, %v2402
      %v2404 = vpop.f32.mrb[0].mxu0
      %2405 = vmatprep.mubr.bf16.mxu0 0
      %2406 = vmatmul.mubr.bf16.gmra.mrb[0].mxu0 %v2306
      %v2407 = vpop.f32.mrb[0].mxu0
      %v2408 = vadd.f32 0.0, %v2407
      %v2409 = vpop.f32.mrb[0].mxu0
      %v2410 = vpop.f32.mrb[0].mxu0
      %v2411 = vadd.f32 0.0, %v2410
      %v2412 = vpop.f32.mrb[0].mxu0
      %2413 = vmatprep.mubr.bf16.mxu0 0
      %2414 = vmatmul.mubr.bf16.gmra.mrb[0].mxu0 %v2309
      %v2415 = vpop.f32.mrb[0].mxu0
      %v2416 = vadd.f32 0.0, %v2415
      %v2417 = vpop.f32.mrb[0].mxu0
      %v2418 = vpop.f32.mrb[0].mxu0
      %v2419 = vadd.f32 0.0, %v2418
      %v2420 = vpop.f32.mrb[0].mxu0
      %2421 = vmatprep.mubr.bf16.mxu0 0
      %2422 = vmatmul.mubr.bf16.gmra.mrb[0].mxu0 %v2312
      %v2423 = vpop.f32.mrb[0].mxu0
      %v2424 = vadd.f32 0.0, %v2423
      %v2425 = vpop.f32.mrb[0].mxu0
      %v2426 = vpop.f32.mrb[0].mxu0
      %v2427 = vadd.f32 0.0, %v2426
      %v2428 = vpop.f32.mrb[0].mxu0
      %2429 = vmatprep.mubr.bf16.mxu0 0
      %2430 = vmatmul.mubr.bf16.gmra.mrb[0].mxu0 %v2315
      %v2431 = vpop.f32.mrb[0].mxu0
      %v2432 = vadd.f32 0.0, %v2431
      %v2433 = vpop.f32.mrb[0].mxu0
      %v2434 = vpop.f32.mrb[0].mxu0
      %v2435 = vadd.f32 0.0, %v2434
      %v2436 = vpop.f32.mrb[0].mxu0
      %2437 = vmatprep.mubr.bf16.mxu0 0
      %2438 = vmatmul.mubr.bf16.gmra.mrb[0].mxu0 %v2318
      %v2439 = vpop.f32.mrb[0].mxu0
      %v2440 = vadd.f32 0.0, %v2439
      %v2441 = vpop.f32.mrb[0].mxu0
      %v2442 = vpop.f32.mrb[0].mxu0
      %v2443 = vadd.f32 0.0, %v2442
      %v2444 = vpop.f32.mrb[0].mxu0
      %2445 = vmatprep.mubr.bf16.mxu0 0
      %2446 = vmatmul.mubr.bf16.gmra.mrb[0].mxu0 %v2321
      %v2447 = vpop.f32.mrb[0].mxu0
      %v2448 = vadd.f32 0.0, %v2447
      %v2449 = vpop.f32.mrb[0].mxu0
      %v2450 = vpop.f32.mrb[0].mxu0
      %v2451 = vadd.f32 0.0, %v2450
      %v2452 = vpop.f32.mrb[0].mxu0
      %2453 = vmatprep.mubr.bf16.mxu0 0
      %2454 = vmatmul.mubr.bf16.gmra.mrb[0].mxu0 %v2324
      %v2455 = vpop.f32.mrb[0].mxu0
      %v2456 = vadd.f32 0.0, %v2455
      %v2457 = vpop.f32.mrb[0].mxu0
      %v2458 = vpop.f32.mrb[0].mxu0
      %v2459 = vadd.f32 0.0, %v2458
      %v2460 = vpop.f32.mrb[0].mxu0
      %2461 = vmatprep.mubr.bf16.mxu0 0
      %2462 = vmatmul.mubr.bf16.gmra.mrb[0].mxu0 %v2327
      %v2463 = vpop.f32.mrb[0].mxu0
      %v2464 = vadd.f32 0.0, %v2463
      %v2465 = vpop.f32.mrb[0].mxu0
      %v2466 = vpop.f32.mrb[0].mxu0
      %v2467 = vadd.f32 0.0, %v2466
      %v2468 = vpop.f32.mrb[0].mxu0
      %2469 = vmatprep.mubr.bf16.mxu0 0
      %2470 = vmatmul.mubr.bf16.gmra.mrb[0].mxu0 %v2330
      %v2471 = vpop.f32.mrb[0].mxu0
      %v2472 = vadd.f32 0.0, %v2471
      %v2473 = vpop.f32.mrb[0].mxu0
      %v2474 = vpop.f32.mrb[0].mxu0
      %v2475 = vadd.f32 0.0, %v2474
      %v2476 = vpop.f32.mrb[0].mxu0
      %2477 = vmatprep.mubr.bf16.mxu0 0
      %2478 = vmatmul.mubr.bf16.gmra.mrb[0].mxu0 %v2333
      %v2479 = vpop.f32.mrb[0].mxu0
      %v2480 = vadd.f32 0.0, %v2479
      %v2481 = vpop.f32.mrb[0].mxu0
      %v2482 = vpop.f32.mrb[0].mxu0
      %v2483 = vadd.f32 0.0, %v2482
      %v2484 = vpop.f32.mrb[0].mxu0
      %2485 = vmatprep.mubr.bf16.mxu0 0
      %2486 = vmatmul.mubr.bf16.gmra.mrb[0].mxu0 %v2336
      %v2487 = vpop.f32.mrb[0].mxu0
      %v2488 = vadd.f32 0.0, %v2487
      %v2489 = vpop.f32.mrb[0].mxu0
      %v2490 = vpop.f32.mrb[0].mxu0
      %v2491 = vadd.f32 0.0, %v2490
      %v2492 = vpop.f32.mrb[0].mxu0
      %2493 = vmatprep.mubr.bf16.mxu0 0
      %2494 = vmatmul.mubr.bf16.gmra.mrb[0].mxu0 %v2339
      %v2495 = vpop.f32.mrb[0].mxu0
      %v2496 = vadd.f32 0.0, %v2495
      %v2497 = vpop.f32.mrb[0].mxu0
      %v2498 = vpop.f32.mrb[0].mxu0
      %v2499 = vadd.f32 0.0, %v2498
      %v2500 = vpop.f32.mrb[0].mxu0
      %2501 = vdwg.mxu0
      %v2502 = vadd.f32 %v2148, %v2376
      %v2503 = vadd.f32 %v2149, %v2379
      %v2504 = vadd.f32 %v2150, %v2384
      %v2505 = vadd.f32 %v2151, %v2387
      %v2506 = vadd.f32 %v2152, %v2392
      %v2507 = vadd.f32 %v2153, %v2395
      %v2508 = vadd.f32 %v2154, %v2400
      %v2509 = vadd.f32 %v2155, %v2403
      %v2510 = vadd.f32 %v2156, %v2408
      %v2511 = vadd.f32 %v2157, %v2411
      %v2512 = vadd.f32 %v2158, %v2416
      %v2513 = vadd.f32 %v2159, %v2419
      %v2514 = vadd.f32 %v2160, %v2424
      %v2515 = vadd.f32 %v2161, %v2427
      %v2516 = vadd.f32 %v2162, %v2432
      %v2517 = vadd.f32 %v2163, %v2435
      %v2518 = vadd.f32 %v2164, %v2440
      %v2519 = vadd.f32 %v2165, %v2443
      %v2520 = vadd.f32 %v2166, %v2448
      %v2521 = vadd.f32 %v2167, %v2451
      %v2522 = vadd.f32 %v2168, %v2456
      %v2523 = vadd.f32 %v2169, %v2459
      %v2524 = vadd.f32 %v2170, %v2464
      %v2525 = vadd.f32 %v2171, %v2467
      %v2526 = vadd.f32 %v2172, %v2472
      %v2527 = vadd.f32 %v2173, %v2475
      %v2528 = vadd.f32 %v2174, %v2480
      %v2529 = vadd.f32 %v2175, %v2483
      %v2530 = vadd.f32 %v2176, %v2488
      %v2531 = vadd.f32 %v2177, %v2491
      %v2532 = vadd.f32 %v2178, %v2496
      %v2533 = vadd.f32 %v2179, %v2499
      %v2534 = vld [vmem:[#allocation2 + $0xb8] sm:$0xff]
      %v2535 = vld [vmem:[#allocation2 + $0xc0] sm:$0xff]
      %v2536 = vld [vmem:[#allocation2 + $0xc8] sm:$0xff]
      %v2537 = vld [vmem:[#allocation2 + $0xd0] sm:$0xff]
      %v2538 = vld [vmem:[#allocation2 + $0xd8] sm:$0xff]
      %v2539 = vld [vmem:[#allocation2 + $0xe0] sm:$0xff]
      %v2540 = vld [vmem:[#allocation2 + $0xe8] sm:$0xff]
      %v2541 = vld [vmem:[#allocation2 + $0xf0] sm:$0xff]
      %v2542 = vsel %vm2204, %v2534, 0.0
      %v2543 = vsel %vm2205, %v2535, 0.0
      %v2544 = vsel %vm2206, %v2536, 0.0
      %v2545 = vsel %vm2207, %v2537, 0.0
      %v2546 = vsel %vm2208, %v2538, 0.0
      %v2547 = vsel %vm2209, %v2539, 0.0
      %v2548 = vsel %vm2210, %v2540, 0.0
      %v2549 = vsel %vm2211, %v2541, 0.0
      %v2550 = vld [vmem:[#allocation2 + $0x1b8] sm:$0xff]
      %v2551 = vld [vmem:[#allocation2 + $0x1c0] sm:$0xff]
      %v2552 = vld [vmem:[#allocation2 + $0x1c8] sm:$0xff]
      %v2553 = vld [vmem:[#allocation2 + $0x1d0] sm:$0xff]
      %v2554 = vld [vmem:[#allocation2 + $0x1d8] sm:$0xff]
      %v2555 = vld [vmem:[#allocation2 + $0x1e0] sm:$0xff]
      %v2556 = vld [vmem:[#allocation2 + $0x1e8] sm:$0xff]
      %v2557 = vld [vmem:[#allocation2 + $0x1f0] sm:$0xff]
      %v2558 = vsel %vm2204, %v2550, 0.0
      %v2559 = vsel %vm2205, %v2551, 0.0
      %v2560 = vsel %vm2206, %v2552, 0.0
      %v2561 = vsel %vm2207, %v2553, 0.0
      %v2562 = vsel %vm2208, %v2554, 0.0
      %v2563 = vsel %vm2209, %v2555, 0.0
      %v2564 = vsel %vm2210, %v2556, 0.0
      %v2565 = vsel %vm2211, %v2557, 0.0
      %v2566 = vld [vmem:[#allocation2 + $0x2b8] sm:$0xff]
      %v2567 = vld [vmem:[#allocation2 + $0x2c0] sm:$0xff]
      %v2568 = vld [vmem:[#allocation2 + $0x2c8] sm:$0xff]
      %v2569 = vld [vmem:[#allocation2 + $0x2d0] sm:$0xff]
      %v2570 = vld [vmem:[#allocation2 + $0x2d8] sm:$0xff]
      %v2571 = vld [vmem:[#allocation2 + $0x2e0] sm:$0xff]
      %v2572 = vld [vmem:[#allocation2 + $0x2e8] sm:$0xff]
      %v2573 = vld [vmem:[#allocation2 + $0x2f0] sm:$0xff]
      %v2574 = vsel %vm2204, %v2566, 0.0
      %v2575 = vsel %vm2205, %v2567, 0.0
      %v2576 = vsel %vm2206, %v2568, 0.0
      %v2577 = vsel %vm2207, %v2569, 0.0
      %v2578 = vsel %vm2208, %v2570, 0.0
      %v2579 = vsel %vm2209, %v2571, 0.0
      %v2580 = vsel %vm2210, %v2572, 0.0
      %v2581 = vsel %vm2211, %v2573, 0.0
      %v2582 = vld [vmem:[#allocation2 + $0x3b8] sm:$0xff]
      %v2583 = vld [vmem:[#allocation2 + $0x3c0] sm:$0xff]
      %v2584 = vld [vmem:[#allocation2 + $0x3c8] sm:$0xff]
      %v2585 = vld [vmem:[#allocation2 + $0x3d0] sm:$0xff]
      %v2586 = vld [vmem:[#allocation2 + $0x3d8] sm:$0xff]
      %v2587 = vld [vmem:[#allocation2 + $0x3e0] sm:$0xff]
      %v2588 = vld [vmem:[#allocation2 + $0x3e8] sm:$0xff]
      %v2589 = vld [vmem:[#allocation2 + $0x3f0] sm:$0xff]
      %v2590 = vsel %vm2204, %v2582, 0.0
      %v2591 = vsel %vm2205, %v2583, 0.0
      %v2592 = vsel %vm2206, %v2584, 0.0
      %v2593 = vsel %vm2207, %v2585, 0.0
      %v2594 = vsel %vm2208, %v2586, 0.0
      %v2595 = vsel %vm2209, %v2587, 0.0
      %v2596 = vsel %vm2210, %v2588, 0.0
      %v2597 = vsel %vm2211, %v2589, 0.0
      %v2598 = vpack.c.bf16 %v2543, %v2542
      %v2599 = vpack.c.bf16 %v2545, %v2544
      %v2600 = vpack.c.bf16 %v2547, %v2546
      %v2601 = vpack.c.bf16 %v2549, %v2548
      %v2602 = vpack.c.bf16 %v2559, %v2558
      %v2603 = vpack.c.bf16 %v2561, %v2560
      %v2604 = vpack.c.bf16 %v2563, %v2562
      %v2605 = vpack.c.bf16 %v2565, %v2564
      %v2606 = vpack.c.bf16 %v2575, %v2574
      %v2607 = vpack.c.bf16 %v2577, %v2576
      %v2608 = vpack.c.bf16 %v2579, %v2578
      %v2609 = vpack.c.bf16 %v2581, %v2580
      %v2610 = vpack.c.bf16 %v2591, %v2590
      %v2611 = vpack.c.bf16 %v2593, %v2592
      %v2612 = vpack.c.bf16 %v2595, %v2594
      %v2613 = vpack.c.bf16 %v2597, %v2596
      %s2614 = scalar_lea.vmem %s3, 16
      %v2615 = vld [vmem:[%s2614] sm:$0xf]
      %v2616 = vld [vmem:[%s2614 + $0x4] sm:$0xf]
      %v2619 = vunpack.c.l.b16 %v2615
      %v2620 = vunpack.c.l.b16 %v2616
      %v2621 = vpack.c.b16 %v2620, %v2619
      %v2624 = vsel %vm1569, %v2598, 0
      %v2627 = vsel %vm1569, %v2599, 0
      %v2630 = vsel %vm1569, %v2600, 0
      %v2633 = vsel %vm1569, %v2601, 0
      %v2636 = vsel %vm1569, %v2602, 0
      %v2639 = vsel %vm1569, %v2603, 0
      %v2642 = vsel %vm1569, %v2604, 0
      %v2645 = vsel %vm1569, %v2605, 0
      %v2648 = vsel %vm1569, %v2606, 0
      %v2651 = vsel %vm1569, %v2607, 0
      %v2654 = vsel %vm1569, %v2608, 0
      %v2657 = vsel %vm1569, %v2609, 0
      %v2660 = vsel %vm1569, %v2610, 0
      %v2663 = vsel %vm1569, %v2611, 0
      %v2666 = vsel %vm1569, %v2612, 0
      %v2669 = vsel %vm1569, %v2613, 0
      %2671 = vmatprep.subr.bf16.mxu0 0
      %2672 = vmatpush1.bf16.msra.mxu0 %v2621
      %2673 = vmatprep.subr.bf16.mxu0 0
      %2674 = vmatpush1.bf16.msra.mxu0 0
      %2675 = vmatprep.subr.bf16.mxu0 0
      %2676 = vmatpush1.bf16.msra.mxu0 0
      %2677 = vmatprep.subr.bf16.mxu0 0
      %2678 = vmatpush1.bf16.msra.mxu0 0
      %2679 = vmatprep.subr.bf16.mxu0 0
      %2680 = vmatpush1.bf16.msra.mxu0 0
      %2681 = vmatprep.subr.bf16.mxu0 0
      %2682 = vmatpush1.bf16.msra.mxu0 0
      %2683 = vmatprep.subr.bf16.mxu0 0
      %2684 = vmatpush1.bf16.msra.mxu0 0
      %2685 = vmatprep.subr.bf16.mxu0 0
      %2686 = vmatpush1.bf16.msra.mxu0 0
      %2687 = vmatprep.subr.bf16.mxu0 0
      %2688 = vmatpush1.bf16.msra.mxu0 0
      %2689 = vmatprep.subr.bf16.mxu0 0
      %2690 = vmatpush1.bf16.msra.mxu0 0
      %2691 = vmatprep.subr.bf16.mxu0 0
      %2692 = vmatpush1.bf16.msra.mxu0 0
      %2693 = vmatprep.subr.bf16.mxu0 0
      %2694 = vmatpush1.bf16.msra.mxu0 0
      %2695 = vmatprep.subr.bf16.mxu0 0
      %2696 = vmatpush1.bf16.msra.mxu0 0
      %2697 = vmatprep.subr.bf16.mxu0 0
      %2698 = vmatpush1.bf16.msra.mxu0 0
      %2699 = vmatprep.subr.bf16.mxu0 0
      %2700 = vmatpush1.bf16.msra.mxu0 0
      %2701 = vmatprep.subr.bf16.mxu0 0
      %2702 = vmatpush1.bf16.msra.mxu0 0
      %2703 = vmatprep.mubr.bf16.mxu0 0
      %2704 = vmatmul.mubr.bf16.gmra.mrb[0].mxu0 %v2624
      %v2705 = vpop.f32.mrb[0].mxu0
      %v2706 = vadd.f32 0.0, %v2705
      %v2707 = vpop.f32.mrb[0].mxu0
      %v2708 = vpop.f32.mrb[0].mxu0
      %v2709 = vadd.f32 0.0, %v2708
      %v2710 = vpop.f32.mrb[0].mxu0
      %2711 = vmatprep.mubr.bf16.mxu0 0
      %2712 = vmatmul.mubr.bf16.gmra.mrb[0].mxu0 %v2627
      %v2713 = vpop.f32.mrb[0].mxu0
      %v2714 = vadd.f32 0.0, %v2713
      %v2715 = vpop.f32.mrb[0].mxu0
      %v2716 = vpop.f32.mrb[0].mxu0
      %v2717 = vadd.f32 0.0, %v2716
      %v2718 = vpop.f32.mrb[0].mxu0
      %2719 = vmatprep.mubr.bf16.mxu0 0
      %2720 = vmatmul.mubr.bf16.gmra.mrb[0].mxu0 %v2630
      %v2721 = vpop.f32.mrb[0].mxu0
      %v2722 = vadd.f32 0.0, %v2721
      %v2723 = vpop.f32.mrb[0].mxu0
      %v2724 = vpop.f32.mrb[0].mxu0
      %v2725 = vadd.f32 0.0, %v2724
      %v2726 = vpop.f32.mrb[0].mxu0
      %2727 = vmatprep.mubr.bf16.mxu0 0
      %2728 = vmatmul.mubr.bf16.gmra.mrb[0].mxu0 %v2633
      %v2729 = vpop.f32.mrb[0].mxu0
      %v2730 = vadd.f32 0.0, %v2729
      %v2731 = vpop.f32.mrb[0].mxu0
      %v2732 = vpop.f32.mrb[0].mxu0
      %v2733 = vadd.f32 0.0, %v2732
      %v2734 = vpop.f32.mrb[0].mxu0
      %2735 = vmatprep.mubr.bf16.mxu0 0
      %2736 = vmatmul.mubr.bf16.gmra.mrb[0].mxu0 %v2636
      %v2737 = vpop.f32.mrb[0].mxu0
      %v2738 = vadd.f32 0.0, %v2737
      %v2739 = vpop.f32.mrb[0].mxu0
      %v2740 = vpop.f32.mrb[0].mxu0
      %v2741 = vadd.f32 0.0, %v2740
      %v2742 = vpop.f32.mrb[0].mxu0
      %2743 = vmatprep.mubr.bf16.mxu0 0
      %2744 = vmatmul.mubr.bf16.gmra.mrb[0].mxu0 %v2639
      %v2745 = vpop.f32.mrb[0].mxu0
      %v2746 = vadd.f32 0.0, %v2745
      %v2747 = vpop.f32.mrb[0].mxu0
      %v2748 = vpop.f32.mrb[0].mxu0
      %v2749 = vadd.f32 0.0, %v2748
      %v2750 = vpop.f32.mrb[0].mxu0
      %2751 = vmatprep.mubr.bf16.mxu0 0
      %2752 = vmatmul.mubr.bf16.gmra.mrb[0].mxu0 %v2642
      %v2753 = vpop.f32.mrb[0].mxu0
      %v2754 = vadd.f32 0.0, %v2753
      %v2755 = vpop.f32.mrb[0].mxu0
      %v2756 = vpop.f32.mrb[0].mxu0
      %v2757 = vadd.f32 0.0, %v2756
      %v2758 = vpop.f32.mrb[0].mxu0
      %2759 = vmatprep.mubr.bf16.mxu0 0
      %2760 = vmatmul.mubr.bf16.gmra.mrb[0].mxu0 %v2645
      %v2761 = vpop.f32.mrb[0].mxu0
      %v2762 = vadd.f32 0.0, %v2761
      %v2763 = vpop.f32.mrb[0].mxu0
      %v2764 = vpop.f32.mrb[0].mxu0
      %v2765 = vadd.f32 0.0, %v2764
      %v2766 = vpop.f32.mrb[0].mxu0
      %2767 = vmatprep.mubr.bf16.mxu0 0
      %2768 = vmatmul.mubr.bf16.gmra.mrb[0].mxu0 %v2648
      %v2769 = vpop.f32.mrb[0].mxu0
      %v2770 = vadd.f32 0.0, %v2769
      %v2771 = vpop.f32.mrb[0].mxu0
      %v2772 = vpop.f32.mrb[0].mxu0
      %v2773 = vadd.f32 0.0, %v2772
      %v2774 = vpop.f32.mrb[0].mxu0
      %2775 = vmatprep.mubr.bf16.mxu0 0
      %2776 = vmatmul.mubr.bf16.gmra.mrb[0].mxu0 %v2651
      %v2777 = vpop.f32.mrb[0].mxu0
      %v2778 = vadd.f32 0.0, %v2777
      %v2779 = vpop.f32.mrb[0].mxu0
      %v2780 = vpop.f32.mrb[0].mxu0
      %v2781 = vadd.f32 0.0, %v2780
      %v2782 = vpop.f32.mrb[0].mxu0
      %2783 = vmatprep.mubr.bf16.mxu0 0
      %2784 = vmatmul.mubr.bf16.gmra.mrb[0].mxu0 %v2654
      %v2785 = vpop.f32.mrb[0].mxu0
      %v2786 = vadd.f32 0.0, %v2785
      %v2787 = vpop.f32.mrb[0].mxu0
      %v2788 = vpop.f32.mrb[0].mxu0
      %v2789 = vadd.f32 0.0, %v2788
      %v2790 = vpop.f32.mrb[0].mxu0
      %2791 = vmatprep.mubr.bf16.mxu0 0
      %2792 = vmatmul.mubr.bf16.gmra.mrb[0].mxu0 %v2657
      %v2793 = vpop.f32.mrb[0].mxu0
      %v2794 = vadd.f32 0.0, %v2793
      %v2795 = vpop.f32.mrb[0].mxu0
      %v2796 = vpop.f32.mrb[0].mxu0
      %v2797 = vadd.f32 0.0, %v2796
      %v2798 = vpop.f32.mrb[0].mxu0
      %2799 = vmatprep.mubr.bf16.mxu0 0
      %2800 = vmatmul.mubr.bf16.gmra.mrb[0].mxu0 %v2660
      %v2801 = vpop.f32.mrb[0].mxu0
      %v2802 = vadd.f32 0.0, %v2801
      %v2803 = vpop.f32.mrb[0].mxu0
      %v2804 = vpop.f32.mrb[0].mxu0
      %v2805 = vadd.f32 0.0, %v2804
      %v2806 = vpop.f32.mrb[0].mxu0
      %2807 = vmatprep.mubr.bf16.mxu0 0
      %2808 = vmatmul.mubr.bf16.gmra.mrb[0].mxu0 %v2663
      %v2809 = vpop.f32.mrb[0].mxu0
      %v2810 = vadd.f32 0.0, %v2809
      %v2811 = vpop.f32.mrb[0].mxu0
      %v2812 = vpop.f32.mrb[0].mxu0
      %v2813 = vadd.f32 0.0, %v2812
      %v2814 = vpop.f32.mrb[0].mxu0
      %2815 = vmatprep.mubr.bf16.mxu0 0
      %2816 = vmatmul.mubr.bf16.gmra.mrb[0].mxu0 %v2666
      %v2817 = vpop.f32.mrb[0].mxu0
      %v2818 = vadd.f32 0.0, %v2817
      %v2819 = vpop.f32.mrb[0].mxu0
      %v2820 = vpop.f32.mrb[0].mxu0
      %v2821 = vadd.f32 0.0, %v2820
      %v2822 = vpop.f32.mrb[0].mxu0
      %2823 = vmatprep.mubr.bf16.mxu0 0
      %2824 = vmatmul.mubr.bf16.gmra.mrb[0].mxu0 %v2669
      %v2825 = vpop.f32.mrb[0].mxu0
      %v2826 = vadd.f32 0.0, %v2825
      %v2827 = vpop.f32.mrb[0].mxu0
      %v2828 = vpop.f32.mrb[0].mxu0
      %v2829 = vadd.f32 0.0, %v2828
      %v2830 = vpop.f32.mrb[0].mxu0
      %2831 = vdwg.mxu0
      %v2832 = vadd.f32 %v2502, %v2706
      %v2833 = vadd.f32 %v2503, %v2709
      %v2834 = vadd.f32 %v2504, %v2714
      %v2835 = vadd.f32 %v2505, %v2717
      %v2836 = vadd.f32 %v2506, %v2722
      %v2837 = vadd.f32 %v2507, %v2725
      %v2838 = vadd.f32 %v2508, %v2730
      %v2839 = vadd.f32 %v2509, %v2733
      %v2840 = vadd.f32 %v2510, %v2738
      %v2841 = vadd.f32 %v2511, %v2741
      %v2842 = vadd.f32 %v2512, %v2746
      %v2843 = vadd.f32 %v2513, %v2749
      %v2844 = vadd.f32 %v2514, %v2754
      %v2845 = vadd.f32 %v2515, %v2757
      %v2846 = vadd.f32 %v2516, %v2762
      %v2847 = vadd.f32 %v2517, %v2765
      %v2848 = vadd.f32 %v2518, %v2770
      %v2849 = vadd.f32 %v2519, %v2773
      %v2850 = vadd.f32 %v2520, %v2778
      %v2851 = vadd.f32 %v2521, %v2781
      %v2852 = vadd.f32 %v2522, %v2786
      %v2853 = vadd.f32 %v2523, %v2789
      %v2854 = vadd.f32 %v2524, %v2794
      %v2855 = vadd.f32 %v2525, %v2797
      %v2856 = vadd.f32 %v2526, %v2802
      %v2857 = vadd.f32 %v2527, %v2805
      %v2858 = vadd.f32 %v2528, %v2810
      %v2859 = vadd.f32 %v2529, %v2813
      %v2860 = vadd.f32 %v2530, %v2818
      %v2861 = vadd.f32 %v2531, %v2821
      %v2862 = vadd.f32 %v2532, %v2826
      %v2863 = vadd.f32 %v2533, %v2829
      %vm2864 = vcmp.ge.s32.totalorder %v1699, 1
      %vm2865 = vcmp.ge.s32.totalorder %v1700, 1
      %vm2866 = vcmp.ge.s32.totalorder %v1701, 1
      %vm2867 = vcmp.ge.s32.totalorder %v1702, 1
      %vm2868 = vcmp.ge.s32.totalorder %v1703, 1
      %vm2869 = vcmp.ge.s32.totalorder %v1704, 1
      %vm2870 = vcmp.ge.s32.totalorder %v1705, 1
      %vm2871 = vcmp.ge.s32.totalorder %v1706, 1
      %vm2872 = vmand %vm2864, %vm1819
      %vm2873 = vmand %vm2865, %vm1820
      %vm2874 = vmand %vm2866, %vm1821
      %vm2875 = vmand %vm2867, %vm1822
      %vm2876 = vmand %vm2868, %vm1823
      %vm2877 = vmand %vm2869, %vm1824
      %vm2878 = vmand %vm2870, %vm1825
      %vm2879 = vmand %vm2871, %vm1826
      %v2880 = vld [vmem:[#allocation2 + $0x3f] sm:$0xff]
      %v2881 = vld [vmem:[#allocation2 + $0x47] sm:$0xff]
      %v2882 = vld [vmem:[#allocation2 + $0x4f] sm:$0xff]
      %v2883 = vld [vmem:[#allocation2 + $0x57] sm:$0xff]
      %v2884 = vld [vmem:[#allocation2 + $0x5f] sm:$0xff]
      %v2885 = vld [vmem:[#allocation2 + $0x67] sm:$0xff]
      %v2886 = vld [vmem:[#allocation2 + $0x6f] sm:$0xff]
      %v2887 = vld [vmem:[#allocation2 + $0x77] sm:$0xff]
      %v2888 = vsel %vm2872, 1, 0
      %v2889 = vsel %vm2873, 1, 0
      %v2890 = vsel %vm2874, 1, 0
      %v2891 = vsel %vm2875, 1, 0
      %v2892 = vsel %vm2876, 1, 0
      %v2893 = vsel %vm2877, 1, 0
      %v2894 = vsel %vm2878, 1, 0
      %v2895 = vsel %vm2879, 1, 0
      %vm2896 = vcmp.eq.s32.totalorder %v2888, 1
      %vm2897 = vcmp.eq.s32.totalorder %v2889, 1
      %vm2898 = vcmp.eq.s32.totalorder %v2890, 1
      %vm2899 = vcmp.eq.s32.totalorder %v2891, 1
      %vm2900 = vcmp.eq.s32.totalorder %v2892, 1
      %vm2901 = vcmp.eq.s32.totalorder %v2893, 1
      %vm2902 = vcmp.eq.s32.totalorder %v2894, 1
      %vm2903 = vcmp.eq.s32.totalorder %v2895, 1
      %v2904 = vsel %vm2896, %v2880, 0.0
      %v2905 = vsel %vm2897, %v2881, 0.0
      %v2906 = vsel %vm2898, %v2882, 0.0
      %v2907 = vsel %vm2899, %v2883, 0.0
      %v2908 = vsel %vm2900, %v2884, 0.0
      %v2909 = vsel %vm2901, %v2885, 0.0
      %v2910 = vsel %vm2902, %v2886, 0.0
      %v2911 = vsel %vm2903, %v2887, 0.0
      %v2912 = vld [vmem:[#allocation2 + $0x13f] sm:$0xff]
      %v2913 = vld [vmem:[#allocation2 + $0x147] sm:$0xff]
      %v2914 = vld [vmem:[#allocation2 + $0x14f] sm:$0xff]
      %v2915 = vld [vmem:[#allocation2 + $0x157] sm:$0xff]
      %v2916 = vld [vmem:[#allocation2 + $0x15f] sm:$0xff]
      %v2917 = vld [vmem:[#allocation2 + $0x167] sm:$0xff]
      %v2918 = vld [vmem:[#allocation2 + $0x16f] sm:$0xff]
      %v2919 = vld [vmem:[#allocation2 + $0x177] sm:$0xff]
      %v2920 = vsel %vm2896, %v2912, 0.0
      %v2921 = vsel %vm2897, %v2913, 0.0
      %v2922 = vsel %vm2898, %v2914, 0.0
      %v2923 = vsel %vm2899, %v2915, 0.0
      %v2924 = vsel %vm2900, %v2916, 0.0
      %v2925 = vsel %vm2901, %v2917, 0.0
      %v2926 = vsel %vm2902, %v2918, 0.0
      %v2927 = vsel %vm2903, %v2919, 0.0
      %v2928 = vld [vmem:[#allocation2 + $0x23f] sm:$0xff]
      %v2929 = vld [vmem:[#allocation2 + $0x247] sm:$0xff]
      %v2930 = vld [vmem:[#allocation2 + $0x24f] sm:$0xff]
      %v2931 = vld [vmem:[#allocation2 + $0x257] sm:$0xff]
      %v2932 = vld [vmem:[#allocation2 + $0x25f] sm:$0xff]
      %v2933 = vld [vmem:[#allocation2 + $0x267] sm:$0xff]
      %v2934 = vld [vmem:[#allocation2 + $0x26f] sm:$0xff]
      %v2935 = vld [vmem:[#allocation2 + $0x277] sm:$0xff]
      %v2936 = vsel %vm2896, %v2928, 0.0
      %v2937 = vsel %vm2897, %v2929, 0.0
      %v2938 = vsel %vm2898, %v2930, 0.0
      %v2939 = vsel %vm2899, %v2931, 0.0
      %v2940 = vsel %vm2900, %v2932, 0.0
      %v2941 = vsel %vm2901, %v2933, 0.0
      %v2942 = vsel %vm2902, %v2934, 0.0
      %v2943 = vsel %vm2903, %v2935, 0.0
      %v2944 = vld [vmem:[#allocation2 + $0x33f] sm:$0xff]
      %v2945 = vld [vmem:[#allocation2 + $0x347] sm:$0xff]
      %v2946 = vld [vmem:[#allocation2 + $0x34f] sm:$0xff]
      %v2947 = vld [vmem:[#allocation2 + $0x357] sm:$0xff]
      %v2948 = vld [vmem:[#allocation2 + $0x35f] sm:$0xff]
      %v2949 = vld [vmem:[#allocation2 + $0x367] sm:$0xff]
      %v2950 = vld [vmem:[#allocation2 + $0x36f] sm:$0xff]
      %v2951 = vld [vmem:[#allocation2 + $0x377] sm:$0xff]
      %v2952 = vsel %vm2896, %v2944, 0.0
      %v2953 = vsel %vm2897, %v2945, 0.0
      %v2954 = vsel %vm2898, %v2946, 0.0
      %v2955 = vsel %vm2899, %v2947, 0.0
      %v2956 = vsel %vm2900, %v2948, 0.0
      %v2957 = vsel %vm2901, %v2949, 0.0
      %v2958 = vsel %vm2902, %v2950, 0.0
      %v2959 = vsel %vm2903, %v2951, 0.0
      %v2960 = vpack.c.bf16 %v2905, %v2904
      %v2961 = vpack.c.bf16 %v2907, %v2906
      %v2962 = vpack.c.bf16 %v2909, %v2908
      %v2963 = vpack.c.bf16 %v2911, %v2910
      %v2964 = vpack.c.bf16 %v2921, %v2920
      %v2965 = vpack.c.bf16 %v2923, %v2922
      %v2966 = vpack.c.bf16 %v2925, %v2924
      %v2967 = vpack.c.bf16 %v2927, %v2926
      %v2968 = vpack.c.bf16 %v2937, %v2936
      %v2969 = vpack.c.bf16 %v2939, %v2938
      %v2970 = vpack.c.bf16 %v2941, %v2940
      %v2971 = vpack.c.bf16 %v2943, %v2942
      %v2972 = vpack.c.bf16 %v2953, %v2952
      %v2973 = vpack.c.bf16 %v2955, %v2954
      %v2974 = vpack.c.bf16 %v2957, %v2956
      %v2975 = vpack.c.bf16 %v2959, %v2958
      %s2976 = scalar_lea.vmem %s3, 24
      %v2977 = vld [vmem:[%s2976] sm:$0xf]
      %v2978 = vld [vmem:[%s2976 + $0x4] sm:$0xf]
      %v2981 = vunpack.c.l.b16 %v2977
      %v2982 = vunpack.c.l.b16 %v2978
      %v2983 = vpack.c.b16 %v2982, %v2981
      %v2986 = vsel %vm1569, %v2960, 0
      %v2989 = vsel %vm1569, %v2961, 0
      %v2992 = vsel %vm1569, %v2962, 0
      %v2995 = vsel %vm1569, %v2963, 0
      %v2998 = vsel %vm1569, %v2964, 0
      %v3001 = vsel %vm1569, %v2965, 0
      %v3004 = vsel %vm1569, %v2966, 0
      %v3007 = vsel %vm1569, %v2967, 0
      %v3010 = vsel %vm1569, %v2968, 0
      %v3013 = vsel %vm1569, %v2969, 0
      %v3016 = vsel %vm1569, %v2970, 0
      %v3019 = vsel %vm1569, %v2971, 0
      %v3022 = vsel %vm1569, %v2972, 0
      %v3025 = vsel %vm1569, %v2973, 0
      %v3028 = vsel %vm1569, %v2974, 0
      %v3031 = vsel %vm1569, %v2975, 0
      %3033 = vmatprep.subr.bf16.mxu0 0
      %3034 = vmatpush1.bf16.msra.mxu0 %v2983
      %3035 = vmatprep.subr.bf16.mxu0 0
      %3036 = vmatpush1.bf16.msra.mxu0 0
      %3037 = vmatprep.subr.bf16.mxu0 0
      %3038 = vmatpush1.bf16.msra.mxu0 0
      %3039 = vmatprep.subr.bf16.mxu0 0
      %3040 = vmatpush1.bf16.msra.mxu0 0
      %3041 = vmatprep.subr.bf16.mxu0 0
      %3042 = vmatpush1.bf16.msra.mxu0 0
      %3043 = vmatprep.subr.bf16.mxu0 0
      %3044 = vmatpush1.bf16.msra.mxu0 0
      %3045 = vmatprep.subr.bf16.mxu0 0
      %3046 = vmatpush1.bf16.msra.mxu0 0
      %3047 = vmatprep.subr.bf16.mxu0 0
      %3048 = vmatpush1.bf16.msra.mxu0 0
      %3049 = vmatprep.subr.bf16.mxu0 0
      %3050 = vmatpush1.bf16.msra.mxu0 0
      %3051 = vmatprep.subr.bf16.mxu0 0
      %3052 = vmatpush1.bf16.msra.mxu0 0
      %3053 = vmatprep.subr.bf16.mxu0 0
      %3054 = vmatpush1.bf16.msra.mxu0 0
      %3055 = vmatprep.subr.bf16.mxu0 0
      %3056 = vmatpush1.bf16.msra.mxu0 0
      %3057 = vmatprep.subr.bf16.mxu0 0
      %3058 = vmatpush1.bf16.msra.mxu0 0
      %3059 = vmatprep.subr.bf16.mxu0 0
      %3060 = vmatpush1.bf16.msra.mxu0 0
      %3061 = vmatprep.subr.bf16.mxu0 0
      %3062 = vmatpush1.bf16.msra.mxu0 0
      %3063 = vmatprep.subr.bf16.mxu0 0
      %3064 = vmatpush1.bf16.msra.mxu0 0
      %3065 = vmatprep.mubr.bf16.mxu0 0
      %3066 = vmatmul.mubr.bf16.gmra.mrb[0].mxu0 %v2986
      %v3067 = vpop.f32.mrb[0].mxu0
      %v3068 = vadd.f32 0.0, %v3067
      %v3069 = vpop.f32.mrb[0].mxu0
      %v3070 = vpop.f32.mrb[0].mxu0
      %v3071 = vadd.f32 0.0, %v3070
      %v3072 = vpop.f32.mrb[0].mxu0
      %3073 = vmatprep.mubr.bf16.mxu0 0
      %3074 = vmatmul.mubr.bf16.gmra.mrb[0].mxu0 %v2989
      %v3075 = vpop.f32.mrb[0].mxu0
      %v3076 = vadd.f32 0.0, %v3075
      %v3077 = vpop.f32.mrb[0].mxu0
      %v3078 = vpop.f32.mrb[0].mxu0
      %v3079 = vadd.f32 0.0, %v3078
      %v3080 = vpop.f32.mrb[0].mxu0
      %3081 = vmatprep.mubr.bf16.mxu0 0
      %3082 = vmatmul.mubr.bf16.gmra.mrb[0].mxu0 %v2992
      %v3083 = vpop.f32.mrb[0].mxu0
      %v3084 = vadd.f32 0.0, %v3083
      %v3085 = vpop.f32.mrb[0].mxu0
      %v3086 = vpop.f32.mrb[0].mxu0
      %v3087 = vadd.f32 0.0, %v3086
      %v3088 = vpop.f32.mrb[0].mxu0
      %3089 = vmatprep.mubr.bf16.mxu0 0
      %3090 = vmatmul.mubr.bf16.gmra.mrb[0].mxu0 %v2995
      %v3091 = vpop.f32.mrb[0].mxu0
      %v3092 = vadd.f32 0.0, %v3091
      %v3093 = vpop.f32.mrb[0].mxu0
      %v3094 = vpop.f32.mrb[0].mxu0
      %v3095 = vadd.f32 0.0, %v3094
      %v3096 = vpop.f32.mrb[0].mxu0
      %3097 = vmatprep.mubr.bf16.mxu0 0
      %3098 = vmatmul.mubr.bf16.gmra.mrb[0].mxu0 %v2998
      %v3099 = vpop.f32.mrb[0].mxu0
      %v3100 = vadd.f32 0.0, %v3099
      %v3101 = vpop.f32.mrb[0].mxu0
      %v3102 = vpop.f32.mrb[0].mxu0
      %v3103 = vadd.f32 0.0, %v3102
      %v3104 = vpop.f32.mrb[0].mxu0
      %3105 = vmatprep.mubr.bf16.mxu0 0
      %3106 = vmatmul.mubr.bf16.gmra.mrb[0].mxu0 %v3001
      %v3107 = vpop.f32.mrb[0].mxu0
      %v3108 = vadd.f32 0.0, %v3107
      %v3109 = vpop.f32.mrb[0].mxu0
      %v3110 = vpop.f32.mrb[0].mxu0
      %v3111 = vadd.f32 0.0, %v3110
      %v3112 = vpop.f32.mrb[0].mxu0
      %3113 = vmatprep.mubr.bf16.mxu0 0
      %3114 = vmatmul.mubr.bf16.gmra.mrb[0].mxu0 %v3004
      %v3115 = vpop.f32.mrb[0].mxu0
      %v3116 = vadd.f32 0.0, %v3115
      %v3117 = vpop.f32.mrb[0].mxu0
      %v3118 = vpop.f32.mrb[0].mxu0
      %v3119 = vadd.f32 0.0, %v3118
      %v3120 = vpop.f32.mrb[0].mxu0
      %3121 = vmatprep.mubr.bf16.mxu0 0
      %3122 = vmatmul.mubr.bf16.gmra.mrb[0].mxu0 %v3007
      %v3123 = vpop.f32.mrb[0].mxu0
      %v3124 = vadd.f32 0.0, %v3123
      %v3125 = vpop.f32.mrb[0].mxu0
      %v3126 = vpop.f32.mrb[0].mxu0
      %v3127 = vadd.f32 0.0, %v3126
      %v3128 = vpop.f32.mrb[0].mxu0
      %3129 = vmatprep.mubr.bf16.mxu0 0
      %3130 = vmatmul.mubr.bf16.gmra.mrb[0].mxu0 %v3010
      %v3131 = vpop.f32.mrb[0].mxu0
      %v3132 = vadd.f32 0.0, %v3131
      %v3133 = vpop.f32.mrb[0].mxu0
      %v3134 = vpop.f32.mrb[0].mxu0
      %v3135 = vadd.f32 0.0, %v3134
      %v3136 = vpop.f32.mrb[0].mxu0
      %3137 = vmatprep.mubr.bf16.mxu0 0
      %3138 = vmatmul.mubr.bf16.gmra.mrb[0].mxu0 %v3013
      %v3139 = vpop.f32.mrb[0].mxu0
      %v3140 = vadd.f32 0.0, %v3139
      %v3141 = vpop.f32.mrb[0].mxu0
      %v3142 = vpop.f32.mrb[0].mxu0
      %v3143 = vadd.f32 0.0, %v3142
      %v3144 = vpop.f32.mrb[0].mxu0
      %3145 = vmatprep.mubr.bf16.mxu0 0
      %3146 = vmatmul.mubr.bf16.gmra.mrb[0].mxu0 %v3016
      %v3147 = vpop.f32.mrb[0].mxu0
      %v3148 = vadd.f32 0.0, %v3147
      %v3149 = vpop.f32.mrb[0].mxu0
      %v3150 = vpop.f32.mrb[0].mxu0
      %v3151 = vadd.f32 0.0, %v3150
      %v3152 = vpop.f32.mrb[0].mxu0
      %3153 = vmatprep.mubr.bf16.mxu0 0
      %3154 = vmatmul.mubr.bf16.gmra.mrb[0].mxu0 %v3019
      %v3155 = vpop.f32.mrb[0].mxu0
      %v3156 = vadd.f32 0.0, %v3155
      %v3157 = vpop.f32.mrb[0].mxu0
      %v3158 = vpop.f32.mrb[0].mxu0
      %v3159 = vadd.f32 0.0, %v3158
      %v3160 = vpop.f32.mrb[0].mxu0
      %3161 = vmatprep.mubr.bf16.mxu0 0
      %3162 = vmatmul.mubr.bf16.gmra.mrb[0].mxu0 %v3022
      %v3163 = vpop.f32.mrb[0].mxu0
      %v3164 = vadd.f32 0.0, %v3163
      %v3165 = vpop.f32.mrb[0].mxu0
      %v3166 = vpop.f32.mrb[0].mxu0
      %v3167 = vadd.f32 0.0, %v3166
      %v3168 = vpop.f32.mrb[0].mxu0
      %3169 = vmatprep.mubr.bf16.mxu0 0
      %3170 = vmatmul.mubr.bf16.gmra.mrb[0].mxu0 %v3025
      %v3171 = vpop.f32.mrb[0].mxu0
      %v3172 = vadd.f32 0.0, %v3171
      %v3173 = vpop.f32.mrb[0].mxu0
      %v3174 = vpop.f32.mrb[0].mxu0
      %v3175 = vadd.f32 0.0, %v3174
      %v3176 = vpop.f32.mrb[0].mxu0
      %3177 = vmatprep.mubr.bf16.mxu0 0
      %3178 = vmatmul.mubr.bf16.gmra.mrb[0].mxu0 %v3028
      %v3179 = vpop.f32.mrb[0].mxu0
      %v3180 = vadd.f32 0.0, %v3179
      %v3181 = vpop.f32.mrb[0].mxu0
      %v3182 = vpop.f32.mrb[0].mxu0
      %v3183 = vadd.f32 0.0, %v3182
      %v3184 = vpop.f32.mrb[0].mxu0
      %3185 = vmatprep.mubr.bf16.mxu0 0
      %3186 = vmatmul.mubr.bf16.gmra.mrb[0].mxu0 %v3031
      %v3187 = vpop.f32.mrb[0].mxu0
      %v3188 = vadd.f32 0.0, %v3187
      %v3189 = vpop.f32.mrb[0].mxu0
      %v3190 = vpop.f32.mrb[0].mxu0
      %v3191 = vadd.f32 0.0, %v3190
      %v3192 = vpop.f32.mrb[0].mxu0
      %3193 = vdwg.mxu0
      %v3194 = vadd.f32 %v2832, %v3068
      %v3195 = vadd.f32 %v2833, %v3071
      %v3196 = vadd.f32 %v2834, %v3076
      %v3197 = vadd.f32 %v2835, %v3079
      %v3198 = vadd.f32 %v2836, %v3084
      %v3199 = vadd.f32 %v2837, %v3087
      %v3200 = vadd.f32 %v2838, %v3092
      %v3201 = vadd.f32 %v2839, %v3095
      %v3202 = vadd.f32 %v2840, %v3100
      %v3203 = vadd.f32 %v2841, %v3103
      %v3204 = vadd.f32 %v2842, %v3108
      %v3205 = vadd.f32 %v2843, %v3111
      %v3206 = vadd.f32 %v2844, %v3116
      %v3207 = vadd.f32 %v2845, %v3119
      %v3208 = vadd.f32 %v2846, %v3124
      %v3209 = vadd.f32 %v2847, %v3127
      %v3210 = vadd.f32 %v2848, %v3132
      %v3211 = vadd.f32 %v2849, %v3135
      %v3212 = vadd.f32 %v2850, %v3140
      %v3213 = vadd.f32 %v2851, %v3143
      %v3214 = vadd.f32 %v2852, %v3148
      %v3215 = vadd.f32 %v2853, %v3151
      %v3216 = vadd.f32 %v2854, %v3156
      %v3217 = vadd.f32 %v2855, %v3159
      %v3218 = vadd.f32 %v2856, %v3164
      %v3219 = vadd.f32 %v2857, %v3167
      %v3220 = vadd.f32 %v2858, %v3172
      %v3221 = vadd.f32 %v2859, %v3175
      %v3222 = vadd.f32 %v2860, %v3180
      %v3223 = vadd.f32 %v2861, %v3183
      %v3224 = vadd.f32 %v2862, %v3188
      %v3225 = vadd.f32 %v2863, %v3191
      %v3226 = vld [vmem:[#allocation2] sm:$0xff]
      %v3227 = vld [vmem:[#allocation2 + $0x8] sm:$0xff]
      %v3228 = vld [vmem:[#allocation2 + $0x10] sm:$0xff]
      %v3229 = vld [vmem:[#allocation2 + $0x18] sm:$0xff]
      %v3230 = vld [vmem:[#allocation2 + $0x20] sm:$0xff]
      %v3231 = vld [vmem:[#allocation2 + $0x28] sm:$0xff]
      %v3232 = vld [vmem:[#allocation2 + $0x30] sm:$0xff]
      %v3233 = vld [vmem:[#allocation2 + $0x38] sm:$0xff]
      %v3234 = vld [vmem:[#allocation2 + $0x100] sm:$0xff]
      %v3235 = vld [vmem:[#allocation2 + $0x108] sm:$0xff]
      %v3236 = vld [vmem:[#allocation2 + $0x110] sm:$0xff]
      %v3237 = vld [vmem:[#allocation2 + $0x118] sm:$0xff]
      %v3238 = vld [vmem:[#allocation2 + $0x120] sm:$0xff]
      %v3239 = vld [vmem:[#allocation2 + $0x128] sm:$0xff]
      %v3240 = vld [vmem:[#allocation2 + $0x130] sm:$0xff]
      %v3241 = vld [vmem:[#allocation2 + $0x138] sm:$0xff]
      %v3242 = vld [vmem:[#allocation2 + $0x200] sm:$0xff]
      %v3243 = vld [vmem:[#allocation2 + $0x208] sm:$0xff]
      %v3244 = vld [vmem:[#allocation2 + $0x210] sm:$0xff]
      %v3245 = vld [vmem:[#allocation2 + $0x218] sm:$0xff]
      %v3246 = vld [vmem:[#allocation2 + $0x220] sm:$0xff]
      %v3247 = vld [vmem:[#allocation2 + $0x228] sm:$0xff]
      %v3248 = vld [vmem:[#allocation2 + $0x230] sm:$0xff]
      %v3249 = vld [vmem:[#allocation2 + $0x238] sm:$0xff]
      %v3250 = vld [vmem:[#allocation2 + $0x300] sm:$0xff]
      %v3251 = vld [vmem:[#allocation2 + $0x308] sm:$0xff]
      %v3252 = vld [vmem:[#allocation2 + $0x310] sm:$0xff]
      %v3253 = vld [vmem:[#allocation2 + $0x318] sm:$0xff]
      %v3254 = vld [vmem:[#allocation2 + $0x320] sm:$0xff]
      %v3255 = vld [vmem:[#allocation2 + $0x328] sm:$0xff]
      %v3256 = vld [vmem:[#allocation2 + $0x330] sm:$0xff]
      %v3257 = vld [vmem:[#allocation2 + $0x338] sm:$0xff]
      %v3258 = vpack.c.bf16 %v3227, %v3226
      %v3259 = vpack.c.bf16 %v3229, %v3228
      %v3260 = vpack.c.bf16 %v3231, %v3230
      %v3261 = vpack.c.bf16 %v3233, %v3232
      %v3262 = vpack.c.bf16 %v3235, %v3234
      %v3263 = vpack.c.bf16 %v3237, %v3236
      %v3264 = vpack.c.bf16 %v3239, %v3238
      %v3265 = vpack.c.bf16 %v3241, %v3240
      %v3266 = vpack.c.bf16 %v3243, %v3242
      %v3267 = vpack.c.bf16 %v3245, %v3244
      %v3268 = vpack.c.bf16 %v3247, %v3246
      %v3269 = vpack.c.bf16 %v3249, %v3248
      %v3270 = vpack.c.bf16 %v3251, %v3250
      %v3271 = vpack.c.bf16 %v3253, %v3252
      %v3272 = vpack.c.bf16 %v3255, %v3254
      %v3273 = vpack.c.bf16 %v3257, %v3256
      %s3274 = scalar_lea.vmem %s3, 32
      %v3275 = vld [vmem:[%s3274] sm:$0xf]
      %v3276 = vld [vmem:[%s3274 + $0x4] sm:$0xf]
      %v3279 = vunpack.c.l.b16 %v3275
      %v3280 = vunpack.c.l.b16 %v3276
      %v3281 = vpack.c.b16 %v3280, %v3279
      %v3284 = vsel %vm1569, %v3258, 0
      %v3287 = vsel %vm1569, %v3259, 0
      %v3290 = vsel %vm1569, %v3260, 0
      %v3293 = vsel %vm1569, %v3261, 0
      %v3296 = vsel %vm1569, %v3262, 0
      %v3299 = vsel %vm1569, %v3263, 0
      %v3302 = vsel %vm1569, %v3264, 0
      %v3305 = vsel %vm1569, %v3265, 0
      %v3308 = vsel %vm1569, %v3266, 0
      %v3311 = vsel %vm1569, %v3267, 0
      %v3314 = vsel %vm1569, %v3268, 0
      %v3317 = vsel %vm1569, %v3269, 0
      %v3320 = vsel %vm1569, %v3270, 0
      %v3323 = vsel %vm1569, %v3271, 0
      %v3326 = vsel %vm1569, %v3272, 0
      %v3329 = vsel %vm1569, %v3273, 0
      %3331 = vmatprep.subr.bf16.mxu0 0
      %3332 = vmatpush1.bf16.msra.mxu0 %v3281
      %3333 = vmatprep.subr.bf16.mxu0 0
      %3334 = vmatpush1.bf16.msra.mxu0 0
      %3335 = vmatprep.subr.bf16.mxu0 0
      %3336 = vmatpush1.bf16.msra.mxu0 0
      %3337 = vmatprep.subr.bf16.mxu0 0
      %3338 = vmatpush1.bf16.msra.mxu0 0
      %3339 = vmatprep.subr.bf16.mxu0 0
      %3340 = vmatpush1.bf16.msra.mxu0 0
      %3341 = vmatprep.subr.bf16.mxu0 0
      %3342 = vmatpush1.bf16.msra.mxu0 0
      %3343 = vmatprep.subr.bf16.mxu0 0
      %3344 = vmatpush1.bf16.msra.mxu0 0
      %3345 = vmatprep.subr.bf16.mxu0 0
      %3346 = vmatpush1.bf16.msra.mxu0 0
      %3347 = vmatprep.subr.bf16.mxu0 0
      %3348 = vmatpush1.bf16.msra.mxu0 0
      %3349 = vmatprep.subr.bf16.mxu0 0
      %3350 = vmatpush1.bf16.msra.mxu0 0
      %3351 = vmatprep.subr.bf16.mxu0 0
      %3352 = vmatpush1.bf16.msra.mxu0 0
      %3353 = vmatprep.subr.bf16.mxu0 0
      %3354 = vmatpush1.bf16.msra.mxu0 0
      %3355 = vmatprep.subr.bf16.mxu0 0
      %3356 = vmatpush1.bf16.msra.mxu0 0
      %3357 = vmatprep.subr.bf16.mxu0 0
      %3358 = vmatpush1.bf16.msra.mxu0 0
      %3359 = vmatprep.subr.bf16.mxu0 0
      %3360 = vmatpush1.bf16.msra.mxu0 0
      %3361 = vmatprep.subr.bf16.mxu0 0
      %3362 = vmatpush1.bf16.msra.mxu0 0
      %3363 = vmatprep.mubr.bf16.mxu0 0
      %3364 = vmatmul.mubr.bf16.gmra.mrb[0].mxu0 %v3284
      %v3365 = vpop.f32.mrb[0].mxu0
      %v3366 = vadd.f32 0.0, %v3365
      %v3367 = vpop.f32.mrb[0].mxu0
      %v3368 = vpop.f32.mrb[0].mxu0
      %v3369 = vadd.f32 0.0, %v3368
      %v3370 = vpop.f32.mrb[0].mxu0
      %3371 = vmatprep.mubr.bf16.mxu0 0
      %3372 = vmatmul.mubr.bf16.gmra.mrb[0].mxu0 %v3287
      %v3373 = vpop.f32.mrb[0].mxu0
      %v3374 = vadd.f32 0.0, %v3373
      %v3375 = vpop.f32.mrb[0].mxu0
      %v3376 = vpop.f32.mrb[0].mxu0
      %v3377 = vadd.f32 0.0, %v3376
      %v3378 = vpop.f32.mrb[0].mxu0
      %3379 = vmatprep.mubr.bf16.mxu0 0
      %3380 = vmatmul.mubr.bf16.gmra.mrb[0].mxu0 %v3290
      %v3381 = vpop.f32.mrb[0].mxu0
      %v3382 = vadd.f32 0.0, %v3381
      %v3383 = vpop.f32.mrb[0].mxu0
      %v3384 = vpop.f32.mrb[0].mxu0
      %v3385 = vadd.f32 0.0, %v3384
      %v3386 = vpop.f32.mrb[0].mxu0
      %3387 = vmatprep.mubr.bf16.mxu0 0
      %3388 = vmatmul.mubr.bf16.gmra.mrb[0].mxu0 %v3293
      %v3389 = vpop.f32.mrb[0].mxu0
      %v3390 = vadd.f32 0.0, %v3389
      %v3391 = vpop.f32.mrb[0].mxu0
      %v3392 = vpop.f32.mrb[0].mxu0
      %v3393 = vadd.f32 0.0, %v3392
      %v3394 = vpop.f32.mrb[0].mxu0
      %3395 = vmatprep.mubr.bf16.mxu0 0
      %3396 = vmatmul.mubr.bf16.gmra.mrb[0].mxu0 %v3296
      %v3397 = vpop.f32.mrb[0].mxu0
      %v3398 = vadd.f32 0.0, %v3397
      %v3399 = vpop.f32.mrb[0].mxu0
      %v3400 = vpop.f32.mrb[0].mxu0
      %v3401 = vadd.f32 0.0, %v3400
      %v3402 = vpop.f32.mrb[0].mxu0
      %3403 = vmatprep.mubr.bf16.mxu0 0
      %3404 = vmatmul.mubr.bf16.gmra.mrb[0].mxu0 %v3299
      %v3405 = vpop.f32.mrb[0].mxu0
      %v3406 = vadd.f32 0.0, %v3405
      %v3407 = vpop.f32.mrb[0].mxu0
      %v3408 = vpop.f32.mrb[0].mxu0
      %v3409 = vadd.f32 0.0, %v3408
      %v3410 = vpop.f32.mrb[0].mxu0
      %3411 = vmatprep.mubr.bf16.mxu0 0
      %3412 = vmatmul.mubr.bf16.gmra.mrb[0].mxu0 %v3302
      %v3413 = vpop.f32.mrb[0].mxu0
      %v3414 = vadd.f32 0.0, %v3413
      %v3415 = vpop.f32.mrb[0].mxu0
      %v3416 = vpop.f32.mrb[0].mxu0
      %v3417 = vadd.f32 0.0, %v3416
      %v3418 = vpop.f32.mrb[0].mxu0
      %3419 = vmatprep.mubr.bf16.mxu0 0
      %3420 = vmatmul.mubr.bf16.gmra.mrb[0].mxu0 %v3305
      %v3421 = vpop.f32.mrb[0].mxu0
      %v3422 = vadd.f32 0.0, %v3421
      %v3423 = vpop.f32.mrb[0].mxu0
      %v3424 = vpop.f32.mrb[0].mxu0
      %v3425 = vadd.f32 0.0, %v3424
      %v3426 = vpop.f32.mrb[0].mxu0
      %3427 = vmatprep.mubr.bf16.mxu0 0
      %3428 = vmatmul.mubr.bf16.gmra.mrb[0].mxu0 %v3308
      %v3429 = vpop.f32.mrb[0].mxu0
      %v3430 = vadd.f32 0.0, %v3429
      %v3431 = vpop.f32.mrb[0].mxu0
      %v3432 = vpop.f32.mrb[0].mxu0
      %v3433 = vadd.f32 0.0, %v3432
      %v3434 = vpop.f32.mrb[0].mxu0
      %3435 = vmatprep.mubr.bf16.mxu0 0
      %3436 = vmatmul.mubr.bf16.gmra.mrb[0].mxu0 %v3311
      %v3437 = vpop.f32.mrb[0].mxu0
      %v3438 = vadd.f32 0.0, %v3437
      %v3439 = vpop.f32.mrb[0].mxu0
      %v3440 = vpop.f32.mrb[0].mxu0
      %v3441 = vadd.f32 0.0, %v3440
      %v3442 = vpop.f32.mrb[0].mxu0
      %3443 = vmatprep.mubr.bf16.mxu0 0
      %3444 = vmatmul.mubr.bf16.gmra.mrb[0].mxu0 %v3314
      %v3445 = vpop.f32.mrb[0].mxu0
      %v3446 = vadd.f32 0.0, %v3445
      %v3447 = vpop.f32.mrb[0].mxu0
      %v3448 = vpop.f32.mrb[0].mxu0
      %v3449 = vadd.f32 0.0, %v3448
      %v3450 = vpop.f32.mrb[0].mxu0
      %3451 = vmatprep.mubr.bf16.mxu0 0
      %3452 = vmatmul.mubr.bf16.gmra.mrb[0].mxu0 %v3317
      %v3453 = vpop.f32.mrb[0].mxu0
      %v3454 = vadd.f32 0.0, %v3453
      %v3455 = vpop.f32.mrb[0].mxu0
      %v3456 = vpop.f32.mrb[0].mxu0
      %v3457 = vadd.f32 0.0, %v3456
      %v3458 = vpop.f32.mrb[0].mxu0
      %3459 = vmatprep.mubr.bf16.mxu0 0
      %3460 = vmatmul.mubr.bf16.gmra.mrb[0].mxu0 %v3320
      %v3461 = vpop.f32.mrb[0].mxu0
      %v3462 = vadd.f32 0.0, %v3461
      %v3463 = vpop.f32.mrb[0].mxu0
      %v3464 = vpop.f32.mrb[0].mxu0
      %v3465 = vadd.f32 0.0, %v3464
      %v3466 = vpop.f32.mrb[0].mxu0
      %3467 = vmatprep.mubr.bf16.mxu0 0
      %3468 = vmatmul.mubr.bf16.gmra.mrb[0].mxu0 %v3323
      %v3469 = vpop.f32.mrb[0].mxu0
      %v3470 = vadd.f32 0.0, %v3469
      %v3471 = vpop.f32.mrb[0].mxu0
      %v3472 = vpop.f32.mrb[0].mxu0
      %v3473 = vadd.f32 0.0, %v3472
      %v3474 = vpop.f32.mrb[0].mxu0
      %3475 = vmatprep.mubr.bf16.mxu0 0
      %3476 = vmatmul.mubr.bf16.gmra.mrb[0].mxu0 %v3326
      %v3477 = vpop.f32.mrb[0].mxu0
      %v3478 = vadd.f32 0.0, %v3477
      %v3479 = vpop.f32.mrb[0].mxu0
      %v3480 = vpop.f32.mrb[0].mxu0
      %v3481 = vadd.f32 0.0, %v3480
      %v3482 = vpop.f32.mrb[0].mxu0
      %3483 = vmatprep.mubr.bf16.mxu0 0
      %3484 = vmatmul.mubr.bf16.gmra.mrb[0].mxu0 %v3329
      %v3485 = vpop.f32.mrb[0].mxu0
      %v3486 = vadd.f32 0.0, %v3485
      %v3487 = vpop.f32.mrb[0].mxu0
      %v3488 = vpop.f32.mrb[0].mxu0
      %v3489 = vadd.f32 0.0, %v3488
      %v3490 = vpop.f32.mrb[0].mxu0
      %3491 = vdwg.mxu0
      %v3492 = vadd.f32 %v3194, %v3366
      %v3493 = vadd.f32 %v3195, %v3369
      %v3494 = vadd.f32 %v3196, %v3374
      %v3495 = vadd.f32 %v3197, %v3377
      %v3496 = vadd.f32 %v3198, %v3382
      %v3497 = vadd.f32 %v3199, %v3385
      %v3498 = vadd.f32 %v3200, %v3390
      %v3499 = vadd.f32 %v3201, %v3393
      %v3500 = vadd.f32 %v3202, %v3398
      %v3501 = vadd.f32 %v3203, %v3401
      %v3502 = vadd.f32 %v3204, %v3406
      %v3503 = vadd.f32 %v3205, %v3409
      %v3504 = vadd.f32 %v3206, %v3414
      %v3505 = vadd.f32 %v3207, %v3417
      %v3506 = vadd.f32 %v3208, %v3422
      %v3507 = vadd.f32 %v3209, %v3425
      %v3508 = vadd.f32 %v3210, %v3430
      %v3509 = vadd.f32 %v3211, %v3433
      %v3510 = vadd.f32 %v3212, %v3438
      %v3511 = vadd.f32 %v3213, %v3441
      %v3512 = vadd.f32 %v3214, %v3446
      %v3513 = vadd.f32 %v3215, %v3449
      %v3514 = vadd.f32 %v3216, %v3454
      %v3515 = vadd.f32 %v3217, %v3457
      %v3516 = vadd.f32 %v3218, %v3462
      %v3517 = vadd.f32 %v3219, %v3465
      %v3518 = vadd.f32 %v3220, %v3470
      %v3519 = vadd.f32 %v3221, %v3473
      %v3520 = vadd.f32 %v3222, %v3478
      %v3521 = vadd.f32 %v3223, %v3481
      %v3522 = vadd.f32 %v3224, %v3486
      %v3523 = vadd.f32 %v3225, %v3489
      %v3524 = vld [vmem:[#allocation2 + $0x40] sm:$0xff]
      %v3525 = vld [vmem:[#allocation2 + $0x48] sm:$0xff]
      %v3526 = vld [vmem:[#allocation2 + $0x50] sm:$0xff]
      %v3527 = vld [vmem:[#allocation2 + $0x58] sm:$0xff]
      %v3528 = vld [vmem:[#allocation2 + $0x60] sm:$0xff]
      %v3529 = vld [vmem:[#allocation2 + $0x68] sm:$0xff]
      %v3530 = vld [vmem:[#allocation2 + $0x70] sm:$0xff]
      %v3531 = vld [vmem:[#allocation2 + $0x78] sm:$0xff]
      %v3532 = vld [vmem:[#allocation2 + $0x140] sm:$0xff]
      %v3533 = vld [vmem:[#allocation2 + $0x148] sm:$0xff]
      %v3534 = vld [vmem:[#allocation2 + $0x150] sm:$0xff]
      %v3535 = vld [vmem:[#allocation2 + $0x158] sm:$0xff]
      %v3536 = vld [vmem:[#allocation2 + $0x160] sm:$0xff]
      %v3537 = vld [vmem:[#allocation2 + $0x168] sm:$0xff]
      %v3538 = vld [vmem:[#allocation2 + $0x170] sm:$0xff]
      %v3539 = vld [vmem:[#allocation2 + $0x178] sm:$0xff]
      %v3540 = vld [vmem:[#allocation2 + $0x240] sm:$0xff]
      %v3541 = vld [vmem:[#allocation2 + $0x248] sm:$0xff]
      %v3542 = vld [vmem:[#allocation2 + $0x250] sm:$0xff]
      %v3543 = vld [vmem:[#allocation2 + $0x258] sm:$0xff]
      %v3544 = vld [vmem:[#allocation2 + $0x260] sm:$0xff]
      %v3545 = vld [vmem:[#allocation2 + $0x268] sm:$0xff]
      %v3546 = vld [vmem:[#allocation2 + $0x270] sm:$0xff]
      %v3547 = vld [vmem:[#allocation2 + $0x278] sm:$0xff]
      %v3548 = vld [vmem:[#allocation2 + $0x340] sm:$0xff]
      %v3549 = vld [vmem:[#allocation2 + $0x348] sm:$0xff]
      %v3550 = vld [vmem:[#allocation2 + $0x350] sm:$0xff]
      %v3551 = vld [vmem:[#allocation2 + $0x358] sm:$0xff]
      %v3552 = vld [vmem:[#allocation2 + $0x360] sm:$0xff]
      %v3553 = vld [vmem:[#allocation2 + $0x368] sm:$0xff]
      %v3554 = vld [vmem:[#allocation2 + $0x370] sm:$0xff]
      %v3555 = vld [vmem:[#allocation2 + $0x378] sm:$0xff]
      %v3556 = vpack.c.bf16 %v3525, %v3524
      %v3557 = vpack.c.bf16 %v3527, %v3526
      %v3558 = vpack.c.bf16 %v3529, %v3528
      %v3559 = vpack.c.bf16 %v3531, %v3530
      %v3560 = vpack.c.bf16 %v3533, %v3532
      %v3561 = vpack.c.bf16 %v3535, %v3534
      %v3562 = vpack.c.bf16 %v3537, %v3536
      %v3563 = vpack.c.bf16 %v3539, %v3538
      %v3564 = vpack.c.bf16 %v3541, %v3540
      %v3565 = vpack.c.bf16 %v3543, %v3542
      %v3566 = vpack.c.bf16 %v3545, %v3544
      %v3567 = vpack.c.bf16 %v3547, %v3546
      %v3568 = vpack.c.bf16 %v3549, %v3548
      %v3569 = vpack.c.bf16 %v3551, %v3550
      %v3570 = vpack.c.bf16 %v3553, %v3552
      %v3571 = vpack.c.bf16 %v3555, %v3554
      %s3572 = scalar_lea.vmem %s3, 40
      %v3573 = vld [vmem:[%s3572] sm:$0xf]
      %v3574 = vld [vmem:[%s3572 + $0x4] sm:$0xf]
      %v3577 = vunpack.c.l.b16 %v3573
      %v3578 = vunpack.c.l.b16 %v3574
      %v3579 = vpack.c.b16 %v3578, %v3577
      %v3582 = vsel %vm1569, %v3556, 0
      %v3585 = vsel %vm1569, %v3557, 0
      %v3588 = vsel %vm1569, %v3558, 0
      %v3591 = vsel %vm1569, %v3559, 0
      %v3594 = vsel %vm1569, %v3560, 0
      %v3597 = vsel %vm1569, %v3561, 0
      %v3600 = vsel %vm1569, %v3562, 0
      %v3603 = vsel %vm1569, %v3563, 0
      %v3606 = vsel %vm1569, %v3564, 0
      %v3609 = vsel %vm1569, %v3565, 0
      %v3612 = vsel %vm1569, %v3566, 0
      %v3615 = vsel %vm1569, %v3567, 0
      %v3618 = vsel %vm1569, %v3568, 0
      %v3621 = vsel %vm1569, %v3569, 0
      %v3624 = vsel %vm1569, %v3570, 0
      %v3627 = vsel %vm1569, %v3571, 0
      %3629 = vmatprep.subr.bf16.mxu0 0
      %3630 = vmatpush1.bf16.msra.mxu0 %v3579
      %3631 = vmatprep.subr.bf16.mxu0 0
      %3632 = vmatpush1.bf16.msra.mxu0 0
      %3633 = vmatprep.subr.bf16.mxu0 0
      %3634 = vmatpush1.bf16.msra.mxu0 0
      %3635 = vmatprep.subr.bf16.mxu0 0
      %3636 = vmatpush1.bf16.msra.mxu0 0
      %3637 = vmatprep.subr.bf16.mxu0 0
      %3638 = vmatpush1.bf16.msra.mxu0 0
      %3639 = vmatprep.subr.bf16.mxu0 0
      %3640 = vmatpush1.bf16.msra.mxu0 0
      %3641 = vmatprep.subr.bf16.mxu0 0
      %3642 = vmatpush1.bf16.msra.mxu0 0
      %3643 = vmatprep.subr.bf16.mxu0 0
      %3644 = vmatpush1.bf16.msra.mxu0 0
      %3645 = vmatprep.subr.bf16.mxu0 0
      %3646 = vmatpush1.bf16.msra.mxu0 0
      %3647 = vmatprep.subr.bf16.mxu0 0
      %3648 = vmatpush1.bf16.msra.mxu0 0
      %3649 = vmatprep.subr.bf16.mxu0 0
      %3650 = vmatpush1.bf16.msra.mxu0 0
      %3651 = vmatprep.subr.bf16.mxu0 0
      %3652 = vmatpush1.bf16.msra.mxu0 0
      %3653 = vmatprep.subr.bf16.mxu0 0
      %3654 = vmatpush1.bf16.msra.mxu0 0
      %3655 = vmatprep.subr.bf16.mxu0 0
      %3656 = vmatpush1.bf16.msra.mxu0 0
      %3657 = vmatprep.subr.bf16.mxu0 0
      %3658 = vmatpush1.bf16.msra.mxu0 0
      %3659 = vmatprep.subr.bf16.mxu0 0
      %3660 = vmatpush1.bf16.msra.mxu0 0
      %3661 = vmatprep.mubr.bf16.mxu0 0
      %3662 = vmatmul.mubr.bf16.gmra.mrb[0].mxu0 %v3582
      %v3663 = vpop.f32.mrb[0].mxu0
      %v3664 = vadd.f32 0.0, %v3663
      %v3665 = vpop.f32.mrb[0].mxu0
      %v3666 = vpop.f32.mrb[0].mxu0
      %v3667 = vadd.f32 0.0, %v3666
      %v3668 = vpop.f32.mrb[0].mxu0
      %3669 = vmatprep.mubr.bf16.mxu0 0
      %3670 = vmatmul.mubr.bf16.gmra.mrb[0].mxu0 %v3585
      %v3671 = vpop.f32.mrb[0].mxu0
      %v3672 = vadd.f32 0.0, %v3671
      %v3673 = vpop.f32.mrb[0].mxu0
      %v3674 = vpop.f32.mrb[0].mxu0
      %v3675 = vadd.f32 0.0, %v3674
      %v3676 = vpop.f32.mrb[0].mxu0
      %3677 = vmatprep.mubr.bf16.mxu0 0
      %3678 = vmatmul.mubr.bf16.gmra.mrb[0].mxu0 %v3588
      %v3679 = vpop.f32.mrb[0].mxu0
      %v3680 = vadd.f32 0.0, %v3679
      %v3681 = vpop.f32.mrb[0].mxu0
      %v3682 = vpop.f32.mrb[0].mxu0
      %v3683 = vadd.f32 0.0, %v3682
      %v3684 = vpop.f32.mrb[0].mxu0
      %3685 = vmatprep.mubr.bf16.mxu0 0
      %3686 = vmatmul.mubr.bf16.gmra.mrb[0].mxu0 %v3591
      %v3687 = vpop.f32.mrb[0].mxu0
      %v3688 = vadd.f32 0.0, %v3687
      %v3689 = vpop.f32.mrb[0].mxu0
      %v3690 = vpop.f32.mrb[0].mxu0
      %v3691 = vadd.f32 0.0, %v3690
      %v3692 = vpop.f32.mrb[0].mxu0
      %3693 = vmatprep.mubr.bf16.mxu0 0
      %3694 = vmatmul.mubr.bf16.gmra.mrb[0].mxu0 %v3594
      %v3695 = vpop.f32.mrb[0].mxu0
      %v3696 = vadd.f32 0.0, %v3695
      %v3697 = vpop.f32.mrb[0].mxu0
      %v3698 = vpop.f32.mrb[0].mxu0
      %v3699 = vadd.f32 0.0, %v3698
      %v3700 = vpop.f32.mrb[0].mxu0
      %3701 = vmatprep.mubr.bf16.mxu0 0
      %3702 = vmatmul.mubr.bf16.gmra.mrb[0].mxu0 %v3597
      %v3703 = vpop.f32.mrb[0].mxu0
      %v3704 = vadd.f32 0.0, %v3703
      %v3705 = vpop.f32.mrb[0].mxu0
      %v3706 = vpop.f32.mrb[0].mxu0
      %v3707 = vadd.f32 0.0, %v3706
      %v3708 = vpop.f32.mrb[0].mxu0
      %3709 = vmatprep.mubr.bf16.mxu0 0
      %3710 = vmatmul.mubr.bf16.gmra.mrb[0].mxu0 %v3600
      %v3711 = vpop.f32.mrb[0].mxu0
      %v3712 = vadd.f32 0.0, %v3711
      %v3713 = vpop.f32.mrb[0].mxu0
      %v3714 = vpop.f32.mrb[0].mxu0
      %v3715 = vadd.f32 0.0, %v3714
      %v3716 = vpop.f32.mrb[0].mxu0
      %3717 = vmatprep.mubr.bf16.mxu0 0
      %3718 = vmatmul.mubr.bf16.gmra.mrb[0].mxu0 %v3603
      %v3719 = vpop.f32.mrb[0].mxu0
      %v3720 = vadd.f32 0.0, %v3719
      %v3721 = vpop.f32.mrb[0].mxu0
      %v3722 = vpop.f32.mrb[0].mxu0
      %v3723 = vadd.f32 0.0, %v3722
      %v3724 = vpop.f32.mrb[0].mxu0
      %3725 = vmatprep.mubr.bf16.mxu0 0
      %3726 = vmatmul.mubr.bf16.gmra.mrb[0].mxu0 %v3606
      %v3727 = vpop.f32.mrb[0].mxu0
      %v3728 = vadd.f32 0.0, %v3727
      %v3729 = vpop.f32.mrb[0].mxu0
      %v3730 = vpop.f32.mrb[0].mxu0
      %v3731 = vadd.f32 0.0, %v3730
      %v3732 = vpop.f32.mrb[0].mxu0
      %3733 = vmatprep.mubr.bf16.mxu0 0
      %3734 = vmatmul.mubr.bf16.gmra.mrb[0].mxu0 %v3609
      %v3735 = vpop.f32.mrb[0].mxu0
      %v3736 = vadd.f32 0.0, %v3735
      %v3737 = vpop.f32.mrb[0].mxu0
      %v3738 = vpop.f32.mrb[0].mxu0
      %v3739 = vadd.f32 0.0, %v3738
      %v3740 = vpop.f32.mrb[0].mxu0
      %3741 = vmatprep.mubr.bf16.mxu0 0
      %3742 = vmatmul.mubr.bf16.gmra.mrb[0].mxu0 %v3612
      %v3743 = vpop.f32.mrb[0].mxu0
      %v3744 = vadd.f32 0.0, %v3743
      %v3745 = vpop.f32.mrb[0].mxu0
      %v3746 = vpop.f32.mrb[0].mxu0
      %v3747 = vadd.f32 0.0, %v3746
      %v3748 = vpop.f32.mrb[0].mxu0
      %3749 = vmatprep.mubr.bf16.mxu0 0
      %3750 = vmatmul.mubr.bf16.gmra.mrb[0].mxu0 %v3615
      %v3751 = vpop.f32.mrb[0].mxu0
      %v3752 = vadd.f32 0.0, %v3751
      %v3753 = vpop.f32.mrb[0].mxu0
      %v3754 = vpop.f32.mrb[0].mxu0
      %v3755 = vadd.f32 0.0, %v3754
      %v3756 = vpop.f32.mrb[0].mxu0
      %3757 = vmatprep.mubr.bf16.mxu0 0
      %3758 = vmatmul.mubr.bf16.gmra.mrb[0].mxu0 %v3618
      %v3759 = vpop.f32.mrb[0].mxu0
      %v3760 = vadd.f32 0.0, %v3759
      %v3761 = vpop.f32.mrb[0].mxu0
      %v3762 = vpop.f32.mrb[0].mxu0
      %v3763 = vadd.f32 0.0, %v3762
      %v3764 = vpop.f32.mrb[0].mxu0
      %3765 = vmatprep.mubr.bf16.mxu0 0
      %3766 = vmatmul.mubr.bf16.gmra.mrb[0].mxu0 %v3621
      %v3767 = vpop.f32.mrb[0].mxu0
      %v3768 = vadd.f32 0.0, %v3767
      %v3769 = vpop.f32.mrb[0].mxu0
      %v3770 = vpop.f32.mrb[0].mxu0
      %v3771 = vadd.f32 0.0, %v3770
      %v3772 = vpop.f32.mrb[0].mxu0
      %3773 = vmatprep.mubr.bf16.mxu0 0
      %3774 = vmatmul.mubr.bf16.gmra.mrb[0].mxu0 %v3624
      %v3775 = vpop.f32.mrb[0].mxu0
      %v3776 = vadd.f32 0.0, %v3775
      %v3777 = vpop.f32.mrb[0].mxu0
      %v3778 = vpop.f32.mrb[0].mxu0
      %v3779 = vadd.f32 0.0, %v3778
      %v3780 = vpop.f32.mrb[0].mxu0
      %3781 = vmatprep.mubr.bf16.mxu0 0
      %3782 = vmatmul.mubr.bf16.gmra.mrb[0].mxu0 %v3627
      %v3783 = vpop.f32.mrb[0].mxu0
      %v3784 = vadd.f32 0.0, %v3783
      %v3785 = vpop.f32.mrb[0].mxu0
      %v3786 = vpop.f32.mrb[0].mxu0
      %v3787 = vadd.f32 0.0, %v3786
      %v3788 = vpop.f32.mrb[0].mxu0
      %3789 = vdwg.mxu0
      %v3790 = vadd.f32 %v3492, %v3664
      %v3791 = vadd.f32 %v3493, %v3667
      %v3792 = vadd.f32 %v3494, %v3672
      %v3793 = vadd.f32 %v3495, %v3675
      %v3794 = vadd.f32 %v3496, %v3680
      %v3795 = vadd.f32 %v3497, %v3683
      %v3796 = vadd.f32 %v3498, %v3688
      %v3797 = vadd.f32 %v3499, %v3691
      %v3798 = vadd.f32 %v3500, %v3696
      %v3799 = vadd.f32 %v3501, %v3699
      %v3800 = vadd.f32 %v3502, %v3704
      %v3801 = vadd.f32 %v3503, %v3707
      %v3802 = vadd.f32 %v3504, %v3712
      %v3803 = vadd.f32 %v3505, %v3715
      %v3804 = vadd.f32 %v3506, %v3720
      %v3805 = vadd.f32 %v3507, %v3723
      %v3806 = vadd.f32 %v3508, %v3728
      %v3807 = vadd.f32 %v3509, %v3731
      %v3808 = vadd.f32 %v3510, %v3736
      %v3809 = vadd.f32 %v3511, %v3739
      %v3810 = vadd.f32 %v3512, %v3744
      %v3811 = vadd.f32 %v3513, %v3747
      %v3812 = vadd.f32 %v3514, %v3752
      %v3813 = vadd.f32 %v3515, %v3755
      %v3814 = vadd.f32 %v3516, %v3760
      %v3815 = vadd.f32 %v3517, %v3763
      %v3816 = vadd.f32 %v3518, %v3768
      %v3817 = vadd.f32 %v3519, %v3771
      %v3818 = vadd.f32 %v3520, %v3776
      %v3819 = vadd.f32 %v3521, %v3779
      %v3820 = vadd.f32 %v3522, %v3784
      %v3821 = vadd.f32 %v3523, %v3787
      %v3822 = vld [vmem:[#allocation2 + $0xbf] sm:$0xff]
      %v3823 = vld [vmem:[#allocation2 + $0xc7] sm:$0xff]
      %v3824 = vld [vmem:[#allocation2 + $0xcf] sm:$0xff]
      %v3825 = vld [vmem:[#allocation2 + $0xd7] sm:$0xff]
      %v3826 = vld [vmem:[#allocation2 + $0xdf] sm:$0xff]
      %v3827 = vld [vmem:[#allocation2 + $0xe7] sm:$0xff]
      %v3828 = vld [vmem:[#allocation2 + $0xef] sm:$0xff]
      %v3829 = vld [vmem:[#allocation2 + $0xf7] sm:$0xff]
      %v3830 = vsel %vm2896, %v3822, 0.0
      %v3831 = vsel %vm2897, %v3823, 0.0
      %v3832 = vsel %vm2898, %v3824, 0.0
      %v3833 = vsel %vm2899, %v3825, 0.0
      %v3834 = vsel %vm2900, %v3826, 0.0
      %v3835 = vsel %vm2901, %v3827, 0.0
      %v3836 = vsel %vm2902, %v3828, 0.0
      %v3837 = vsel %vm2903, %v3829, 0.0
      %v3838 = vld [vmem:[#allocation2 + $0x1bf] sm:$0xff]
      %v3839 = vld [vmem:[#allocation2 + $0x1c7] sm:$0xff]
      %v3840 = vld [vmem:[#allocation2 + $0x1cf] sm:$0xff]
      %v3841 = vld [vmem:[#allocation2 + $0x1d7] sm:$0xff]
      %v3842 = vld [vmem:[#allocation2 + $0x1df] sm:$0xff]
      %v3843 = vld [vmem:[#allocation2 + $0x1e7] sm:$0xff]
      %v3844 = vld [vmem:[#allocation2 + $0x1ef] sm:$0xff]
      %v3845 = vld [vmem:[#allocation2 + $0x1f7] sm:$0xff]
      %v3846 = vsel %vm2896, %v3838, 0.0
      %v3847 = vsel %vm2897, %v3839, 0.0
      %v3848 = vsel %vm2898, %v3840, 0.0
      %v3849 = vsel %vm2899, %v3841, 0.0
      %v3850 = vsel %vm2900, %v3842, 0.0
      %v3851 = vsel %vm2901, %v3843, 0.0
      %v3852 = vsel %vm2902, %v3844, 0.0
      %v3853 = vsel %vm2903, %v3845, 0.0
      %v3854 = vld [vmem:[#allocation2 + $0x2bf] sm:$0xff]
      %v3855 = vld [vmem:[#allocation2 + $0x2c7] sm:$0xff]
      %v3856 = vld [vmem:[#allocation2 + $0x2cf] sm:$0xff]
      %v3857 = vld [vmem:[#allocation2 + $0x2d7] sm:$0xff]
      %v3858 = vld [vmem:[#allocation2 + $0x2df] sm:$0xff]
      %v3859 = vld [vmem:[#allocation2 + $0x2e7] sm:$0xff]
      %v3860 = vld [vmem:[#allocation2 + $0x2ef] sm:$0xff]
      %v3861 = vld [vmem:[#allocation2 + $0x2f7] sm:$0xff]
      %v3862 = vsel %vm2896, %v3854, 0.0
      %v3863 = vsel %vm2897, %v3855, 0.0
      %v3864 = vsel %vm2898, %v3856, 0.0
      %v3865 = vsel %vm2899, %v3857, 0.0
      %v3866 = vsel %vm2900, %v3858, 0.0
      %v3867 = vsel %vm2901, %v3859, 0.0
      %v3868 = vsel %vm2902, %v3860, 0.0
      %v3869 = vsel %vm2903, %v3861, 0.0
      %v3870 = vld [vmem:[#allocation2 + $0x3bf] sm:$0xff]
      %v3871 = vld [vmem:[#allocation2 + $0x3c7] sm:$0xff]
      %v3872 = vld [vmem:[#allocation2 + $0x3cf] sm:$0xff]
      %v3873 = vld [vmem:[#allocation2 + $0x3d7] sm:$0xff]
      %v3874 = vld [vmem:[#allocation2 + $0x3df] sm:$0xff]
      %v3875 = vld [vmem:[#allocation2 + $0x3e7] sm:$0xff]
      %v3876 = vld [vmem:[#allocation2 + $0x3ef] sm:$0xff]
      %v3877 = vld [vmem:[#allocation2 + $0x3f7] sm:$0xff]
      %v3878 = vsel %vm2896, %v3870, 0.0
      %v3879 = vsel %vm2897, %v3871, 0.0
      %v3880 = vsel %vm2898, %v3872, 0.0
      %v3881 = vsel %vm2899, %v3873, 0.0
      %v3882 = vsel %vm2900, %v3874, 0.0
      %v3883 = vsel %vm2901, %v3875, 0.0
      %v3884 = vsel %vm2902, %v3876, 0.0
      %v3885 = vsel %vm2903, %v3877, 0.0
      %v3886 = vpack.c.bf16 %v3831, %v3830
      %v3887 = vpack.c.bf16 %v3833, %v3832
      %v3888 = vpack.c.bf16 %v3835, %v3834
      %v3889 = vpack.c.bf16 %v3837, %v3836
      %v3890 = vpack.c.bf16 %v3847, %v3846
      %v3891 = vpack.c.bf16 %v3849, %v3848
      %v3892 = vpack.c.bf16 %v3851, %v3850
      %v3893 = vpack.c.bf16 %v3853, %v3852
      %v3894 = vpack.c.bf16 %v3863, %v3862
      %v3895 = vpack.c.bf16 %v3865, %v3864
      %v3896 = vpack.c.bf16 %v3867, %v3866
      %v3897 = vpack.c.bf16 %v3869, %v3868
      %v3898 = vpack.c.bf16 %v3879, %v3878
      %v3899 = vpack.c.bf16 %v3881, %v3880
      %v3900 = vpack.c.bf16 %v3883, %v3882
      %v3901 = vpack.c.bf16 %v3885, %v3884
      %s3902 = scalar_lea.vmem %s3, 48
      %v3903 = vld [vmem:[%s3902] sm:$0xf]
      %v3904 = vld [vmem:[%s3902 + $0x4] sm:$0xf]
      %v3907 = vunpack.c.l.b16 %v3903
      %v3908 = vunpack.c.l.b16 %v3904
      %v3909 = vpack.c.b16 %v3908, %v3907
      %v3912 = vsel %vm1569, %v3886, 0
      %v3915 = vsel %vm1569, %v3887, 0
      %v3918 = vsel %vm1569, %v3888, 0
      %v3921 = vsel %vm1569, %v3889, 0
      %v3924 = vsel %vm1569, %v3890, 0
      %v3927 = vsel %vm1569, %v3891, 0
      %v3930 = vsel %vm1569, %v3892, 0
      %v3933 = vsel %vm1569, %v3893, 0
      %v3936 = vsel %vm1569, %v3894, 0
      %v3939 = vsel %vm1569, %v3895, 0
      %v3942 = vsel %vm1569, %v3896, 0
      %v3945 = vsel %vm1569, %v3897, 0
      %v3948 = vsel %vm1569, %v3898, 0
      %v3951 = vsel %vm1569, %v3899, 0
      %v3954 = vsel %vm1569, %v3900, 0
      %v3957 = vsel %vm1569, %v3901, 0
      %3959 = vmatprep.subr.bf16.mxu0 0
      %3960 = vmatpush1.bf16.msra.mxu0 %v3909
      %3961 = vmatprep.subr.bf16.mxu0 0
      %3962 = vmatpush1.bf16.msra.mxu0 0
      %3963 = vmatprep.subr.bf16.mxu0 0
      %3964 = vmatpush1.bf16.msra.mxu0 0
      %3965 = vmatprep.subr.bf16.mxu0 0
      %3966 = vmatpush1.bf16.msra.mxu0 0
      %3967 = vmatprep.subr.bf16.mxu0 0
      %3968 = vmatpush1.bf16.msra.mxu0 0
      %3969 = vmatprep.subr.bf16.mxu0 0
      %3970 = vmatpush1.bf16.msra.mxu0 0
      %3971 = vmatprep.subr.bf16.mxu0 0
      %3972 = vmatpush1.bf16.msra.mxu0 0
      %3973 = vmatprep.subr.bf16.mxu0 0
      %3974 = vmatpush1.bf16.msra.mxu0 0
      %3975 = vmatprep.subr.bf16.mxu0 0
      %3976 = vmatpush1.bf16.msra.mxu0 0
      %3977 = vmatprep.subr.bf16.mxu0 0
      %3978 = vmatpush1.bf16.msra.mxu0 0
      %3979 = vmatprep.subr.bf16.mxu0 0
      %3980 = vmatpush1.bf16.msra.mxu0 0
      %3981 = vmatprep.subr.bf16.mxu0 0
      %3982 = vmatpush1.bf16.msra.mxu0 0
      %3983 = vmatprep.subr.bf16.mxu0 0
      %3984 = vmatpush1.bf16.msra.mxu0 0
      %3985 = vmatprep.subr.bf16.mxu0 0
      %3986 = vmatpush1.bf16.msra.mxu0 0
      %3987 = vmatprep.subr.bf16.mxu0 0
      %3988 = vmatpush1.bf16.msra.mxu0 0
      %3989 = vmatprep.subr.bf16.mxu0 0
      %3990 = vmatpush1.bf16.msra.mxu0 0
      %3991 = vmatprep.mubr.bf16.mxu0 0
      %3992 = vmatmul.mubr.bf16.gmra.mrb[0].mxu0 %v3912
      %v3993 = vpop.f32.mrb[0].mxu0
      %v3994 = vadd.f32 0.0, %v3993
      %v3995 = vpop.f32.mrb[0].mxu0
      %v3996 = vpop.f32.mrb[0].mxu0
      %v3997 = vadd.f32 0.0, %v3996
      %v3998 = vpop.f32.mrb[0].mxu0
      %3999 = vmatprep.mubr.bf16.mxu0 0
      %4000 = vmatmul.mubr.bf16.gmra.mrb[0].mxu0 %v3915
      %v4001 = vpop.f32.mrb[0].mxu0
      %v4002 = vadd.f32 0.0, %v4001
      %v4003 = vpop.f32.mrb[0].mxu0
      %v4004 = vpop.f32.mrb[0].mxu0
      %v4005 = vadd.f32 0.0, %v4004
      %v4006 = vpop.f32.mrb[0].mxu0
      %4007 = vmatprep.mubr.bf16.mxu0 0
      %4008 = vmatmul.mubr.bf16.gmra.mrb[0].mxu0 %v3918
      %v4009 = vpop.f32.mrb[0].mxu0
      %v4010 = vadd.f32 0.0, %v4009
      %v4011 = vpop.f32.mrb[0].mxu0
      %v4012 = vpop.f32.mrb[0].mxu0
      %v4013 = vadd.f32 0.0, %v4012
      %v4014 = vpop.f32.mrb[0].mxu0
      %4015 = vmatprep.mubr.bf16.mxu0 0
      %4016 = vmatmul.mubr.bf16.gmra.mrb[0].mxu0 %v3921
      %v4017 = vpop.f32.mrb[0].mxu0
      %v4018 = vadd.f32 0.0, %v4017
      %v4019 = vpop.f32.mrb[0].mxu0
      %v4020 = vpop.f32.mrb[0].mxu0
      %v4021 = vadd.f32 0.0, %v4020
      %v4022 = vpop.f32.mrb[0].mxu0
      %4023 = vmatprep.mubr.bf16.mxu0 0
      %4024 = vmatmul.mubr.bf16.gmra.mrb[0].mxu0 %v3924
      %v4025 = vpop.f32.mrb[0].mxu0
      %v4026 = vadd.f32 0.0, %v4025
      %v4027 = vpop.f32.mrb[0].mxu0
      %v4028 = vpop.f32.mrb[0].mxu0
      %v4029 = vadd.f32 0.0, %v4028
      %v4030 = vpop.f32.mrb[0].mxu0
      %4031 = vmatprep.mubr.bf16.mxu0 0
      %4032 = vmatmul.mubr.bf16.gmra.mrb[0].mxu0 %v3927
      %v4033 = vpop.f32.mrb[0].mxu0
      %v4034 = vadd.f32 0.0, %v4033
      %v4035 = vpop.f32.mrb[0].mxu0
      %v4036 = vpop.f32.mrb[0].mxu0
      %v4037 = vadd.f32 0.0, %v4036
      %v4038 = vpop.f32.mrb[0].mxu0
      %4039 = vmatprep.mubr.bf16.mxu0 0
      %4040 = vmatmul.mubr.bf16.gmra.mrb[0].mxu0 %v3930
      %v4041 = vpop.f32.mrb[0].mxu0
      %v4042 = vadd.f32 0.0, %v4041
      %v4043 = vpop.f32.mrb[0].mxu0
      %v4044 = vpop.f32.mrb[0].mxu0
      %v4045 = vadd.f32 0.0, %v4044
      %v4046 = vpop.f32.mrb[0].mxu0
      %4047 = vmatprep.mubr.bf16.mxu0 0
      %4048 = vmatmul.mubr.bf16.gmra.mrb[0].mxu0 %v3933
      %v4049 = vpop.f32.mrb[0].mxu0
      %v4050 = vadd.f32 0.0, %v4049
      %v4051 = vpop.f32.mrb[0].mxu0
      %v4052 = vpop.f32.mrb[0].mxu0
      %v4053 = vadd.f32 0.0, %v4052
      %v4054 = vpop.f32.mrb[0].mxu0
      %4055 = vmatprep.mubr.bf16.mxu0 0
      %4056 = vmatmul.mubr.bf16.gmra.mrb[0].mxu0 %v3936
      %v4057 = vpop.f32.mrb[0].mxu0
      %v4058 = vadd.f32 0.0, %v4057
      %v4059 = vpop.f32.mrb[0].mxu0
      %v4060 = vpop.f32.mrb[0].mxu0
      %v4061 = vadd.f32 0.0, %v4060
      %v4062 = vpop.f32.mrb[0].mxu0
      %4063 = vmatprep.mubr.bf16.mxu0 0
      %4064 = vmatmul.mubr.bf16.gmra.mrb[0].mxu0 %v3939
      %v4065 = vpop.f32.mrb[0].mxu0
      %v4066 = vadd.f32 0.0, %v4065
      %v4067 = vpop.f32.mrb[0].mxu0
      %v4068 = vpop.f32.mrb[0].mxu0
      %v4069 = vadd.f32 0.0, %v4068
      %v4070 = vpop.f32.mrb[0].mxu0
      %4071 = vmatprep.mubr.bf16.mxu0 0
      %4072 = vmatmul.mubr.bf16.gmra.mrb[0].mxu0 %v3942
      %v4073 = vpop.f32.mrb[0].mxu0
      %v4074 = vadd.f32 0.0, %v4073
      %v4075 = vpop.f32.mrb[0].mxu0
      %v4076 = vpop.f32.mrb[0].mxu0
      %v4077 = vadd.f32 0.0, %v4076
      %v4078 = vpop.f32.mrb[0].mxu0
      %4079 = vmatprep.mubr.bf16.mxu0 0
      %4080 = vmatmul.mubr.bf16.gmra.mrb[0].mxu0 %v3945
      %v4081 = vpop.f32.mrb[0].mxu0
      %v4082 = vadd.f32 0.0, %v4081
      %v4083 = vpop.f32.mrb[0].mxu0
      %v4084 = vpop.f32.mrb[0].mxu0
      %v4085 = vadd.f32 0.0, %v4084
      %v4086 = vpop.f32.mrb[0].mxu0
      %4087 = vmatprep.mubr.bf16.mxu0 0
      %4088 = vmatmul.mubr.bf16.gmra.mrb[0].mxu0 %v3948
      %v4089 = vpop.f32.mrb[0].mxu0
      %v4090 = vadd.f32 0.0, %v4089
      %v4091 = vpop.f32.mrb[0].mxu0
      %v4092 = vpop.f32.mrb[0].mxu0
      %v4093 = vadd.f32 0.0, %v4092
      %v4094 = vpop.f32.mrb[0].mxu0
      %4095 = vmatprep.mubr.bf16.mxu0 0
      %4096 = vmatmul.mubr.bf16.gmra.mrb[0].mxu0 %v3951
      %v4097 = vpop.f32.mrb[0].mxu0
      %v4098 = vadd.f32 0.0, %v4097
      %v4099 = vpop.f32.mrb[0].mxu0
      %v4100 = vpop.f32.mrb[0].mxu0
      %v4101 = vadd.f32 0.0, %v4100
      %v4102 = vpop.f32.mrb[0].mxu0
      %4103 = vmatprep.mubr.bf16.mxu0 0
      %4104 = vmatmul.mubr.bf16.gmra.mrb[0].mxu0 %v3954
      %v4105 = vpop.f32.mrb[0].mxu0
      %v4106 = vadd.f32 0.0, %v4105
      %v4107 = vpop.f32.mrb[0].mxu0
      %v4108 = vpop.f32.mrb[0].mxu0
      %v4109 = vadd.f32 0.0, %v4108
      %v4110 = vpop.f32.mrb[0].mxu0
      %4111 = vmatprep.mubr.bf16.mxu0 0
      %4112 = vmatmul.mubr.bf16.gmra.mrb[0].mxu0 %v3957
      %v4113 = vpop.f32.mrb[0].mxu0
      %v4114 = vadd.f32 0.0, %v4113
      %v4115 = vpop.f32.mrb[0].mxu0
      %v4116 = vpop.f32.mrb[0].mxu0
      %v4117 = vadd.f32 0.0, %v4116
      %v4118 = vpop.f32.mrb[0].mxu0
      %4119 = vdwg.mxu0
      %v4120 = vadd.f32 %v3790, %v3994
      %v4121 = vadd.f32 %v3791, %v3997
      %v4122 = vadd.f32 %v3792, %v4002
      %v4123 = vadd.f32 %v3793, %v4005
      %v4124 = vadd.f32 %v3794, %v4010
      %v4125 = vadd.f32 %v3795, %v4013
      %v4126 = vadd.f32 %v3796, %v4018
      %v4127 = vadd.f32 %v3797, %v4021
      %v4128 = vadd.f32 %v3798, %v4026
      %v4129 = vadd.f32 %v3799, %v4029
      %v4130 = vadd.f32 %v3800, %v4034
      %v4131 = vadd.f32 %v3801, %v4037
      %v4132 = vadd.f32 %v3802, %v4042
      %v4133 = vadd.f32 %v3803, %v4045
      %v4134 = vadd.f32 %v3804, %v4050
      %v4135 = vadd.f32 %v3805, %v4053
      %v4136 = vadd.f32 %v3806, %v4058
      %v4137 = vadd.f32 %v3807, %v4061
      %v4138 = vadd.f32 %v3808, %v4066
      %v4139 = vadd.f32 %v3809, %v4069
      %v4140 = vadd.f32 %v3810, %v4074
      %v4141 = vadd.f32 %v3811, %v4077
      %v4142 = vadd.f32 %v3812, %v4082
      %v4143 = vadd.f32 %v3813, %v4085
      %v4144 = vadd.f32 %v3814, %v4090
      %v4145 = vadd.f32 %v3815, %v4093
      %v4146 = vadd.f32 %v3816, %v4098
      %v4147 = vadd.f32 %v3817, %v4101
      %v4148 = vadd.f32 %v3818, %v4106
      %v4149 = vadd.f32 %v3819, %v4109
      %v4150 = vadd.f32 %v3820, %v4114
      %v4151 = vadd.f32 %v3821, %v4117
      %v4152 = vld [vmem:[#allocation2 + $0x80] sm:$0xff]
      %v4153 = vld [vmem:[#allocation2 + $0x88] sm:$0xff]
      %v4154 = vld [vmem:[#allocation2 + $0x90] sm:$0xff]
      %v4155 = vld [vmem:[#allocation2 + $0x98] sm:$0xff]
      %v4156 = vld [vmem:[#allocation2 + $0xa0] sm:$0xff]
      %v4157 = vld [vmem:[#allocation2 + $0xa8] sm:$0xff]
      %v4158 = vld [vmem:[#allocation2 + $0xb0] sm:$0xff]
      %v4159 = vld [vmem:[#allocation2 + $0xb8] sm:$0xff]
      %v4160 = vld [vmem:[#allocation2 + $0x180] sm:$0xff]
      %v4161 = vld [vmem:[#allocation2 + $0x188] sm:$0xff]
      %v4162 = vld [vmem:[#allocation2 + $0x190] sm:$0xff]
      %v4163 = vld [vmem:[#allocation2 + $0x198] sm:$0xff]
      %v4164 = vld [vmem:[#allocation2 + $0x1a0] sm:$0xff]
      %v4165 = vld [vmem:[#allocation2 + $0x1a8] sm:$0xff]
      %v4166 = vld [vmem:[#allocation2 + $0x1b0] sm:$0xff]
      %v4167 = vld [vmem:[#allocation2 + $0x1b8] sm:$0xff]
      %v4168 = vld [vmem:[#allocation2 + $0x280] sm:$0xff]
      %v4169 = vld [vmem:[#allocation2 + $0x288] sm:$0xff]
      %v4170 = vld [vmem:[#allocation2 + $0x290] sm:$0xff]
      %v4171 = vld [vmem:[#allocation2 + $0x298] sm:$0xff]
      %v4172 = vld [vmem:[#allocation2 + $0x2a0] sm:$0xff]
      %v4173 = vld [vmem:[#allocation2 + $0x2a8] sm:$0xff]
      %v4174 = vld [vmem:[#allocation2 + $0x2b0] sm:$0xff]
      %v4175 = vld [vmem:[#allocation2 + $0x2b8] sm:$0xff]
      %v4176 = vld [vmem:[#allocation2 + $0x380] sm:$0xff]
      %v4177 = vld [vmem:[#allocation2 + $0x388] sm:$0xff]
      %v4178 = vld [vmem:[#allocation2 + $0x390] sm:$0xff]
      %v4179 = vld [vmem:[#allocation2 + $0x398] sm:$0xff]
      %v4180 = vld [vmem:[#allocation2 + $0x3a0] sm:$0xff]
      %v4181 = vld [vmem:[#allocation2 + $0x3a8] sm:$0xff]
      %v4182 = vld [vmem:[#allocation2 + $0x3b0] sm:$0xff]
      %v4183 = vld [vmem:[#allocation2 + $0x3b8] sm:$0xff]
      %v4184 = vpack.c.bf16 %v4153, %v4152
      %v4185 = vpack.c.bf16 %v4155, %v4154
      %v4186 = vpack.c.bf16 %v4157, %v4156
      %v4187 = vpack.c.bf16 %v4159, %v4158
      %v4188 = vpack.c.bf16 %v4161, %v4160
      %v4189 = vpack.c.bf16 %v4163, %v4162
      %v4190 = vpack.c.bf16 %v4165, %v4164
      %v4191 = vpack.c.bf16 %v4167, %v4166
      %v4192 = vpack.c.bf16 %v4169, %v4168
      %v4193 = vpack.c.bf16 %v4171, %v4170
      %v4194 = vpack.c.bf16 %v4173, %v4172
      %v4195 = vpack.c.bf16 %v4175, %v4174
      %v4196 = vpack.c.bf16 %v4177, %v4176
      %v4197 = vpack.c.bf16 %v4179, %v4178
      %v4198 = vpack.c.bf16 %v4181, %v4180
      %v4199 = vpack.c.bf16 %v4183, %v4182
      %s4200 = scalar_lea.vmem %s3, 56
      %v4201 = vld [vmem:[%s4200] sm:$0xf]
      %v4202 = vld [vmem:[%s4200 + $0x4] sm:$0xf]
      %v4205 = vunpack.c.l.b16 %v4201
      %v4206 = vunpack.c.l.b16 %v4202
      %v4207 = vpack.c.b16 %v4206, %v4205
      %v4210 = vsel %vm1569, %v4184, 0
      %v4213 = vsel %vm1569, %v4185, 0
      %v4216 = vsel %vm1569, %v4186, 0
      %v4219 = vsel %vm1569, %v4187, 0
      %v4222 = vsel %vm1569, %v4188, 0
      %v4225 = vsel %vm1569, %v4189, 0
      %v4228 = vsel %vm1569, %v4190, 0
      %v4231 = vsel %vm1569, %v4191, 0
      %v4234 = vsel %vm1569, %v4192, 0
      %v4237 = vsel %vm1569, %v4193, 0
      %v4240 = vsel %vm1569, %v4194, 0
      %v4243 = vsel %vm1569, %v4195, 0
      %v4246 = vsel %vm1569, %v4196, 0
      %v4249 = vsel %vm1569, %v4197, 0
      %v4252 = vsel %vm1569, %v4198, 0
      %v4255 = vsel %vm1569, %v4199, 0
      %4257 = vmatprep.subr.bf16.mxu0 0
      %4258 = vmatpush1.bf16.msra.mxu0 %v4207
      %4259 = vmatprep.subr.bf16.mxu0 0
      %4260 = vmatpush1.bf16.msra.mxu0 0
      %4261 = vmatprep.subr.bf16.mxu0 0
      %4262 = vmatpush1.bf16.msra.mxu0 0
      %4263 = vmatprep.subr.bf16.mxu0 0
      %4264 = vmatpush1.bf16.msra.mxu0 0
      %4265 = vmatprep.subr.bf16.mxu0 0
      %4266 = vmatpush1.bf16.msra.mxu0 0
      %4267 = vmatprep.subr.bf16.mxu0 0
      %4268 = vmatpush1.bf16.msra.mxu0 0
      %4269 = vmatprep.subr.bf16.mxu0 0
      %4270 = vmatpush1.bf16.msra.mxu0 0
      %4271 = vmatprep.subr.bf16.mxu0 0
      %4272 = vmatpush1.bf16.msra.mxu0 0
      %4273 = vmatprep.subr.bf16.mxu0 0
      %4274 = vmatpush1.bf16.msra.mxu0 0
      %4275 = vmatprep.subr.bf16.mxu0 0
      %4276 = vmatpush1.bf16.msra.mxu0 0
      %4277 = vmatprep.subr.bf16.mxu0 0
      %4278 = vmatpush1.bf16.msra.mxu0 0
      %4279 = vmatprep.subr.bf16.mxu0 0
      %4280 = vmatpush1.bf16.msra.mxu0 0
      %4281 = vmatprep.subr.bf16.mxu0 0
      %4282 = vmatpush1.bf16.msra.mxu0 0
      %4283 = vmatprep.subr.bf16.mxu0 0
      %4284 = vmatpush1.bf16.msra.mxu0 0
      %4285 = vmatprep.subr.bf16.mxu0 0
      %4286 = vmatpush1.bf16.msra.mxu0 0
      %4287 = vmatprep.subr.bf16.mxu0 0
      %4288 = vmatpush1.bf16.msra.mxu0 0
      %4289 = vmatprep.mubr.bf16.mxu0 0
      %4290 = vmatmul.mubr.bf16.gmra.mrb[0].mxu0 %v4210
      %v4291 = vpop.f32.mrb[0].mxu0
      %v4292 = vadd.f32 0.0, %v4291
      %v4293 = vpop.f32.mrb[0].mxu0
      %v4294 = vpop.f32.mrb[0].mxu0
      %v4295 = vadd.f32 0.0, %v4294
      %v4296 = vpop.f32.mrb[0].mxu0
      %4297 = vmatprep.mubr.bf16.mxu0 0
      %4298 = vmatmul.mubr.bf16.gmra.mrb[0].mxu0 %v4213
      %v4299 = vpop.f32.mrb[0].mxu0
      %v4300 = vadd.f32 0.0, %v4299
      %v4301 = vpop.f32.mrb[0].mxu0
      %v4302 = vpop.f32.mrb[0].mxu0
      %v4303 = vadd.f32 0.0, %v4302
      %v4304 = vpop.f32.mrb[0].mxu0
      %4305 = vmatprep.mubr.bf16.mxu0 0
      %4306 = vmatmul.mubr.bf16.gmra.mrb[0].mxu0 %v4216
      %v4307 = vpop.f32.mrb[0].mxu0
      %v4308 = vadd.f32 0.0, %v4307
      %v4309 = vpop.f32.mrb[0].mxu0
      %v4310 = vpop.f32.mrb[0].mxu0
      %v4311 = vadd.f32 0.0, %v4310
      %v4312 = vpop.f32.mrb[0].mxu0
      %4313 = vmatprep.mubr.bf16.mxu0 0
      %4314 = vmatmul.mubr.bf16.gmra.mrb[0].mxu0 %v4219
      %v4315 = vpop.f32.mrb[0].mxu0
      %v4316 = vadd.f32 0.0, %v4315
      %v4317 = vpop.f32.mrb[0].mxu0
      %v4318 = vpop.f32.mrb[0].mxu0
      %v4319 = vadd.f32 0.0, %v4318
      %v4320 = vpop.f32.mrb[0].mxu0
      %4321 = vmatprep.mubr.bf16.mxu0 0
      %4322 = vmatmul.mubr.bf16.gmra.mrb[0].mxu0 %v4222
      %v4323 = vpop.f32.mrb[0].mxu0
      %v4324 = vadd.f32 0.0, %v4323
      %v4325 = vpop.f32.mrb[0].mxu0
      %v4326 = vpop.f32.mrb[0].mxu0
      %v4327 = vadd.f32 0.0, %v4326
      %v4328 = vpop.f32.mrb[0].mxu0
      %4329 = vmatprep.mubr.bf16.mxu0 0
      %4330 = vmatmul.mubr.bf16.gmra.mrb[0].mxu0 %v4225
      %v4331 = vpop.f32.mrb[0].mxu0
      %v4332 = vadd.f32 0.0, %v4331
      %v4333 = vpop.f32.mrb[0].mxu0
      %v4334 = vpop.f32.mrb[0].mxu0
      %v4335 = vadd.f32 0.0, %v4334
      %v4336 = vpop.f32.mrb[0].mxu0
      %4337 = vmatprep.mubr.bf16.mxu0 0
      %4338 = vmatmul.mubr.bf16.gmra.mrb[0].mxu0 %v4228
      %v4339 = vpop.f32.mrb[0].mxu0
      %v4340 = vadd.f32 0.0, %v4339
      %v4341 = vpop.f32.mrb[0].mxu0
      %v4342 = vpop.f32.mrb[0].mxu0
      %v4343 = vadd.f32 0.0, %v4342
      %v4344 = vpop.f32.mrb[0].mxu0
      %4345 = vmatprep.mubr.bf16.mxu0 0
      %4346 = vmatmul.mubr.bf16.gmra.mrb[0].mxu0 %v4231
      %v4347 = vpop.f32.mrb[0].mxu0
      %v4348 = vadd.f32 0.0, %v4347
      %v4349 = vpop.f32.mrb[0].mxu0
      %v4350 = vpop.f32.mrb[0].mxu0
      %v4351 = vadd.f32 0.0, %v4350
      %v4352 = vpop.f32.mrb[0].mxu0
      %4353 = vmatprep.mubr.bf16.mxu0 0
      %4354 = vmatmul.mubr.bf16.gmra.mrb[0].mxu0 %v4234
      %v4355 = vpop.f32.mrb[0].mxu0
      %v4356 = vadd.f32 0.0, %v4355
      %v4357 = vpop.f32.mrb[0].mxu0
      %v4358 = vpop.f32.mrb[0].mxu0
      %v4359 = vadd.f32 0.0, %v4358
      %v4360 = vpop.f32.mrb[0].mxu0
      %4361 = vmatprep.mubr.bf16.mxu0 0
      %4362 = vmatmul.mubr.bf16.gmra.mrb[0].mxu0 %v4237
      %v4363 = vpop.f32.mrb[0].mxu0
      %v4364 = vadd.f32 0.0, %v4363
      %v4365 = vpop.f32.mrb[0].mxu0
      %v4366 = vpop.f32.mrb[0].mxu0
      %v4367 = vadd.f32 0.0, %v4366
      %v4368 = vpop.f32.mrb[0].mxu0
      %4369 = vmatprep.mubr.bf16.mxu0 0
      %4370 = vmatmul.mubr.bf16.gmra.mrb[0].mxu0 %v4240
      %v4371 = vpop.f32.mrb[0].mxu0
      %v4372 = vadd.f32 0.0, %v4371
      %v4373 = vpop.f32.mrb[0].mxu0
      %v4374 = vpop.f32.mrb[0].mxu0
      %v4375 = vadd.f32 0.0, %v4374
      %v4376 = vpop.f32.mrb[0].mxu0
      %4377 = vmatprep.mubr.bf16.mxu0 0
      %4378 = vmatmul.mubr.bf16.gmra.mrb[0].mxu0 %v4243
      %v4379 = vpop.f32.mrb[0].mxu0
      %v4380 = vadd.f32 0.0, %v4379
      %v4381 = vpop.f32.mrb[0].mxu0
      %v4382 = vpop.f32.mrb[0].mxu0
      %v4383 = vadd.f32 0.0, %v4382
      %v4384 = vpop.f32.mrb[0].mxu0
      %4385 = vmatprep.mubr.bf16.mxu0 0
      %4386 = vmatmul.mubr.bf16.gmra.mrb[0].mxu0 %v4246
      %v4387 = vpop.f32.mrb[0].mxu0
      %v4388 = vadd.f32 0.0, %v4387
      %v4389 = vpop.f32.mrb[0].mxu0
      %v4390 = vpop.f32.mrb[0].mxu0
      %v4391 = vadd.f32 0.0, %v4390
      %v4392 = vpop.f32.mrb[0].mxu0
      %4393 = vmatprep.mubr.bf16.mxu0 0
      %4394 = vmatmul.mubr.bf16.gmra.mrb[0].mxu0 %v4249
      %v4395 = vpop.f32.mrb[0].mxu0
      %v4396 = vadd.f32 0.0, %v4395
      %v4397 = vpop.f32.mrb[0].mxu0
      %v4398 = vpop.f32.mrb[0].mxu0
      %v4399 = vadd.f32 0.0, %v4398
      %v4400 = vpop.f32.mrb[0].mxu0
      %4401 = vmatprep.mubr.bf16.mxu0 0
      %4402 = vmatmul.mubr.bf16.gmra.mrb[0].mxu0 %v4252
      %v4403 = vpop.f32.mrb[0].mxu0
      %v4404 = vadd.f32 0.0, %v4403
      %v4405 = vpop.f32.mrb[0].mxu0
      %v4406 = vpop.f32.mrb[0].mxu0
      %v4407 = vadd.f32 0.0, %v4406
      %v4408 = vpop.f32.mrb[0].mxu0
      %4409 = vmatprep.mubr.bf16.mxu0 0
      %4410 = vmatmul.mubr.bf16.gmra.mrb[0].mxu0 %v4255
      %v4411 = vpop.f32.mrb[0].mxu0
      %v4412 = vadd.f32 0.0, %v4411
      %v4413 = vpop.f32.mrb[0].mxu0
      %v4414 = vpop.f32.mrb[0].mxu0
      %v4415 = vadd.f32 0.0, %v4414
      %v4416 = vpop.f32.mrb[0].mxu0
      %4417 = vdwg.mxu0
      %v4418 = vadd.f32 %v4120, %v4292
      %v4419 = vadd.f32 %v4121, %v4295
      %v4420 = vadd.f32 %v4122, %v4300
      %v4421 = vadd.f32 %v4123, %v4303
      %v4422 = vadd.f32 %v4124, %v4308
      %v4423 = vadd.f32 %v4125, %v4311
      %v4424 = vadd.f32 %v4126, %v4316
      %v4425 = vadd.f32 %v4127, %v4319
      %v4426 = vadd.f32 %v4128, %v4324
      %v4427 = vadd.f32 %v4129, %v4327
      %v4428 = vadd.f32 %v4130, %v4332
      %v4429 = vadd.f32 %v4131, %v4335
      %v4430 = vadd.f32 %v4132, %v4340
      %v4431 = vadd.f32 %v4133, %v4343
      %v4432 = vadd.f32 %v4134, %v4348
      %v4433 = vadd.f32 %v4135, %v4351
      %v4434 = vadd.f32 %v4136, %v4356
      %v4435 = vadd.f32 %v4137, %v4359
      %v4436 = vadd.f32 %v4138, %v4364
      %v4437 = vadd.f32 %v4139, %v4367
      %v4438 = vadd.f32 %v4140, %v4372
      %v4439 = vadd.f32 %v4141, %v4375
      %v4440 = vadd.f32 %v4142, %v4380
      %v4441 = vadd.f32 %v4143, %v4383
      %v4442 = vadd.f32 %v4144, %v4388
      %v4443 = vadd.f32 %v4145, %v4391
      %v4444 = vadd.f32 %v4146, %v4396
      %v4445 = vadd.f32 %v4147, %v4399
      %v4446 = vadd.f32 %v4148, %v4404
      %v4447 = vadd.f32 %v4149, %v4407
      %v4448 = vadd.f32 %v4150, %v4412
      %v4449 = vadd.f32 %v4151, %v4415
      %v4450 = vld [vmem:[#allocation2 + $0xc0] sm:$0xff]
      %v4451 = vld [vmem:[#allocation2 + $0xc8] sm:$0xff]
      %v4452 = vld [vmem:[#allocation2 + $0xd0] sm:$0xff]
      %v4453 = vld [vmem:[#allocation2 + $0xd8] sm:$0xff]
      %v4454 = vld [vmem:[#allocation2 + $0xe0] sm:$0xff]
      %v4455 = vld [vmem:[#allocation2 + $0xe8] sm:$0xff]
      %v4456 = vld [vmem:[#allocation2 + $0xf0] sm:$0xff]
      %v4457 = vld [vmem:[#allocation2 + $0xf8] sm:$0xff]
      %v4458 = vld [vmem:[#allocation2 + $0x1c0] sm:$0xff]
      %v4459 = vld [vmem:[#allocation2 + $0x1c8] sm:$0xff]
      %v4460 = vld [vmem:[#allocation2 + $0x1d0] sm:$0xff]
      %v4461 = vld [vmem:[#allocation2 + $0x1d8] sm:$0xff]
      %v4462 = vld [vmem:[#allocation2 + $0x1e0] sm:$0xff]
      %v4463 = vld [vmem:[#allocation2 + $0x1e8] sm:$0xff]
      %v4464 = vld [vmem:[#allocation2 + $0x1f0] sm:$0xff]
      %v4465 = vld [vmem:[#allocation2 + $0x1f8] sm:$0xff]
      %v4466 = vld [vmem:[#allocation2 + $0x2c0] sm:$0xff]
      %v4467 = vld [vmem:[#allocation2 + $0x2c8] sm:$0xff]
      %v4468 = vld [vmem:[#allocation2 + $0x2d0] sm:$0xff]
      %v4469 = vld [vmem:[#allocation2 + $0x2d8] sm:$0xff]
      %v4470 = vld [vmem:[#allocation2 + $0x2e0] sm:$0xff]
      %v4471 = vld [vmem:[#allocation2 + $0x2e8] sm:$0xff]
      %v4472 = vld [vmem:[#allocation2 + $0x2f0] sm:$0xff]
      %v4473 = vld [vmem:[#allocation2 + $0x2f8] sm:$0xff]
      %v4474 = vld [vmem:[#allocation2 + $0x3c0] sm:$0xff]
      %v4475 = vld [vmem:[#allocation2 + $0x3c8] sm:$0xff]
      %v4476 = vld [vmem:[#allocation2 + $0x3d0] sm:$0xff]
      %v4477 = vld [vmem:[#allocation2 + $0x3d8] sm:$0xff]
      %v4478 = vld [vmem:[#allocation2 + $0x3e0] sm:$0xff]
      %v4479 = vld [vmem:[#allocation2 + $0x3e8] sm:$0xff]
      %v4480 = vld [vmem:[#allocation2 + $0x3f0] sm:$0xff]
      %v4481 = vld [vmem:[#allocation2 + $0x3f8] sm:$0xff]
      %v4482 = vpack.c.bf16 %v4451, %v4450
      %v4483 = vpack.c.bf16 %v4453, %v4452
      %v4484 = vpack.c.bf16 %v4455, %v4454
      %v4485 = vpack.c.bf16 %v4457, %v4456
      %v4486 = vpack.c.bf16 %v4459, %v4458
      %v4487 = vpack.c.bf16 %v4461, %v4460
      %v4488 = vpack.c.bf16 %v4463, %v4462
      %v4489 = vpack.c.bf16 %v4465, %v4464
      %v4490 = vpack.c.bf16 %v4467, %v4466
      %v4491 = vpack.c.bf16 %v4469, %v4468
      %v4492 = vpack.c.bf16 %v4471, %v4470
      %v4493 = vpack.c.bf16 %v4473, %v4472
      %v4494 = vpack.c.bf16 %v4475, %v4474
      %v4495 = vpack.c.bf16 %v4477, %v4476
      %v4496 = vpack.c.bf16 %v4479, %v4478
      %v4497 = vpack.c.bf16 %v4481, %v4480
      %s4498 = scalar_lea.vmem %s3, 64
      %v4499 = vld [vmem:[%s4498] sm:$0xf]
      %v4500 = vld [vmem:[%s4498 + $0x4] sm:$0xf]
      %v4503 = vunpack.c.l.b16 %v4499
      %v4504 = vunpack.c.l.b16 %v4500
      %v4505 = vpack.c.b16 %v4504, %v4503
      %v4508 = vsel %vm1569, %v4482, 0
      %v4511 = vsel %vm1569, %v4483, 0
      %v4514 = vsel %vm1569, %v4484, 0
      %v4517 = vsel %vm1569, %v4485, 0
      %v4520 = vsel %vm1569, %v4486, 0
      %v4523 = vsel %vm1569, %v4487, 0
      %v4526 = vsel %vm1569, %v4488, 0
      %v4529 = vsel %vm1569, %v4489, 0
      %v4532 = vsel %vm1569, %v4490, 0
      %v4535 = vsel %vm1569, %v4491, 0
      %v4538 = vsel %vm1569, %v4492, 0
      %v4541 = vsel %vm1569, %v4493, 0
      %v4544 = vsel %vm1569, %v4494, 0
      %v4547 = vsel %vm1569, %v4495, 0
      %v4550 = vsel %vm1569, %v4496, 0
      %v4553 = vsel %vm1569, %v4497, 0
      %4555 = vmatprep.subr.bf16.mxu0 0
      %4556 = vmatpush1.bf16.msra.mxu0 %v4505
      %4557 = vmatprep.subr.bf16.mxu0 0
      %4558 = vmatpush1.bf16.msra.mxu0 0
      %4559 = vmatprep.subr.bf16.mxu0 0
      %4560 = vmatpush1.bf16.msra.mxu0 0
      %4561 = vmatprep.subr.bf16.mxu0 0
      %4562 = vmatpush1.bf16.msra.mxu0 0
      %4563 = vmatprep.subr.bf16.mxu0 0
      %4564 = vmatpush1.bf16.msra.mxu0 0
      %4565 = vmatprep.subr.bf16.mxu0 0
      %4566 = vmatpush1.bf16.msra.mxu0 0
      %4567 = vmatprep.subr.bf16.mxu0 0
      %4568 = vmatpush1.bf16.msra.mxu0 0
      %4569 = vmatprep.subr.bf16.mxu0 0
      %4570 = vmatpush1.bf16.msra.mxu0 0
      %4571 = vmatprep.subr.bf16.mxu0 0
      %4572 = vmatpush1.bf16.msra.mxu0 0
      %4573 = vmatprep.subr.bf16.mxu0 0
      %4574 = vmatpush1.bf16.msra.mxu0 0
      %4575 = vmatprep.subr.bf16.mxu0 0
      %4576 = vmatpush1.bf16.msra.mxu0 0
      %4577 = vmatprep.subr.bf16.mxu0 0
      %4578 = vmatpush1.bf16.msra.mxu0 0
      %4579 = vmatprep.subr.bf16.mxu0 0
      %4580 = vmatpush1.bf16.msra.mxu0 0
      %4581 = vmatprep.subr.bf16.mxu0 0
      %4582 = vmatpush1.bf16.msra.mxu0 0
      %4583 = vmatprep.subr.bf16.mxu0 0
      %4584 = vmatpush1.bf16.msra.mxu0 0
      %4585 = vmatprep.subr.bf16.mxu0 0
      %4586 = vmatpush1.bf16.msra.mxu0 0
      %4587 = vmatprep.mubr.bf16.mxu0 0
      %4588 = vmatmul.mubr.bf16.gmra.mrb[0].mxu0 %v4508
      %v4589 = vpop.f32.mrb[0].mxu0
      %v4590 = vadd.f32 0.0, %v4589
      %v4591 = vpop.f32.mrb[0].mxu0
      %v4592 = vpop.f32.mrb[0].mxu0
      %v4593 = vadd.f32 0.0, %v4592
      %v4594 = vpop.f32.mrb[0].mxu0
      %4595 = vmatprep.mubr.bf16.mxu0 0
      %4596 = vmatmul.mubr.bf16.gmra.mrb[0].mxu0 %v4511
      %v4597 = vpop.f32.mrb[0].mxu0
      %v4598 = vadd.f32 0.0, %v4597
      %v4599 = vpop.f32.mrb[0].mxu0
      %v4600 = vpop.f32.mrb[0].mxu0
      %v4601 = vadd.f32 0.0, %v4600
      %v4602 = vpop.f32.mrb[0].mxu0
      %4603 = vmatprep.mubr.bf16.mxu0 0
      %4604 = vmatmul.mubr.bf16.gmra.mrb[0].mxu0 %v4514
      %v4605 = vpop.f32.mrb[0].mxu0
      %v4606 = vadd.f32 0.0, %v4605
      %v4607 = vpop.f32.mrb[0].mxu0
      %v4608 = vpop.f32.mrb[0].mxu0
      %v4609 = vadd.f32 0.0, %v4608
      %v4610 = vpop.f32.mrb[0].mxu0
      %4611 = vmatprep.mubr.bf16.mxu0 0
      %4612 = vmatmul.mubr.bf16.gmra.mrb[0].mxu0 %v4517
      %v4613 = vpop.f32.mrb[0].mxu0
      %v4614 = vadd.f32 0.0, %v4613
      %v4615 = vpop.f32.mrb[0].mxu0
      %v4616 = vpop.f32.mrb[0].mxu0
      %v4617 = vadd.f32 0.0, %v4616
      %v4618 = vpop.f32.mrb[0].mxu0
      %4619 = vmatprep.mubr.bf16.mxu0 0
      %4620 = vmatmul.mubr.bf16.gmra.mrb[0].mxu0 %v4520
      %v4621 = vpop.f32.mrb[0].mxu0
      %v4622 = vadd.f32 0.0, %v4621
      %v4623 = vpop.f32.mrb[0].mxu0
      %v4624 = vpop.f32.mrb[0].mxu0
      %v4625 = vadd.f32 0.0, %v4624
      %v4626 = vpop.f32.mrb[0].mxu0
      %4627 = vmatprep.mubr.bf16.mxu0 0
      %4628 = vmatmul.mubr.bf16.gmra.mrb[0].mxu0 %v4523
      %v4629 = vpop.f32.mrb[0].mxu0
      %v4630 = vadd.f32 0.0, %v4629
      %v4631 = vpop.f32.mrb[0].mxu0
      %v4632 = vpop.f32.mrb[0].mxu0
      %v4633 = vadd.f32 0.0, %v4632
      %v4634 = vpop.f32.mrb[0].mxu0
      %4635 = vmatprep.mubr.bf16.mxu0 0
      %4636 = vmatmul.mubr.bf16.gmra.mrb[0].mxu0 %v4526
      %v4637 = vpop.f32.mrb[0].mxu0
      %v4638 = vadd.f32 0.0, %v4637
      %v4639 = vpop.f32.mrb[0].mxu0
      %v4640 = vpop.f32.mrb[0].mxu0
      %v4641 = vadd.f32 0.0, %v4640
      %v4642 = vpop.f32.mrb[0].mxu0
      %4643 = vmatprep.mubr.bf16.mxu0 0
      %4644 = vmatmul.mubr.bf16.gmra.mrb[0].mxu0 %v4529
      %v4645 = vpop.f32.mrb[0].mxu0
      %v4646 = vadd.f32 0.0, %v4645
      %v4647 = vpop.f32.mrb[0].mxu0
      %v4648 = vpop.f32.mrb[0].mxu0
      %v4649 = vadd.f32 0.0, %v4648
      %v4650 = vpop.f32.mrb[0].mxu0
      %4651 = vmatprep.mubr.bf16.mxu0 0
      %4652 = vmatmul.mubr.bf16.gmra.mrb[0].mxu0 %v4532
      %v4653 = vpop.f32.mrb[0].mxu0
      %v4654 = vadd.f32 0.0, %v4653
      %v4655 = vpop.f32.mrb[0].mxu0
      %v4656 = vpop.f32.mrb[0].mxu0
      %v4657 = vadd.f32 0.0, %v4656
      %v4658 = vpop.f32.mrb[0].mxu0
      %4659 = vmatprep.mubr.bf16.mxu0 0
      %4660 = vmatmul.mubr.bf16.gmra.mrb[0].mxu0 %v4535
      %v4661 = vpop.f32.mrb[0].mxu0
      %v4662 = vadd.f32 0.0, %v4661
      %v4663 = vpop.f32.mrb[0].mxu0
      %v4664 = vpop.f32.mrb[0].mxu0
      %v4665 = vadd.f32 0.0, %v4664
      %v4666 = vpop.f32.mrb[0].mxu0
      %4667 = vmatprep.mubr.bf16.mxu0 0
      %4668 = vmatmul.mubr.bf16.gmra.mrb[0].mxu0 %v4538
      %v4669 = vpop.f32.mrb[0].mxu0
      %v4670 = vadd.f32 0.0, %v4669
      %v4671 = vpop.f32.mrb[0].mxu0
      %v4672 = vpop.f32.mrb[0].mxu0
      %v4673 = vadd.f32 0.0, %v4672
      %v4674 = vpop.f32.mrb[0].mxu0
      %4675 = vmatprep.mubr.bf16.mxu0 0
      %4676 = vmatmul.mubr.bf16.gmra.mrb[0].mxu0 %v4541
      %v4677 = vpop.f32.mrb[0].mxu0
      %v4678 = vadd.f32 0.0, %v4677
      %v4679 = vpop.f32.mrb[0].mxu0
      %v4680 = vpop.f32.mrb[0].mxu0
      %v4681 = vadd.f32 0.0, %v4680
      %v4682 = vpop.f32.mrb[0].mxu0
      %4683 = vmatprep.mubr.bf16.mxu0 0
      %4684 = vmatmul.mubr.bf16.gmra.mrb[0].mxu0 %v4544
      %v4685 = vpop.f32.mrb[0].mxu0
      %v4686 = vadd.f32 0.0, %v4685
      %v4687 = vpop.f32.mrb[0].mxu0
      %v4688 = vpop.f32.mrb[0].mxu0
      %v4689 = vadd.f32 0.0, %v4688
      %v4690 = vpop.f32.mrb[0].mxu0
      %4691 = vmatprep.mubr.bf16.mxu0 0
      %4692 = vmatmul.mubr.bf16.gmra.mrb[0].mxu0 %v4547
      %v4693 = vpop.f32.mrb[0].mxu0
      %v4694 = vadd.f32 0.0, %v4693
      %v4695 = vpop.f32.mrb[0].mxu0
      %v4696 = vpop.f32.mrb[0].mxu0
      %v4697 = vadd.f32 0.0, %v4696
      %v4698 = vpop.f32.mrb[0].mxu0
      %4699 = vmatprep.mubr.bf16.mxu0 0
      %4700 = vmatmul.mubr.bf16.gmra.mrb[0].mxu0 %v4550
      %v4701 = vpop.f32.mrb[0].mxu0
      %v4702 = vadd.f32 0.0, %v4701
      %v4703 = vpop.f32.mrb[0].mxu0
      %v4704 = vpop.f32.mrb[0].mxu0
      %v4705 = vadd.f32 0.0, %v4704
      %v4706 = vpop.f32.mrb[0].mxu0
      %4707 = vmatprep.mubr.bf16.mxu0 0
      %4708 = vmatmul.mubr.bf16.gmra.mrb[0].mxu0 %v4553
      %v4709 = vpop.f32.mrb[0].mxu0
      %v4710 = vadd.f32 0.0, %v4709
      %v4711 = vpop.f32.mrb[0].mxu0
      %v4712 = vpop.f32.mrb[0].mxu0
      %v4713 = vadd.f32 0.0, %v4712
      %v4714 = vpop.f32.mrb[0].mxu0
      %4715 = vdwg.mxu0
      %v4716 = vadd.f32 %v4418, %v4590
      %v4717 = vadd.f32 %v4419, %v4593
      %v4718 = vadd.f32 %v4420, %v4598
      %v4719 = vadd.f32 %v4421, %v4601
      %v4720 = vadd.f32 %v4422, %v4606
      %v4721 = vadd.f32 %v4423, %v4609
      %v4722 = vadd.f32 %v4424, %v4614
      %v4723 = vadd.f32 %v4425, %v4617
      %v4724 = vadd.f32 %v4426, %v4622
      %v4725 = vadd.f32 %v4427, %v4625
      %v4726 = vadd.f32 %v4428, %v4630
      %v4727 = vadd.f32 %v4429, %v4633
      %v4728 = vadd.f32 %v4430, %v4638
      %v4729 = vadd.f32 %v4431, %v4641
      %v4730 = vadd.f32 %v4432, %v4646
      %v4731 = vadd.f32 %v4433, %v4649
      %v4732 = vadd.f32 %v4434, %v4654
      %v4733 = vadd.f32 %v4435, %v4657
      %v4734 = vadd.f32 %v4436, %v4662
      %v4735 = vadd.f32 %v4437, %v4665
      %v4736 = vadd.f32 %v4438, %v4670
      %v4737 = vadd.f32 %v4439, %v4673
      %v4738 = vadd.f32 %v4440, %v4678
      %v4739 = vadd.f32 %v4441, %v4681
      %v4740 = vadd.f32 %v4442, %v4686
      %v4741 = vadd.f32 %v4443, %v4689
      %v4742 = vadd.f32 %v4444, %v4694
      %v4743 = vadd.f32 %v4445, %v4697
      %v4744 = vadd.f32 %v4446, %v4702
      %v4745 = vadd.f32 %v4447, %v4705
      %v4746 = vadd.f32 %v4448, %v4710
      %v4747 = vadd.f32 %v4449, %v4713
      %v4748 = vmax.f32 %v4716, 0.0
      %v4749 = vmax.f32 %v4717, 0.0
      %v4750 = vmax.f32 %v4718, 0.0
      %v4751 = vmax.f32 %v4719, 0.0
      %v4752 = vmax.f32 %v4720, 0.0
      %v4753 = vmax.f32 %v4721, 0.0
      %v4754 = vmax.f32 %v4722, 0.0
      %v4755 = vmax.f32 %v4723, 0.0
      %v4756 = vmax.f32 %v4724, 0.0
      %v4757 = vmax.f32 %v4725, 0.0
      %v4758 = vmax.f32 %v4726, 0.0
      %v4759 = vmax.f32 %v4727, 0.0
      %v4760 = vmax.f32 %v4728, 0.0
      %v4761 = vmax.f32 %v4729, 0.0
      %v4762 = vmax.f32 %v4730, 0.0
      %v4763 = vmax.f32 %v4731, 0.0
      %v4764 = vmax.f32 %v4732, 0.0
      %v4765 = vmax.f32 %v4733, 0.0
      %v4766 = vmax.f32 %v4734, 0.0
      %v4767 = vmax.f32 %v4735, 0.0
      %v4768 = vmax.f32 %v4736, 0.0
      %v4769 = vmax.f32 %v4737, 0.0
      %v4770 = vmax.f32 %v4738, 0.0
      %v4771 = vmax.f32 %v4739, 0.0
      %v4772 = vmax.f32 %v4740, 0.0
      %v4773 = vmax.f32 %v4741, 0.0
      %v4774 = vmax.f32 %v4742, 0.0
      %v4775 = vmax.f32 %v4743, 0.0
      %v4776 = vmax.f32 %v4744, 0.0
      %v4777 = vmax.f32 %v4745, 0.0
      %v4778 = vmax.f32 %v4746, 0.0
      %v4779 = vmax.f32 %v4747, 0.0
      %vm4780 = vcmask 261120
      %4781 = vst.msk [vmem:[%s224] sm:$0xff] %vm4780, %v4748
      %4782 = vst.msk [vmem:[%s224 + $0x8] sm:$0xff] %vm4780, %v4749
      %4783 = vst.msk [vmem:[%s224 + $0x10] sm:$0xff] %vm4780, %v4750
      %4784 = vst.msk [vmem:[%s224 + $0x18] sm:$0xff] %vm4780, %v4751
      %4785 = vst.msk [vmem:[%s224 + $0x20] sm:$0xff] %vm4780, %v4752
      %4786 = vst.msk [vmem:[%s224 + $0x28] sm:$0xff] %vm4780, %v4753
      %4787 = vst.msk [vmem:[%s224 + $0x30] sm:$0xff] %vm4780, %v4754
      %4788 = vst.msk [vmem:[%s224 + $0x38] sm:$0xff] %vm4780, %v4755
      %4789 = vst.msk [vmem:[%s224 + $0x40] sm:$0xff] %vm4780, %v4756
      %4790 = vst.msk [vmem:[%s224 + $0x48] sm:$0xff] %vm4780, %v4757
      %4791 = vst.msk [vmem:[%s224 + $0x50] sm:$0xff] %vm4780, %v4758
      %4792 = vst.msk [vmem:[%s224 + $0x58] sm:$0xff] %vm4780, %v4759
      %4793 = vst.msk [vmem:[%s224 + $0x60] sm:$0xff] %vm4780, %v4760
      %4794 = vst.msk [vmem:[%s224 + $0x68] sm:$0xff] %vm4780, %v4761
      %4795 = vst.msk [vmem:[%s224 + $0x70] sm:$0xff] %vm4780, %v4762
      %4796 = vst.msk [vmem:[%s224 + $0x78] sm:$0xff] %vm4780, %v4763
      %4797 = vst.msk [vmem:[%s224 + $0x80] sm:$0xff] %vm4780, %v4764
      %4798 = vst.msk [vmem:[%s224 + $0x88] sm:$0xff] %vm4780, %v4765
      %4799 = vst.msk [vmem:[%s224 + $0x90] sm:$0xff] %vm4780, %v4766
      %4800 = vst.msk [vmem:[%s224 + $0x98] sm:$0xff] %vm4780, %v4767
      %4801 = vst.msk [vmem:[%s224 + $0xa0] sm:$0xff] %vm4780, %v4768
      %4802 = vst.msk [vmem:[%s224 + $0xa8] sm:$0xff] %vm4780, %v4769
      %4803 = vst.msk [vmem:[%s224 + $0xb0] sm:$0xff] %vm4780, %v4770
      %4804 = vst.msk [vmem:[%s224 + $0xb8] sm:$0xff] %vm4780, %v4771
      %4805 = vst.msk [vmem:[%s224 + $0xc0] sm:$0xff] %vm4780, %v4772
      %4806 = vst.msk [vmem:[%s224 + $0xc8] sm:$0xff] %vm4780, %v4773
      %4807 = vst.msk [vmem:[%s224 + $0xd0] sm:$0xff] %vm4780, %v4774
      %4808 = vst.msk [vmem:[%s224 + $0xd8] sm:$0xff] %vm4780, %v4775
      %4809 = vst.msk [vmem:[%s224 + $0xe0] sm:$0xff] %vm4780, %v4776
      %4810 = vst.msk [vmem:[%s224 + $0xe8] sm:$0xff] %vm4780, %v4777
      %4811 = vst.msk [vmem:[%s224 + $0xf0] sm:$0xff] %vm4780, %v4778
      %4812 = vst.msk [vmem:[%s224 + $0xf8] sm:$0xff] %vm4780, %v4779
      %p4813 = scmp.lt.s32.totalorder %s16, 3
      %s4814 = scalar_select %p4813, %s16, 3
      %s4815 = smul.addr %s4814, 32
      %s4816 = smul.addr %s4815, 8
      %s4817 = scalar_lea.vmem %s5, %s4816
      // Predicated region
      $region41: #{_lambda_.2} parent=39 // pred_check
        %p4818 = pneg %p144
      $region42: #{_lambda_.2} parent=39 // pred_check_branch
        %4820 = sbr.rel (%p4818) target = $region44
      $region43: #{_lambda_.2} parent=39 // pred_region
        _
      $region44: #{_lambda_.2} parent=39 // pred_fallthru
        _
    $region40: #{_lambda_.2} parent=5 // pred_fallthru
      _
    %p4821 = scmp.le.s32.totalorder 2, %s11
    // Predicated region
    $region45: #{_lambda_.2} parent=5 // pred_check
      %p4822 = pneg %p4821
    $region46: #{_lambda_.2} parent=5 // pred_check_branch
      %4824 = sbr.rel (%p4822) target = $region48
    $region47: #{_lambda_.2} parent=5 // pred_region
      %s4825 = ssub.s32 %s11, 2
      // Predicated region
      $region49: #{_lambda_.2} parent=47 // pred_check
        %p4826 = pneg %p150
      $region50: #{_lambda_.2} parent=47 // pred_check_branch
        %4828 = sbr.rel (%p4826) target = $region52
      $region51: #{_lambda_.2} parent=47 // pred_region
        %p4829 = scmp.lt.s32.totalorder %s17, 3
        %s4830 = scalar_select %p4829, %s17, 3
        %s4831 = smul.addr %s4830, 32
        %s4832 = smul.addr %s4831, 8
        %s4833 = scalar_lea.vmem %s5, %s4832
      $region52: #{_lambda_.2} parent=47 // pred_fallthru
        _
    $region48: #{_lambda_.2} parent=5 // pred_fallthru
      _
  $region6: #{_lambda_.2} parent=0 // loop_footer
    %s15 = sadd.s32 1, %s11
  $region7: #{_lambda_.2} parent=0 // loop_footer_branch
    %10 = sbr.rel target = $region3
  $region8: #{_lambda_.2} parent=0 // loop_exit
    _

// kernel: _lambda_.3
$region0: #{_lambda_.3}
  #allocation0 [shape = 'u32[]', space=smem, size = 0x4, offset = 0x4, fixed_abs, tag = 'smem constant byte address 0x4 - core index']
  #allocation1 [shape = 'u32[144,128]{1,0:T(1,128)}', space=vmem, size = 0x12000, scoped, tag = 'internal scratch']
  #allocation2 [shape = 'f32[8,128]{1,0:T(8,128)}', space=vmem, size = 0x1000, scoped, tag = 'scratch operand']
  %s0 = inlined_call_operand.vmem [shape: f32[2,8,2048], index: 0, kind: input, shape index: {}]
  %s1 = inlined_call_operand.vmem [shape: bf16[2048,128], index: 1, kind: input, shape index: {}]
  %s2 = inlined_call_operand.vmem [shape: f32[1,128], index: 2, kind: input, shape index: {}]
  %s3 = inlined_call_operand.vmem [shape: f32[1,128], index: 3, kind: input, shape index: {}]
  %s4 = inlined_call_operand.vmem [shape: f32[1,128], index: 4, kind: input, shape index: {}]
  %s5 = inlined_call_operand.vmem [shape: f32[2,1,128], index: 5, kind: input, shape index: {}]
  %s6 = inlined_call_operand.vmem [shape: f32[2,1,128], index: 6, kind: input, shape index: {}]
  %s7 = inlined_call_operand.vmem [shape: bf16[2,128,384], index: 7, kind: input, shape index: {}]
  %s8 = inlined_call_operand.vmem [shape: f32[2,1,384], index: 8, kind: input, shape index: {}]
  %s9 = inlined_call_operand.vmem [shape: bf16[2,128,128], index: 9, kind: input, shape index: {}]
  %s10 = inlined_call_operand.vmem [shape: f32[2,1,128], index: 10, kind: input, shape index: {}]
  %s11 = inlined_call_operand.vmem [shape: f32[2,1,128], index: 11, kind: input, shape index: {}]
  %s12 = inlined_call_operand.vmem [shape: f32[2,1,128], index: 12, kind: input, shape index: {}]
  %s13 = inlined_call_operand.vmem [shape: bf16[2,128,512], index: 13, kind: input, shape index: {}]
  %s14 = inlined_call_operand.vmem [shape: f32[2,1,512], index: 14, kind: input, shape index: {}]
  %s15 = inlined_call_operand.vmem [shape: bf16[2,512,128], index: 15, kind: input, shape index: {}]
  %s16 = inlined_call_operand.vmem [shape: f32[2,1,128], index: 16, kind: input, shape index: {}]
  %s17 = inlined_call_operand.vmem [shape: bf16[128,128], index: 17, kind: input, shape index: {}]
  %s18 = inlined_call_operand.vmem [shape: f32[1,128], index: 18, kind: input, shape index: {}]
  %s19 = inlined_call_operand.vmem [shape: f32[1,128], index: 19, kind: input, shape index: {}]
  %s20 = inlined_call_operand.vmem [shape: f32[1,128], index: 20, kind: input, shape index: {}]
  %s21 = inlined_call_operand.vmem [shape: f32[2,2,16,128], index: 21, kind: input, shape index: {}]
  %s22 = inlined_call_operand.vmem [shape: f32[2,8,128], index: 22, kind: output, shape index: {0}]
  %s23 = inlined_call_operand.hbm [shape: f32[2,8,128], index: 23, kind: output, shape index: {1}]
  %s24 = inlined_call_operand.vmem [shape: f32[2,8,128], index: 24, kind: output, shape index: {2}]
  %s25 = inlined_call_operand.vmem [shape: f32[2,2,16,128], index: 25, kind: output, shape index: {3}]
  %26 = xla_tuple %s22, %s23, %s24, %s25
  %s27 = sld [smem:[#allocation0]]
  $region153: #{_lambda_.3} parent=0
    _
  %s29 = ssub.s32 1, %s27
  %s30 = scalar_select 0, %s29, %s27
  $region1: #{_lambda_.3} parent=0
    #allocation3 [shape = 'u8[8192]{0}', space=vmem, size = 0x2000, scoped, tag = 'output window, operand 1']
    #allocation4 [shape = 's32[2]{0}', space=sflag, size = 0x8, scoped, tag = 'scoped memory for _lambda_.3']
    %31 = vsyncpa [#allocation4], 0
    %s32 = scalar_lea.sflag [#allocation4], 1
    %33 = vsyncpa %s32, 0
    loop: start=0, step=1, limit=6
    $region2: #{_lambda_.3} parent=1 // loop_pre_header
      _
    $region3: #{_lambda_.3} parent=1 // loop_header
      %s35 = sphi 0, %s39
      %p36 = scmp.ge.s32.totalorder %s35, 6
      %s42 = sphi 0, %s54
      %s43 = sphi 0, %s50
      %s44 = sphi 0, %s42
      %s45 = sphi 0, %s43
      %s46 = sphi 0, %s44
      %s47 = sphi 0, %s45
      %s57 = sphi 0, %s59
      %s60 = sphi 0, %s57
      %s61 = sphi 0, %s60
      %s77 = sphi 0, %s61
      %s81 = sphi 0, %s81
      %s83 = sphi 0, %s81
      %s84 = sphi 0, %s83
      %s98 = sphi 0, %s84
      %s102 = sphi 0, %s102
      %s104 = sphi 0, %s102
      %s105 = sphi 0, %s104
      %s119 = sphi 0, %s105
      %s123 = sphi 0, %s123
      %s125 = sphi 0, %s123
      %s126 = sphi 0, %s125
      %s140 = sphi 0, %s126
      %s144 = sphi 0, %s144
      %s146 = sphi 0, %s144
      %s147 = sphi 0, %s146
      %s161 = sphi 0, %s147
      %s167 = sphi 0, %s169
      %s170 = sphi 0, %s167
      %s171 = sphi 0, %s170
      %s187 = sphi 0, %s171
      %s193 = sphi 0, %s195
      %s196 = sphi 0, %s193
      %s197 = sphi 0, %s196
      %s213 = sphi 0, %s197
      %s219 = sphi 0, %s221
      %s222 = sphi 0, %s219
      %s223 = sphi 0, %s222
      %s239 = sphi 0, %s223
      %s245 = sphi 0, %s247
      %s248 = sphi 0, %s245
      %s249 = sphi 0, %s248
      %s265 = sphi 0, %s249
      %s271 = sphi 0, %s273
      %s274 = sphi 0, %s271
      %s275 = sphi 0, %s274
      %s291 = sphi 0, %s275
      %s297 = sphi 0, %s299
      %s300 = sphi 0, %s297
      %s301 = sphi 0, %s300
      %s317 = sphi 0, %s301
      %s323 = sphi 0, %s325
      %s326 = sphi 0, %s323
      %s327 = sphi 0, %s326
      %s343 = sphi 0, %s327
      %s349 = sphi 0, %s351
      %s352 = sphi 0, %s349
      %s353 = sphi 0, %s352
      %s369 = sphi 0, %s353
      %s375 = sphi 0, %s377
      %s378 = sphi 0, %s375
      %s379 = sphi 0, %s378
      %s395 = sphi 0, %s379
      %s401 = sphi 0, %s403
      %s404 = sphi 0, %s401
      %s405 = sphi 0, %s404
      %s421 = sphi 0, %s405
      %s427 = sphi 0, %s429
      %s430 = sphi 0, %s427
      %s431 = sphi 0, %s430
      %s447 = sphi 0, %s431
      %s453 = sphi 0, %s455
      %s456 = sphi 0, %s453
      %s457 = sphi 0, %s456
      %s473 = sphi 0, %s457
      %s477 = sphi 0, %s477
      %s479 = sphi 0, %s477
      %s480 = sphi 0, %s479
      %s494 = sphi 0, %s480
      %s498 = sphi 0, %s498
      %s500 = sphi 0, %s498
      %s501 = sphi 0, %s500
      %s515 = sphi 0, %s501
      %s519 = sphi 0, %s519
      %s521 = sphi 0, %s519
      %s522 = sphi 0, %s521
      %s536 = sphi 0, %s522
      %s540 = sphi 0, %s540
      %s542 = sphi 0, %s540
      %s543 = sphi 0, %s542
      %s557 = sphi 0, %s543
      %s565 = sphi 0, %s567
      %s568 = sphi 0, %s565
      %s569 = sphi 0, %s568
      %s585 = sphi 0, %s569
      %s591 = sphi 0, %s593
      %s594 = sphi 0, %s591
      %s595 = sphi 0, %s594
      %s611 = sphi 0, %s595
      %s617 = sphi 0, %s619
      %s620 = sphi 0, %s617
      %s621 = sphi 0, %s620
      %s637 = sphi 0, %s621
      %s643 = sphi 0, %s645
      %s646 = sphi 0, %s643
      %s647 = sphi 0, %s646
      %s663 = sphi 0, %s647
      %s671 = sphi 0, %s673
      %s674 = sphi 0, %s671
      %s675 = sphi 0, %s674
      %s691 = sphi 0, %s675
    $region4: #{_lambda_.3} parent=1 // loop_header_branch
      %38 = sbr.rel (%p36) target = $region8
    $region5: #{_lambda_.3} parent=1 // loop_body
      %s40 = ssub.s32 %s35, 1
      %s41 = ssub.s32 %s35, 2
      %s48 = sadd.s32 1, %s43
      %p49 = scmp.ge.s32.totalorder %s48, 2
      %s50 = scalar_select %p49, 0, %s48
      %s51 = sadd.s32 1, %s42
      %s52 = scalar_select %p49, %s51, %s42
      %p53 = scmp.ge.s32.totalorder %s52, 2
      %s54 = scalar_select %p53, 0, %s52
      %s55 = ssub.s32 %s42, %s54
      %p56 = scmp.eq.s32.totalorder %s55, 0
      %s58 = sadd.s32 %s57, 1
      %s59 = scalar_select %p56, %s57, %s58
      %p62 = pneg %p56
      %p63 = scmp.eq.s32.totalorder %s35, 3
      %p64 = por %p62, %p63
      %p65 = scmp.ne.s32.totalorder %s57, %s60
      %p66 = scmp.eq.s32.totalorder %s35, 0
      %p67 = por %p65, %p66
      %p68 = scmp.ne.s32.totalorder %s57, %s60
      %p69 = scmp.eq.s32.totalorder %s40, 3
      %p70 = por %p68, %p69
      %p71 = scmp.ne.s32.totalorder %s60, %s61
      %p72 = scmp.eq.s32.totalorder %s40, 0
      %p73 = por %p71, %p72
      %p74 = scmp.ne.s32.totalorder %s60, %s61
      %p75 = scmp.eq.s32.totalorder %s41, 3
      %p76 = por %p74, %p75
      %p78 = scmp.ne.s32.totalorder %s61, %s77
      %p79 = scmp.eq.s32.totalorder %s41, 0
      %p80 = por %p78, %p79
      %s82 = sadd.s32 %s81, 1
      %p85 = scmp.eq.s32.totalorder %s35, 3
      %p86 = scmp.ne.s32.totalorder %s81, %s83
      %p87 = scmp.eq.s32.totalorder %s35, 0
      %p88 = por %p86, %p87
      %p89 = scmp.ne.s32.totalorder %s81, %s83
      %p90 = scmp.eq.s32.totalorder %s40, 3
      %p91 = por %p89, %p90
      %p92 = scmp.ne.s32.totalorder %s83, %s84
      %p93 = scmp.eq.s32.totalorder %s40, 0
      %p94 = por %p92, %p93
      %p95 = scmp.ne.s32.totalorder %s83, %s84
      %p96 = scmp.eq.s32.totalorder %s41, 3
      %p97 = por %p95, %p96
      %p99 = scmp.ne.s32.totalorder %s84, %s98
      %p100 = scmp.eq.s32.totalorder %s41, 0
      %p101 = por %p99, %p100
      %s103 = sadd.s32 %s102, 1
      %p106 = scmp.eq.s32.totalorder %s35, 3
      %p107 = scmp.ne.s32.totalorder %s102, %s104
      %p108 = scmp.eq.s32.totalorder %s35, 0
      %p109 = por %p107, %p108
      %p110 = scmp.ne.s32.totalorder %s102, %s104
      %p111 = scmp.eq.s32.totalorder %s40, 3
      %p112 = por %p110, %p111
      %p113 = scmp.ne.s32.totalorder %s104, %s105
      %p114 = scmp.eq.s32.totalorder %s40, 0
      %p115 = por %p113, %p114
      %p116 = scmp.ne.s32.totalorder %s104, %s105
      %p117 = scmp.eq.s32.totalorder %s41, 3
      %p118 = por %p116, %p117
      %p120 = scmp.ne.s32.totalorder %s105, %s119
      %p121 = scmp.eq.s32.totalorder %s41, 0
      %p122 = por %p120, %p121
      %s124 = sadd.s32 %s123, 1
      %p127 = scmp.eq.s32.totalorder %s35, 3
      %p128 = scmp.ne.s32.totalorder %s123, %s125
      %p129 = scmp.eq.s32.totalorder %s35, 0
      %p130 = por %p128, %p129
      %p131 = scmp.ne.s32.totalorder %s123, %s125
      %p132 = scmp.eq.s32.totalorder %s40, 3
      %p133 = por %p131, %p132
      %p134 = scmp.ne.s32.totalorder %s125, %s126
      %p135 = scmp.eq.s32.totalorder %s40, 0
      %p136 = por %p134, %p135
      %p137 = scmp.ne.s32.totalorder %s125, %s126
      %p138 = scmp.eq.s32.totalorder %s41, 3
      %p139 = por %p137, %p138
      %p141 = scmp.ne.s32.totalorder %s126, %s140
      %p142 = scmp.eq.s32.totalorder %s41, 0
      %p143 = por %p141, %p142
      %s145 = sadd.s32 %s144, 1
      %p148 = scmp.eq.s32.totalorder %s35, 3
      %p149 = scmp.ne.s32.totalorder %s144, %s146
      %p150 = scmp.eq.s32.totalorder %s35, 0
      %p151 = por %p149, %p150
      %p152 = scmp.ne.s32.totalorder %s144, %s146
      %p153 = scmp.eq.s32.totalorder %s40, 3
      %p154 = por %p152, %p153
      %p155 = scmp.ne.s32.totalorder %s146, %s147
      %p156 = scmp.eq.s32.totalorder %s40, 0
      %p157 = por %p155, %p156
      %p158 = scmp.ne.s32.totalorder %s146, %s147
      %p159 = scmp.eq.s32.totalorder %s41, 3
      %p160 = por %p158, %p159
      %p162 = scmp.ne.s32.totalorder %s147, %s161
      %p163 = scmp.eq.s32.totalorder %s41, 0
      %p164 = por %p162, %p163
      %s165 = ssub.s32 %s43, %s50
      %p166 = scmp.eq.s32.totalorder %s165, 0
      %s168 = sadd.s32 %s167, 1
      %s169 = scalar_select %p166, %s167, %s168
      %p172 = pneg %p166
      %p173 = scmp.eq.s32.totalorder %s35, 3
      %p174 = por %p172, %p173
      %p175 = scmp.ne.s32.totalorder %s167, %s170
      %p176 = scmp.eq.s32.totalorder %s35, 0
      %p177 = por %p175, %p176
      %p178 = scmp.ne.s32.totalorder %s167, %s170
      %p179 = scmp.eq.s32.totalorder %s40, 3
      %p180 = por %p178, %p179
      %p181 = scmp.ne.s32.totalorder %s170, %s171
      %p182 = scmp.eq.s32.totalorder %s40, 0
      %p183 = por %p181, %p182
      %p184 = scmp.ne.s32.totalorder %s170, %s171
      %p185 = scmp.eq.s32.totalorder %s41, 3
      %p186 = por %p184, %p185
      %p188 = scmp.ne.s32.totalorder %s171, %s187
      %p189 = scmp.eq.s32.totalorder %s41, 0
      %p190 = por %p188, %p189
      %s191 = ssub.s32 %s43, %s50
      %p192 = scmp.eq.s32.totalorder %s191, 0
      %s194 = sadd.s32 %s193, 1
      %s195 = scalar_select %p192, %s193, %s194
      %p198 = pneg %p192
      %p199 = scmp.eq.s32.totalorder %s35, 3
      %p200 = por %p198, %p199
      %p201 = scmp.ne.s32.totalorder %s193, %s196
      %p202 = scmp.eq.s32.totalorder %s35, 0
      %p203 = por %p201, %p202
      %p204 = scmp.ne.s32.totalorder %s193, %s196
      %p205 = scmp.eq.s32.totalorder %s40, 3
      %p206 = por %p204, %p205
      %p207 = scmp.ne.s32.totalorder %s196, %s197
      %p208 = scmp.eq.s32.totalorder %s40, 0
      %p209 = por %p207, %p208
      %p210 = scmp.ne.s32.totalorder %s196, %s197
      %p211 = scmp.eq.s32.totalorder %s41, 3
      %p212 = por %p210, %p211
      %p214 = scmp.ne.s32.totalorder %s197, %s213
      %p215 = scmp.eq.s32.totalorder %s41, 0
      %p216 = por %p214, %p215
      %s217 = ssub.s32 %s43, %s50
      %p218 = scmp.eq.s32.totalorder %s217, 0
      %s220 = sadd.s32 %s219, 1
      %s221 = scalar_select %p218, %s219, %s220
      %p224 = pneg %p218
      %p225 = scmp.eq.s32.totalorder %s35, 3
      %p226 = por %p224, %p225
      %p227 = scmp.ne.s32.totalorder %s219, %s222
      %p228 = scmp.eq.s32.totalorder %s35, 0
      %p229 = por %p227, %p228
      %p230 = scmp.ne.s32.totalorder %s219, %s222
      %p231 = scmp.eq.s32.totalorder %s40, 3
      %p232 = por %p230, %p231
      %p233 = scmp.ne.s32.totalorder %s222, %s223
      %p234 = scmp.eq.s32.totalorder %s40, 0
      %p235 = por %p233, %p234
      %p236 = scmp.ne.s32.totalorder %s222, %s223
      %p237 = scmp.eq.s32.totalorder %s41, 3
      %p238 = por %p236, %p237
      %p240 = scmp.ne.s32.totalorder %s223, %s239
      %p241 = scmp.eq.s32.totalorder %s41, 0
      %p242 = por %p240, %p241
      %s243 = ssub.s32 %s43, %s50
      %p244 = scmp.eq.s32.totalorder %s243, 0
      %s246 = sadd.s32 %s245, 1
      %s247 = scalar_select %p244, %s245, %s246
      %p250 = pneg %p244
      %p251 = scmp.eq.s32.totalorder %s35, 3
      %p252 = por %p250, %p251
      %p253 = scmp.ne.s32.totalorder %s245, %s248
      %p254 = scmp.eq.s32.totalorder %s35, 0
      %p255 = por %p253, %p254
      %p256 = scmp.ne.s32.totalorder %s245, %s248
      %p257 = scmp.eq.s32.totalorder %s40, 3
      %p258 = por %p256, %p257
      %p259 = scmp.ne.s32.totalorder %s248, %s249
      %p260 = scmp.eq.s32.totalorder %s40, 0
      %p261 = por %p259, %p260
      %p262 = scmp.ne.s32.totalorder %s248, %s249
      %p263 = scmp.eq.s32.totalorder %s41, 3
      %p264 = por %p262, %p263
      %p266 = scmp.ne.s32.totalorder %s249, %s265
      %p267 = scmp.eq.s32.totalorder %s41, 0
      %p268 = por %p266, %p267
      %s269 = ssub.s32 %s43, %s50
      %p270 = scmp.eq.s32.totalorder %s269, 0
      %s272 = sadd.s32 %s271, 1
      %s273 = scalar_select %p270, %s271, %s272
      %p276 = pneg %p270
      %p277 = scmp.eq.s32.totalorder %s35, 3
      %p278 = por %p276, %p277
      %p279 = scmp.ne.s32.totalorder %s271, %s274
      %p280 = scmp.eq.s32.totalorder %s35, 0
      %p281 = por %p279, %p280
      %p282 = scmp.ne.s32.totalorder %s271, %s274
      %p283 = scmp.eq.s32.totalorder %s40, 3
      %p284 = por %p282, %p283
      %p285 = scmp.ne.s32.totalorder %s274, %s275
      %p286 = scmp.eq.s32.totalorder %s40, 0
      %p287 = por %p285, %p286
      %p288 = scmp.ne.s32.totalorder %s274, %s275
      %p289 = scmp.eq.s32.totalorder %s41, 3
      %p290 = por %p288, %p289
      %p292 = scmp.ne.s32.totalorder %s275, %s291
      %p293 = scmp.eq.s32.totalorder %s41, 0
      %p294 = por %p292, %p293
      %s295 = ssub.s32 %s43, %s50
      %p296 = scmp.eq.s32.totalorder %s295, 0
      %s298 = sadd.s32 %s297, 1
      %s299 = scalar_select %p296, %s297, %s298
      %p302 = pneg %p296
      %p303 = scmp.eq.s32.totalorder %s35, 3
      %p304 = por %p302, %p303
      %p305 = scmp.ne.s32.totalorder %s297, %s300
      %p306 = scmp.eq.s32.totalorder %s35, 0
      %p307 = por %p305, %p306
      %p308 = scmp.ne.s32.totalorder %s297, %s300
      %p309 = scmp.eq.s32.totalorder %s40, 3
      %p310 = por %p308, %p309
      %p311 = scmp.ne.s32.totalorder %s300, %s301
      %p312 = scmp.eq.s32.totalorder %s40, 0
      %p313 = por %p311, %p312
      %p314 = scmp.ne.s32.totalorder %s300, %s301
      %p315 = scmp.eq.s32.totalorder %s41, 3
      %p316 = por %p314, %p315
      %p318 = scmp.ne.s32.totalorder %s301, %s317
      %p319 = scmp.eq.s32.totalorder %s41, 0
      %p320 = por %p318, %p319
      %s321 = ssub.s32 %s43, %s50
      %p322 = scmp.eq.s32.totalorder %s321, 0
      %s324 = sadd.s32 %s323, 1
      %s325 = scalar_select %p322, %s323, %s324
      %p328 = pneg %p322
      %p329 = scmp.eq.s32.totalorder %s35, 3
      %p330 = por %p328, %p329
      %p331 = scmp.ne.s32.totalorder %s323, %s326
      %p332 = scmp.eq.s32.totalorder %s35, 0
      %p333 = por %p331, %p332
      %p334 = scmp.ne.s32.totalorder %s323, %s326
      %p335 = scmp.eq.s32.totalorder %s40, 3
      %p336 = por %p334, %p335
      %p337 = scmp.ne.s32.totalorder %s326, %s327
      %p338 = scmp.eq.s32.totalorder %s40, 0
      %p339 = por %p337, %p338
      %p340 = scmp.ne.s32.totalorder %s326, %s327
      %p341 = scmp.eq.s32.totalorder %s41, 3
      %p342 = por %p340, %p341
      %p344 = scmp.ne.s32.totalorder %s327, %s343
      %p345 = scmp.eq.s32.totalorder %s41, 0
      %p346 = por %p344, %p345
      %s347 = ssub.s32 %s43, %s50
      %p348 = scmp.eq.s32.totalorder %s347, 0
      %s350 = sadd.s32 %s349, 1
      %s351 = scalar_select %p348, %s349, %s350
      %p354 = pneg %p348
      %p355 = scmp.eq.s32.totalorder %s35, 3
      %p356 = por %p354, %p355
      %p357 = scmp.ne.s32.totalorder %s349, %s352
      %p358 = scmp.eq.s32.totalorder %s35, 0
      %p359 = por %p357, %p358
      %p360 = scmp.ne.s32.totalorder %s349, %s352
      %p361 = scmp.eq.s32.totalorder %s40, 3
      %p362 = por %p360, %p361
      %p363 = scmp.ne.s32.totalorder %s352, %s353
      %p364 = scmp.eq.s32.totalorder %s40, 0
      %p365 = por %p363, %p364
      %p366 = scmp.ne.s32.totalorder %s352, %s353
      %p367 = scmp.eq.s32.totalorder %s41, 3
      %p368 = por %p366, %p367
      %p370 = scmp.ne.s32.totalorder %s353, %s369
      %p371 = scmp.eq.s32.totalorder %s41, 0
      %p372 = por %p370, %p371
      %s373 = ssub.s32 %s43, %s50
      %p374 = scmp.eq.s32.totalorder %s373, 0
      %s376 = sadd.s32 %s375, 1
      %s377 = scalar_select %p374, %s375, %s376
      %p380 = pneg %p374
      %p381 = scmp.eq.s32.totalorder %s35, 3
      %p382 = por %p380, %p381
      %p383 = scmp.ne.s32.totalorder %s375, %s378
      %p384 = scmp.eq.s32.totalorder %s35, 0
      %p385 = por %p383, %p384
      %p386 = scmp.ne.s32.totalorder %s375, %s378
      %p387 = scmp.eq.s32.totalorder %s40, 3
      %p388 = por %p386, %p387
      %p389 = scmp.ne.s32.totalorder %s378, %s379
      %p390 = scmp.eq.s32.totalorder %s40, 0
      %p391 = por %p389, %p390
      %p392 = scmp.ne.s32.totalorder %s378, %s379
      %p393 = scmp.eq.s32.totalorder %s41, 3
      %p394 = por %p392, %p393
      %p396 = scmp.ne.s32.totalorder %s379, %s395
      %p397 = scmp.eq.s32.totalorder %s41, 0
      %p398 = por %p396, %p397
      %s399 = ssub.s32 %s43, %s50
      %p400 = scmp.eq.s32.totalorder %s399, 0
      %s402 = sadd.s32 %s401, 1
      %s403 = scalar_select %p400, %s401, %s402
      %p406 = pneg %p400
      %p407 = scmp.eq.s32.totalorder %s35, 3
      %p408 = por %p406, %p407
      %p409 = scmp.ne.s32.totalorder %s401, %s404
      %p410 = scmp.eq.s32.totalorder %s35, 0
      %p411 = por %p409, %p410
      %p412 = scmp.ne.s32.totalorder %s401, %s404
      %p413 = scmp.eq.s32.totalorder %s40, 3
      %p414 = por %p412, %p413
      %p415 = scmp.ne.s32.totalorder %s404, %s405
      %p416 = scmp.eq.s32.totalorder %s40, 0
      %p417 = por %p415, %p416
      %p418 = scmp.ne.s32.totalorder %s404, %s405
      %p419 = scmp.eq.s32.totalorder %s41, 3
      %p420 = por %p418, %p419
      %p422 = scmp.ne.s32.totalorder %s405, %s421
      %p423 = scmp.eq.s32.totalorder %s41, 0
      %p424 = por %p422, %p423
      %s425 = ssub.s32 %s43, %s50
      %p426 = scmp.eq.s32.totalorder %s425, 0
      %s428 = sadd.s32 %s427, 1
      %s429 = scalar_select %p426, %s427, %s428
      %p432 = pneg %p426
      %p433 = scmp.eq.s32.totalorder %s35, 3
      %p434 = por %p432, %p433
      %p435 = scmp.ne.s32.totalorder %s427, %s430
      %p436 = scmp.eq.s32.totalorder %s35, 0
      %p437 = por %p435, %p436
      %p438 = scmp.ne.s32.totalorder %s427, %s430
      %p439 = scmp.eq.s32.totalorder %s40, 3
      %p440 = por %p438, %p439
      %p441 = scmp.ne.s32.totalorder %s430, %s431
      %p442 = scmp.eq.s32.totalorder %s40, 0
      %p443 = por %p441, %p442
      %p444 = scmp.ne.s32.totalorder %s430, %s431
      %p445 = scmp.eq.s32.totalorder %s41, 3
      %p446 = por %p444, %p445
      %p448 = scmp.ne.s32.totalorder %s431, %s447
      %p449 = scmp.eq.s32.totalorder %s41, 0
      %p450 = por %p448, %p449
      %s451 = ssub.s32 %s43, %s50
      %p452 = scmp.eq.s32.totalorder %s451, 0
      %s454 = sadd.s32 %s453, 1
      %s455 = scalar_select %p452, %s453, %s454
      %p458 = pneg %p452
      %p459 = scmp.eq.s32.totalorder %s35, 3
      %p460 = por %p458, %p459
      %p461 = scmp.ne.s32.totalorder %s453, %s456
      %p462 = scmp.eq.s32.totalorder %s35, 0
      %p463 = por %p461, %p462
      %p464 = scmp.ne.s32.totalorder %s453, %s456
      %p465 = scmp.eq.s32.totalorder %s40, 3
      %p466 = por %p464, %p465
      %p467 = scmp.ne.s32.totalorder %s456, %s457
      %p468 = scmp.eq.s32.totalorder %s40, 0
      %p469 = por %p467, %p468
      %p470 = scmp.ne.s32.totalorder %s456, %s457
      %p471 = scmp.eq.s32.totalorder %s41, 3
      %p472 = por %p470, %p471
      %p474 = scmp.ne.s32.totalorder %s457, %s473
      %p475 = scmp.eq.s32.totalorder %s41, 0
      %p476 = por %p474, %p475
      %s478 = sadd.s32 %s477, 1
      %p481 = scmp.eq.s32.totalorder %s35, 3
      %p482 = scmp.ne.s32.totalorder %s477, %s479
      %p483 = scmp.eq.s32.totalorder %s35, 0
      %p484 = por %p482, %p483
      %p485 = scmp.ne.s32.totalorder %s477, %s479
      %p486 = scmp.eq.s32.totalorder %s40, 3
      %p487 = por %p485, %p486
      %p488 = scmp.ne.s32.totalorder %s479, %s480
      %p489 = scmp.eq.s32.totalorder %s40, 0
      %p490 = por %p488, %p489
      %p491 = scmp.ne.s32.totalorder %s479, %s480
      %p492 = scmp.eq.s32.totalorder %s41, 3
      %p493 = por %p491, %p492
      %p495 = scmp.ne.s32.totalorder %s480, %s494
      %p496 = scmp.eq.s32.totalorder %s41, 0
      %p497 = por %p495, %p496
      %s499 = sadd.s32 %s498, 1
      %p502 = scmp.eq.s32.totalorder %s35, 3
      %p503 = scmp.ne.s32.totalorder %s498, %s500
      %p504 = scmp.eq.s32.totalorder %s35, 0
      %p505 = por %p503, %p504
      %p506 = scmp.ne.s32.totalorder %s498, %s500
      %p507 = scmp.eq.s32.totalorder %s40, 3
      %p508 = por %p506, %p507
      %p509 = scmp.ne.s32.totalorder %s500, %s501
      %p510 = scmp.eq.s32.totalorder %s40, 0
      %p511 = por %p509, %p510
      %p512 = scmp.ne.s32.totalorder %s500, %s501
      %p513 = scmp.eq.s32.totalorder %s41, 3
      %p514 = por %p512, %p513
      %p516 = scmp.ne.s32.totalorder %s501, %s515
      %p517 = scmp.eq.s32.totalorder %s41, 0
      %p518 = por %p516, %p517
      %s520 = sadd.s32 %s519, 1
      %p523 = scmp.eq.s32.totalorder %s35, 3
      %p524 = scmp.ne.s32.totalorder %s519, %s521
      %p525 = scmp.eq.s32.totalorder %s35, 0
      %p526 = por %p524, %p525
      %p527 = scmp.ne.s32.totalorder %s519, %s521
      %p528 = scmp.eq.s32.totalorder %s40, 3
      %p529 = por %p527, %p528
      %p530 = scmp.ne.s32.totalorder %s521, %s522
      %p531 = scmp.eq.s32.totalorder %s40, 0
      %p532 = por %p530, %p531
      %p533 = scmp.ne.s32.totalorder %s521, %s522
      %p534 = scmp.eq.s32.totalorder %s41, 3
      %p535 = por %p533, %p534
      %p537 = scmp.ne.s32.totalorder %s522, %s536
      %p538 = scmp.eq.s32.totalorder %s41, 0
      %p539 = por %p537, %p538
      %s541 = sadd.s32 %s540, 1
      %p544 = scmp.eq.s32.totalorder %s35, 3
      %p545 = scmp.ne.s32.totalorder %s540, %s542
      %p546 = scmp.eq.s32.totalorder %s35, 0
      %p547 = por %p545, %p546
      %p548 = scmp.ne.s32.totalorder %s540, %s542
      %p549 = scmp.eq.s32.totalorder %s40, 3
      %p550 = por %p548, %p549
      %p551 = scmp.ne.s32.totalorder %s542, %s543
      %p552 = scmp.eq.s32.totalorder %s40, 0
      %p553 = por %p551, %p552
      %p554 = scmp.ne.s32.totalorder %s542, %s543
      %p555 = scmp.eq.s32.totalorder %s41, 3
      %p556 = por %p554, %p555
      %p558 = scmp.ne.s32.totalorder %s543, %s557
      %p559 = scmp.eq.s32.totalorder %s41, 0
      %p560 = por %p558, %p559
      %s561 = ssub.s32 %s43, %s50
      %s562 = ssub.s32 %s42, %s54
      %s563 = sor.u32 %s561, %s562
      %p564 = scmp.eq.s32.totalorder %s563, 0
      %s566 = sadd.s32 %s565, 1
      %s567 = scalar_select %p564, %s565, %s566
      %p570 = pneg %p564
      %p571 = scmp.eq.s32.totalorder %s35, 3
      %p572 = por %p570, %p571
      %p573 = scmp.ne.s32.totalorder %s565, %s568
      %p574 = scmp.eq.s32.totalorder %s35, 0
      %p575 = por %p573, %p574
      %p576 = scmp.ne.s32.totalorder %s565, %s568
      %p577 = scmp.eq.s32.totalorder %s40, 3
      %p578 = por %p576, %p577
      %p579 = scmp.ne.s32.totalorder %s568, %s569
      %p580 = scmp.eq.s32.totalorder %s40, 0
      %p581 = por %p579, %p580
      %p582 = scmp.ne.s32.totalorder %s568, %s569
      %p583 = scmp.eq.s32.totalorder %s41, 3
      %p584 = por %p582, %p583
      %p586 = scmp.ne.s32.totalorder %s569, %s585
      %p587 = scmp.eq.s32.totalorder %s41, 0
      %p588 = por %p586, %p587
      %s589 = ssub.s32 %s42, %s54
      %p590 = scmp.eq.s32.totalorder %s589, 0
      %s592 = sadd.s32 %s591, 1
      %s593 = scalar_select %p590, %s591, %s592
      %p596 = pneg %p590
      %p597 = scmp.eq.s32.totalorder %s35, 3
      %p598 = por %p596, %p597
      %p599 = scmp.ne.s32.totalorder %s591, %s594
      %p600 = scmp.eq.s32.totalorder %s35, 0
      %p601 = por %p599, %p600
      %p602 = scmp.ne.s32.totalorder %s591, %s594
      %p603 = scmp.eq.s32.totalorder %s40, 3
      %p604 = por %p602, %p603
      %p605 = scmp.ne.s32.totalorder %s594, %s595
      %p606 = scmp.eq.s32.totalorder %s40, 0
      %p607 = por %p605, %p606
      %p608 = scmp.ne.s32.totalorder %s594, %s595
      %p609 = scmp.eq.s32.totalorder %s41, 3
      %p610 = por %p608, %p609
      %p612 = scmp.ne.s32.totalorder %s595, %s611
      %p613 = scmp.eq.s32.totalorder %s41, 0
      %p614 = por %p612, %p613
      %s615 = ssub.s32 %s42, %s54
      %p616 = scmp.eq.s32.totalorder %s615, 0
      %s618 = sadd.s32 %s617, 1
      %s619 = scalar_select %p616, %s617, %s618
      %p622 = pneg %p616
      %p623 = scmp.eq.s32.totalorder %s35, 3
      %p624 = por %p622, %p623
      %p625 = scmp.ne.s32.totalorder %s617, %s620
      %p626 = scmp.eq.s32.totalorder %s35, 0
      %p627 = por %p625, %p626
      %p628 = scmp.ne.s32.totalorder %s617, %s620
      %p629 = scmp.eq.s32.totalorder %s40, 3
      %p630 = por %p628, %p629
      %p631 = scmp.ne.s32.totalorder %s620, %s621
      %p632 = scmp.eq.s32.totalorder %s40, 0
      %p633 = por %p631, %p632
      %p634 = scmp.ne.s32.totalorder %s620, %s621
      %p635 = scmp.eq.s32.totalorder %s41, 3
      %p636 = por %p634, %p635
      %p638 = scmp.ne.s32.totalorder %s621, %s637
      %p639 = scmp.eq.s32.totalorder %s41, 0
      %p640 = por %p638, %p639
      %s641 = ssub.s32 %s42, %s54
      %p642 = scmp.eq.s32.totalorder %s641, 0
      %s644 = sadd.s32 %s643, 1
      %s645 = scalar_select %p642, %s643, %s644
      %p648 = pneg %p642
      %p649 = scmp.eq.s32.totalorder %s35, 3
      %p650 = por %p648, %p649
      %p651 = scmp.ne.s32.totalorder %s643, %s646
      %p652 = scmp.eq.s32.totalorder %s35, 0
      %p653 = por %p651, %p652
      %p654 = scmp.ne.s32.totalorder %s643, %s646
      %p655 = scmp.eq.s32.totalorder %s40, 3
      %p656 = por %p654, %p655
      %p657 = scmp.ne.s32.totalorder %s646, %s647
      %p658 = scmp.eq.s32.totalorder %s40, 0
      %p659 = por %p657, %p658
      %p660 = scmp.ne.s32.totalorder %s646, %s647
      %p661 = scmp.eq.s32.totalorder %s41, 3
      %p662 = por %p660, %p661
      %p664 = scmp.ne.s32.totalorder %s647, %s663
      %p665 = scmp.eq.s32.totalorder %s41, 0
      %p666 = por %p664, %p665
      %s667 = ssub.s32 %s43, %s50
      %s668 = ssub.s32 %s42, %s54
      %s669 = sor.u32 %s667, %s668
      %p670 = scmp.eq.s32.totalorder %s669, 0
      %s672 = sadd.s32 %s671, 1
      %s673 = scalar_select %p670, %s671, %s672
      %p676 = pneg %p670
      %p677 = scmp.eq.s32.totalorder %s35, 3
      %p678 = por %p676, %p677
      %p679 = scmp.ne.s32.totalorder %s671, %s674
      %p680 = scmp.eq.s32.totalorder %s35, 0
      %p681 = por %p679, %p680
      %p682 = scmp.ne.s32.totalorder %s671, %s674
      %p683 = scmp.eq.s32.totalorder %s40, 3
      %p684 = por %p682, %p683
      %p685 = scmp.ne.s32.totalorder %s674, %s675
      %p686 = scmp.eq.s32.totalorder %s40, 0
      %p687 = por %p685, %p686
      %p688 = scmp.ne.s32.totalorder %s674, %s675
      %p689 = scmp.eq.s32.totalorder %s41, 3
      %p690 = por %p688, %p689
      %p692 = scmp.ne.s32.totalorder %s675, %s691
      %p693 = scmp.eq.s32.totalorder %s41, 0
      %p694 = por %p692, %p693
      %p695 = scmp.le.s32.totalorder 1, %s35
      %p696 = scmp.lt.s32.totalorder %s35, 5
      %p697 = pnand %p695, %p696
      %p698 = pneg %p697
      // Predicated region
      $region9: #{_lambda_.3} parent=5 // pred_check
        _
      $region10: #{_lambda_.3} parent=5 // pred_check_branch
        %700 = sbr.rel (%p697) target = $region12
      $region11: #{_lambda_.3} parent=5 // pred_region
        %s701 = ssub.s32 %s35, 1
        // Predicated region
        $region13: #{_lambda_.3} parent=11 // pred_check
          %p702 = pneg %p94
        $region14: #{_lambda_.3} parent=11 // pred_check_branch
          %704 = sbr.rel (%p702) target = $region16
        $region15: #{_lambda_.3} parent=11 // pred_region
          _
        $region16: #{_lambda_.3} parent=11 // pred_fallthru
          _
        // Predicated region
        $region17: #{_lambda_.3} parent=11 // pred_check
          %p705 = pneg %p115
        $region18: #{_lambda_.3} parent=11 // pred_check_branch
          %707 = sbr.rel (%p705) target = $region20
        $region19: #{_lambda_.3} parent=11 // pred_region
          _
        $region20: #{_lambda_.3} parent=11 // pred_fallthru
          _
        // Predicated region
        $region21: #{_lambda_.3} parent=11 // pred_check
          %p708 = pneg %p136
        $region22: #{_lambda_.3} parent=11 // pred_check_branch
          %710 = sbr.rel (%p708) target = $region24
        $region23: #{_lambda_.3} parent=11 // pred_region
          _
        $region24: #{_lambda_.3} parent=11 // pred_fallthru
          _
        // Predicated region
        $region25: #{_lambda_.3} parent=11 // pred_check
          %p711 = pneg %p157
        $region26: #{_lambda_.3} parent=11 // pred_check_branch
          %713 = sbr.rel (%p711) target = $region28
        $region27: #{_lambda_.3} parent=11 // pred_region
          _
        $region28: #{_lambda_.3} parent=11 // pred_fallthru
          _
        // Predicated region
        $region29: #{_lambda_.3} parent=11 // pred_check
          %p714 = pneg %p490
        $region30: #{_lambda_.3} parent=11 // pred_check_branch
          %716 = sbr.rel (%p714) target = $region32
        $region31: #{_lambda_.3} parent=11 // pred_region
          _
        $region32: #{_lambda_.3} parent=11 // pred_fallthru
          _
        // Predicated region
        $region33: #{_lambda_.3} parent=11 // pred_check
          %p717 = pneg %p511
        $region34: #{_lambda_.3} parent=11 // pred_check_branch
          %719 = sbr.rel (%p717) target = $region36
        $region35: #{_lambda_.3} parent=11 // pred_region
          _
        $region36: #{_lambda_.3} parent=11 // pred_fallthru
          _
        // Predicated region
        $region37: #{_lambda_.3} parent=11 // pred_check
          %p720 = pneg %p532
        $region38: #{_lambda_.3} parent=11 // pred_check_branch
          %722 = sbr.rel (%p720) target = $region40
        $region39: #{_lambda_.3} parent=11 // pred_region
          _
        $region40: #{_lambda_.3} parent=11 // pred_fallthru
          _
        // Predicated region
        $region41: #{_lambda_.3} parent=11 // pred_check
          %p723 = pneg %p553
        $region42: #{_lambda_.3} parent=11 // pred_check_branch
          %725 = sbr.rel (%p723) target = $region44
        $region43: #{_lambda_.3} parent=11 // pred_region
          _
        $region44: #{_lambda_.3} parent=11 // pred_fallthru
          _
      $region12: #{_lambda_.3} parent=5 // pred_fallthru
        _
      %p726 = scmp.lt.s32.totalorder %s35, 4
      // Predicated region
      $region45: #{_lambda_.3} parent=5 // pred_check
        %p727 = pneg %p726
      $region46: #{_lambda_.3} parent=5 // pred_check_branch
        %729 = sbr.rel (%p727) target = $region48
      $region47: #{_lambda_.3} parent=5 // pred_region
        // Predicated region
        $region49: #{_lambda_.3} parent=47 // pred_check
          %p730 = pneg %p67
        $region50: #{_lambda_.3} parent=47 // pred_check_branch
          %732 = sbr.rel (%p730) target = $region52
        $region51: #{_lambda_.3} parent=47 // pred_region
          %p733 = scmp.lt.s32.totalorder %s42, 1
          %s734 = scalar_select %p733, %s42, 1
          %s735 = smul.addr %s734, 16
          %s736 = smul.addr %s735, 8
          %s737 = scalar_lea.vmem %s0, %s736
        $region52: #{_lambda_.3} parent=47 // pred_fallthru
          _
        // Predicated region
        $region53: #{_lambda_.3} parent=47 // pred_check
          %p738 = pneg %p177
        $region54: #{_lambda_.3} parent=47 // pred_check_branch
          %740 = sbr.rel (%p738) target = $region56
        $region55: #{_lambda_.3} parent=47 // pred_region
          %p741 = scmp.lt.s32.totalorder %s43, 1
          %s742 = scalar_select %p741, %s43, 1
          %s743 = scalar_lea.vmem %s5, %s742
        $region56: #{_lambda_.3} parent=47 // pred_fallthru
          _
        // Predicated region
        $region57: #{_lambda_.3} parent=47 // pred_check
          %p744 = pneg %p203
        $region58: #{_lambda_.3} parent=47 // pred_check_branch
          %746 = sbr.rel (%p744) target = $region60
        $region59: #{_lambda_.3} parent=47 // pred_region
          %p747 = scmp.lt.s32.totalorder %s43, 1
          %s748 = scalar_select %p747, %s43, 1
          %s749 = scalar_lea.vmem %s6, %s748
        $region60: #{_lambda_.3} parent=47 // pred_fallthru
          _
        // Predicated region
        $region61: #{_lambda_.3} parent=47 // pred_check
          %p750 = pneg %p229
        $region62: #{_lambda_.3} parent=47 // pred_check_branch
          %752 = sbr.rel (%p750) target = $region64
        $region63: #{_lambda_.3} parent=47 // pred_region
          %p753 = scmp.lt.s32.totalorder %s43, 1
          %s754 = scalar_select %p753, %s43, 1
          %s755 = smul.addr %s754, 48
          %s756 = smul.addr %s755, 4
          %s757 = scalar_lea.vmem %s7, %s756
        $region64: #{_lambda_.3} parent=47 // pred_fallthru
          _
        // Predicated region
        $region65: #{_lambda_.3} parent=47 // pred_check
          %p758 = pneg %p255
        $region66: #{_lambda_.3} parent=47 // pred_check_branch
          %760 = sbr.rel (%p758) target = $region68
        $region67: #{_lambda_.3} parent=47 // pred_region
          %p761 = scmp.lt.s32.totalorder %s43, 1
          %s762 = scalar_select %p761, %s43, 1
          %s763 = smul.addr %s762, 3
          %s764 = scalar_lea.vmem %s8, %s763
        $region68: #{_lambda_.3} parent=47 // pred_fallthru
          _
        // Predicated region
        $region69: #{_lambda_.3} parent=47 // pred_check
          %p765 = pneg %p281
        $region70: #{_lambda_.3} parent=47 // pred_check_branch
          %767 = sbr.rel (%p765) target = $region72
        $region71: #{_lambda_.3} parent=47 // pred_region
          %p768 = scmp.lt.s32.totalorder %s43, 1
          %s769 = scalar_select %p768, %s43, 1
          %s770 = smul.addr %s769, 16
          %s771 = smul.addr %s770, 4
          %s772 = scalar_lea.vmem %s9, %s771
        $region72: #{_lambda_.3} parent=47 // pred_fallthru
          _
        // Predicated region
        $region73: #{_lambda_.3} parent=47 // pred_check
          %p773 = pneg %p307
        $region74: #{_lambda_.3} parent=47 // pred_check_branch
          %775 = sbr.rel (%p773) target = $region76
        $region75: #{_lambda_.3} parent=47 // pred_region
          %p776 = scmp.lt.s32.totalorder %s43, 1
          %s777 = scalar_select %p776, %s43, 1
          %s778 = scalar_lea.vmem %s10, %s777
        $region76: #{_lambda_.3} parent=47 // pred_fallthru
          _
        // Predicated region
        $region77: #{_lambda_.3} parent=47 // pred_check
          %p779 = pneg %p333
        $region78: #{_lambda_.3} parent=47 // pred_check_branch
          %781 = sbr.rel (%p779) target = $region80
        $region79: #{_lambda_.3} parent=47 // pred_region
          %p782 = scmp.lt.s32.totalorder %s43, 1
          %s783 = scalar_select %p782, %s43, 1
          %s784 = scalar_lea.vmem %s11, %s783
        $region80: #{_lambda_.3} parent=47 // pred_fallthru
          _
        // Predicated region
        $region81: #{_lambda_.3} parent=47 // pred_check
          %p785 = pneg %p359
        $region82: #{_lambda_.3} parent=47 // pred_check_branch
          %787 = sbr.rel (%p785) target = $region84
        $region83: #{_lambda_.3} parent=47 // pred_region
          %p788 = scmp.lt.s32.totalorder %s43, 1
          %s789 = scalar_select %p788, %s43, 1
          %s790 = scalar_lea.vmem %s12, %s789
        $region84: #{_lambda_.3} parent=47 // pred_fallthru
          _
        // Predicated region
        $region85: #{_lambda_.3} parent=47 // pred_check
          %p791 = pneg %p385
        $region86: #{_lambda_.3} parent=47 // pred_check_branch
          %793 = sbr.rel (%p791) target = $region88
        $region87: #{_lambda_.3} parent=47 // pred_region
          %p794 = scmp.lt.s32.totalorder %s43, 1
          %s795 = scalar_select %p794, %s43, 1
          %s796 = smul.addr %s795, 64
          %s797 = smul.addr %s796, 4
          %s798 = scalar_lea.vmem %s13, %s797
        $region88: #{_lambda_.3} parent=47 // pred_fallthru
          _
        // Predicated region
        $region89: #{_lambda_.3} parent=47 // pred_check
          %p799 = pneg %p411
        $region90: #{_lambda_.3} parent=47 // pred_check_branch
          %801 = sbr.rel (%p799) target = $region92
        $region91: #{_lambda_.3} parent=47 // pred_region
          %p802 = scmp.lt.s32.totalorder %s43, 1
          %s803 = scalar_select %p802, %s43, 1
          %s804 = smul.addr %s803, 4
          %s805 = scalar_lea.vmem %s14, %s804
        $region92: #{_lambda_.3} parent=47 // pred_fallthru
          _
        // Predicated region
        $region93: #{_lambda_.3} parent=47 // pred_check
          %p806 = pneg %p437
        $region94: #{_lambda_.3} parent=47 // pred_check_branch
          %808 = sbr.rel (%p806) target = $region96
        $region95: #{_lambda_.3} parent=47 // pred_region
          %p809 = scmp.lt.s32.totalorder %s43, 1
          %s810 = scalar_select %p809, %s43, 1
          %s811 = smul.addr %s810, 64
          %s812 = smul.addr %s811, 4
          %s813 = scalar_lea.vmem %s15, %s812
        $region96: #{_lambda_.3} parent=47 // pred_fallthru
          _
        // Predicated region
        $region97: #{_lambda_.3} parent=47 // pred_check
          %p814 = pneg %p463
        $region98: #{_lambda_.3} parent=47 // pred_check_branch
          %816 = sbr.rel (%p814) target = $region100
        $region99: #{_lambda_.3} parent=47 // pred_region
          %p817 = scmp.lt.s32.totalorder %s43, 1
          %s818 = scalar_select %p817, %s43, 1
          %s819 = scalar_lea.vmem %s16, %s818
        $region100: #{_lambda_.3} parent=47 // pred_fallthru
          _
        // Predicated region
        $region101: #{_lambda_.3} parent=47 // pred_check
          %p820 = pneg %p575
        $region102: #{_lambda_.3} parent=47 // pred_check_branch
          %822 = sbr.rel (%p820) target = $region104
        $region103: #{_lambda_.3} parent=47 // pred_region
          %p823 = scmp.lt.s32.totalorder %s43, 1
          %s824 = scalar_select %p823, %s43, 1
          %p825 = scmp.lt.s32.totalorder %s42, 1
          %s826 = scalar_select %p825, %s42, 1
          %s827 = smul.addr %s826, 2
          %s828 = smul.addr %s824, 4
          %s829 = sadd.s32 %s827, %s828
          %s830 = smul.addr %s829, 8
          %s831 = scalar_lea.vmem %s21, %s830
        $region104: #{_lambda_.3} parent=47 // pred_fallthru
          _
      $region48: #{_lambda_.3} parent=5 // pred_fallthru
        _
      %p832 = scmp.le.s32.totalorder 1, %s35
      %p833 = scmp.lt.s32.totalorder %s35, 5
      %p834 = pnand %p832, %p833
      %p835 = pneg %p834
      // Predicated region
      $region105: #{_lambda_.3} parent=5 // pred_check
        _
      $region106: #{_lambda_.3} parent=5 // pred_check_branch
        %837 = sbr.rel (%p834) target = $region108
      $region107: #{_lambda_.3} parent=5 // pred_region
        %s838 = ssub.s32 %s35, 1
        %p839 = scmp.lt.s32.totalorder %s44, 1
        %s840 = scalar_select %p839, %s44, 1
        %s841 = smul.addr %s840, 16
        %s842 = smul.addr %s841, 8
        %s843 = scalar_lea.vmem %s0, %s842
        %p844 = pneg %p73
        %p845 = pneg %p70
        %p846 = pneg %p94
        %p847 = pneg %p91
        %p848 = pneg %p115
        %p849 = pneg %p112
        %p850 = pneg %p136
        %p851 = pneg %p133
        %p852 = pneg %p157
        %p853 = pneg %p154
        %p854 = scmp.lt.s32.totalorder %s45, 1
        %s855 = scalar_select %p854, %s45, 1
        %s856 = scalar_lea.vmem %s5, %s855
        %p857 = pneg %p183
        %p858 = pneg %p180
        %p859 = scmp.lt.s32.totalorder %s45, 1
        %s860 = scalar_select %p859, %s45, 1
        %s861 = scalar_lea.vmem %s6, %s860
        %p862 = pneg %p209
        %p863 = pneg %p206
        %p864 = scmp.lt.s32.totalorder %s45, 1
        %s865 = scalar_select %p864, %s45, 1
        %s866 = smul.addr %s865, 48
        %s867 = smul.addr %s866, 4
        %s868 = scalar_lea.vmem %s7, %s867
        %p869 = pneg %p235
        %p870 = pneg %p232
        %p871 = scmp.lt.s32.totalorder %s45, 1
        %s872 = scalar_select %p871, %s45, 1
        %s873 = smul.addr %s872, 3
        %s874 = scalar_lea.vmem %s8, %s873
        %p875 = pneg %p261
        %p876 = pneg %p258
        %p877 = scmp.lt.s32.totalorder %s45, 1
        %s878 = scalar_select %p877, %s45, 1
        %s879 = smul.addr %s878, 16
        %s880 = smul.addr %s879, 4
        %s881 = scalar_lea.vmem %s9, %s880
        %p882 = pneg %p287
        %p883 = pneg %p284
        %p884 = scmp.lt.s32.totalorder %s45, 1
        %s885 = scalar_select %p884, %s45, 1
        %s886 = scalar_lea.vmem %s10, %s885
        %p887 = pneg %p313
        %p888 = pneg %p310
        %p889 = scmp.lt.s32.totalorder %s45, 1
        %s890 = scalar_select %p889, %s45, 1
        %s891 = scalar_lea.vmem %s11, %s890
        %p892 = pneg %p339
        %p893 = pneg %p336
        %p894 = scmp.lt.s32.totalorder %s45, 1
        %s895 = scalar_select %p894, %s45, 1
        %s896 = scalar_lea.vmem %s12, %s895
        %p897 = pneg %p365
        %p898 = pneg %p362
        %p899 = scmp.lt.s32.totalorder %s45, 1
        %s900 = scalar_select %p899, %s45, 1
        %s901 = smul.addr %s900, 64
        %s902 = smul.addr %s901, 4
        %s903 = scalar_lea.vmem %s13, %s902
        %p904 = pneg %p391
        %p905 = pneg %p388
        %p906 = scmp.lt.s32.totalorder %s45, 1
        %s907 = scalar_select %p906, %s45, 1
        %s908 = smul.addr %s907, 4
        %s909 = scalar_lea.vmem %s14, %s908
        %p910 = pneg %p417
        %p911 = pneg %p414
        %p912 = scmp.lt.s32.totalorder %s45, 1
        %s913 = scalar_select %p912, %s45, 1
        %s914 = smul.addr %s913, 64
        %s915 = smul.addr %s914, 4
        %s916 = scalar_lea.vmem %s15, %s915
        %p917 = pneg %p443
        %p918 = pneg %p440
        %p919 = scmp.lt.s32.totalorder %s45, 1
        %s920 = scalar_select %p919, %s45, 1
        %s921 = scalar_lea.vmem %s16, %s920
        %p922 = pneg %p469
        %p923 = pneg %p466
        %p924 = pneg %p490
        %p925 = pneg %p487
        %p926 = pneg %p511
        %p927 = pneg %p508
        %p928 = pneg %p532
        %p929 = pneg %p529
        %p930 = pneg %p553
        %p931 = pneg %p550
        %p932 = scmp.lt.s32.totalorder %s45, 1
        %s933 = scalar_select %p932, %s45, 1
        %p934 = scmp.lt.s32.totalorder %s44, 1
        %s935 = scalar_select %p934, %s44, 1
        %s936 = smul.addr %s935, 2
        %s937 = smul.addr %s933, 4
        %s938 = sadd.s32 %s936, %s937
        %s939 = smul.addr %s938, 8
        %s940 = scalar_lea.vmem %s21, %s939
        %p941 = pneg %p581
        %p942 = pneg %p578
        %p943 = pneg %p607
        %p944 = pneg %p604
        %p945 = scmp.lt.s32.totalorder %s44, 1
        %s946 = scalar_select %p945, %s44, 1
        %s947 = smul.addr %s946, 8
        %s948 = scalar_lea.vmem %s22, %s947
        %p949 = pneg %p633
        %p950 = pneg %p630
        %s951 = sand.u32 %s620, 1
        %s952 = scalar_lea.sflag [#allocation4], %s951
        %s953 = sand.u32 %s620, 1
        %s954 = smul.addr %s953, 8
        %s955 = scalar_lea.vmem [#allocation3], %s954
        %p956 = pneg %p659
        %p957 = pneg %p656
        %p958 = scmp.lt.s32.totalorder %s44, 1
        %s959 = scalar_select %p958, %s44, 1
        %s960 = smul.addr %s959, 8
        %s961 = scalar_lea.vmem %s24, %s960
        %p962 = pneg %p687
        %p963 = pneg %p684
        %p964 = scmp.lt.s32.totalorder %s45, 1
        %s965 = scalar_select %p964, %s45, 1
        %p966 = scmp.lt.s32.totalorder %s44, 1
        %s967 = scalar_select %p966, %s44, 1
        %s968 = smul.addr %s967, 2
        %s969 = smul.addr %s965, 4
        %s970 = sadd.s32 %s968, %s969
        %s971 = smul.addr %s970, 8
        %s972 = scalar_lea.vmem %s25, %s971
        %p973 = scmp.lt.s32.totalorder %s44, 1
        %s974 = scalar_select %p973, %s44, 1
        %s975 = smul.addr %s974, 16
        %s976 = smul.addr %s975, 8
        %s977 = scalar_lea.vmem %s0, %s976
        %p978 = scmp.lt.s32.totalorder %s45, 1
        %s979 = scalar_select %p978, %s45, 1
        %s980 = scalar_lea.vmem %s5, %s979
        %p981 = scmp.lt.s32.totalorder %s45, 1
        %s982 = scalar_select %p981, %s45, 1
        %s983 = scalar_lea.vmem %s6, %s982
        %p984 = scmp.lt.s32.totalorder %s45, 1
        %s985 = scalar_select %p984, %s45, 1
        %s986 = smul.addr %s985, 48
        %s987 = smul.addr %s986, 4
        %s988 = scalar_lea.vmem %s7, %s987
        %p989 = scmp.lt.s32.totalorder %s45, 1
        %s990 = scalar_select %p989, %s45, 1
        %s991 = smul.addr %s990, 3
        %s992 = scalar_lea.vmem %s8, %s991
        %p993 = scmp.lt.s32.totalorder %s45, 1
        %s994 = scalar_select %p993, %s45, 1
        %s995 = smul.addr %s994, 16
        %s996 = smul.addr %s995, 4
        %s997 = scalar_lea.vmem %s9, %s996
        %p998 = scmp.lt.s32.totalorder %s45, 1
        %s999 = scalar_select %p998, %s45, 1
        %s1000 = scalar_lea.vmem %s10, %s999
        %p1001 = scmp.lt.s32.totalorder %s45, 1
        %s1002 = scalar_select %p1001, %s45, 1
        %s1003 = scalar_lea.vmem %s11, %s1002
        %p1004 = scmp.lt.s32.totalorder %s45, 1
        %s1005 = scalar_select %p1004, %s45, 1
        %s1006 = scalar_lea.vmem %s12, %s1005
        %p1007 = scmp.lt.s32.totalorder %s45, 1
        %s1008 = scalar_select %p1007, %s45, 1
        %s1009 = smul.addr %s1008, 64
        %s1010 = smul.addr %s1009, 4
        %s1011 = scalar_lea.vmem %s13, %s1010
        %p1012 = scmp.lt.s32.totalorder %s45, 1
        %s1013 = scalar_select %p1012, %s45, 1
        %s1014 = smul.addr %s1013, 4
        %s1015 = scalar_lea.vmem %s14, %s1014
        %p1016 = scmp.lt.s32.totalorder %s45, 1
        %s1017 = scalar_select %p1016, %s45, 1
        %s1018 = smul.addr %s1017, 64
        %s1019 = smul.addr %s1018, 4
        %s1020 = scalar_lea.vmem %s15, %s1019
        %p1021 = scmp.lt.s32.totalorder %s45, 1
        %s1022 = scalar_select %p1021, %s45, 1
        %s1023 = scalar_lea.vmem %s16, %s1022
        %p1024 = scmp.lt.s32.totalorder %s45, 1
        %s1025 = scalar_select %p1024, %s45, 1
        %p1026 = scmp.lt.s32.totalorder %s44, 1
        %s1027 = scalar_select %p1026, %s44, 1
        %s1028 = smul.addr %s1027, 2
        %s1029 = smul.addr %s1025, 4
        %s1030 = sadd.s32 %s1028, %s1029
        %s1031 = smul.addr %s1030, 8
        %s1032 = scalar_lea.vmem %s21, %s1031
        %p1033 = scmp.lt.s32.totalorder %s44, 1
        %s1034 = scalar_select %p1033, %s44, 1
        %s1035 = smul.addr %s1034, 8
        %s1036 = scalar_lea.vmem %s22, %s1035
        %p1037 = scmp.lt.s32.totalorder %s44, 1
        %s1038 = scalar_select %p1037, %s44, 1
        %s1039 = smul.addr %s1038, 8
        %s1040 = scalar_lea.vmem %s24, %s1039
        %p1041 = scmp.lt.s32.totalorder %s45, 1
        %s1042 = scalar_select %p1041, %s45, 1
        %p1043 = scmp.lt.s32.totalorder %s44, 1
        %s1044 = scalar_select %p1043, %s44, 1
        %s1045 = smul.addr %s1044, 2
        %s1046 = smul.addr %s1042, 4
        %s1047 = sadd.s32 %s1045, %s1046
        %s1048 = smul.addr %s1047, 8
        %s1049 = scalar_lea.vmem %s25, %s1048
        %p1051 = scmp.eq.s32.totalorder %s45, 0
        // Predicated region
        $region109: #{_lambda_.3} parent=107 // pred_check
          %p1052 = pneg %p1051
        $region110: #{_lambda_.3} parent=107 // pred_check_branch
          %1054 = sbr.rel (%p1052) target = $region112
        $region111: #{_lambda_.3} parent=107 // pred_region
          %v1055 = vld [vmem:[%s977] sm:$0xff]
          %v1056 = vld [vmem:[%s977 + $0x8] sm:$0xff]
          %v1057 = vld [vmem:[%s977 + $0x10] sm:$0xff]
          %v1058 = vld [vmem:[%s977 + $0x18] sm:$0xff]
          %v1059 = vld [vmem:[%s977 + $0x20] sm:$0xff]
          %v1060 = vld [vmem:[%s977 + $0x28] sm:$0xff]
          %v1061 = vld [vmem:[%s977 + $0x30] sm:$0xff]
          %v1062 = vld [vmem:[%s977 + $0x38] sm:$0xff]
          %v1063 = vld [vmem:[%s977 + $0x40] sm:$0xff]
          %v1064 = vld [vmem:[%s977 + $0x48] sm:$0xff]
          %v1065 = vld [vmem:[%s977 + $0x50] sm:$0xff]
          %v1066 = vld [vmem:[%s977 + $0x58] sm:$0xff]
          %v1067 = vld [vmem:[%s977 + $0x60] sm:$0xff]
          %v1068 = vld [vmem:[%s977 + $0x68] sm:$0xff]
          %v1069 = vld [vmem:[%s977 + $0x70] sm:$0xff]
          %v1070 = vld [vmem:[%s977 + $0x78] sm:$0xff]
          %v1071 = vpack.c.bf16 %v1055, %v1055
          %v1072 = vpack.c.bf16 %v1056, %v1056
          %v1073 = vpack.c.bf16 %v1057, %v1057
          %v1074 = vpack.c.bf16 %v1058, %v1058
          %v1075 = vpack.c.bf16 %v1059, %v1059
          %v1076 = vpack.c.bf16 %v1060, %v1060
          %v1077 = vpack.c.bf16 %v1061, %v1061
          %v1078 = vpack.c.bf16 %v1062, %v1062
          %v1079 = vpack.c.bf16 %v1063, %v1063
          %v1080 = vpack.c.bf16 %v1064, %v1064
          %v1081 = vpack.c.bf16 %v1065, %v1065
          %v1082 = vpack.c.bf16 %v1066, %v1066
          %v1083 = vpack.c.bf16 %v1067, %v1067
          %v1084 = vpack.c.bf16 %v1068, %v1068
          %v1085 = vpack.c.bf16 %v1069, %v1069
          %v1086 = vpack.c.bf16 %v1070, %v1070
          %v1087 = vld [vmem:[%s1] sm:$0xf]
          %v1088 = vld [vmem:[%s1 + $0x4] sm:$0xf]
          %v1089 = vld [vmem:[%s1 + $0x8] sm:$0xf]
          %v1090 = vld [vmem:[%s1 + $0xc] sm:$0xf]
          %v1091 = vld [vmem:[%s1 + $0x10] sm:$0xf]
          %v1092 = vld [vmem:[%s1 + $0x14] sm:$0xf]
          %v1093 = vld [vmem:[%s1 + $0x18] sm:$0xf]
          %v1094 = vld [vmem:[%s1 + $0x1c] sm:$0xf]
          %v1095 = vld [vmem:[%s1 + $0x20] sm:$0xf]
          %v1096 = vld [vmem:[%s1 + $0x24] sm:$0xf]
          %v1097 = vld [vmem:[%s1 + $0x28] sm:$0xf]
          %v1098 = vld [vmem:[%s1 + $0x2c] sm:$0xf]
          %v1099 = vld [vmem:[%s1 + $0x30] sm:$0xf]
          %v1100 = vld [vmem:[%s1 + $0x34] sm:$0xf]
          %v1101 = vld [vmem:[%s1 + $0x38] sm:$0xf]
          %v1102 = vld [vmem:[%s1 + $0x3c] sm:$0xf]
          %v1103 = vld [vmem:[%s1 + $0x40] sm:$0xf]
          %v1104 = vld [vmem:[%s1 + $0x44] sm:$0xf]
          %v1105 = vld [vmem:[%s1 + $0x48] sm:$0xf]
          %v1106 = vld [vmem:[%s1 + $0x4c] sm:$0xf]
          %v1107 = vld [vmem:[%s1 + $0x50] sm:$0xf]
          %v1108 = vld [vmem:[%s1 + $0x54] sm:$0xf]
          %v1109 = vld [vmem:[%s1 + $0x58] sm:$0xf]
          %v1110 = vld [vmem:[%s1 + $0x5c] sm:$0xf]
          %v1111 = vld [vmem:[%s1 + $0x60] sm:$0xf]
          %v1112 = vld [vmem:[%s1 + $0x64] sm:$0xf]
          %v1113 = vld [vmem:[%s1 + $0x68] sm:$0xf]
          %v1114 = vld [vmem:[%s1 + $0x6c] sm:$0xf]
          %v1115 = vld [vmem:[%s1 + $0x70] sm:$0xf]
          %v1116 = vld [vmem:[%s1 + $0x74] sm:$0xf]
          %v1117 = vld [vmem:[%s1 + $0x78] sm:$0xf]
          %v1118 = vld [vmem:[%s1 + $0x7c] sm:$0xf]
          %v1119 = vld [vmem:[%s1 + $0x80] sm:$0xf]
          %v1120 = vld [vmem:[%s1 + $0x84] sm:$0xf]
          %v1121 = vld [vmem:[%s1 + $0x88] sm:$0xf]
          %v1122 = vld [vmem:[%s1 + $0x8c] sm:$0xf]
          %v1123 = vld [vmem:[%s1 + $0x90] sm:$0xf]
          %v1124 = vld [vmem:[%s1 + $0x94] sm:$0xf]
          %v1125 = vld [vmem:[%s1 + $0x98] sm:$0xf]
          %v1126 = vld [vmem:[%s1 + $0x9c] sm:$0xf]
          %v1127 = vld [vmem:[%s1 + $0xa0] sm:$0xf]
          %v1128 = vld [vmem:[%s1 + $0xa4] sm:$0xf]
          %v1129 = vld [vmem:[%s1 + $0xa8] sm:$0xf]
          %v1130 = vld [vmem:[%s1 + $0xac] sm:$0xf]
          %v1131 = vld [vmem:[%s1 + $0xb0] sm:$0xf]
          %v1132 = vld [vmem:[%s1 + $0xb4] sm:$0xf]
          %v1133 = vld [vmem:[%s1 + $0xb8] sm:$0xf]
          %v1134 = vld [vmem:[%s1 + $0xbc] sm:$0xf]
          %v1135 = vld [vmem:[%s1 + $0xc0] sm:$0xf]
          %v1136 = vld [vmem:[%s1 + $0xc4] sm:$0xf]
          %v1137 = vld [vmem:[%s1 + $0xc8] sm:$0xf]
          %v1138 = vld [vmem:[%s1 + $0xcc] sm:$0xf]
          %v1139 = vld [vmem:[%s1 + $0xd0] sm:$0xf]
          %v1140 = vld [vmem:[%s1 + $0xd4] sm:$0xf]
          %v1141 = vld [vmem:[%s1 + $0xd8] sm:$0xf]
          %v1142 = vld [vmem:[%s1 + $0xdc] sm:$0xf]
          %v1143 = vld [vmem:[%s1 + $0xe0] sm:$0xf]
          %v1144 = vld [vmem:[%s1 + $0xe4] sm:$0xf]
          %v1145 = vld [vmem:[%s1 + $0xe8] sm:$0xf]
          %v1146 = vld [vmem:[%s1 + $0xec] sm:$0xf]
          %v1147 = vld [vmem:[%s1 + $0xf0] sm:$0xf]
          %v1148 = vld [vmem:[%s1 + $0xf4] sm:$0xf]
          %v1149 = vld [vmem:[%s1 + $0xf8] sm:$0xf]
          %v1150 = vld [vmem:[%s1 + $0xfc] sm:$0xf]
          %v1151 = vld [vmem:[%s1 + $0x100] sm:$0xf]
          %v1152 = vld [vmem:[%s1 + $0x104] sm:$0xf]
          %v1153 = vld [vmem:[%s1 + $0x108] sm:$0xf]
          %v1154 = vld [vmem:[%s1 + $0x10c] sm:$0xf]
          %v1155 = vld [vmem:[%s1 + $0x110] sm:$0xf]
          %v1156 = vld [vmem:[%s1 + $0x114] sm:$0xf]
          %v1157 = vld [vmem:[%s1 + $0x118] sm:$0xf]
          %v1158 = vld [vmem:[%s1 + $0x11c] sm:$0xf]
          %v1159 = vld [vmem:[%s1 + $0x120] sm:$0xf]
          %v1160 = vld [vmem:[%s1 + $0x124] sm:$0xf]
          %v1161 = vld [vmem:[%s1 + $0x128] sm:$0xf]
          %v1162 = vld [vmem:[%s1 + $0x12c] sm:$0xf]
          %v1163 = vld [vmem:[%s1 + $0x130] sm:$0xf]
          %v1164 = vld [vmem:[%s1 + $0x134] sm:$0xf]
          %v1165 = vld [vmem:[%s1 + $0x138] sm:$0xf]
          %v1166 = vld [vmem:[%s1 + $0x13c] sm:$0xf]
          %v1167 = vld [vmem:[%s1 + $0x140] sm:$0xf]
          %v1168 = vld [vmem:[%s1 + $0x144] sm:$0xf]
          %v1169 = vld [vmem:[%s1 + $0x148] sm:$0xf]
          %v1170 = vld [vmem:[%s1 + $0x14c] sm:$0xf]
          %v1171 = vld [vmem:[%s1 + $0x150] sm:$0xf]
          %v1172 = vld [vmem:[%s1 + $0x154] sm:$0xf]
          %v1173 = vld [vmem:[%s1 + $0x158] sm:$0xf]
          %v1174 = vld [vmem:[%s1 + $0x15c] sm:$0xf]
          %v1175 = vld [vmem:[%s1 + $0x160] sm:$0xf]
          %v1176 = vld [vmem:[%s1 + $0x164] sm:$0xf]
          %v1177 = vld [vmem:[%s1 + $0x168] sm:$0xf]
          %v1178 = vld [vmem:[%s1 + $0x16c] sm:$0xf]
          %v1179 = vld [vmem:[%s1 + $0x170] sm:$0xf]
          %v1180 = vld [vmem:[%s1 + $0x174] sm:$0xf]
          %v1181 = vld [vmem:[%s1 + $0x178] sm:$0xf]
          %v1182 = vld [vmem:[%s1 + $0x17c] sm:$0xf]
          %v1183 = vld [vmem:[%s1 + $0x180] sm:$0xf]
          %v1184 = vld [vmem:[%s1 + $0x184] sm:$0xf]
          %v1185 = vld [vmem:[%s1 + $0x188] sm:$0xf]
          %v1186 = vld [vmem:[%s1 + $0x18c] sm:$0xf]
          %v1187 = vld [vmem:[%s1 + $0x190] sm:$0xf]
          %v1188 = vld [vmem:[%s1 + $0x194] sm:$0xf]
          %v1189 = vld [vmem:[%s1 + $0x198] sm:$0xf]
          %v1190 = vld [vmem:[%s1 + $0x19c] sm:$0xf]
          %v1191 = vld [vmem:[%s1 + $0x1a0] sm:$0xf]
          %v1192 = vld [vmem:[%s1 + $0x1a4] sm:$0xf]
          %v1193 = vld [vmem:[%s1 + $0x1a8] sm:$0xf]
          %v1194 = vld [vmem:[%s1 + $0x1ac] sm:$0xf]
          %v1195 = vld [vmem:[%s1 + $0x1b0] sm:$0xf]
          %v1196 = vld [vmem:[%s1 + $0x1b4] sm:$0xf]
          %v1197 = vld [vmem:[%s1 + $0x1b8] sm:$0xf]
          %v1198 = vld [vmem:[%s1 + $0x1bc] sm:$0xf]
          %v1199 = vld [vmem:[%s1 + $0x1c0] sm:$0xf]
          %v1200 = vld [vmem:[%s1 + $0x1c4] sm:$0xf]
          %v1201 = vld [vmem:[%s1 + $0x1c8] sm:$0xf]
          %v1202 = vld [vmem:[%s1 + $0x1cc] sm:$0xf]
          %v1203 = vld [vmem:[%s1 + $0x1d0] sm:$0xf]
          %v1204 = vld [vmem:[%s1 + $0x1d4] sm:$0xf]
          %v1205 = vld [vmem:[%s1 + $0x1d8] sm:$0xf]
          %v1206 = vld [vmem:[%s1 + $0x1dc] sm:$0xf]
          %v1207 = vld [vmem:[%s1 + $0x1e0] sm:$0xf]
          %v1208 = vld [vmem:[%s1 + $0x1e4] sm:$0xf]
          %v1209 = vld [vmem:[%s1 + $0x1e8] sm:$0xf]
          %v1210 = vld [vmem:[%s1 + $0x1ec] sm:$0xf]
          %v1211 = vld [vmem:[%s1 + $0x1f0] sm:$0xf]
          %v1212 = vld [vmem:[%s1 + $0x1f4] sm:$0xf]
          %v1213 = vld [vmem:[%s1 + $0x1f8] sm:$0xf]
          %v1214 = vld [vmem:[%s1 + $0x1fc] sm:$0xf]
          %v1215 = vld [vmem:[%s1 + $0x200] sm:$0xf]
          %v1216 = vld [vmem:[%s1 + $0x204] sm:$0xf]
          %v1217 = vld [vmem:[%s1 + $0x208] sm:$0xf]
          %v1218 = vld [vmem:[%s1 + $0x20c] sm:$0xf]
          %v1219 = vld [vmem:[%s1 + $0x210] sm:$0xf]
          %v1220 = vld [vmem:[%s1 + $0x214] sm:$0xf]
          %v1221 = vld [vmem:[%s1 + $0x218] sm:$0xf]
          %v1222 = vld [vmem:[%s1 + $0x21c] sm:$0xf]
          %v1223 = vld [vmem:[%s1 + $0x220] sm:$0xf]
          %v1224 = vld [vmem:[%s1 + $0x224] sm:$0xf]
          %v1225 = vld [vmem:[%s1 + $0x228] sm:$0xf]
          %v1226 = vld [vmem:[%s1 + $0x22c] sm:$0xf]
          %v1227 = vld [vmem:[%s1 + $0x230] sm:$0xf]
          %v1228 = vld [vmem:[%s1 + $0x234] sm:$0xf]
          %v1229 = vld [vmem:[%s1 + $0x238] sm:$0xf]
          %v1230 = vld [vmem:[%s1 + $0x23c] sm:$0xf]
          %v1231 = vld [vmem:[%s1 + $0x240] sm:$0xf]
          %v1232 = vld [vmem:[%s1 + $0x244] sm:$0xf]
          %v1233 = vld [vmem:[%s1 + $0x248] sm:$0xf]
          %v1234 = vld [vmem:[%s1 + $0x24c] sm:$0xf]
          %v1235 = vld [vmem:[%s1 + $0x250] sm:$0xf]
          %v1236 = vld [vmem:[%s1 + $0x254] sm:$0xf]
          %v1237 = vld [vmem:[%s1 + $0x258] sm:$0xf]
          %v1238 = vld [vmem:[%s1 + $0x25c] sm:$0xf]
          %v1239 = vld [vmem:[%s1 + $0x260] sm:$0xf]
          %v1240 = vld [vmem:[%s1 + $0x264] sm:$0xf]
          %v1241 = vld [vmem:[%s1 + $0x268] sm:$0xf]
          %v1242 = vld [vmem:[%s1 + $0x26c] sm:$0xf]
          %v1243 = vld [vmem:[%s1 + $0x270] sm:$0xf]
          %v1244 = vld [vmem:[%s1 + $0x274] sm:$0xf]
          %v1245 = vld [vmem:[%s1 + $0x278] sm:$0xf]
          %v1246 = vld [vmem:[%s1 + $0x27c] sm:$0xf]
          %v1247 = vld [vmem:[%s1 + $0x280] sm:$0xf]
          %v1248 = vld [vmem:[%s1 + $0x284] sm:$0xf]
          %v1249 = vld [vmem:[%s1 + $0x288] sm:$0xf]
          %v1250 = vld [vmem:[%s1 + $0x28c] sm:$0xf]
          %v1251 = vld [vmem:[%s1 + $0x290] sm:$0xf]
          %v1252 = vld [vmem:[%s1 + $0x294] sm:$0xf]
          %v1253 = vld [vmem:[%s1 + $0x298] sm:$0xf]
          %v1254 = vld [vmem:[%s1 + $0x29c] sm:$0xf]
          %v1255 = vld [vmem:[%s1 + $0x2a0] sm:$0xf]
          %v1256 = vld [vmem:[%s1 + $0x2a4] sm:$0xf]
          %v1257 = vld [vmem:[%s1 + $0x2a8] sm:$0xf]
          %v1258 = vld [vmem:[%s1 + $0x2ac] sm:$0xf]
          %v1259 = vld [vmem:[%s1 + $0x2b0] sm:$0xf]
          %v1260 = vld [vmem:[%s1 + $0x2b4] sm:$0xf]
          %v1261 = vld [vmem:[%s1 + $0x2b8] sm:$0xf]
          %v1262 = vld [vmem:[%s1 + $0x2bc] sm:$0xf]
          %v1263 = vld [vmem:[%s1 + $0x2c0] sm:$0xf]
          %v1264 = vld [vmem:[%s1 + $0x2c4] sm:$0xf]
          %v1265 = vld [vmem:[%s1 + $0x2c8] sm:$0xf]
          %v1266 = vld [vmem:[%s1 + $0x2cc] sm:$0xf]
          %v1267 = vld [vmem:[%s1 + $0x2d0] sm:$0xf]
          %v1268 = vld [vmem:[%s1 + $0x2d4] sm:$0xf]
          %v1269 = vld [vmem:[%s1 + $0x2d8] sm:$0xf]
          %v1270 = vld [vmem:[%s1 + $0x2dc] sm:$0xf]
          %v1271 = vld [vmem:[%s1 + $0x2e0] sm:$0xf]
          %v1272 = vld [vmem:[%s1 + $0x2e4] sm:$0xf]
          %v1273 = vld [vmem:[%s1 + $0x2e8] sm:$0xf]
          %v1274 = vld [vmem:[%s1 + $0x2ec] sm:$0xf]
          %v1275 = vld [vmem:[%s1 + $0x2f0] sm:$0xf]
          %v1276 = vld [vmem:[%s1 + $0x2f4] sm:$0xf]
          %v1277 = vld [vmem:[%s1 + $0x2f8] sm:$0xf]
          %v1278 = vld [vmem:[%s1 + $0x2fc] sm:$0xf]
          %v1279 = vld [vmem:[%s1 + $0x300] sm:$0xf]
          %v1280 = vld [vmem:[%s1 + $0x304] sm:$0xf]
          %v1281 = vld [vmem:[%s1 + $0x308] sm:$0xf]
          %v1282 = vld [vmem:[%s1 + $0x30c] sm:$0xf]
          %v1283 = vld [vmem:[%s1 + $0x310] sm:$0xf]
          %v1284 = vld [vmem:[%s1 + $0x314] sm:$0xf]
          %v1285 = vld [vmem:[%s1 + $0x318] sm:$0xf]
          %v1286 = vld [vmem:[%s1 + $0x31c] sm:$0xf]
          %v1287 = vld [vmem:[%s1 + $0x320] sm:$0xf]
          %v1288 = vld [vmem:[%s1 + $0x324] sm:$0xf]
          %v1289 = vld [vmem:[%s1 + $0x328] sm:$0xf]
          %v1290 = vld [vmem:[%s1 + $0x32c] sm:$0xf]
          %v1291 = vld [vmem:[%s1 + $0x330] sm:$0xf]
          %v1292 = vld [vmem:[%s1 + $0x334] sm:$0xf]
          %v1293 = vld [vmem:[%s1 + $0x338] sm:$0xf]
          %v1294 = vld [vmem:[%s1 + $0x33c] sm:$0xf]
          %v1295 = vld [vmem:[%s1 + $0x340] sm:$0xf]
          %v1296 = vld [vmem:[%s1 + $0x344] sm:$0xf]
          %v1297 = vld [vmem:[%s1 + $0x348] sm:$0xf]
          %v1298 = vld [vmem:[%s1 + $0x34c] sm:$0xf]
          %v1299 = vld [vmem:[%s1 + $0x350] sm:$0xf]
          %v1300 = vld [vmem:[%s1 + $0x354] sm:$0xf]
          %v1301 = vld [vmem:[%s1 + $0x358] sm:$0xf]
          %v1302 = vld [vmem:[%s1 + $0x35c] sm:$0xf]
          %v1303 = vld [vmem:[%s1 + $0x360] sm:$0xf]
          %v1304 = vld [vmem:[%s1 + $0x364] sm:$0xf]
          %v1305 = vld [vmem:[%s1 + $0x368] sm:$0xf]
          %v1306 = vld [vmem:[%s1 + $0x36c] sm:$0xf]
          %v1307 = vld [vmem:[%s1 + $0x370] sm:$0xf]
          %v1308 = vld [vmem:[%s1 + $0x374] sm:$0xf]
          %v1309 = vld [vmem:[%s1 + $0x378] sm:$0xf]
          %v1310 = vld [vmem:[%s1 + $0x37c] sm:$0xf]
          %v1311 = vld [vmem:[%s1 + $0x380] sm:$0xf]
          %v1312 = vld [vmem:[%s1 + $0x384] sm:$0xf]
          %v1313 = vld [vmem:[%s1 + $0x388] sm:$0xf]
          %v1314 = vld [vmem:[%s1 + $0x38c] sm:$0xf]
          %v1315 = vld [vmem:[%s1 + $0x390] sm:$0xf]
          %v1316 = vld [vmem:[%s1 + $0x394] sm:$0xf]
          %v1317 = vld [vmem:[%s1 + $0x398] sm:$0xf]
          %v1318 = vld [vmem:[%s1 + $0x39c] sm:$0xf]
          %v1319 = vld [vmem:[%s1 + $0x3a0] sm:$0xf]
          %v1320 = vld [vmem:[%s1 + $0x3a4] sm:$0xf]
          %v1321 = vld [vmem:[%s1 + $0x3a8] sm:$0xf]
          %v1322 = vld [vmem:[%s1 + $0x3ac] sm:$0xf]
          %v1323 = vld [vmem:[%s1 + $0x3b0] sm:$0xf]
          %v1324 = vld [vmem:[%s1 + $0x3b4] sm:$0xf]
          %v1325 = vld [vmem:[%s1 + $0x3b8] sm:$0xf]
          %v1326 = vld [vmem:[%s1 + $0x3bc] sm:$0xf]
          %v1327 = vld [vmem:[%s1 + $0x3c0] sm:$0xf]
          %v1328 = vld [vmem:[%s1 + $0x3c4] sm:$0xf]
          %v1329 = vld [vmem:[%s1 + $0x3c8] sm:$0xf]
          %v1330 = vld [vmem:[%s1 + $0x3cc] sm:$0xf]
          %v1331 = vld [vmem:[%s1 + $0x3d0] sm:$0xf]
          %v1332 = vld [vmem:[%s1 + $0x3d4] sm:$0xf]
          %v1333 = vld [vmem:[%s1 + $0x3d8] sm:$0xf]
          %v1334 = vld [vmem:[%s1 + $0x3dc] sm:$0xf]
          %v1335 = vld [vmem:[%s1 + $0x3e0] sm:$0xf]
          %v1336 = vld [vmem:[%s1 + $0x3e4] sm:$0xf]
          %v1337 = vld [vmem:[%s1 + $0x3e8] sm:$0xf]
          %v1338 = vld [vmem:[%s1 + $0x3ec] sm:$0xf]
          %v1339 = vld [vmem:[%s1 + $0x3f0] sm:$0xf]
          %v1340 = vld [vmem:[%s1 + $0x3f4] sm:$0xf]
          %v1341 = vld [vmem:[%s1 + $0x3f8] sm:$0xf]
          %v1342 = vld [vmem:[%s1 + $0x3fc] sm:$0xf]
          %v1343 = vld [vmem:[%s2] sm:$0x1]
          %v1345 = vlaneseq
          %v1346 = vshrl.u32 %v1345, 7
          %v1347 = vsub.s32 0, %v1346
          %v1348 = vrot.slane %v1343, %v1347
          %v1606 = vunpack.c.l.b16 %v1087
          %v1607 = vunpack.c.l.b16 %v1088
          %v1608 = vunpack.c.l.b16 %v1089
          %v1609 = vunpack.c.l.b16 %v1090
          %v1610 = vunpack.c.l.b16 %v1091
          %v1611 = vunpack.c.l.b16 %v1092
          %v1612 = vunpack.c.l.b16 %v1093
          %v1613 = vunpack.c.l.b16 %v1094
          %v1614 = vunpack.c.l.b16 %v1095
          %v1615 = vunpack.c.l.b16 %v1096
          %v1616 = vunpack.c.l.b16 %v1097
          %v1617 = vunpack.c.l.b16 %v1098
          %v1618 = vunpack.c.l.b16 %v1099
          %v1619 = vunpack.c.l.b16 %v1100
          %v1620 = vunpack.c.l.b16 %v1101
          %v1621 = vunpack.c.l.b16 %v1102
          %v1622 = vunpack.c.l.b16 %v1103
          %v1623 = vunpack.c.l.b16 %v1104
          %v1624 = vunpack.c.l.b16 %v1105
          %v1625 = vunpack.c.l.b16 %v1106
          %v1626 = vunpack.c.l.b16 %v1107
          %v1627 = vunpack.c.l.b16 %v1108
          %v1628 = vunpack.c.l.b16 %v1109
          %v1629 = vunpack.c.l.b16 %v1110
          %v1630 = vunpack.c.l.b16 %v1111
          %v1631 = vunpack.c.l.b16 %v1112
          %v1632 = vunpack.c.l.b16 %v1113
          %v1633 = vunpack.c.l.b16 %v1114
          %v1634 = vunpack.c.l.b16 %v1115
          %v1635 = vunpack.c.l.b16 %v1116
          %v1636 = vunpack.c.l.b16 %v1117
          %v1637 = vunpack.c.l.b16 %v1118
          %v1638 = vunpack.c.l.b16 %v1119
          %v1639 = vunpack.c.l.b16 %v1120
          %v1640 = vunpack.c.l.b16 %v1121
          %v1641 = vunpack.c.l.b16 %v1122
          %v1642 = vunpack.c.l.b16 %v1123
          %v1643 = vunpack.c.l.b16 %v1124
          %v1644 = vunpack.c.l.b16 %v1125
          %v1645 = vunpack.c.l.b16 %v1126
          %v1646 = vunpack.c.l.b16 %v1127
          %v1647 = vunpack.c.l.b16 %v1128
          %v1648 = vunpack.c.l.b16 %v1129
          %v1649 = vunpack.c.l.b16 %v1130
          %v1650 = vunpack.c.l.b16 %v1131
          %v1651 = vunpack.c.l.b16 %v1132
          %v1652 = vunpack.c.l.b16 %v1133
          %v1653 = vunpack.c.l.b16 %v1134
          %v1654 = vunpack.c.l.b16 %v1135
          %v1655 = vunpack.c.l.b16 %v1136
          %v1656 = vunpack.c.l.b16 %v1137
          %v1657 = vunpack.c.l.b16 %v1138
          %v1658 = vunpack.c.l.b16 %v1139
          %v1659 = vunpack.c.l.b16 %v1140
          %v1660 = vunpack.c.l.b16 %v1141
          %v1661 = vunpack.c.l.b16 %v1142
          %v1662 = vunpack.c.l.b16 %v1143
          %v1663 = vunpack.c.l.b16 %v1144
          %v1664 = vunpack.c.l.b16 %v1145
          %v1665 = vunpack.c.l.b16 %v1146
          %v1666 = vunpack.c.l.b16 %v1147
          %v1667 = vunpack.c.l.b16 %v1148
          %v1668 = vunpack.c.l.b16 %v1149
          %v1669 = vunpack.c.l.b16 %v1150
          %v1670 = vunpack.c.l.b16 %v1151
          %v1671 = vunpack.c.l.b16 %v1152
          %v1672 = vunpack.c.l.b16 %v1153
          %v1673 = vunpack.c.l.b16 %v1154
          %v1674 = vunpack.c.l.b16 %v1155
          %v1675 = vunpack.c.l.b16 %v1156
          %v1676 = vunpack.c.l.b16 %v1157
          %v1677 = vunpack.c.l.b16 %v1158
          %v1678 = vunpack.c.l.b16 %v1159
          %v1679 = vunpack.c.l.b16 %v1160
          %v1680 = vunpack.c.l.b16 %v1161
          %v1681 = vunpack.c.l.b16 %v1162
          %v1682 = vunpack.c.l.b16 %v1163
          %v1683 = vunpack.c.l.b16 %v1164
          %v1684 = vunpack.c.l.b16 %v1165
          %v1685 = vunpack.c.l.b16 %v1166
          %v1686 = vunpack.c.l.b16 %v1167
          %v1687 = vunpack.c.l.b16 %v1168
          %v1688 = vunpack.c.l.b16 %v1169
          %v1689 = vunpack.c.l.b16 %v1170
          %v1690 = vunpack.c.l.b16 %v1171
          %v1691 = vunpack.c.l.b16 %v1172
          %v1692 = vunpack.c.l.b16 %v1173
          %v1693 = vunpack.c.l.b16 %v1174
          %v1694 = vunpack.c.l.b16 %v1175
          %v1695 = vunpack.c.l.b16 %v1176
          %v1696 = vunpack.c.l.b16 %v1177
          %v1697 = vunpack.c.l.b16 %v1178
          %v1698 = vunpack.c.l.b16 %v1179
          %v1699 = vunpack.c.l.b16 %v1180
          %v1700 = vunpack.c.l.b16 %v1181
          %v1701 = vunpack.c.l.b16 %v1182
          %v1702 = vunpack.c.l.b16 %v1183
          %v1703 = vunpack.c.l.b16 %v1184
          %v1704 = vunpack.c.l.b16 %v1185
          %v1705 = vunpack.c.l.b16 %v1186
          %v1706 = vunpack.c.l.b16 %v1187
          %v1707 = vunpack.c.l.b16 %v1188
          %v1708 = vunpack.c.l.b16 %v1189
          %v1709 = vunpack.c.l.b16 %v1190
          %v1710 = vunpack.c.l.b16 %v1191
          %v1711 = vunpack.c.l.b16 %v1192
          %v1712 = vunpack.c.l.b16 %v1193
          %v1713 = vunpack.c.l.b16 %v1194
          %v1714 = vunpack.c.l.b16 %v1195
          %v1715 = vunpack.c.l.b16 %v1196
          %v1716 = vunpack.c.l.b16 %v1197
          %v1717 = vunpack.c.l.b16 %v1198
          %v1718 = vunpack.c.l.b16 %v1199
          %v1719 = vunpack.c.l.b16 %v1200
          %v1720 = vunpack.c.l.b16 %v1201
          %v1721 = vunpack.c.l.b16 %v1202
          %v1722 = vunpack.c.l.b16 %v1203
          %v1723 = vunpack.c.l.b16 %v1204
          %v1724 = vunpack.c.l.b16 %v1205
          %v1725 = vunpack.c.l.b16 %v1206
          %v1726 = vunpack.c.l.b16 %v1207
          %v1727 = vunpack.c.l.b16 %v1208
          %v1728 = vunpack.c.l.b16 %v1209
          %v1729 = vunpack.c.l.b16 %v1210
          %v1730 = vunpack.c.l.b16 %v1211
          %v1731 = vunpack.c.l.b16 %v1212
          %v1732 = vunpack.c.l.b16 %v1213
          %v1733 = vunpack.c.l.b16 %v1214
          %v1734 = vunpack.c.l.b16 %v1215
          %v1735 = vunpack.c.l.b16 %v1216
          %v1736 = vunpack.c.l.b16 %v1217
          %v1737 = vunpack.c.l.b16 %v1218
          %v1738 = vunpack.c.l.b16 %v1219
          %v1739 = vunpack.c.l.b16 %v1220
          %v1740 = vunpack.c.l.b16 %v1221
          %v1741 = vunpack.c.l.b16 %v1222
          %v1742 = vunpack.c.l.b16 %v1223
          %v1743 = vunpack.c.l.b16 %v1224
          %v1744 = vunpack.c.l.b16 %v1225
          %v1745 = vunpack.c.l.b16 %v1226
          %v1746 = vunpack.c.l.b16 %v1227
          %v1747 = vunpack.c.l.b16 %v1228
          %v1748 = vunpack.c.l.b16 %v1229
          %v1749 = vunpack.c.l.b16 %v1230
          %v1750 = vunpack.c.l.b16 %v1231
          %v1751 = vunpack.c.l.b16 %v1232
          %v1752 = vunpack.c.l.b16 %v1233
          %v1753 = vunpack.c.l.b16 %v1234
          %v1754 = vunpack.c.l.b16 %v1235
          %v1755 = vunpack.c.l.b16 %v1236
          %v1756 = vunpack.c.l.b16 %v1237
          %v1757 = vunpack.c.l.b16 %v1238
          %v1758 = vunpack.c.l.b16 %v1239
          %v1759 = vunpack.c.l.b16 %v1240
          %v1760 = vunpack.c.l.b16 %v1241
          %v1761 = vunpack.c.l.b16 %v1242
          %v1762 = vunpack.c.l.b16 %v1243
          %v1763 = vunpack.c.l.b16 %v1244
          %v1764 = vunpack.c.l.b16 %v1245
          %v1765 = vunpack.c.l.b16 %v1246
          %v1766 = vunpack.c.l.b16 %v1247
          %v1767 = vunpack.c.l.b16 %v1248
          %v1768 = vunpack.c.l.b16 %v1249
          %v1769 = vunpack.c.l.b16 %v1250
          %v1770 = vunpack.c.l.b16 %v1251
          %v1771 = vunpack.c.l.b16 %v1252
          %v1772 = vunpack.c.l.b16 %v1253
          %v1773 = vunpack.c.l.b16 %v1254
          %v1774 = vunpack.c.l.b16 %v1255
          %v1775 = vunpack.c.l.b16 %v1256
          %v1776 = vunpack.c.l.b16 %v1257
          %v1777 = vunpack.c.l.b16 %v1258
          %v1778 = vunpack.c.l.b16 %v1259
          %v1779 = vunpack.c.l.b16 %v1260
          %v1780 = vunpack.c.l.b16 %v1261
          %v1781 = vunpack.c.l.b16 %v1262
          %v1782 = vunpack.c.l.b16 %v1263
          %v1783 = vunpack.c.l.b16 %v1264
          %v1784 = vunpack.c.l.b16 %v1265
          %v1785 = vunpack.c.l.b16 %v1266
          %v1786 = vunpack.c.l.b16 %v1267
          %v1787 = vunpack.c.l.b16 %v1268
          %v1788 = vunpack.c.l.b16 %v1269
          %v1789 = vunpack.c.l.b16 %v1270
          %v1790 = vunpack.c.l.b16 %v1271
          %v1791 = vunpack.c.l.b16 %v1272
          %v1792 = vunpack.c.l.b16 %v1273
          %v1793 = vunpack.c.l.b16 %v1274
          %v1794 = vunpack.c.l.b16 %v1275
          %v1795 = vunpack.c.l.b16 %v1276
          %v1796 = vunpack.c.l.b16 %v1277
          %v1797 = vunpack.c.l.b16 %v1278
          %v1798 = vunpack.c.l.b16 %v1279
          %v1799 = vunpack.c.l.b16 %v1280
          %v1800 = vunpack.c.l.b16 %v1281
          %v1801 = vunpack.c.l.b16 %v1282
          %v1802 = vunpack.c.l.b16 %v1283
          %v1803 = vunpack.c.l.b16 %v1284
          %v1804 = vunpack.c.l.b16 %v1285
          %v1805 = vunpack.c.l.b16 %v1286
          %v1806 = vunpack.c.l.b16 %v1287
          %v1807 = vunpack.c.l.b16 %v1288
          %v1808 = vunpack.c.l.b16 %v1289
          %v1809 = vunpack.c.l.b16 %v1290
          %v1810 = vunpack.c.l.b16 %v1291
          %v1811 = vunpack.c.l.b16 %v1292
          %v1812 = vunpack.c.l.b16 %v1293
          %v1813 = vunpack.c.l.b16 %v1294
          %v1814 = vunpack.c.l.b16 %v1295
          %v1815 = vunpack.c.l.b16 %v1296
          %v1816 = vunpack.c.l.b16 %v1297
          %v1817 = vunpack.c.l.b16 %v1298
          %v1818 = vunpack.c.l.b16 %v1299
          %v1819 = vunpack.c.l.b16 %v1300
          %v1820 = vunpack.c.l.b16 %v1301
          %v1821 = vunpack.c.l.b16 %v1302
          %v1822 = vunpack.c.l.b16 %v1303
          %v1823 = vunpack.c.l.b16 %v1304
          %v1824 = vunpack.c.l.b16 %v1305
          %v1825 = vunpack.c.l.b16 %v1306
          %v1826 = vunpack.c.l.b16 %v1307
          %v1827 = vunpack.c.l.b16 %v1308
          %v1828 = vunpack.c.l.b16 %v1309
          %v1829 = vunpack.c.l.b16 %v1310
          %v1830 = vunpack.c.l.b16 %v1311
          %v1831 = vunpack.c.l.b16 %v1312
          %v1832 = vunpack.c.l.b16 %v1313
          %v1833 = vunpack.c.l.b16 %v1314
          %v1834 = vunpack.c.l.b16 %v1315
          %v1835 = vunpack.c.l.b16 %v1316
          %v1836 = vunpack.c.l.b16 %v1317
          %v1837 = vunpack.c.l.b16 %v1318
          %v1838 = vunpack.c.l.b16 %v1319
          %v1839 = vunpack.c.l.b16 %v1320
          %v1840 = vunpack.c.l.b16 %v1321
          %v1841 = vunpack.c.l.b16 %v1322
          %v1842 = vunpack.c.l.b16 %v1323
          %v1843 = vunpack.c.l.b16 %v1324
          %v1844 = vunpack.c.l.b16 %v1325
          %v1845 = vunpack.c.l.b16 %v1326
          %v1846 = vunpack.c.l.b16 %v1327
          %v1847 = vunpack.c.l.b16 %v1328
          %v1848 = vunpack.c.l.b16 %v1329
          %v1849 = vunpack.c.l.b16 %v1330
          %v1850 = vunpack.c.l.b16 %v1331
          %v1851 = vunpack.c.l.b16 %v1332
          %v1852 = vunpack.c.l.b16 %v1333
          %v1853 = vunpack.c.l.b16 %v1334
          %v1854 = vunpack.c.l.b16 %v1335
          %v1855 = vunpack.c.l.b16 %v1336
          %v1856 = vunpack.c.l.b16 %v1337
          %v1857 = vunpack.c.l.b16 %v1338
          %v1858 = vunpack.c.l.b16 %v1339
          %v1859 = vunpack.c.l.b16 %v1340
          %v1860 = vunpack.c.l.b16 %v1341
          %v1861 = vunpack.c.l.b16 %v1342
          %v1862 = vpack.c.b16 %v1607, %v1606
          %v1863 = vpack.c.b16 %v1609, %v1608
          %v1864 = vpack.c.b16 %v1611, %v1610
          %v1865 = vpack.c.b16 %v1613, %v1612
          %v1866 = vpack.c.b16 %v1615, %v1614
          %v1867 = vpack.c.b16 %v1617, %v1616
          %v1868 = vpack.c.b16 %v1619, %v1618
          %v1869 = vpack.c.b16 %v1621, %v1620
          %v1870 = vpack.c.b16 %v1623, %v1622
          %v1871 = vpack.c.b16 %v1625, %v1624
          %v1872 = vpack.c.b16 %v1627, %v1626
          %v1873 = vpack.c.b16 %v1629, %v1628
          %v1874 = vpack.c.b16 %v1631, %v1630
          %v1875 = vpack.c.b16 %v1633, %v1632
          %v1876 = vpack.c.b16 %v1635, %v1634
          %v1877 = vpack.c.b16 %v1637, %v1636
          %v1878 = vpack.c.b16 %v1639, %v1638
          %v1879 = vpack.c.b16 %v1641, %v1640
          %v1880 = vpack.c.b16 %v1643, %v1642
          %v1881 = vpack.c.b16 %v1645, %v1644
          %v1882 = vpack.c.b16 %v1647, %v1646
          %v1883 = vpack.c.b16 %v1649, %v1648
          %v1884 = vpack.c.b16 %v1651, %v1650
          %v1885 = vpack.c.b16 %v1653, %v1652
          %v1886 = vpack.c.b16 %v1655, %v1654
          %v1887 = vpack.c.b16 %v1657, %v1656
          %v1888 = vpack.c.b16 %v1659, %v1658
          %v1889 = vpack.c.b16 %v1661, %v1660
          %v1890 = vpack.c.b16 %v1663, %v1662
          %v1891 = vpack.c.b16 %v1665, %v1664
          %v1892 = vpack.c.b16 %v1667, %v1666
          %v1893 = vpack.c.b16 %v1669, %v1668
          %v1894 = vpack.c.b16 %v1671, %v1670
          %v1895 = vpack.c.b16 %v1673, %v1672
          %v1896 = vpack.c.b16 %v1675, %v1674
          %v1897 = vpack.c.b16 %v1677, %v1676
          %v1898 = vpack.c.b16 %v1679, %v1678
          %v1899 = vpack.c.b16 %v1681, %v1680
          %v1900 = vpack.c.b16 %v1683, %v1682
          %v1901 = vpack.c.b16 %v1685, %v1684
          %v1902 = vpack.c.b16 %v1687, %v1686
          %v1903 = vpack.c.b16 %v1689, %v1688
          %v1904 = vpack.c.b16 %v1691, %v1690
          %v1905 = vpack.c.b16 %v1693, %v1692
          %v1906 = vpack.c.b16 %v1695, %v1694
          %v1907 = vpack.c.b16 %v1697, %v1696
          %v1908 = vpack.c.b16 %v1699, %v1698
          %v1909 = vpack.c.b16 %v1701, %v1700
          %v1910 = vpack.c.b16 %v1703, %v1702
          %v1911 = vpack.c.b16 %v1705, %v1704
          %v1912 = vpack.c.b16 %v1707, %v1706
          %v1913 = vpack.c.b16 %v1709, %v1708
          %v1914 = vpack.c.b16 %v1711, %v1710
          %v1915 = vpack.c.b16 %v1713, %v1712
          %v1916 = vpack.c.b16 %v1715, %v1714
          %v1917 = vpack.c.b16 %v1717, %v1716
          %v1918 = vpack.c.b16 %v1719, %v1718
          %v1919 = vpack.c.b16 %v1721, %v1720
          %v1920 = vpack.c.b16 %v1723, %v1722
          %v1921 = vpack.c.b16 %v1725, %v1724
          %v1922 = vpack.c.b16 %v1727, %v1726
          %v1923 = vpack.c.b16 %v1729, %v1728
          %v1924 = vpack.c.b16 %v1731, %v1730
          %v1925 = vpack.c.b16 %v1733, %v1732
          %v1926 = vpack.c.b16 %v1735, %v1734
          %v1927 = vpack.c.b16 %v1737, %v1736
          %v1928 = vpack.c.b16 %v1739, %v1738
          %v1929 = vpack.c.b16 %v1741, %v1740
          %v1930 = vpack.c.b16 %v1743, %v1742
          %v1931 = vpack.c.b16 %v1745, %v1744
          %v1932 = vpack.c.b16 %v1747, %v1746
          %v1933 = vpack.c.b16 %v1749, %v1748
          %v1934 = vpack.c.b16 %v1751, %v1750
          %v1935 = vpack.c.b16 %v1753, %v1752
          %v1936 = vpack.c.b16 %v1755, %v1754
          %v1937 = vpack.c.b16 %v1757, %v1756
          %v1938 = vpack.c.b16 %v1759, %v1758
          %v1939 = vpack.c.b16 %v1761, %v1760
          %v1940 = vpack.c.b16 %v1763, %v1762
          %v1941 = vpack.c.b16 %v1765, %v1764
          %v1942 = vpack.c.b16 %v1767, %v1766
          %v1943 = vpack.c.b16 %v1769, %v1768
          %v1944 = vpack.c.b16 %v1771, %v1770
          %v1945 = vpack.c.b16 %v1773, %v1772
          %v1946 = vpack.c.b16 %v1775, %v1774
          %v1947 = vpack.c.b16 %v1777, %v1776
          %v1948 = vpack.c.b16 %v1779, %v1778
          %v1949 = vpack.c.b16 %v1781, %v1780
          %v1950 = vpack.c.b16 %v1783, %v1782
          %v1951 = vpack.c.b16 %v1785, %v1784
          %v1952 = vpack.c.b16 %v1787, %v1786
          %v1953 = vpack.c.b16 %v1789, %v1788
          %v1954 = vpack.c.b16 %v1791, %v1790
          %v1955 = vpack.c.b16 %v1793, %v1792
          %v1956 = vpack.c.b16 %v1795, %v1794
          %v1957 = vpack.c.b16 %v1797, %v1796
          %v1958 = vpack.c.b16 %v1799, %v1798
          %v1959 = vpack.c.b16 %v1801, %v1800
          %v1960 = vpack.c.b16 %v1803, %v1802
          %v1961 = vpack.c.b16 %v1805, %v1804
          %v1962 = vpack.c.b16 %v1807, %v1806
          %v1963 = vpack.c.b16 %v1809, %v1808
          %v1964 = vpack.c.b16 %v1811, %v1810
          %v1965 = vpack.c.b16 %v1813, %v1812
          %v1966 = vpack.c.b16 %v1815, %v1814
          %v1967 = vpack.c.b16 %v1817, %v1816
          %v1968 = vpack.c.b16 %v1819, %v1818
          %v1969 = vpack.c.b16 %v1821, %v1820
          %v1970 = vpack.c.b16 %v1823, %v1822
          %v1971 = vpack.c.b16 %v1825, %v1824
          %v1972 = vpack.c.b16 %v1827, %v1826
          %v1973 = vpack.c.b16 %v1829, %v1828
          %v1974 = vpack.c.b16 %v1831, %v1830
          %v1975 = vpack.c.b16 %v1833, %v1832
          %v1976 = vpack.c.b16 %v1835, %v1834
          %v1977 = vpack.c.b16 %v1837, %v1836
          %v1978 = vpack.c.b16 %v1839, %v1838
          %v1979 = vpack.c.b16 %v1841, %v1840
          %v1980 = vpack.c.b16 %v1843, %v1842
          %v1981 = vpack.c.b16 %v1845, %v1844
          %v1982 = vpack.c.b16 %v1847, %v1846
          %v1983 = vpack.c.b16 %v1849, %v1848
          %v1984 = vpack.c.b16 %v1851, %v1850
          %v1985 = vpack.c.b16 %v1853, %v1852
          %v1986 = vpack.c.b16 %v1855, %v1854
          %v1987 = vpack.c.b16 %v1857, %v1856
          %v1988 = vpack.c.b16 %v1859, %v1858
          %v1989 = vpack.c.b16 %v1861, %v1860
          %2118 = vmatprep.subr.bf16.mxu0 0
          %2119 = vmatpush1.bf16.msra.mxu0 %v1862
          %2120 = vmatprep.subr.bf16.mxu0 0
          %2121 = vmatpush1.bf16.msra.mxu0 %v1863
          %2122 = vmatprep.subr.bf16.mxu0 0
          %2123 = vmatpush1.bf16.msra.mxu0 %v1864
          %2124 = vmatprep.subr.bf16.mxu0 0
          %2125 = vmatpush1.bf16.msra.mxu0 %v1865
          %2126 = vmatprep.subr.bf16.mxu0 0
          %2127 = vmatpush1.bf16.msra.mxu0 %v1866
          %2128 = vmatprep.subr.bf16.mxu0 0
          %2129 = vmatpush1.bf16.msra.mxu0 %v1867
          %2130 = vmatprep.subr.bf16.mxu0 0
          %2131 = vmatpush1.bf16.msra.mxu0 %v1868
          %2132 = vmatprep.subr.bf16.mxu0 0
          %2133 = vmatpush1.bf16.msra.mxu0 %v1869
          %2134 = vmatprep.subr.bf16.mxu0 0
          %2135 = vmatpush1.bf16.msra.mxu0 %v1870
          %2136 = vmatprep.subr.bf16.mxu0 0
          %2137 = vmatpush1.bf16.msra.mxu0 %v1871
          %2138 = vmatprep.subr.bf16.mxu0 0
          %2139 = vmatpush1.bf16.msra.mxu0 %v1872
          %2140 = vmatprep.subr.bf16.mxu0 0
          %2141 = vmatpush1.bf16.msra.mxu0 %v1873
          %2142 = vmatprep.subr.bf16.mxu0 0
          %2143 = vmatpush1.bf16.msra.mxu0 %v1874
          %2144 = vmatprep.subr.bf16.mxu0 0
          %2145 = vmatpush1.bf16.msra.mxu0 %v1875
          %2146 = vmatprep.subr.bf16.mxu0 0
          %2147 = vmatpush1.bf16.msra.mxu0 %v1876
          %2148 = vmatprep.subr.bf16.mxu0 0
          %2149 = vmatpush1.bf16.msra.mxu0 %v1877
          %2150 = vmatprep.mubr.bf16.mxu0 %v1072
          %2151 = vmatmul.mubr.bf16.gmra.mrb[0].mxu0 %v1071
          %v2152 = vpop.f32.mrb[0].mxu0
          %v2153 = vadd.f32 %v1348, %v2152
          %v2154 = vpop.f32.mrb[0].mxu0
          %v2155 = vpop.f32.mrb[0].mxu0
          %v2156 = vpop.f32.mrb[0].mxu0
          %2157 = vdwg.mxu0
          %2158 = vmatprep.subr.bf16.mxu0 0
          %2159 = vmatpush1.bf16.msra.mxu0 %v1878
          %2160 = vmatprep.subr.bf16.mxu0 0
          %2161 = vmatpush1.bf16.msra.mxu0 %v1879
          %2162 = vmatprep.subr.bf16.mxu0 0
          %2163 = vmatpush1.bf16.msra.mxu0 %v1880
          %2164 = vmatprep.subr.bf16.mxu0 0
          %2165 = vmatpush1.bf16.msra.mxu0 %v1881
          %2166 = vmatprep.subr.bf16.mxu0 0
          %2167 = vmatpush1.bf16.msra.mxu0 %v1882
          %2168 = vmatprep.subr.bf16.mxu0 0
          %2169 = vmatpush1.bf16.msra.mxu0 %v1883
          %2170 = vmatprep.subr.bf16.mxu0 0
          %2171 = vmatpush1.bf16.msra.mxu0 %v1884
          %2172 = vmatprep.subr.bf16.mxu0 0
          %2173 = vmatpush1.bf16.msra.mxu0 %v1885
          %2174 = vmatprep.subr.bf16.mxu0 0
          %2175 = vmatpush1.bf16.msra.mxu0 %v1886
          %2176 = vmatprep.subr.bf16.mxu0 0
          %2177 = vmatpush1.bf16.msra.mxu0 %v1887
          %2178 = vmatprep.subr.bf16.mxu0 0
          %2179 = vmatpush1.bf16.msra.mxu0 %v1888
          %2180 = vmatprep.subr.bf16.mxu0 0
          %2181 = vmatpush1.bf16.msra.mxu0 %v1889
          %2182 = vmatprep.subr.bf16.mxu0 0
          %2183 = vmatpush1.bf16.msra.mxu0 %v1890
          %2184 = vmatprep.subr.bf16.mxu0 0
          %2185 = vmatpush1.bf16.msra.mxu0 %v1891
          %2186 = vmatprep.subr.bf16.mxu0 0
          %2187 = vmatpush1.bf16.msra.mxu0 %v1892
          %2188 = vmatprep.subr.bf16.mxu0 0
          %2189 = vmatpush1.bf16.msra.mxu0 %v1893
          %2190 = vmatprep.mubr.bf16.mxu0 %v1074
          %2191 = vmatmul.mubr.bf16.gmra.mrb[0].mxu0 %v1073
          %v2192 = vpop.f32.mrb[0].mxu0
          %v2193 = vadd.f32 %v2153, %v2192
          %v2194 = vpop.f32.mrb[0].mxu0
          %v2195 = vpop.f32.mrb[0].mxu0
          %v2196 = vpop.f32.mrb[0].mxu0
          %2197 = vdwg.mxu0
          %2198 = vmatprep.subr.bf16.mxu0 0
          %2199 = vmatpush1.bf16.msra.mxu0 %v1894
          %2200 = vmatprep.subr.bf16.mxu0 0
          %2201 = vmatpush1.bf16.msra.mxu0 %v1895
          %2202 = vmatprep.subr.bf16.mxu0 0
          %2203 = vmatpush1.bf16.msra.mxu0 %v1896
          %2204 = vmatprep.subr.bf16.mxu0 0
          %2205 = vmatpush1.bf16.msra.mxu0 %v1897
          %2206 = vmatprep.subr.bf16.mxu0 0
          %2207 = vmatpush1.bf16.msra.mxu0 %v1898
          %2208 = vmatprep.subr.bf16.mxu0 0
          %2209 = vmatpush1.bf16.msra.mxu0 %v1899
          %2210 = vmatprep.subr.bf16.mxu0 0
          %2211 = vmatpush1.bf16.msra.mxu0 %v1900
          %2212 = vmatprep.subr.bf16.mxu0 0
          %2213 = vmatpush1.bf16.msra.mxu0 %v1901
          %2214 = vmatprep.subr.bf16.mxu0 0
          %2215 = vmatpush1.bf16.msra.mxu0 %v1902
          %2216 = vmatprep.subr.bf16.mxu0 0
          %2217 = vmatpush1.bf16.msra.mxu0 %v1903
          %2218 = vmatprep.subr.bf16.mxu0 0
          %2219 = vmatpush1.bf16.msra.mxu0 %v1904
          %2220 = vmatprep.subr.bf16.mxu0 0
          %2221 = vmatpush1.bf16.msra.mxu0 %v1905
          %2222 = vmatprep.subr.bf16.mxu0 0
          %2223 = vmatpush1.bf16.msra.mxu0 %v1906
          %2224 = vmatprep.subr.bf16.mxu0 0
          %2225 = vmatpush1.bf16.msra.mxu0 %v1907
          %2226 = vmatprep.subr.bf16.mxu0 0
          %2227 = vmatpush1.bf16.msra.mxu0 %v1908
          %2228 = vmatprep.subr.bf16.mxu0 0
          %2229 = vmatpush1.bf16.msra.mxu0 %v1909
          %2230 = vmatprep.mubr.bf16.mxu0 %v1076
          %2231 = vmatmul.mubr.bf16.gmra.mrb[0].mxu0 %v1075
          %v2232 = vpop.f32.mrb[0].mxu0
          %v2233 = vadd.f32 %v2193, %v2232
          %v2234 = vpop.f32.mrb[0].mxu0
          %v2235 = vpop.f32.mrb[0].mxu0
          %v2236 = vpop.f32.mrb[0].mxu0
          %2237 = vdwg.mxu0
          %2238 = vmatprep.subr.bf16.mxu0 0
          %2239 = vmatpush1.bf16.msra.mxu0 %v1910
          %2240 = vmatprep.subr.bf16.mxu0 0
          %2241 = vmatpush1.bf16.msra.mxu0 %v1911
          %2242 = vmatprep.subr.bf16.mxu0 0
          %2243 = vmatpush1.bf16.msra.mxu0 %v1912
          %2244 = vmatprep.subr.bf16.mxu0 0
          %2245 = vmatpush1.bf16.msra.mxu0 %v1913
          %2246 = vmatprep.subr.bf16.mxu0 0
          %2247 = vmatpush1.bf16.msra.mxu0 %v1914
          %2248 = vmatprep.subr.bf16.mxu0 0
          %2249 = vmatpush1.bf16.msra.mxu0 %v1915
          %2250 = vmatprep.subr.bf16.mxu0 0
          %2251 = vmatpush1.bf16.msra.mxu0 %v1916
          %2252 = vmatprep.subr.bf16.mxu0 0
          %2253 = vmatpush1.bf16.msra.mxu0 %v1917
          %2254 = vmatprep.subr.bf16.mxu0 0
          %2255 = vmatpush1.bf16.msra.mxu0 %v1918
          %2256 = vmatprep.subr.bf16.mxu0 0
          %2257 = vmatpush1.bf16.msra.mxu0 %v1919
          %2258 = vmatprep.subr.bf16.mxu0 0
          %2259 = vmatpush1.bf16.msra.mxu0 %v1920
          %2260 = vmatprep.subr.bf16.mxu0 0
          %2261 = vmatpush1.bf16.msra.mxu0 %v1921
          %2262 = vmatprep.subr.bf16.mxu0 0
          %2263 = vmatpush1.bf16.msra.mxu0 %v1922
          %2264 = vmatprep.subr.bf16.mxu0 0
          %2265 = vmatpush1.bf16.msra.mxu0 %v1923
          %2266 = vmatprep.subr.bf16.mxu0 0
          %2267 = vmatpush1.bf16.msra.mxu0 %v1924
          %2268 = vmatprep.subr.bf16.mxu0 0
          %2269 = vmatpush1.bf16.msra.mxu0 %v1925
          %2270 = vmatprep.mubr.bf16.mxu0 %v1078
          %2271 = vmatmul.mubr.bf16.gmra.mrb[0].mxu0 %v1077
          %v2272 = vpop.f32.mrb[0].mxu0
          %v2273 = vadd.f32 %v2233, %v2272
          %v2274 = vpop.f32.mrb[0].mxu0
          %v2275 = vpop.f32.mrb[0].mxu0
          %v2276 = vpop.f32.mrb[0].mxu0
          %2277 = vdwg.mxu0
          %2278 = vmatprep.subr.bf16.mxu0 0
          %2279 = vmatpush1.bf16.msra.mxu0 %v1926
          %2280 = vmatprep.subr.bf16.mxu0 0
          %2281 = vmatpush1.bf16.msra.mxu0 %v1927
          %2282 = vmatprep.subr.bf16.mxu0 0
          %2283 = vmatpush1.bf16.msra.mxu0 %v1928
          %2284 = vmatprep.subr.bf16.mxu0 0
          %2285 = vmatpush1.bf16.msra.mxu0 %v1929
          %2286 = vmatprep.subr.bf16.mxu0 0
          %2287 = vmatpush1.bf16.msra.mxu0 %v1930
          %2288 = vmatprep.subr.bf16.mxu0 0
          %2289 = vmatpush1.bf16.msra.mxu0 %v1931
          %2290 = vmatprep.subr.bf16.mxu0 0
          %2291 = vmatpush1.bf16.msra.mxu0 %v1932
          %2292 = vmatprep.subr.bf16.mxu0 0
          %2293 = vmatpush1.bf16.msra.mxu0 %v1933
          %2294 = vmatprep.subr.bf16.mxu0 0
          %2295 = vmatpush1.bf16.msra.mxu0 %v1934
          %2296 = vmatprep.subr.bf16.mxu0 0
          %2297 = vmatpush1.bf16.msra.mxu0 %v1935
          %2298 = vmatprep.subr.bf16.mxu0 0
          %2299 = vmatpush1.bf16.msra.mxu0 %v1936
          %2300 = vmatprep.subr.bf16.mxu0 0
          %2301 = vmatpush1.bf16.msra.mxu0 %v1937
          %2302 = vmatprep.subr.bf16.mxu0 0
          %2303 = vmatpush1.bf16.msra.mxu0 %v1938
          %2304 = vmatprep.subr.bf16.mxu0 0
          %2305 = vmatpush1.bf16.msra.mxu0 %v1939
          %2306 = vmatprep.subr.bf16.mxu0 0
          %2307 = vmatpush1.bf16.msra.mxu0 %v1940
          %2308 = vmatprep.subr.bf16.mxu0 0
          %2309 = vmatpush1.bf16.msra.mxu0 %v1941
          %2310 = vmatprep.mubr.bf16.mxu0 %v1080
          %2311 = vmatmul.mubr.bf16.gmra.mrb[0].mxu0 %v1079
          %v2312 = vpop.f32.mrb[0].mxu0
          %v2313 = vadd.f32 %v2273, %v2312
          %v2314 = vpop.f32.mrb[0].mxu0
          %v2315 = vpop.f32.mrb[0].mxu0
          %v2316 = vpop.f32.mrb[0].mxu0
          %2317 = vdwg.mxu0
          %2318 = vmatprep.subr.bf16.mxu0 0
          %2319 = vmatpush1.bf16.msra.mxu0 %v1942
          %2320 = vmatprep.subr.bf16.mxu0 0
          %2321 = vmatpush1.bf16.msra.mxu0 %v1943
          %2322 = vmatprep.subr.bf16.mxu0 0
          %2323 = vmatpush1.bf16.msra.mxu0 %v1944
          %2324 = vmatprep.subr.bf16.mxu0 0
          %2325 = vmatpush1.bf16.msra.mxu0 %v1945
          %2326 = vmatprep.subr.bf16.mxu0 0
          %2327 = vmatpush1.bf16.msra.mxu0 %v1946
          %2328 = vmatprep.subr.bf16.mxu0 0
          %2329 = vmatpush1.bf16.msra.mxu0 %v1947
          %2330 = vmatprep.subr.bf16.mxu0 0
          %2331 = vmatpush1.bf16.msra.mxu0 %v1948
          %2332 = vmatprep.subr.bf16.mxu0 0
          %2333 = vmatpush1.bf16.msra.mxu0 %v1949
          %2334 = vmatprep.subr.bf16.mxu0 0
          %2335 = vmatpush1.bf16.msra.mxu0 %v1950
          %2336 = vmatprep.subr.bf16.mxu0 0
          %2337 = vmatpush1.bf16.msra.mxu0 %v1951
          %2338 = vmatprep.subr.bf16.mxu0 0
          %2339 = vmatpush1.bf16.msra.mxu0 %v1952
          %2340 = vmatprep.subr.bf16.mxu0 0
          %2341 = vmatpush1.bf16.msra.mxu0 %v1953
          %2342 = vmatprep.subr.bf16.mxu0 0
          %2343 = vmatpush1.bf16.msra.mxu0 %v1954
          %2344 = vmatprep.subr.bf16.mxu0 0
          %2345 = vmatpush1.bf16.msra.mxu0 %v1955
          %2346 = vmatprep.subr.bf16.mxu0 0
          %2347 = vmatpush1.bf16.msra.mxu0 %v1956
          %2348 = vmatprep.subr.bf16.mxu0 0
          %2349 = vmatpush1.bf16.msra.mxu0 %v1957
          %2350 = vmatprep.mubr.bf16.mxu0 %v1082
          %2351 = vmatmul.mubr.bf16.gmra.mrb[0].mxu0 %v1081
          %v2352 = vpop.f32.mrb[0].mxu0
          %v2353 = vadd.f32 %v2313, %v2352
          %v2354 = vpop.f32.mrb[0].mxu0
          %v2355 = vpop.f32.mrb[0].mxu0
          %v2356 = vpop.f32.mrb[0].mxu0
          %2357 = vdwg.mxu0
          %2358 = vmatprep.subr.bf16.mxu0 0
          %2359 = vmatpush1.bf16.msra.mxu0 %v1958
          %2360 = vmatprep.subr.bf16.mxu0 0
          %2361 = vmatpush1.bf16.msra.mxu0 %v1959
          %2362 = vmatprep.subr.bf16.mxu0 0
          %2363 = vmatpush1.bf16.msra.mxu0 %v1960
          %2364 = vmatprep.subr.bf16.mxu0 0
          %2365 = vmatpush1.bf16.msra.mxu0 %v1961
          %2366 = vmatprep.subr.bf16.mxu0 0
          %2367 = vmatpush1.bf16.msra.mxu0 %v1962
          %2368 = vmatprep.subr.bf16.mxu0 0
          %2369 = vmatpush1.bf16.msra.mxu0 %v1963
          %2370 = vmatprep.subr.bf16.mxu0 0
          %2371 = vmatpush1.bf16.msra.mxu0 %v1964
          %2372 = vmatprep.subr.bf16.mxu0 0
          %2373 = vmatpush1.bf16.msra.mxu0 %v1965
          %2374 = vmatprep.subr.bf16.mxu0 0
          %2375 = vmatpush1.bf16.msra.mxu0 %v1966
          %2376 = vmatprep.subr.bf16.mxu0 0
          %2377 = vmatpush1.bf16.msra.mxu0 %v1967
          %2378 = vmatprep.subr.bf16.mxu0 0
          %2379 = vmatpush1.bf16.msra.mxu0 %v1968
          %2380 = vmatprep.subr.bf16.mxu0 0
          %2381 = vmatpush1.bf16.msra.mxu0 %v1969
          %2382 = vmatprep.subr.bf16.mxu0 0
          %2383 = vmatpush1.bf16.msra.mxu0 %v1970
          %2384 = vmatprep.subr.bf16.mxu0 0
          %2385 = vmatpush1.bf16.msra.mxu0 %v1971
          %2386 = vmatprep.subr.bf16.mxu0 0
          %2387 = vmatpush1.bf16.msra.mxu0 %v1972
          %2388 = vmatprep.subr.bf16.mxu0 0
          %2389 = vmatpush1.bf16.msra.mxu0 %v1973
          %2390 = vmatprep.mubr.bf16.mxu0 %v1084
          %2391 = vmatmul.mubr.bf16.gmra.mrb[0].mxu0 %v1083
          %v2392 = vpop.f32.mrb[0].mxu0
          %v2393 = vadd.f32 %v2353, %v2392
          %v2394 = vpop.f32.mrb[0].mxu0
          %v2395 = vpop.f32.mrb[0].mxu0
          %v2396 = vpop.f32.mrb[0].mxu0
          %2397 = vdwg.mxu0
          %2398 = vmatprep.subr.bf16.mxu0 0
          %2399 = vmatpush1.bf16.msra.mxu0 %v1974
          %2400 = vmatprep.subr.bf16.mxu0 0
          %2401 = vmatpush1.bf16.msra.mxu0 %v1975
          %2402 = vmatprep.subr.bf16.mxu0 0
          %2403 = vmatpush1.bf16.msra.mxu0 %v1976
          %2404 = vmatprep.subr.bf16.mxu0 0
          %2405 = vmatpush1.bf16.msra.mxu0 %v1977
          %2406 = vmatprep.subr.bf16.mxu0 0
          %2407 = vmatpush1.bf16.msra.mxu0 %v1978
          %2408 = vmatprep.subr.bf16.mxu0 0
          %2409 = vmatpush1.bf16.msra.mxu0 %v1979
          %2410 = vmatprep.subr.bf16.mxu0 0
          %2411 = vmatpush1.bf16.msra.mxu0 %v1980
          %2412 = vmatprep.subr.bf16.mxu0 0
          %2413 = vmatpush1.bf16.msra.mxu0 %v1981
          %2414 = vmatprep.subr.bf16.mxu0 0
          %2415 = vmatpush1.bf16.msra.mxu0 %v1982
          %2416 = vmatprep.subr.bf16.mxu0 0
          %2417 = vmatpush1.bf16.msra.mxu0 %v1983
          %2418 = vmatprep.subr.bf16.mxu0 0
          %2419 = vmatpush1.bf16.msra.mxu0 %v1984
          %2420 = vmatprep.subr.bf16.mxu0 0
          %2421 = vmatpush1.bf16.msra.mxu0 %v1985
          %2422 = vmatprep.subr.bf16.mxu0 0
          %2423 = vmatpush1.bf16.msra.mxu0 %v1986
          %2424 = vmatprep.subr.bf16.mxu0 0
          %2425 = vmatpush1.bf16.msra.mxu0 %v1987
          %2426 = vmatprep.subr.bf16.mxu0 0
          %2427 = vmatpush1.bf16.msra.mxu0 %v1988
          %2428 = vmatprep.subr.bf16.mxu0 0
          %2429 = vmatpush1.bf16.msra.mxu0 %v1989
          %2430 = vmatprep.mubr.bf16.mxu0 %v1086
          %2431 = vmatmul.mubr.bf16.gmra.mrb[0].mxu0 %v1085
          %v2432 = vpop.f32.mrb[0].mxu0
          %v2433 = vadd.f32 %v2393, %v2432
          %v2434 = vpop.f32.mrb[0].mxu0
          %v2435 = vpop.f32.mrb[0].mxu0
          %v2436 = vpop.f32.mrb[0].mxu0
          %2437 = vdwg.mxu0
          %v2438 = vmax.f32 %v2433, 0.0
          %2439 = vst [vmem:[%s1036] sm:$0xff] %v2438
          %v2440 = vld [vmem:[%s3] sm:$0x1]
          %v2441 = vld [vmem:[%s4] sm:$0x1]
          %2442 = vadd.xlane.f32.xlu0 %v2438
          %v2443 = vpop.xlane.xlu0 %2442
          %v2444 = vrcp.pop 128.0
          %v2445 = vmul.f32 %v2443, %v2444
          %v2446 = vsub.f32 %v2438, %v2445
          %v2447 = vmul.f32 %v2446, %v2446
          %2448 = vadd.xlane.f32.xlu0 %v2447
          %v2449 = vpop.xlane.xlu0 %2448
          %v2450 = vmul.f32 %v2449, %v2444
          %v2451 = vadd.f32 %v2450, 1e-05
          %v2452 = vrsqrt.pop %v2451
          %v2453 = vmul.f32 %v2446, %v2452
          %v2455 = vlaneseq
          %v2456 = vshrl.u32 %v2455, 7
          %v2457 = vsub.s32 0, %v2456
          %v2458 = vrot.slane %v2440, %v2457
          %v2460 = vmul.f32 %v2453, %v2458
          %v2462 = vlaneseq
          %v2463 = vshrl.u32 %v2462, 7
          %v2464 = vsub.s32 0, %v2463
          %v2465 = vrot.slane %v2441, %v2464
          %v2467 = vadd.f32 %v2460, %v2465
          %2468 = vst [vmem:[#allocation2] sm:$0xff] %v2467
        $region112: #{_lambda_.3} parent=107 // pred_fallthru
          _
        %v2469 = vld [vmem:[#allocation2] sm:$0xff]
        %v2470 = vld [vmem:[%s980] sm:$0x1]
        %v2471 = vld [vmem:[%s983] sm:$0x1]
        %2472 = vadd.xlane.f32.xlu0 %v2469
        %v2473 = vpop.xlane.xlu0 %2472
        %v2474 = vrcp.pop 128.0
        %v2475 = vmul.f32 %v2473, %v2474
        %v2476 = vsub.f32 %v2469, %v2475
        %v2477 = vmul.f32 %v2476, %v2476
        %2478 = vadd.xlane.f32.xlu0 %v2477
        %v2479 = vpop.xlane.xlu0 %2478
        %v2480 = vmul.f32 %v2479, %v2474
        %v2481 = vadd.f32 %v2480, 1e-05
        %v2482 = vrsqrt.pop %v2481
        %v2483 = vmul.f32 %v2476, %v2482
        %v2485 = vlaneseq
        %v2486 = vshrl.u32 %v2485, 7
        %v2487 = vsub.s32 0, %v2486
        %v2488 = vrot.slane %v2470, %v2487
        %v2490 = vmul.f32 %v2483, %v2488
        %v2492 = vlaneseq
        %v2493 = vshrl.u32 %v2492, 7
        %v2494 = vsub.s32 0, %v2493
        %v2495 = vrot.slane %v2471, %v2494
        %v2497 = vadd.f32 %v2490, %v2495
        %v2498 = vld [vmem:[%s1032 + $0x8] sm:$0xff]
        %2499 = vst [vmem:[%s1049] sm:$0xff] %v2498
        %2500 = vst [vmem:[%s1049 + $0x8] sm:$0xff] %v2497
        %v2501 = vpack.c.bf16 %v2497, %v2497
        %v2502 = vld [vmem:[%s988] sm:$0xff]
        %v2503 = vld [vmem:[%s988 + $0x8] sm:$0xf]
        %v2504 = vld [vmem:[%s988 + $0xc] sm:$0xff]
        %v2505 = vld [vmem:[%s988 + $0x14] sm:$0xf]
        %v2506 = vld [vmem:[%s988 + $0x18] sm:$0xff]
        %v2507 = vld [vmem:[%s988 + $0x20] sm:$0xf]
        %v2508 = vld [vmem:[%s988 + $0x24] sm:$0xff]
        %v2509 = vld [vmem:[%s988 + $0x2c] sm:$0xf]
        %v2510 = vld [vmem:[%s988 + $0x30] sm:$0xff]
        %v2511 = vld [vmem:[%s988 + $0x38] sm:$0xf]
        %v2512 = vld [vmem:[%s988 + $0x3c] sm:$0xff]
        %v2513 = vld [vmem:[%s988 + $0x44] sm:$0xf]
        %v2514 = vld [vmem:[%s988 + $0x48] sm:$0xff]
        %v2515 = vld [vmem:[%s988 + $0x50] sm:$0xf]
        %v2516 = vld [vmem:[%s988 + $0x54] sm:$0xff]
        %v2517 = vld [vmem:[%s988 + $0x5c] sm:$0xf]
        %v2518 = vld [vmem:[%s988 + $0x60] sm:$0xff]
        %v2519 = vld [vmem:[%s988 + $0x68] sm:$0xf]
        %v2520 = vld [vmem:[%s988 + $0x6c] sm:$0xff]
        %v2521 = vld [vmem:[%s988 + $0x74] sm:$0xf]
        %v2522 = vld [vmem:[%s988 + $0x78] sm:$0xff]
        %v2523 = vld [vmem:[%s988 + $0x80] sm:$0xf]
        %v2524 = vld [vmem:[%s988 + $0x84] sm:$0xff]
        %v2525 = vld [vmem:[%s988 + $0x8c] sm:$0xf]
        %v2526 = vld [vmem:[%s988 + $0x90] sm:$0xff]
        %v2527 = vld [vmem:[%s988 + $0x98] sm:$0xf]
        %v2528 = vld [vmem:[%s988 + $0x9c] sm:$0xff]
        %v2529 = vld [vmem:[%s988 + $0xa4] sm:$0xf]
        %v2530 = vld [vmem:[%s988 + $0xa8] sm:$0xff]
        %v2531 = vld [vmem:[%s988 + $0xb0] sm:$0xf]
        %v2532 = vld [vmem:[%s988 + $0xb4] sm:$0xff]
        %v2533 = vld [vmem:[%s988 + $0xbc] sm:$0xf]
        %v2534 = vld [vmem:[%s992] sm:$0x7]
        %v2536 = vlaneseq
        %v2537 = vshrl.u32 %v2536, 7
        %v2538 = vsub.s32 0, %v2537
        %v2539 = vrot.slane %v2534, %v2538
        %v2540 = vlaneseq
        %v2541 = vshrl.u32 %v2540, 7
        %v2542 = vsub.s32 1, %v2541
        %v2543 = vrot.slane %v2534, %v2542
        %v2544 = vlaneseq
        %v2545 = vshrl.u32 %v2544, 7
        %v2546 = vsub.s32 2, %v2545
        %v2547 = vrot.slane %v2534, %v2546
        %v2583 = vunpack.c.l.b16 %v2502
        %v2584 = vunpack.c.h.b16 %v2502
        %v2585 = vunpack.c.l.b16 %v2503
        %v2586 = vunpack.c.l.b16 %v2504
        %v2587 = vunpack.c.h.b16 %v2504
        %v2588 = vunpack.c.l.b16 %v2505
        %v2589 = vunpack.c.l.b16 %v2506
        %v2590 = vunpack.c.h.b16 %v2506
        %v2591 = vunpack.c.l.b16 %v2507
        %v2592 = vunpack.c.l.b16 %v2508
        %v2593 = vunpack.c.h.b16 %v2508
        %v2594 = vunpack.c.l.b16 %v2509
        %v2595 = vunpack.c.l.b16 %v2510
        %v2596 = vunpack.c.h.b16 %v2510
        %v2597 = vunpack.c.l.b16 %v2511
        %v2598 = vunpack.c.l.b16 %v2512
        %v2599 = vunpack.c.h.b16 %v2512
        %v2600 = vunpack.c.l.b16 %v2513
        %v2601 = vunpack.c.l.b16 %v2514
        %v2602 = vunpack.c.h.b16 %v2514
        %v2603 = vunpack.c.l.b16 %v2515
        %v2604 = vunpack.c.l.b16 %v2516
        %v2605 = vunpack.c.h.b16 %v2516
        %v2606 = vunpack.c.l.b16 %v2517
        %v2607 = vunpack.c.l.b16 %v2518
        %v2608 = vunpack.c.h.b16 %v2518
        %v2609 = vunpack.c.l.b16 %v2519
        %v2610 = vunpack.c.l.b16 %v2520
        %v2611 = vunpack.c.h.b16 %v2520
        %v2612 = vunpack.c.l.b16 %v2521
        %v2613 = vunpack.c.l.b16 %v2522
        %v2614 = vunpack.c.h.b16 %v2522
        %v2615 = vunpack.c.l.b16 %v2523
        %v2616 = vunpack.c.l.b16 %v2524
        %v2617 = vunpack.c.h.b16 %v2524
        %v2618 = vunpack.c.l.b16 %v2525
        %v2619 = vunpack.c.l.b16 %v2526
        %v2620 = vunpack.c.h.b16 %v2526
        %v2621 = vunpack.c.l.b16 %v2527
        %v2622 = vunpack.c.l.b16 %v2528
        %v2623 = vunpack.c.h.b16 %v2528
        %v2624 = vunpack.c.l.b16 %v2529
        %v2625 = vunpack.c.l.b16 %v2530
        %v2626 = vunpack.c.h.b16 %v2530
        %v2627 = vunpack.c.l.b16 %v2531
        %v2628 = vunpack.c.l.b16 %v2532
        %v2629 = vunpack.c.h.b16 %v2532
        %v2630 = vunpack.c.l.b16 %v2533
        %v2631 = vpack.c.b16 %v2586, %v2583
        %v2632 = vpack.c.b16 %v2587, %v2584
        %v2633 = vpack.c.b16 %v2588, %v2585
        %v2634 = vpack.c.b16 %v2592, %v2589
        %v2635 = vpack.c.b16 %v2593, %v2590
        %v2636 = vpack.c.b16 %v2594, %v2591
        %v2637 = vpack.c.b16 %v2598, %v2595
        %v2638 = vpack.c.b16 %v2599, %v2596
        %v2639 = vpack.c.b16 %v2600, %v2597
        %v2640 = vpack.c.b16 %v2604, %v2601
        %v2641 = vpack.c.b16 %v2605, %v2602
        %v2642 = vpack.c.b16 %v2606, %v2603
        %v2643 = vpack.c.b16 %v2610, %v2607
        %v2644 = vpack.c.b16 %v2611, %v2608
        %v2645 = vpack.c.b16 %v2612, %v2609
        %v2646 = vpack.c.b16 %v2616, %v2613
        %v2647 = vpack.c.b16 %v2617, %v2614
        %v2648 = vpack.c.b16 %v2618, %v2615
        %v2649 = vpack.c.b16 %v2622, %v2619
        %v2650 = vpack.c.b16 %v2623, %v2620
        %v2651 = vpack.c.b16 %v2624, %v2621
        %v2652 = vpack.c.b16 %v2628, %v2625
        %v2653 = vpack.c.b16 %v2629, %v2626
        %v2654 = vpack.c.b16 %v2630, %v2627
        %2679 = vmatprep.subr.bf16.mxu0 %v2632
        %2680 = vmatpush1.bf16.msra.mxu0 %v2631
        %2681 = vmatprep.subr.bf16.mxu0 %v2635
        %2682 = vmatpush1.bf16.msra.mxu0 %v2634
        %2683 = vmatprep.subr.bf16.mxu0 %v2638
        %2684 = vmatpush1.bf16.msra.mxu0 %v2637
        %2685 = vmatprep.subr.bf16.mxu0 %v2641
        %2686 = vmatpush1.bf16.msra.mxu0 %v2640
        %2687 = vmatprep.subr.bf16.mxu0 %v2644
        %2688 = vmatpush1.bf16.msra.mxu0 %v2643
        %2689 = vmatprep.subr.bf16.mxu0 %v2647
        %2690 = vmatpush1.bf16.msra.mxu0 %v2646
        %2691 = vmatprep.subr.bf16.mxu0 %v2650
        %2692 = vmatpush1.bf16.msra.mxu0 %v2649
        %2693 = vmatprep.subr.bf16.mxu0 %v2653
        %2694 = vmatpush1.bf16.msra.mxu0 %v2652
        %2695 = vmatprep.subr.bf16.mxu0 0
        %2696 = vmatpush1.bf16.msra.mxu0 0
        %2697 = vmatprep.subr.bf16.mxu0 0
        %2698 = vmatpush1.bf16.msra.mxu0 0
        %2699 = vmatprep.subr.bf16.mxu0 0
        %2700 = vmatpush1.bf16.msra.mxu0 0
        %2701 = vmatprep.subr.bf16.mxu0 0
        %2702 = vmatpush1.bf16.msra.mxu0 0
        %2703 = vmatprep.subr.bf16.mxu0 0
        %2704 = vmatpush1.bf16.msra.mxu0 0
        %2705 = vmatprep.subr.bf16.mxu0 0
        %2706 = vmatpush1.bf16.msra.mxu0 0
        %2707 = vmatprep.subr.bf16.mxu0 0
        %2708 = vmatpush1.bf16.msra.mxu0 0
        %2709 = vmatprep.subr.bf16.mxu0 0
        %2710 = vmatpush1.bf16.msra.mxu0 0
        %2711 = vmatprep.mubr.bf16.mxu0 0
        %2712 = vmatmul.mubr.bf16.gmra.mrb[0].mxu0 %v2501
        %v2713 = vpop.f32.mrb[0].mxu0
        %v2714 = vadd.f32 %v2539, %v2713
        %v2715 = vpop.f32.mrb[0].mxu0
        %v2716 = vadd.f32 %v2543, %v2715
        %v2717 = vpop.f32.mrb[0].mxu0
        %v2718 = vpop.f32.mrb[0].mxu0
        %2719 = vdwg.mxu0
        %2720 = vmatprep.subr.bf16.mxu0 0
        %2721 = vmatpush1.bf16.msra.mxu0 %v2633
        %2722 = vmatprep.subr.bf16.mxu0 0
        %2723 = vmatpush1.bf16.msra.mxu0 %v2636
        %2724 = vmatprep.subr.bf16.mxu0 0
        %2725 = vmatpush1.bf16.msra.mxu0 %v2639
        %2726 = vmatprep.subr.bf16.mxu0 0
        %2727 = vmatpush1.bf16.msra.mxu0 %v2642
        %2728 = vmatprep.subr.bf16.mxu0 0
        %2729 = vmatpush1.bf16.msra.mxu0 %v2645
        %2730 = vmatprep.subr.bf16.mxu0 0
        %2731 = vmatpush1.bf16.msra.mxu0 %v2648
        %2732 = vmatprep.subr.bf16.mxu0 0
        %2733 = vmatpush1.bf16.msra.mxu0 %v2651
        %2734 = vmatprep.subr.bf16.mxu0 0
        %2735 = vmatpush1.bf16.msra.mxu0 %v2654
        %2736 = vmatprep.subr.bf16.mxu0 0
        %2737 = vmatpush1.bf16.msra.mxu0 0
        %2738 = vmatprep.subr.bf16.mxu0 0
        %2739 = vmatpush1.bf16.msra.mxu0 0
        %2740 = vmatprep.subr.bf16.mxu0 0
        %2741 = vmatpush1.bf16.msra.mxu0 0
        %2742 = vmatprep.subr.bf16.mxu0 0
        %2743 = vmatpush1.bf16.msra.mxu0 0
        %2744 = vmatprep.subr.bf16.mxu0 0
        %2745 = vmatpush1.bf16.msra.mxu0 0
        %2746 = vmatprep.subr.bf16.mxu0 0
        %2747 = vmatpush1.bf16.msra.mxu0 0
        %2748 = vmatprep.subr.bf16.mxu0 0
        %2749 = vmatpush1.bf16.msra.mxu0 0
        %2750 = vmatprep.subr.bf16.mxu0 0
        %2751 = vmatpush1.bf16.msra.mxu0 0
        %2752 = vmatprep.mubr.bf16.mxu0 0
        %2753 = vmatmul.mubr.bf16.gmra.mrb[0].mxu0 %v2501
        %v2754 = vpop.f32.mrb[0].mxu0
        %v2755 = vadd.f32 %v2547, %v2754
        %v2756 = vpop.f32.mrb[0].mxu0
        %v2757 = vpop.f32.mrb[0].mxu0
        %v2758 = vpop.f32.mrb[0].mxu0
        %2759 = vdwg.mxu0
        %v2760 = vlaneseq
        %v2761 = vshrl.u32 %v2760, 7
        %v2762 = vlaneseq
        %v2763 = vand.u32 %v2762, 127
        %vm2764 = vcmp.le.s32.totalorder %v2763, %v2761
        %v2765 = vmul.f32 %v2714, 0.17677669
        %v2766 = vpack.c.bf16 %v2765, %v2765
        %2767 = vxpose.xlu0.b32.start [1/16] %v2716, 128
        %2768 = vxpose.xlu0.b32.cont [2/16] 0.0, 128
        %2769 = vxpose.xlu0.b32.cont [3/16] 0.0, 128
        %2770 = vxpose.xlu0.b32.cont [4/16] 0.0, 128
        %2771 = vxpose.xlu0.b32.cont [5/16] 0.0, 128
        %2772 = vxpose.xlu0.b32.cont [6/16] 0.0, 128
        %2773 = vxpose.xlu0.b32.cont [7/16] 0.0, 128
        %2774 = vxpose.xlu0.b32.cont [8/16] 0.0, 128
        %2775 = vxpose.xlu0.b32.cont [9/16] 0.0, 128
        %2776 = vxpose.xlu0.b32.cont [10/16] 0.0, 128
        %2777 = vxpose.xlu0.b32.cont [11/16] 0.0, 128
        %2778 = vxpose.xlu0.b32.cont [12/16] 0.0, 128
        %2779 = vxpose.xlu0.b32.cont [13/16] 0.0, 128
        %2780 = vxpose.xlu0.b32.cont [14/16] 0.0, 128
        %2781 = vxpose.xlu0.b32.cont [15/16] 0.0, 128
        %2782 = vxpose.xlu0.b32.end [16/16] 0.0, 128
        %v2783 = vpop.trf.xlu0
        %v2784 = vpop.trf.xlu0
        %v2785 = vpop.trf.xlu0
        %v2786 = vpop.trf.xlu0
        %v2787 = vpop.trf.xlu0
        %v2788 = vpop.trf.xlu0
        %v2789 = vpop.trf.xlu0
        %v2790 = vpop.trf.xlu0
        %v2791 = vpop.trf.xlu0
        %v2792 = vpop.trf.xlu0
        %v2793 = vpop.trf.xlu0
        %v2794 = vpop.trf.xlu0
        %v2795 = vpop.trf.xlu0
        %v2796 = vpop.trf.xlu0
        %v2797 = vpop.trf.xlu0
        %v2798 = vpop.trf.xlu0
        %v2799 = vpack.c.bf16 %v2784, %v2783
        %v2800 = vpack.c.bf16 %v2786, %v2785
        %vm2801 = vcmask 261120
        %v2803 = vsel %vm2801, %v2766, 0
        %2805 = vmatprep.subr.bf16.mxu0 0
        %2806 = vmatpush1.bf16.msra.mxu0 %v2799
        %2807 = vmatprep.subr.bf16.mxu0 0
        %2808 = vmatpush1.bf16.msra.mxu0 %v2800
        %2809 = vmatprep.subr.bf16.mxu0 0
        %2810 = vmatpush1.bf16.msra.mxu0 0
        %2811 = vmatprep.subr.bf16.mxu0 0
        %2812 = vmatpush1.bf16.msra.mxu0 0
        %2813 = vmatprep.subr.bf16.mxu0 0
        %2814 = vmatpush1.bf16.msra.mxu0 0
        %2815 = vmatprep.subr.bf16.mxu0 0
        %2816 = vmatpush1.bf16.msra.mxu0 0
        %2817 = vmatprep.subr.bf16.mxu0 0
        %2818 = vmatpush1.bf16.msra.mxu0 0
        %2819 = vmatprep.subr.bf16.mxu0 0
        %2820 = vmatpush1.bf16.msra.mxu0 0
        %2821 = vmatprep.subr.bf16.mxu0 0
        %2822 = vmatpush1.bf16.msra.mxu0 0
        %2823 = vmatprep.subr.bf16.mxu0 0
        %2824 = vmatpush1.bf16.msra.mxu0 0
        %2825 = vmatprep.subr.bf16.mxu0 0
        %2826 = vmatpush1.bf16.msra.mxu0 0
        %2827 = vmatprep.subr.bf16.mxu0 0
        %2828 = vmatpush1.bf16.msra.mxu0 0
        %2829 = vmatprep.subr.bf16.mxu0 0
        %2830 = vmatpush1.bf16.msra.mxu0 0
        %2831 = vmatprep.subr.bf16.mxu0 0
        %2832 = vmatpush1.bf16.msra.mxu0 0
        %2833 = vmatprep.subr.bf16.mxu0 0
        %2834 = vmatpush1.bf16.msra.mxu0 0
        %2835 = vmatprep.subr.bf16.mxu0 0
        %2836 = vmatpush1.bf16.msra.mxu0 0
        %2837 = vmatprep.mubr.bf16.mxu0 0
        %2838 = vmatmul.mubr.bf16.gmra.mrb[0].mxu0 %v2803
        %v2839 = vpop.f32.mrb[0].mxu0
        %v2840 = vadd.f32 0.0, %v2839
        %v2841 = vpop.f32.mrb[0].mxu0
        %v2842 = vpop.f32.mrb[0].mxu0
        %v2843 = vpop.f32.mrb[0].mxu0
        %2844 = vdwg.mxu0
        %v2845 = vsel %vm2764, %v2840, -1e+30
        %vm2846 = vcmask 64512
        %v2847 = vsel %vm2846, %v2845, -inf
        %2848 = vmax.xlane.f32.xlu0 %v2847
        %v2849 = vpop.xlane.xlu0 %2848
        %v2850 = vsub.f32 %v2845, %v2849
        %v2851 = vmul.f32 %v2850, 1.442695
        %v2852 = vpow.pop %v2851
        %v2853 = vsel %vm2846, %v2852, 0.0
        %2854 = vadd.xlane.f32.xlu0 %v2853
        %v2855 = vpop.xlane.xlu0 %2854
        %v2856 = vrcp.pop %v2855
        %v2857 = vmul.f32 %v2852, %v2856
        %v2858 = vpack.c.bf16 %v2857, %v2857
        %v2859 = vpack.c.bf16 %v2755, %v2755
        %v2861 = vsel %vm2846, %v2858, 0
        %vm2863 = vcmask 1043456
        %v2865 = vsel %vm2863, %v2859, 0
        %2867 = vmatprep.subr.bf16.mxu0 0
        %2868 = vmatpush1.bf16.msra.mxu0 %v2865
        %2869 = vmatprep.subr.bf16.mxu0 0
        %2870 = vmatpush1.bf16.msra.mxu0 0
        %2871 = vmatprep.subr.bf16.mxu0 0
        %2872 = vmatpush1.bf16.msra.mxu0 0
        %2873 = vmatprep.subr.bf16.mxu0 0
        %2874 = vmatpush1.bf16.msra.mxu0 0
        %2875 = vmatprep.subr.bf16.mxu0 0
        %2876 = vmatpush1.bf16.msra.mxu0 0
        %2877 = vmatprep.subr.bf16.mxu0 0
        %2878 = vmatpush1.bf16.msra.mxu0 0
        %2879 = vmatprep.subr.bf16.mxu0 0
        %2880 = vmatpush1.bf16.msra.mxu0 0
        %2881 = vmatprep.subr.bf16.mxu0 0
        %2882 = vmatpush1.bf16.msra.mxu0 0
        %2883 = vmatprep.subr.bf16.mxu0 0
        %2884 = vmatpush1.bf16.msra.mxu0 0
        %2885 = vmatprep.subr.bf16.mxu0 0
        %2886 = vmatpush1.bf16.msra.mxu0 0
        %2887 = vmatprep.subr.bf16.mxu0 0
        %2888 = vmatpush1.bf16.msra.mxu0 0
        %2889 = vmatprep.subr.bf16.mxu0 0
        %2890 = vmatpush1.bf16.msra.mxu0 0
        %2891 = vmatprep.subr.bf16.mxu0 0
        %2892 = vmatpush1.bf16.msra.mxu0 0
        %2893 = vmatprep.subr.bf16.mxu0 0
        %2894 = vmatpush1.bf16.msra.mxu0 0
        %2895 = vmatprep.subr.bf16.mxu0 0
        %2896 = vmatpush1.bf16.msra.mxu0 0
        %2897 = vmatprep.subr.bf16.mxu0 0
        %2898 = vmatpush1.bf16.msra.mxu0 0
        %2899 = vmatprep.mubr.bf16.mxu0 0
        %2900 = vmatmul.mubr.bf16.gmra.mrb[0].mxu0 %v2861
        %v2901 = vpop.f32.mrb[0].mxu0
        %v2902 = vadd.f32 0.0, %v2901
        %v2903 = vpop.f32.mrb[0].mxu0
        %v2904 = vpop.f32.mrb[0].mxu0
        %v2905 = vpop.f32.mrb[0].mxu0
        %2906 = vdwg.mxu0
        %2908 = vrot.lane.b32.xlu0 %v2716, 96
        %v2909 = vpop.permute.xlu0 %2908
        %2911 = vxpose.xlu0.b32.start [1/16] %v2909, 128
        %2912 = vxpose.xlu0.b32.cont [2/16] 0.0, 128
        %2913 = vxpose.xlu0.b32.cont [3/16] 0.0, 128
        %2914 = vxpose.xlu0.b32.cont [4/16] 0.0, 128
        %2915 = vxpose.xlu0.b32.cont [5/16] 0.0, 128
        %2916 = vxpose.xlu0.b32.cont [6/16] 0.0, 128
        %2917 = vxpose.xlu0.b32.cont [7/16] 0.0, 128
        %2918 = vxpose.xlu0.b32.cont [8/16] 0.0, 128
        %2919 = vxpose.xlu0.b32.cont [9/16] 0.0, 128
        %2920 = vxpose.xlu0.b32.cont [10/16] 0.0, 128
        %2921 = vxpose.xlu0.b32.cont [11/16] 0.0, 128
        %2922 = vxpose.xlu0.b32.cont [12/16] 0.0, 128
        %2923 = vxpose.xlu0.b32.cont [13/16] 0.0, 128
        %2924 = vxpose.xlu0.b32.cont [14/16] 0.0, 128
        %2925 = vxpose.xlu0.b32.cont [15/16] 0.0, 128
        %2926 = vxpose.xlu0.b32.end [16/16] 0.0, 128
        %v2927 = vpop.trf.xlu0
        %v2928 = vpop.trf.xlu0
        %v2929 = vpop.trf.xlu0
        %v2930 = vpop.trf.xlu0
        %v2931 = vpop.trf.xlu0
        %v2932 = vpop.trf.xlu0
        %v2933 = vpop.trf.xlu0
        %v2934 = vpop.trf.xlu0
        %v2935 = vpop.trf.xlu0
        %v2936 = vpop.trf.xlu0
        %v2937 = vpop.trf.xlu0
        %v2938 = vpop.trf.xlu0
        %v2939 = vpop.trf.xlu0
        %v2940 = vpop.trf.xlu0
        %v2941 = vpop.trf.xlu0
        %v2942 = vpop.trf.xlu0
        %v2943 = vpack.c.bf16 %v2928, %v2927
        %v2944 = vpack.c.bf16 %v2930, %v2929
        %2946 = vrot.lane.b32.xlu0 %v2766, 96
        %v2947 = vpop.permute.xlu0 %2946
        %v2949 = vsel %vm2801, %v2947, 0
        %2951 = vmatprep.subr.bf16.mxu0 0
        %2952 = vmatpush1.bf16.msra.mxu0 %v2943
        %2953 = vmatprep.subr.bf16.mxu0 0
        %2954 = vmatpush1.bf16.msra.mxu0 %v2944
        %2955 = vmatprep.subr.bf16.mxu0 0
        %2956 = vmatpush1.bf16.msra.mxu0 0
        %2957 = vmatprep.subr.bf16.mxu0 0
        %2958 = vmatpush1.bf16.msra.mxu0 0
        %2959 = vmatprep.subr.bf16.mxu0 0
        %2960 = vmatpush1.bf16.msra.mxu0 0
        %2961 = vmatprep.subr.bf16.mxu0 0
        %2962 = vmatpush1.bf16.msra.mxu0 0
        %2963 = vmatprep.subr.bf16.mxu0 0
        %2964 = vmatpush1.bf16.msra.mxu0 0
        %2965 = vmatprep.subr.bf16.mxu0 0
        %2966 = vmatpush1.bf16.msra.mxu0 0
        %2967 = vmatprep.subr.bf16.mxu0 0
        %2968 = vmatpush1.bf16.msra.mxu0 0
        %2969 = vmatprep.subr.bf16.mxu0 0
        %2970 = vmatpush1.bf16.msra.mxu0 0
        %2971 = vmatprep.subr.bf16.mxu0 0
        %2972 = vmatpush1.bf16.msra.mxu0 0
        %2973 = vmatprep.subr.bf16.mxu0 0
        %2974 = vmatpush1.bf16.msra.mxu0 0
        %2975 = vmatprep.subr.bf16.mxu0 0
        %2976 = vmatpush1.bf16.msra.mxu0 0
        %2977 = vmatprep.subr.bf16.mxu0 0
        %2978 = vmatpush1.bf16.msra.mxu0 0
        %2979 = vmatprep.subr.bf16.mxu0 0
        %2980 = vmatpush1.bf16.msra.mxu0 0
        %2981 = vmatprep.subr.bf16.mxu0 0
        %2982 = vmatpush1.bf16.msra.mxu0 0
        %2983 = vmatprep.mubr.bf16.mxu0 0
        %2984 = vmatmul.mubr.bf16.gmra.mrb[0].mxu0 %v2949
        %v2985 = vpop.f32.mrb[0].mxu0
        %v2986 = vadd.f32 0.0, %v2985
        %v2987 = vpop.f32.mrb[0].mxu0
        %v2988 = vpop.f32.mrb[0].mxu0
        %v2989 = vpop.f32.mrb[0].mxu0
        %2990 = vdwg.mxu0
        %v2991 = vsel %vm2764, %v2986, -1e+30
        %v2992 = vsel %vm2846, %v2991, -inf
        %2993 = vmax.xlane.f32.xlu0 %v2992
        %v2994 = vpop.xlane.xlu0 %2993
        %v2995 = vsub.f32 %v2991, %v2994
        %v2996 = vmul.f32 %v2995, 1.442695
        %v2997 = vpow.pop %v2996
        %v2998 = vsel %vm2846, %v2997, 0.0
        %2999 = vadd.xlane.f32.xlu0 %v2998
        %v3000 = vpop.xlane.xlu0 %2999
        %v3001 = vrcp.pop %v3000
        %v3002 = vmul.f32 %v2997, %v3001
        %v3003 = vpack.c.bf16 %v3002, %v3002
        %3005 = vrot.lane.b32.xlu0 %v2859, 96
        %v3006 = vpop.permute.xlu0 %3005
        %v3008 = vsel %vm2846, %v3003, 0
        %v3011 = vsel %vm2863, %v3006, 0
        %3013 = vmatprep.subr.bf16.mxu0 0
        %3014 = vmatpush1.bf16.msra.mxu0 %v3011
        %3015 = vmatprep.subr.bf16.mxu0 0
        %3016 = vmatpush1.bf16.msra.mxu0 0
        %3017 = vmatprep.subr.bf16.mxu0 0
        %3018 = vmatpush1.bf16.msra.mxu0 0
        %3019 = vmatprep.subr.bf16.mxu0 0
        %3020 = vmatpush1.bf16.msra.mxu0 0
        %3021 = vmatprep.subr.bf16.mxu0 0
        %3022 = vmatpush1.bf16.msra.mxu0 0
        %3023 = vmatprep.subr.bf16.mxu0 0
        %3024 = vmatpush1.bf16.msra.mxu0 0
        %3025 = vmatprep.subr.bf16.mxu0 0
        %3026 = vmatpush1.bf16.msra.mxu0 0
        %3027 = vmatprep.subr.bf16.mxu0 0
        %3028 = vmatpush1.bf16.msra.mxu0 0
        %3029 = vmatprep.subr.bf16.mxu0 0
        %3030 = vmatpush1.bf16.msra.mxu0 0
        %3031 = vmatprep.subr.bf16.mxu0 0
        %3032 = vmatpush1.bf16.msra.mxu0 0
        %3033 = vmatprep.subr.bf16.mxu0 0
        %3034 = vmatpush1.bf16.msra.mxu0 0
        %3035 = vmatprep.subr.bf16.mxu0 0
        %3036 = vmatpush1.bf16.msra.mxu0 0
        %3037 = vmatprep.subr.bf16.mxu0 0
        %3038 = vmatpush1.bf16.msra.mxu0 0
        %3039 = vmatprep.subr.bf16.mxu0 0
        %3040 = vmatpush1.bf16.msra.mxu0 0
        %3041 = vmatprep.subr.bf16.mxu0 0
        %3042 = vmatpush1.bf16.msra.mxu0 0
        %3043 = vmatprep.subr.bf16.mxu0 0
        %3044 = vmatpush1.bf16.msra.mxu0 0
        %3045 = vmatprep.mubr.bf16.mxu0 0
        %3046 = vmatmul.mubr.bf16.gmra.mrb[0].mxu0 %v3008
        %v3047 = vpop.f32.mrb[0].mxu0
        %v3048 = vadd.f32 0.0, %v3047
        %v3049 = vpop.f32.mrb[0].mxu0
        %v3050 = vpop.f32.mrb[0].mxu0
        %v3051 = vpop.f32.mrb[0].mxu0
        %3052 = vdwg.mxu0
        %3053 = vrot.lane.b32.xlu0 %v2716, 64
        %v3054 = vpop.permute.xlu0 %3053
        %3056 = vxpose.xlu0.b32.start [1/16] %v3054, 128
        %3057 = vxpose.xlu0.b32.cont [2/16] 0.0, 128
        %3058 = vxpose.xlu0.b32.cont [3/16] 0.0, 128
        %3059 = vxpose.xlu0.b32.cont [4/16] 0.0, 128
        %3060 = vxpose.xlu0.b32.cont [5/16] 0.0, 128
        %3061 = vxpose.xlu0.b32.cont [6/16] 0.0, 128
        %3062 = vxpose.xlu0.b32.cont [7/16] 0.0, 128
        %3063 = vxpose.xlu0.b32.cont [8/16] 0.0, 128
        %3064 = vxpose.xlu0.b32.cont [9/16] 0.0, 128
        %3065 = vxpose.xlu0.b32.cont [10/16] 0.0, 128
        %3066 = vxpose.xlu0.b32.cont [11/16] 0.0, 128
        %3067 = vxpose.xlu0.b32.cont [12/16] 0.0, 128
        %3068 = vxpose.xlu0.b32.cont [13/16] 0.0, 128
        %3069 = vxpose.xlu0.b32.cont [14/16] 0.0, 128
        %3070 = vxpose.xlu0.b32.cont [15/16] 0.0, 128
        %3071 = vxpose.xlu0.b32.end [16/16] 0.0, 128
        %v3072 = vpop.trf.xlu0
        %v3073 = vpop.trf.xlu0
        %v3074 = vpop.trf.xlu0
        %v3075 = vpop.trf.xlu0
        %v3076 = vpop.trf.xlu0
        %v3077 = vpop.trf.xlu0
        %v3078 = vpop.trf.xlu0
        %v3079 = vpop.trf.xlu0
        %v3080 = vpop.trf.xlu0
        %v3081 = vpop.trf.xlu0
        %v3082 = vpop.trf.xlu0
        %v3083 = vpop.trf.xlu0
        %v3084 = vpop.trf.xlu0
        %v3085 = vpop.trf.xlu0
        %v3086 = vpop.trf.xlu0
        %v3087 = vpop.trf.xlu0
        %v3088 = vpack.c.bf16 %v3073, %v3072
        %v3089 = vpack.c.bf16 %v3075, %v3074
        %3090 = vrot.lane.b32.xlu0 %v2766, 64
        %v3091 = vpop.permute.xlu0 %3090
        %v3093 = vsel %vm2801, %v3091, 0
        %3095 = vmatprep.subr.bf16.mxu0 0
        %3096 = vmatpush1.bf16.msra.mxu0 %v3088
        %3097 = vmatprep.subr.bf16.mxu0 0
        %3098 = vmatpush1.bf16.msra.mxu0 %v3089
        %3099 = vmatprep.subr.bf16.mxu0 0
        %3100 = vmatpush1.bf16.msra.mxu0 0
        %3101 = vmatprep.subr.bf16.mxu0 0
        %3102 = vmatpush1.bf16.msra.mxu0 0
        %3103 = vmatprep.subr.bf16.mxu0 0
        %3104 = vmatpush1.bf16.msra.mxu0 0
        %3105 = vmatprep.subr.bf16.mxu0 0
        %3106 = vmatpush1.bf16.msra.mxu0 0
        %3107 = vmatprep.subr.bf16.mxu0 0
        %3108 = vmatpush1.bf16.msra.mxu0 0
        %3109 = vmatprep.subr.bf16.mxu0 0
        %3110 = vmatpush1.bf16.msra.mxu0 0
        %3111 = vmatprep.subr.bf16.mxu0 0
        %3112 = vmatpush1.bf16.msra.mxu0 0
        %3113 = vmatprep.subr.bf16.mxu0 0
        %3114 = vmatpush1.bf16.msra.mxu0 0
        %3115 = vmatprep.subr.bf16.mxu0 0
        %3116 = vmatpush1.bf16.msra.mxu0 0
        %3117 = vmatprep.subr.bf16.mxu0 0
        %3118 = vmatpush1.bf16.msra.mxu0 0
        %3119 = vmatprep.subr.bf16.mxu0 0
        %3120 = vmatpush1.bf16.msra.mxu0 0
        %3121 = vmatprep.subr.bf16.mxu0 0
        %3122 = vmatpush1.bf16.msra.mxu0 0
        %3123 = vmatprep.subr.bf16.mxu0 0
        %3124 = vmatpush1.bf16.msra.mxu0 0
        %3125 = vmatprep.subr.bf16.mxu0 0
        %3126 = vmatpush1.bf16.msra.mxu0 0
        %3127 = vmatprep.mubr.bf16.mxu0 0
        %3128 = vmatmul.mubr.bf16.gmra.mrb[0].mxu0 %v3093
        %v3129 = vpop.f32.mrb[0].mxu0
        %v3130 = vadd.f32 0.0, %v3129
        %v3131 = vpop.f32.mrb[0].mxu0
        %v3132 = vpop.f32.mrb[0].mxu0
        %v3133 = vpop.f32.mrb[0].mxu0
        %3134 = vdwg.mxu0
        %v3135 = vsel %vm2764, %v3130, -1e+30
        %v3136 = vsel %vm2846, %v3135, -inf
        %3137 = vmax.xlane.f32.xlu0 %v3136
        %v3138 = vpop.xlane.xlu0 %3137
        %v3139 = vsub.f32 %v3135, %v3138
        %v3140 = vmul.f32 %v3139, 1.442695
        %v3141 = vpow.pop %v3140
        %v3142 = vsel %vm2846, %v3141, 0.0
        %3143 = vadd.xlane.f32.xlu0 %v3142
        %v3144 = vpop.xlane.xlu0 %3143
        %v3145 = vrcp.pop %v3144
        %v3146 = vmul.f32 %v3141, %v3145
        %v3147 = vpack.c.bf16 %v3146, %v3146
        %3148 = vrot.lane.b32.xlu0 %v2859, 64
        %v3149 = vpop.permute.xlu0 %3148
        %v3151 = vsel %vm2846, %v3147, 0
        %v3154 = vsel %vm2863, %v3149, 0
        %3156 = vmatprep.subr.bf16.mxu0 0
        %3157 = vmatpush1.bf16.msra.mxu0 %v3154
        %3158 = vmatprep.subr.bf16.mxu0 0
        %3159 = vmatpush1.bf16.msra.mxu0 0
        %3160 = vmatprep.subr.bf16.mxu0 0
        %3161 = vmatpush1.bf16.msra.mxu0 0
        %3162 = vmatprep.subr.bf16.mxu0 0
        %3163 = vmatpush1.bf16.msra.mxu0 0
        %3164 = vmatprep.subr.bf16.mxu0 0
        %3165 = vmatpush1.bf16.msra.mxu0 0
        %3166 = vmatprep.subr.bf16.mxu0 0
        %3167 = vmatpush1.bf16.msra.mxu0 0
        %3168 = vmatprep.subr.bf16.mxu0 0
        %3169 = vmatpush1.bf16.msra.mxu0 0
        %3170 = vmatprep.subr.bf16.mxu0 0
        %3171 = vmatpush1.bf16.msra.mxu0 0
        %3172 = vmatprep.subr.bf16.mxu0 0
        %3173 = vmatpush1.bf16.msra.mxu0 0
        %3174 = vmatprep.subr.bf16.mxu0 0
        %3175 = vmatpush1.bf16.msra.mxu0 0
        %3176 = vmatprep.subr.bf16.mxu0 0
        %3177 = vmatpush1.bf16.msra.mxu0 0
        %3178 = vmatprep.subr.bf16.mxu0 0
        %3179 = vmatpush1.bf16.msra.mxu0 0
        %3180 = vmatprep.subr.bf16.mxu0 0
        %3181 = vmatpush1.bf16.msra.mxu0 0
        %3182 = vmatprep.subr.bf16.mxu0 0
        %3183 = vmatpush1.bf16.msra.mxu0 0
        %3184 = vmatprep.subr.bf16.mxu0 0
        %3185 = vmatpush1.bf16.msra.mxu0 0
        %3186 = vmatprep.subr.bf16.mxu0 0
        %3187 = vmatpush1.bf16.msra.mxu0 0
        %3188 = vmatprep.mubr.bf16.mxu0 0
        %3189 = vmatmul.mubr.bf16.gmra.mrb[0].mxu0 %v3151
        %v3190 = vpop.f32.mrb[0].mxu0
        %v3191 = vadd.f32 0.0, %v3190
        %v3192 = vpop.f32.mrb[0].mxu0
        %v3193 = vpop.f32.mrb[0].mxu0
        %v3194 = vpop.f32.mrb[0].mxu0
        %3195 = vdwg.mxu0
        %3196 = vrot.lane.b32.xlu0 %v2716, 32
        %v3197 = vpop.permute.xlu0 %3196
        %3199 = vxpose.xlu0.b32.start [1/16] %v3197, 128
        %3200 = vxpose.xlu0.b32.cont [2/16] 0.0, 128
        %3201 = vxpose.xlu0.b32.cont [3/16] 0.0, 128
        %3202 = vxpose.xlu0.b32.cont [4/16] 0.0, 128
        %3203 = vxpose.xlu0.b32.cont [5/16] 0.0, 128
        %3204 = vxpose.xlu0.b32.cont [6/16] 0.0, 128
        %3205 = vxpose.xlu0.b32.cont [7/16] 0.0, 128
        %3206 = vxpose.xlu0.b32.cont [8/16] 0.0, 128
        %3207 = vxpose.xlu0.b32.cont [9/16] 0.0, 128
        %3208 = vxpose.xlu0.b32.cont [10/16] 0.0, 128
        %3209 = vxpose.xlu0.b32.cont [11/16] 0.0, 128
        %3210 = vxpose.xlu0.b32.cont [12/16] 0.0, 128
        %3211 = vxpose.xlu0.b32.cont [13/16] 0.0, 128
        %3212 = vxpose.xlu0.b32.cont [14/16] 0.0, 128
        %3213 = vxpose.xlu0.b32.cont [15/16] 0.0, 128
        %3214 = vxpose.xlu0.b32.end [16/16] 0.0, 128
        %v3215 = vpop.trf.xlu0
        %v3216 = vpop.trf.xlu0
        %v3217 = vpop.trf.xlu0
        %v3218 = vpop.trf.xlu0
        %v3219 = vpop.trf.xlu0
        %v3220 = vpop.trf.xlu0
        %v3221 = vpop.trf.xlu0
        %v3222 = vpop.trf.xlu0
        %v3223 = vpop.trf.xlu0
        %v3224 = vpop.trf.xlu0
        %v3225 = vpop.trf.xlu0
        %v3226 = vpop.trf.xlu0
        %v3227 = vpop.trf.xlu0
        %v3228 = vpop.trf.xlu0
        %v3229 = vpop.trf.xlu0
        %v3230 = vpop.trf.xlu0
        %v3231 = vpack.c.bf16 %v3216, %v3215
        %v3232 = vpack.c.bf16 %v3218, %v3217
        %3233 = vrot.lane.b32.xlu0 %v2766, 32
        %v3234 = vpop.permute.xlu0 %3233
        %v3236 = vsel %vm2801, %v3234, 0
        %3238 = vmatprep.subr.bf16.mxu0 0
        %3239 = vmatpush1.bf16.msra.mxu0 %v3231
        %3240 = vmatprep.subr.bf16.mxu0 0
        %3241 = vmatpush1.bf16.msra.mxu0 %v3232
        %3242 = vmatprep.subr.bf16.mxu0 0
        %3243 = vmatpush1.bf16.msra.mxu0 0
        %3244 = vmatprep.subr.bf16.mxu0 0
        %3245 = vmatpush1.bf16.msra.mxu0 0
        %3246 = vmatprep.subr.bf16.mxu0 0
        %3247 = vmatpush1.bf16.msra.mxu0 0
        %3248 = vmatprep.subr.bf16.mxu0 0
        %3249 = vmatpush1.bf16.msra.mxu0 0
        %3250 = vmatprep.subr.bf16.mxu0 0
        %3251 = vmatpush1.bf16.msra.mxu0 0
        %3252 = vmatprep.subr.bf16.mxu0 0
        %3253 = vmatpush1.bf16.msra.mxu0 0
        %3254 = vmatprep.subr.bf16.mxu0 0
        %3255 = vmatpush1.bf16.msra.mxu0 0
        %3256 = vmatprep.subr.bf16.mxu0 0
        %3257 = vmatpush1.bf16.msra.mxu0 0
        %3258 = vmatprep.subr.bf16.mxu0 0
        %3259 = vmatpush1.bf16.msra.mxu0 0
        %3260 = vmatprep.subr.bf16.mxu0 0
        %3261 = vmatpush1.bf16.msra.mxu0 0
        %3262 = vmatprep.subr.bf16.mxu0 0
        %3263 = vmatpush1.bf16.msra.mxu0 0
        %3264 = vmatprep.subr.bf16.mxu0 0
        %3265 = vmatpush1.bf16.msra.mxu0 0
        %3266 = vmatprep.subr.bf16.mxu0 0
        %3267 = vmatpush1.bf16.msra.mxu0 0
        %3268 = vmatprep.subr.bf16.mxu0 0
        %3269 = vmatpush1.bf16.msra.mxu0 0
        %3270 = vmatprep.mubr.bf16.mxu0 0
        %3271 = vmatmul.mubr.bf16.gmra.mrb[0].mxu0 %v3236
        %v3272 = vpop.f32.mrb[0].mxu0
        %v3273 = vadd.f32 0.0, %v3272
        %v3274 = vpop.f32.mrb[0].mxu0
        %v3275 = vpop.f32.mrb[0].mxu0
        %v3276 = vpop.f32.mrb[0].mxu0
        %3277 = vdwg.mxu0
        %v3278 = vsel %vm2764, %v3273, -1e+30
        %v3279 = vsel %vm2846, %v3278, -inf
        %3280 = vmax.xlane.f32.xlu0 %v3279
        %v3281 = vpop.xlane.xlu0 %3280
        %v3282 = vsub.f32 %v3278, %v3281
        %v3283 = vmul.f32 %v3282, 1.442695
        %v3284 = vpow.pop %v3283
        %v3285 = vsel %vm2846, %v3284, 0.0
        %3286 = vadd.xlane.f32.xlu0 %v3285
        %v3287 = vpop.xlane.xlu0 %3286
        %v3288 = vrcp.pop %v3287
        %v3289 = vmul.f32 %v3284, %v3288
        %v3290 = vpack.c.bf16 %v3289, %v3289
        %3291 = vrot.lane.b32.xlu0 %v2859, 32
        %v3292 = vpop.permute.xlu0 %3291
        %v3294 = vsel %vm2846, %v3290, 0
        %v3297 = vsel %vm2863, %v3292, 0
        %3299 = vmatprep.subr.bf16.mxu0 0
        %3300 = vmatpush1.bf16.msra.mxu0 %v3297
        %3301 = vmatprep.subr.bf16.mxu0 0
        %3302 = vmatpush1.bf16.msra.mxu0 0
        %3303 = vmatprep.subr.bf16.mxu0 0
        %3304 = vmatpush1.bf16.msra.mxu0 0
        %3305 = vmatprep.subr.bf16.mxu0 0
        %3306 = vmatpush1.bf16.msra.mxu0 0
        %3307 = vmatprep.subr.bf16.mxu0 0
        %3308 = vmatpush1.bf16.msra.mxu0 0
        %3309 = vmatprep.subr.bf16.mxu0 0
        %3310 = vmatpush1.bf16.msra.mxu0 0
        %3311 = vmatprep.subr.bf16.mxu0 0
        %3312 = vmatpush1.bf16.msra.mxu0 0
        %3313 = vmatprep.subr.bf16.mxu0 0
        %3314 = vmatpush1.bf16.msra.mxu0 0
        %3315 = vmatprep.subr.bf16.mxu0 0
        %3316 = vmatpush1.bf16.msra.mxu0 0
        %3317 = vmatprep.subr.bf16.mxu0 0
        %3318 = vmatpush1.bf16.msra.mxu0 0
        %3319 = vmatprep.subr.bf16.mxu0 0
        %3320 = vmatpush1.bf16.msra.mxu0 0
        %3321 = vmatprep.subr.bf16.mxu0 0
        %3322 = vmatpush1.bf16.msra.mxu0 0
        %3323 = vmatprep.subr.bf16.mxu0 0
        %3324 = vmatpush1.bf16.msra.mxu0 0
        %3325 = vmatprep.subr.bf16.mxu0 0
        %3326 = vmatpush1.bf16.msra.mxu0 0
        %3327 = vmatprep.subr.bf16.mxu0 0
        %3328 = vmatpush1.bf16.msra.mxu0 0
        %3329 = vmatprep.subr.bf16.mxu0 0
        %3330 = vmatpush1.bf16.msra.mxu0 0
        %3331 = vmatprep.mubr.bf16.mxu0 0
        %3332 = vmatmul.mubr.bf16.gmra.mrb[0].mxu0 %v3294
        %v3333 = vpop.f32.mrb[0].mxu0
        %v3334 = vadd.f32 0.0, %v3333
        %v3335 = vpop.f32.mrb[0].mxu0
        %v3336 = vpop.f32.mrb[0].mxu0
        %v3337 = vpop.f32.mrb[0].mxu0
        %3338 = vdwg.mxu0
        %3340 = vrot.lane.b32.xlu0 %v3048, 32
        %v3341 = vpop.permute.xlu0 %3340
        %3344 = vrot.lane.b32.xlu0 %v3191, 64
        %v3345 = vpop.permute.xlu0 %3344
        %3348 = vrot.lane.b32.xlu0 %v3334, 96
        %v3349 = vpop.permute.xlu0 %3348
        %v3351 = vsel %vm2801, %v2902, %v3341
        %vm3352 = vcmask 523264
        %v3353 = vsel %vm3352, %v3351, %v3345
        %vm3354 = vcmask 785408
        %v3355 = vsel %vm3354, %v3353, %v3349
        %v3356 = vpack.c.bf16 %v3355, %v3355
        %v3357 = vld [vmem:[%s997] sm:$0xf]
        %v3358 = vld [vmem:[%s997 + $0x4] sm:$0xf]
        %v3359 = vld [vmem:[%s997 + $0x8] sm:$0xf]
        %v3360 = vld [vmem:[%s997 + $0xc] sm:$0xf]
        %v3361 = vld [vmem:[%s997 + $0x10] sm:$0xf]
        %v3362 = vld [vmem:[%s997 + $0x14] sm:$0xf]
        %v3363 = vld [vmem:[%s997 + $0x18] sm:$0xf]
        %v3364 = vld [vmem:[%s997 + $0x1c] sm:$0xf]
        %v3365 = vld [vmem:[%s997 + $0x20] sm:$0xf]
        %v3366 = vld [vmem:[%s997 + $0x24] sm:$0xf]
        %v3367 = vld [vmem:[%s997 + $0x28] sm:$0xf]
        %v3368 = vld [vmem:[%s997 + $0x2c] sm:$0xf]
        %v3369 = vld [vmem:[%s997 + $0x30] sm:$0xf]
        %v3370 = vld [vmem:[%s997 + $0x34] sm:$0xf]
        %v3371 = vld [vmem:[%s997 + $0x38] sm:$0xf]
        %v3372 = vld [vmem:[%s997 + $0x3c] sm:$0xf]
        %v3373 = vld [vmem:[%s1000] sm:$0x1]
        %v3375 = vlaneseq
        %v3376 = vshrl.u32 %v3375, 7
        %v3377 = vsub.s32 0, %v3376
        %v3378 = vrot.slane %v3373, %v3377
        %v3396 = vunpack.c.l.b16 %v3357
        %v3397 = vunpack.c.l.b16 %v3358
        %v3398 = vunpack.c.l.b16 %v3359
        %v3399 = vunpack.c.l.b16 %v3360
        %v3400 = vunpack.c.l.b16 %v3361
        %v3401 = vunpack.c.l.b16 %v3362
        %v3402 = vunpack.c.l.b16 %v3363
        %v3403 = vunpack.c.l.b16 %v3364
        %v3404 = vunpack.c.l.b16 %v3365
        %v3405 = vunpack.c.l.b16 %v3366
        %v3406 = vunpack.c.l.b16 %v3367
        %v3407 = vunpack.c.l.b16 %v3368
        %v3408 = vunpack.c.l.b16 %v3369
        %v3409 = vunpack.c.l.b16 %v3370
        %v3410 = vunpack.c.l.b16 %v3371
        %v3411 = vunpack.c.l.b16 %v3372
        %v3412 = vpack.c.b16 %v3397, %v3396
        %v3413 = vpack.c.b16 %v3399, %v3398
        %v3414 = vpack.c.b16 %v3401, %v3400
        %v3415 = vpack.c.b16 %v3403, %v3402
        %v3416 = vpack.c.b16 %v3405, %v3404
        %v3417 = vpack.c.b16 %v3407, %v3406
        %v3418 = vpack.c.b16 %v3409, %v3408
        %v3419 = vpack.c.b16 %v3411, %v3410
        %3428 = vmatprep.subr.bf16.mxu0 0
        %3429 = vmatpush1.bf16.msra.mxu0 %v3412
        %3430 = vmatprep.subr.bf16.mxu0 0
        %3431 = vmatpush1.bf16.msra.mxu0 %v3413
        %3432 = vmatprep.subr.bf16.mxu0 0
        %3433 = vmatpush1.bf16.msra.mxu0 %v3414
        %3434 = vmatprep.subr.bf16.mxu0 0
        %3435 = vmatpush1.bf16.msra.mxu0 %v3415
        %3436 = vmatprep.subr.bf16.mxu0 0
        %3437 = vmatpush1.bf16.msra.mxu0 %v3416
        %3438 = vmatprep.subr.bf16.mxu0 0
        %3439 = vmatpush1.bf16.msra.mxu0 %v3417
        %3440 = vmatprep.subr.bf16.mxu0 0
        %3441 = vmatpush1.bf16.msra.mxu0 %v3418
        %3442 = vmatprep.subr.bf16.mxu0 0
        %3443 = vmatpush1.bf16.msra.mxu0 %v3419
        %3444 = vmatprep.subr.bf16.mxu0 0
        %3445 = vmatpush1.bf16.msra.mxu0 0
        %3446 = vmatprep.subr.bf16.mxu0 0
        %3447 = vmatpush1.bf16.msra.mxu0 0
        %3448 = vmatprep.subr.bf16.mxu0 0
        %3449 = vmatpush1.bf16.msra.mxu0 0
        %3450 = vmatprep.subr.bf16.mxu0 0
        %3451 = vmatpush1.bf16.msra.mxu0 0
        %3452 = vmatprep.subr.bf16.mxu0 0
        %3453 = vmatpush1.bf16.msra.mxu0 0
        %3454 = vmatprep.subr.bf16.mxu0 0
        %3455 = vmatpush1.bf16.msra.mxu0 0
        %3456 = vmatprep.subr.bf16.mxu0 0
        %3457 = vmatpush1.bf16.msra.mxu0 0
        %3458 = vmatprep.subr.bf16.mxu0 0
        %3459 = vmatpush1.bf16.msra.mxu0 0
        %3460 = vmatprep.mubr.bf16.mxu0 0
        %3461 = vmatmul.mubr.bf16.gmra.mrb[0].mxu0 %v3356
        %v3462 = vpop.f32.mrb[0].mxu0
        %v3463 = vadd.f32 %v3378, %v3462
        %v3464 = vpop.f32.mrb[0].mxu0
        %v3465 = vpop.f32.mrb[0].mxu0
        %v3466 = vpop.f32.mrb[0].mxu0
        %3467 = vdwg.mxu0
        %v3468 = vadd.f32 %v2469, %v3463
        %v3469 = vld [vmem:[%s1003] sm:$0x1]
        %v3470 = vld [vmem:[%s1006] sm:$0x1]
        %3471 = vadd.xlane.f32.xlu0 %v3468
        %v3472 = vpop.xlane.xlu0 %3471
        %v3473 = vmul.f32 %v3472, %v2474
        %v3474 = vsub.f32 %v3468, %v3473
        %v3475 = vmul.f32 %v3474, %v3474
        %3476 = vadd.xlane.f32.xlu0 %v3475
        %v3477 = vpop.xlane.xlu0 %3476
        %v3478 = vmul.f32 %v3477, %v2474
        %v3479 = vadd.f32 %v3478, 1e-05
        %v3480 = vrsqrt.pop %v3479
        %v3481 = vmul.f32 %v3474, %v3480
        %v3483 = vlaneseq
        %v3484 = vshrl.u32 %v3483, 7
        %v3485 = vsub.s32 0, %v3484
        %v3486 = vrot.slane %v3469, %v3485
        %v3488 = vmul.f32 %v3481, %v3486
        %v3490 = vlaneseq
        %v3491 = vshrl.u32 %v3490, 7
        %v3492 = vsub.s32 0, %v3491
        %v3493 = vrot.slane %v3470, %v3492
        %v3495 = vadd.f32 %v3488, %v3493
        %v3496 = vpack.c.bf16 %v3495, %v3495
        %v3497 = vld [vmem:[%s1011] sm:$0xff]
        %v3498 = vld [vmem:[%s1011 + $0x8] sm:$0xff]
        %v3499 = vld [vmem:[%s1011 + $0x10] sm:$0xff]
        %v3500 = vld [vmem:[%s1011 + $0x18] sm:$0xff]
        %v3501 = vld [vmem:[%s1011 + $0x20] sm:$0xff]
        %v3502 = vld [vmem:[%s1011 + $0x28] sm:$0xff]
        %v3503 = vld [vmem:[%s1011 + $0x30] sm:$0xff]
        %v3504 = vld [vmem:[%s1011 + $0x38] sm:$0xff]
        %v3505 = vld [vmem:[%s1011 + $0x40] sm:$0xff]
        %v3506 = vld [vmem:[%s1011 + $0x48] sm:$0xff]
        %v3507 = vld [vmem:[%s1011 + $0x50] sm:$0xff]
        %v3508 = vld [vmem:[%s1011 + $0x58] sm:$0xff]
        %v3509 = vld [vmem:[%s1011 + $0x60] sm:$0xff]
        %v3510 = vld [vmem:[%s1011 + $0x68] sm:$0xff]
        %v3511 = vld [vmem:[%s1011 + $0x70] sm:$0xff]
        %v3512 = vld [vmem:[%s1011 + $0x78] sm:$0xff]
        %v3513 = vld [vmem:[%s1011 + $0x80] sm:$0xff]
        %v3514 = vld [vmem:[%s1011 + $0x88] sm:$0xff]
        %v3515 = vld [vmem:[%s1011 + $0x90] sm:$0xff]
        %v3516 = vld [vmem:[%s1011 + $0x98] sm:$0xff]
        %v3517 = vld [vmem:[%s1011 + $0xa0] sm:$0xff]
        %v3518 = vld [vmem:[%s1011 + $0xa8] sm:$0xff]
        %v3519 = vld [vmem:[%s1011 + $0xb0] sm:$0xff]
        %v3520 = vld [vmem:[%s1011 + $0xb8] sm:$0xff]
        %v3521 = vld [vmem:[%s1011 + $0xc0] sm:$0xff]
        %v3522 = vld [vmem:[%s1011 + $0xc8] sm:$0xff]
        %v3523 = vld [vmem:[%s1011 + $0xd0] sm:$0xff]
        %v3524 = vld [vmem:[%s1011 + $0xd8] sm:$0xff]
        %v3525 = vld [vmem:[%s1011 + $0xe0] sm:$0xff]
        %v3526 = vld [vmem:[%s1011 + $0xe8] sm:$0xff]
        %v3527 = vld [vmem:[%s1011 + $0xf0] sm:$0xff]
        %v3528 = vld [vmem:[%s1011 + $0xf8] sm:$0xff]
        %v3529 = vld [vmem:[%s1015] sm:$0xf]
        %v3531 = vlaneseq
        %v3532 = vshrl.u32 %v3531, 7
        %v3533 = vsub.s32 0, %v3532
        %v3534 = vrot.slane %v3529, %v3533
        %v3535 = vlaneseq
        %v3536 = vshrl.u32 %v3535, 7
        %v3537 = vsub.s32 1, %v3536
        %v3538 = vrot.slane %v3529, %v3537
        %v3539 = vlaneseq
        %v3540 = vshrl.u32 %v3539, 7
        %v3541 = vsub.s32 2, %v3540
        %v3542 = vrot.slane %v3529, %v3541
        %v3543 = vlaneseq
        %v3544 = vshrl.u32 %v3543, 7
        %v3545 = vsub.s32 3, %v3544
        %v3546 = vrot.slane %v3529, %v3545
        %v3583 = vunpack.c.l.b16 %v3497
        %v3584 = vunpack.c.h.b16 %v3497
        %v3585 = vunpack.c.l.b16 %v3498
        %v3586 = vunpack.c.h.b16 %v3498
        %v3587 = vunpack.c.l.b16 %v3499
        %v3588 = vunpack.c.h.b16 %v3499
        %v3589 = vunpack.c.l.b16 %v3500
        %v3590 = vunpack.c.h.b16 %v3500
        %v3591 = vunpack.c.l.b16 %v3501
        %v3592 = vunpack.c.h.b16 %v3501
        %v3593 = vunpack.c.l.b16 %v3502
        %v3594 = vunpack.c.h.b16 %v3502
        %v3595 = vunpack.c.l.b16 %v3503
        %v3596 = vunpack.c.h.b16 %v3503
        %v3597 = vunpack.c.l.b16 %v3504
        %v3598 = vunpack.c.h.b16 %v3504
        %v3599 = vunpack.c.l.b16 %v3505
        %v3600 = vunpack.c.h.b16 %v3505
        %v3601 = vunpack.c.l.b16 %v3506
        %v3602 = vunpack.c.h.b16 %v3506
        %v3603 = vunpack.c.l.b16 %v3507
        %v3604 = vunpack.c.h.b16 %v3507
        %v3605 = vunpack.c.l.b16 %v3508
        %v3606 = vunpack.c.h.b16 %v3508
        %v3607 = vunpack.c.l.b16 %v3509
        %v3608 = vunpack.c.h.b16 %v3509
        %v3609 = vunpack.c.l.b16 %v3510
        %v3610 = vunpack.c.h.b16 %v3510
        %v3611 = vunpack.c.l.b16 %v3511
        %v3612 = vunpack.c.h.b16 %v3511
        %v3613 = vunpack.c.l.b16 %v3512
        %v3614 = vunpack.c.h.b16 %v3512
        %v3615 = vunpack.c.l.b16 %v3513
        %v3616 = vunpack.c.h.b16 %v3513
        %v3617 = vunpack.c.l.b16 %v3514
        %v3618 = vunpack.c.h.b16 %v3514
        %v3619 = vunpack.c.l.b16 %v3515
        %v3620 = vunpack.c.h.b16 %v3515
        %v3621 = vunpack.c.l.b16 %v3516
        %v3622 = vunpack.c.h.b16 %v3516
        %v3623 = vunpack.c.l.b16 %v3517
        %v3624 = vunpack.c.h.b16 %v3517
        %v3625 = vunpack.c.l.b16 %v3518
        %v3626 = vunpack.c.h.b16 %v3518
        %v3627 = vunpack.c.l.b16 %v3519
        %v3628 = vunpack.c.h.b16 %v3519
        %v3629 = vunpack.c.l.b16 %v3520
        %v3630 = vunpack.c.h.b16 %v3520
        %v3631 = vunpack.c.l.b16 %v3521
        %v3632 = vunpack.c.h.b16 %v3521
        %v3633 = vunpack.c.l.b16 %v3522
        %v3634 = vunpack.c.h.b16 %v3522
        %v3635 = vunpack.c.l.b16 %v3523
        %v3636 = vunpack.c.h.b16 %v3523
        %v3637 = vunpack.c.l.b16 %v3524
        %v3638 = vunpack.c.h.b16 %v3524
        %v3639 = vunpack.c.l.b16 %v3525
        %v3640 = vunpack.c.h.b16 %v3525
        %v3641 = vunpack.c.l.b16 %v3526
        %v3642 = vunpack.c.h.b16 %v3526
        %v3643 = vunpack.c.l.b16 %v3527
        %v3644 = vunpack.c.h.b16 %v3527
        %v3645 = vunpack.c.l.b16 %v3528
        %v3646 = vunpack.c.h.b16 %v3528
        %v3647 = vpack.c.b16 %v3587, %v3583
        %v3648 = vpack.c.b16 %v3588, %v3584
        %v3649 = vpack.c.b16 %v3589, %v3585
        %v3650 = vpack.c.b16 %v3590, %v3586
        %v3651 = vpack.c.b16 %v3595, %v3591
        %v3652 = vpack.c.b16 %v3596, %v3592
        %v3653 = vpack.c.b16 %v3597, %v3593
        %v3654 = vpack.c.b16 %v3598, %v3594
        %v3655 = vpack.c.b16 %v3603, %v3599
        %v3656 = vpack.c.b16 %v3604, %v3600
        %v3657 = vpack.c.b16 %v3605, %v3601
        %v3658 = vpack.c.b16 %v3606, %v3602
        %v3659 = vpack.c.b16 %v3611, %v3607
        %v3660 = vpack.c.b16 %v3612, %v3608
        %v3661 = vpack.c.b16 %v3613, %v3609
        %v3662 = vpack.c.b16 %v3614, %v3610
        %v3663 = vpack.c.b16 %v3619, %v3615
        %v3664 = vpack.c.b16 %v3620, %v3616
        %v3665 = vpack.c.b16 %v3621, %v3617
        %v3666 = vpack.c.b16 %v3622, %v3618
        %v3667 = vpack.c.b16 %v3627, %v3623
        %v3668 = vpack.c.b16 %v3628, %v3624
        %v3669 = vpack.c.b16 %v3629, %v3625
        %v3670 = vpack.c.b16 %v3630, %v3626
        %v3671 = vpack.c.b16 %v3635, %v3631
        %v3672 = vpack.c.b16 %v3636, %v3632
        %v3673 = vpack.c.b16 %v3637, %v3633
        %v3674 = vpack.c.b16 %v3638, %v3634
        %v3675 = vpack.c.b16 %v3643, %v3639
        %v3676 = vpack.c.b16 %v3644, %v3640
        %v3677 = vpack.c.b16 %v3645, %v3641
        %v3678 = vpack.c.b16 %v3646, %v3642
        %3711 = vmatprep.subr.bf16.mxu0 %v3648
        %3712 = vmatpush1.bf16.msra.mxu0 %v3647
        %3713 = vmatprep.subr.bf16.mxu0 %v3652
        %3714 = vmatpush1.bf16.msra.mxu0 %v3651
        %3715 = vmatprep.subr.bf16.mxu0 %v3656
        %3716 = vmatpush1.bf16.msra.mxu0 %v3655
        %3717 = vmatprep.subr.bf16.mxu0 %v3660
        %3718 = vmatpush1.bf16.msra.mxu0 %v3659
        %3719 = vmatprep.subr.bf16.mxu0 %v3664
        %3720 = vmatpush1.bf16.msra.mxu0 %v3663
        %3721 = vmatprep.subr.bf16.mxu0 %v3668
        %3722 = vmatpush1.bf16.msra.mxu0 %v3667
        %3723 = vmatprep.subr.bf16.mxu0 %v3672
        %3724 = vmatpush1.bf16.msra.mxu0 %v3671
        %3725 = vmatprep.subr.bf16.mxu0 %v3676
        %3726 = vmatpush1.bf16.msra.mxu0 %v3675
        %3727 = vmatprep.subr.bf16.mxu0 0
        %3728 = vmatpush1.bf16.msra.mxu0 0
        %3729 = vmatprep.subr.bf16.mxu0 0
        %3730 = vmatpush1.bf16.msra.mxu0 0
        %3731 = vmatprep.subr.bf16.mxu0 0
        %3732 = vmatpush1.bf16.msra.mxu0 0
        %3733 = vmatprep.subr.bf16.mxu0 0
        %3734 = vmatpush1.bf16.msra.mxu0 0
        %3735 = vmatprep.subr.bf16.mxu0 0
        %3736 = vmatpush1.bf16.msra.mxu0 0
        %3737 = vmatprep.subr.bf16.mxu0 0
        %3738 = vmatpush1.bf16.msra.mxu0 0
        %3739 = vmatprep.subr.bf16.mxu0 0
        %3740 = vmatpush1.bf16.msra.mxu0 0
        %3741 = vmatprep.subr.bf16.mxu0 0
        %3742 = vmatpush1.bf16.msra.mxu0 0
        %3743 = vmatprep.mubr.bf16.mxu0 0
        %3744 = vmatmul.mubr.bf16.gmra.mrb[0].mxu0 %v3496
        %v3745 = vpop.f32.mrb[0].mxu0
        %v3746 = vadd.f32 %v3534, %v3745
        %v3747 = vpop.f32.mrb[0].mxu0
        %v3748 = vadd.f32 %v3538, %v3747
        %v3749 = vpop.f32.mrb[0].mxu0
        %v3750 = vpop.f32.mrb[0].mxu0
        %3751 = vdwg.mxu0
        %3752 = vmatprep.subr.bf16.mxu0 %v3650
        %3753 = vmatpush1.bf16.msra.mxu0 %v3649
        %3754 = vmatprep.subr.bf16.mxu0 %v3654
        %3755 = vmatpush1.bf16.msra.mxu0 %v3653
        %3756 = vmatprep.subr.bf16.mxu0 %v3658
        %3757 = vmatpush1.bf16.msra.mxu0 %v3657
        %3758 = vmatprep.subr.bf16.mxu0 %v3662
        %3759 = vmatpush1.bf16.msra.mxu0 %v3661
        %3760 = vmatprep.subr.bf16.mxu0 %v3666
        %3761 = vmatpush1.bf16.msra.mxu0 %v3665
        %3762 = vmatprep.subr.bf16.mxu0 %v3670
        %3763 = vmatpush1.bf16.msra.mxu0 %v3669
        %3764 = vmatprep.subr.bf16.mxu0 %v3674
        %3765 = vmatpush1.bf16.msra.mxu0 %v3673
        %3766 = vmatprep.subr.bf16.mxu0 %v3678
        %3767 = vmatpush1.bf16.msra.mxu0 %v3677
        %3768 = vmatprep.subr.bf16.mxu0 0
        %3769 = vmatpush1.bf16.msra.mxu0 0
        %3770 = vmatprep.subr.bf16.mxu0 0
        %3771 = vmatpush1.bf16.msra.mxu0 0
        %3772 = vmatprep.subr.bf16.mxu0 0
        %3773 = vmatpush1.bf16.msra.mxu0 0
        %3774 = vmatprep.subr.bf16.mxu0 0
        %3775 = vmatpush1.bf16.msra.mxu0 0
        %3776 = vmatprep.subr.bf16.mxu0 0
        %3777 = vmatpush1.bf16.msra.mxu0 0
        %3778 = vmatprep.subr.bf16.mxu0 0
        %3779 = vmatpush1.bf16.msra.mxu0 0
        %3780 = vmatprep.subr.bf16.mxu0 0
        %3781 = vmatpush1.bf16.msra.mxu0 0
        %3782 = vmatprep.subr.bf16.mxu0 0
        %3783 = vmatpush1.bf16.msra.mxu0 0
        %3784 = vmatprep.mubr.bf16.mxu0 0
        %3785 = vmatmul.mubr.bf16.gmra.mrb[0].mxu0 %v3496
        %v3786 = vpop.f32.mrb[0].mxu0
        %v3787 = vadd.f32 %v3542, %v3786
        %v3788 = vpop.f32.mrb[0].mxu0
        %v3789 = vadd.f32 %v3546, %v3788
        %v3790 = vpop.f32.mrb[0].mxu0
        %v3791 = vpop.f32.mrb[0].mxu0
        %3792 = vdwg.mxu0
        %v3793 = vmax.f32 %v3746, 0.0
        %v3794 = vmax.f32 %v3748, 0.0
        %v3795 = vmax.f32 %v3787, 0.0
        %v3796 = vmax.f32 %v3789, 0.0
        %v3797 = vpack.c.bf16 %v3793, %v3793
        %v3798 = vpack.c.bf16 %v3794, %v3794
        %v3799 = vpack.c.bf16 %v3795, %v3795
        %v3800 = vpack.c.bf16 %v3796, %v3796
        %v3801 = vld [vmem:[%s1020] sm:$0xf]
        %v3802 = vld [vmem:[%s1020 + $0x4] sm:$0xf]
        %v3803 = vld [vmem:[%s1020 + $0x8] sm:$0xf]
        %v3804 = vld [vmem:[%s1020 + $0xc] sm:$0xf]
        %v3805 = vld [vmem:[%s1020 + $0x10] sm:$0xf]
        %v3806 = vld [vmem:[%s1020 + $0x14] sm:$0xf]
        %v3807 = vld [vmem:[%s1020 + $0x18] sm:$0xf]
        %v3808 = vld [vmem:[%s1020 + $0x1c] sm:$0xf]
        %v3809 = vld [vmem:[%s1020 + $0x20] sm:$0xf]
        %v3810 = vld [vmem:[%s1020 + $0x24] sm:$0xf]
        %v3811 = vld [vmem:[%s1020 + $0x28] sm:$0xf]
        %v3812 = vld [vmem:[%s1020 + $0x2c] sm:$0xf]
        %v3813 = vld [vmem:[%s1020 + $0x30] sm:$0xf]
        %v3814 = vld [vmem:[%s1020 + $0x34] sm:$0xf]
        %v3815 = vld [vmem:[%s1020 + $0x38] sm:$0xf]
        %v3816 = vld [vmem:[%s1020 + $0x3c] sm:$0xf]
        %v3817 = vld [vmem:[%s1020 + $0x40] sm:$0xf]
        %v3818 = vld [vmem:[%s1020 + $0x44] sm:$0xf]
        %v3819 = vld [vmem:[%s1020 + $0x48] sm:$0xf]
        %v3820 = vld [vmem:[%s1020 + $0x4c] sm:$0xf]
        %v3821 = vld [vmem:[%s1020 + $0x50] sm:$0xf]
        %v3822 = vld [vmem:[%s1020 + $0x54] sm:$0xf]
        %v3823 = vld [vmem:[%s1020 + $0x58] sm:$0xf]
        %v3824 = vld [vmem:[%s1020 + $0x5c] sm:$0xf]
        %v3825 = vld [vmem:[%s1020 + $0x60] sm:$0xf]
        %v3826 = vld [vmem:[%s1020 + $0x64] sm:$0xf]
        %v3827 = vld [vmem:[%s1020 + $0x68] sm:$0xf]
        %v3828 = vld [vmem:[%s1020 + $0x6c] sm:$0xf]
        %v3829 = vld [vmem:[%s1020 + $0x70] sm:$0xf]
        %v3830 = vld [vmem:[%s1020 + $0x74] sm:$0xf]
        %v3831 = vld [vmem:[%s1020 + $0x78] sm:$0xf]
        %v3832 = vld [vmem:[%s1020 + $0x7c] sm:$0xf]
        %v3833 = vld [vmem:[%s1020 + $0x80] sm:$0xf]
        %v3834 = vld [vmem:[%s1020 + $0x84] sm:$0xf]
        %v3835 = vld [vmem:[%s1020 + $0x88] sm:$0xf]
        %v3836 = vld [vmem:[%s1020 + $0x8c] sm:$0xf]
        %v3837 = vld [vmem:[%s1020 + $0x90] sm:$0xf]
        %v3838 = vld [vmem:[%s1020 + $0x94] sm:$0xf]
        %v3839 = vld [vmem:[%s1020 + $0x98] sm:$0xf]
        %v3840 = vld [vmem:[%s1020 + $0x9c] sm:$0xf]
        %v3841 = vld [vmem:[%s1020 + $0xa0] sm:$0xf]
        %v3842 = vld [vmem:[%s1020 + $0xa4] sm:$0xf]
        %v3843 = vld [vmem:[%s1020 + $0xa8] sm:$0xf]
        %v3844 = vld [vmem:[%s1020 + $0xac] sm:$0xf]
        %v3845 = vld [vmem:[%s1020 + $0xb0] sm:$0xf]
        %v3846 = vld [vmem:[%s1020 + $0xb4] sm:$0xf]
        %v3847 = vld [vmem:[%s1020 + $0xb8] sm:$0xf]
        %v3848 = vld [vmem:[%s1020 + $0xbc] sm:$0xf]
        %v3849 = vld [vmem:[%s1020 + $0xc0] sm:$0xf]
        %v3850 = vld [vmem:[%s1020 + $0xc4] sm:$0xf]
        %v3851 = vld [vmem:[%s1020 + $0xc8] sm:$0xf]
        %v3852 = vld [vmem:[%s1020 + $0xcc] sm:$0xf]
        %v3853 = vld [vmem:[%s1020 + $0xd0] sm:$0xf]
        %v3854 = vld [vmem:[%s1020 + $0xd4] sm:$0xf]
        %v3855 = vld [vmem:[%s1020 + $0xd8] sm:$0xf]
        %v3856 = vld [vmem:[%s1020 + $0xdc] sm:$0xf]
        %v3857 = vld [vmem:[%s1020 + $0xe0] sm:$0xf]
        %v3858 = vld [vmem:[%s1020 + $0xe4] sm:$0xf]
        %v3859 = vld [vmem:[%s1020 + $0xe8] sm:$0xf]
        %v3860 = vld [vmem:[%s1020 + $0xec] sm:$0xf]
        %v3861 = vld [vmem:[%s1020 + $0xf0] sm:$0xf]
        %v3862 = vld [vmem:[%s1020 + $0xf4] sm:$0xf]
        %v3863 = vld [vmem:[%s1020 + $0xf8] sm:$0xf]
        %v3864 = vld [vmem:[%s1020 + $0xfc] sm:$0xf]
        %v3865 = vld [vmem:[%s1023] sm:$0x1]
        %v3867 = vlaneseq
        %v3868 = vshrl.u32 %v3867, 7
        %v3869 = vsub.s32 0, %v3868
        %v3870 = vrot.slane %v3865, %v3869
        %v3936 = vunpack.c.l.b16 %v3801
        %v3937 = vunpack.c.l.b16 %v3802
        %v3938 = vunpack.c.l.b16 %v3803
        %v3939 = vunpack.c.l.b16 %v3804
        %v3940 = vunpack.c.l.b16 %v3805
        %v3941 = vunpack.c.l.b16 %v3806
        %v3942 = vunpack.c.l.b16 %v3807
        %v3943 = vunpack.c.l.b16 %v3808
        %v3944 = vunpack.c.l.b16 %v3809
        %v3945 = vunpack.c.l.b16 %v3810
        %v3946 = vunpack.c.l.b16 %v3811
        %v3947 = vunpack.c.l.b16 %v3812
        %v3948 = vunpack.c.l.b16 %v3813
        %v3949 = vunpack.c.l.b16 %v3814
        %v3950 = vunpack.c.l.b16 %v3815
        %v3951 = vunpack.c.l.b16 %v3816
        %v3952 = vunpack.c.l.b16 %v3817
        %v3953 = vunpack.c.l.b16 %v3818
        %v3954 = vunpack.c.l.b16 %v3819
        %v3955 = vunpack.c.l.b16 %v3820
        %v3956 = vunpack.c.l.b16 %v3821
        %v3957 = vunpack.c.l.b16 %v3822
        %v3958 = vunpack.c.l.b16 %v3823
        %v3959 = vunpack.c.l.b16 %v3824
        %v3960 = vunpack.c.l.b16 %v3825
        %v3961 = vunpack.c.l.b16 %v3826
        %v3962 = vunpack.c.l.b16 %v3827
        %v3963 = vunpack.c.l.b16 %v3828
        %v3964 = vunpack.c.l.b16 %v3829
        %v3965 = vunpack.c.l.b16 %v3830
        %v3966 = vunpack.c.l.b16 %v3831
        %v3967 = vunpack.c.l.b16 %v3832
        %v3968 = vunpack.c.l.b16 %v3833
        %v3969 = vunpack.c.l.b16 %v3834
        %v3970 = vunpack.c.l.b16 %v3835
        %v3971 = vunpack.c.l.b16 %v3836
        %v3972 = vunpack.c.l.b16 %v3837
        %v3973 = vunpack.c.l.b16 %v3838
        %v3974 = vunpack.c.l.b16 %v3839
        %v3975 = vunpack.c.l.b16 %v3840
        %v3976 = vunpack.c.l.b16 %v3841
        %v3977 = vunpack.c.l.b16 %v3842
        %v3978 = vunpack.c.l.b16 %v3843
        %v3979 = vunpack.c.l.b16 %v3844
        %v3980 = vunpack.c.l.b16 %v3845
        %v3981 = vunpack.c.l.b16 %v3846
        %v3982 = vunpack.c.l.b16 %v3847
        %v3983 = vunpack.c.l.b16 %v3848
        %v3984 = vunpack.c.l.b16 %v3849
        %v3985 = vunpack.c.l.b16 %v3850
        %v3986 = vunpack.c.l.b16 %v3851
        %v3987 = vunpack.c.l.b16 %v3852
        %v3988 = vunpack.c.l.b16 %v3853
        %v3989 = vunpack.c.l.b16 %v3854
        %v3990 = vunpack.c.l.b16 %v3855
        %v3991 = vunpack.c.l.b16 %v3856
        %v3992 = vunpack.c.l.b16 %v3857
        %v3993 = vunpack.c.l.b16 %v3858
        %v3994 = vunpack.c.l.b16 %v3859
        %v3995 = vunpack.c.l.b16 %v3860
        %v3996 = vunpack.c.l.b16 %v3861
        %v3997 = vunpack.c.l.b16 %v3862
        %v3998 = vunpack.c.l.b16 %v3863
        %v3999 = vunpack.c.l.b16 %v3864
        %v4000 = vpack.c.b16 %v3937, %v3936
        %v4001 = vpack.c.b16 %v3939, %v3938
        %v4002 = vpack.c.b16 %v3941, %v3940
        %v4003 = vpack.c.b16 %v3943, %v3942
        %v4004 = vpack.c.b16 %v3945, %v3944
        %v4005 = vpack.c.b16 %v3947, %v3946
        %v4006 = vpack.c.b16 %v3949, %v3948
        %v4007 = vpack.c.b16 %v3951, %v3950
        %v4008 = vpack.c.b16 %v3953, %v3952
        %v4009 = vpack.c.b16 %v3955, %v3954
        %v4010 = vpack.c.b16 %v3957, %v3956
        %v4011 = vpack.c.b16 %v3959, %v3958
        %v4012 = vpack.c.b16 %v3961, %v3960
        %v4013 = vpack.c.b16 %v3963, %v3962
        %v4014 = vpack.c.b16 %v3965, %v3964
        %v4015 = vpack.c.b16 %v3967, %v3966
        %v4016 = vpack.c.b16 %v3969, %v3968
        %v4017 = vpack.c.b16 %v3971, %v3970
        %v4018 = vpack.c.b16 %v3973, %v3972
        %v4019 = vpack.c.b16 %v3975, %v3974
        %v4020 = vpack.c.b16 %v3977, %v3976
        %v4021 = vpack.c.b16 %v3979, %v3978
        %v4022 = vpack.c.b16 %v3981, %v3980
        %v4023 = vpack.c.b16 %v3983, %v3982
        %v4024 = vpack.c.b16 %v3985, %v3984
        %v4025 = vpack.c.b16 %v3987, %v3986
        %v4026 = vpack.c.b16 %v3989, %v3988
        %v4027 = vpack.c.b16 %v3991, %v3990
        %v4028 = vpack.c.b16 %v3993, %v3992
        %v4029 = vpack.c.b16 %v3995, %v3994
        %v4030 = vpack.c.b16 %v3997, %v3996
        %v4031 = vpack.c.b16 %v3999, %v3998
        %4064 = vmatprep.subr.bf16.mxu0 0
        %4065 = vmatpush1.bf16.msra.mxu0 %v4000
        %4066 = vmatprep.subr.bf16.mxu0 0
        %4067 = vmatpush1.bf16.msra.mxu0 %v4001
        %4068 = vmatprep.subr.bf16.mxu0 0
        %4069 = vmatpush1.bf16.msra.mxu0 %v4002
        %4070 = vmatprep.subr.bf16.mxu0 0
        %4071 = vmatpush1.bf16.msra.mxu0 %v4003
        %4072 = vmatprep.subr.bf16.mxu0 0
        %4073 = vmatpush1.bf16.msra.mxu0 %v4004
        %4074 = vmatprep.subr.bf16.mxu0 0
        %4075 = vmatpush1.bf16.msra.mxu0 %v4005
        %4076 = vmatprep.subr.bf16.mxu0 0
        %4077 = vmatpush1.bf16.msra.mxu0 %v4006
        %4078 = vmatprep.subr.bf16.mxu0 0
        %4079 = vmatpush1.bf16.msra.mxu0 %v4007
        %4080 = vmatprep.subr.bf16.mxu0 0
        %4081 = vmatpush1.bf16.msra.mxu0 %v4008
        %4082 = vmatprep.subr.bf16.mxu0 0
        %4083 = vmatpush1.bf16.msra.mxu0 %v4009
        %4084 = vmatprep.subr.bf16.mxu0 0
        %4085 = vmatpush1.bf16.msra.mxu0 %v4010
        %4086 = vmatprep.subr.bf16.mxu0 0
        %4087 = vmatpush1.bf16.msra.mxu0 %v4011
        %4088 = vmatprep.subr.bf16.mxu0 0
        %4089 = vmatpush1.bf16.msra.mxu0 %v4012
        %4090 = vmatprep.subr.bf16.mxu0 0
        %4091 = vmatpush1.bf16.msra.mxu0 %v4013
        %4092 = vmatprep.subr.bf16.mxu0 0
        %4093 = vmatpush1.bf16.msra.mxu0 %v4014
        %4094 = vmatprep.subr.bf16.mxu0 0
        %4095 = vmatpush1.bf16.msra.mxu0 %v4015
        %4096 = vmatprep.mubr.bf16.mxu0 %v3798
        %4097 = vmatmul.mubr.bf16.gmra.mrb[0].mxu0 %v3797
        %v4098 = vpop.f32.mrb[0].mxu0
        %v4099 = vadd.f32 %v3870, %v4098
        %v4100 = vpop.f32.mrb[0].mxu0
        %v4101 = vpop.f32.mrb[0].mxu0
        %v4102 = vpop.f32.mrb[0].mxu0
        %4103 = vdwg.mxu0
        %4104 = vmatprep.subr.bf16.mxu0 0
        %4105 = vmatpush1.bf16.msra.mxu0 %v4016
        %4106 = vmatprep.subr.bf16.mxu0 0
        %4107 = vmatpush1.bf16.msra.mxu0 %v4017
        %4108 = vmatprep.subr.bf16.mxu0 0
        %4109 = vmatpush1.bf16.msra.mxu0 %v4018
        %4110 = vmatprep.subr.bf16.mxu0 0
        %4111 = vmatpush1.bf16.msra.mxu0 %v4019
        %4112 = vmatprep.subr.bf16.mxu0 0
        %4113 = vmatpush1.bf16.msra.mxu0 %v4020
        %4114 = vmatprep.subr.bf16.mxu0 0
        %4115 = vmatpush1.bf16.msra.mxu0 %v4021
        %4116 = vmatprep.subr.bf16.mxu0 0
        %4117 = vmatpush1.bf16.msra.mxu0 %v4022
        %4118 = vmatprep.subr.bf16.mxu0 0
        %4119 = vmatpush1.bf16.msra.mxu0 %v4023
        %4120 = vmatprep.subr.bf16.mxu0 0
        %4121 = vmatpush1.bf16.msra.mxu0 %v4024
        %4122 = vmatprep.subr.bf16.mxu0 0
        %4123 = vmatpush1.bf16.msra.mxu0 %v4025
        %4124 = vmatprep.subr.bf16.mxu0 0
        %4125 = vmatpush1.bf16.msra.mxu0 %v4026
        %4126 = vmatprep.subr.bf16.mxu0 0
        %4127 = vmatpush1.bf16.msra.mxu0 %v4027
        %4128 = vmatprep.subr.bf16.mxu0 0
        %4129 = vmatpush1.bf16.msra.mxu0 %v4028
        %4130 = vmatprep.subr.bf16.mxu0 0
        %4131 = vmatpush1.bf16.msra.mxu0 %v4029
        %4132 = vmatprep.subr.bf16.mxu0 0
        %4133 = vmatpush1.bf16.msra.mxu0 %v4030
        %4134 = vmatprep.subr.bf16.mxu0 0
        %4135 = vmatpush1.bf16.msra.mxu0 %v4031
        %4136 = vmatprep.mubr.bf16.mxu0 %v3800
        %4137 = vmatmul.mubr.bf16.gmra.mrb[0].mxu0 %v3799
        %v4138 = vpop.f32.mrb[0].mxu0
        %v4139 = vadd.f32 %v4099, %v4138
        %v4140 = vpop.f32.mrb[0].mxu0
        %v4141 = vpop.f32.mrb[0].mxu0
        %v4142 = vpop.f32.mrb[0].mxu0
        %4143 = vdwg.mxu0
        %v4144 = vadd.f32 %v3468, %v4139
        %4145 = vst [vmem:[#allocation2] sm:$0xff] %v4144
        %4146 = vst [vmem:[%s955] sm:$0xff] %v4144
        %p4147 = scmp.eq.s32.totalorder %s45, 1
        // Predicated region
        $region113: #{_lambda_.3} parent=107 // pred_check
          %p4148 = pneg %p4147
        $region114: #{_lambda_.3} parent=107 // pred_check_branch
          %4150 = sbr.rel (%p4148) target = $region116
        $region115: #{_lambda_.3} parent=107 // pred_region
          %v4151 = vmax.f32 %v4144, 0.0
          %v4152 = vpack.c.bf16 %v4151, %v4151
          %v4153 = vld [vmem:[%s17] sm:$0xf]
          %v4154 = vld [vmem:[%s17 + $0x4] sm:$0xf]
          %v4155 = vld [vmem:[%s17 + $0x8] sm:$0xf]
          %v4156 = vld [vmem:[%s17 + $0xc] sm:$0xf]
          %v4157 = vld [vmem:[%s17 + $0x10] sm:$0xf]
          %v4158 = vld [vmem:[%s17 + $0x14] sm:$0xf]
          %v4159 = vld [vmem:[%s17 + $0x18] sm:$0xf]
          %v4160 = vld [vmem:[%s17 + $0x1c] sm:$0xf]
          %v4161 = vld [vmem:[%s17 + $0x20] sm:$0xf]
          %v4162 = vld [vmem:[%s17 + $0x24] sm:$0xf]
          %v4163 = vld [vmem:[%s17 + $0x28] sm:$0xf]
          %v4164 = vld [vmem:[%s17 + $0x2c] sm:$0xf]
          %v4165 = vld [vmem:[%s17 + $0x30] sm:$0xf]
          %v4166 = vld [vmem:[%s17 + $0x34] sm:$0xf]
          %v4167 = vld [vmem:[%s17 + $0x38] sm:$0xf]
          %v4168 = vld [vmem:[%s17 + $0x3c] sm:$0xf]
          %v4169 = vld [vmem:[%s18] sm:$0x1]
          %v4171 = vlaneseq
          %v4172 = vshrl.u32 %v4171, 7
          %v4173 = vsub.s32 0, %v4172
          %v4174 = vrot.slane %v4169, %v4173
          %v4192 = vunpack.c.l.b16 %v4153
          %v4193 = vunpack.c.l.b16 %v4154
          %v4194 = vunpack.c.l.b16 %v4155
          %v4195 = vunpack.c.l.b16 %v4156
          %v4196 = vunpack.c.l.b16 %v4157
          %v4197 = vunpack.c.l.b16 %v4158
          %v4198 = vunpack.c.l.b16 %v4159
          %v4199 = vunpack.c.l.b16 %v4160
          %v4200 = vunpack.c.l.b16 %v4161
          %v4201 = vunpack.c.l.b16 %v4162
          %v4202 = vunpack.c.l.b16 %v4163
          %v4203 = vunpack.c.l.b16 %v4164
          %v4204 = vunpack.c.l.b16 %v4165
          %v4205 = vunpack.c.l.b16 %v4166
          %v4206 = vunpack.c.l.b16 %v4167
          %v4207 = vunpack.c.l.b16 %v4168
          %v4208 = vpack.c.b16 %v4193, %v4192
          %v4209 = vpack.c.b16 %v4195, %v4194
          %v4210 = vpack.c.b16 %v4197, %v4196
          %v4211 = vpack.c.b16 %v4199, %v4198
          %v4212 = vpack.c.b16 %v4201, %v4200
          %v4213 = vpack.c.b16 %v4203, %v4202
          %v4214 = vpack.c.b16 %v4205, %v4204
          %v4215 = vpack.c.b16 %v4207, %v4206
          %4224 = vmatprep.subr.bf16.mxu0 0
          %4225 = vmatpush1.bf16.msra.mxu0 %v4208
          %4226 = vmatprep.subr.bf16.mxu0 0
          %4227 = vmatpush1.bf16.msra.mxu0 %v4209
          %4228 = vmatprep.subr.bf16.mxu0 0
          %4229 = vmatpush1.bf16.msra.mxu0 %v4210
          %4230 = vmatprep.subr.bf16.mxu0 0
          %4231 = vmatpush1.bf16.msra.mxu0 %v4211
          %4232 = vmatprep.subr.bf16.mxu0 0
          %4233 = vmatpush1.bf16.msra.mxu0 %v4212
          %4234 = vmatprep.subr.bf16.mxu0 0
          %4235 = vmatpush1.bf16.msra.mxu0 %v4213
          %4236 = vmatprep.subr.bf16.mxu0 0
          %4237 = vmatpush1.bf16.msra.mxu0 %v4214
          %4238 = vmatprep.subr.bf16.mxu0 0
          %4239 = vmatpush1.bf16.msra.mxu0 %v4215
          %4240 = vmatprep.subr.bf16.mxu0 0
          %4241 = vmatpush1.bf16.msra.mxu0 0
          %4242 = vmatprep.subr.bf16.mxu0 0
          %4243 = vmatpush1.bf16.msra.mxu0 0
          %4244 = vmatprep.subr.bf16.mxu0 0
          %4245 = vmatpush1.bf16.msra.mxu0 0
          %4246 = vmatprep.subr.bf16.mxu0 0
          %4247 = vmatpush1.bf16.msra.mxu0 0
          %4248 = vmatprep.subr.bf16.mxu0 0
          %4249 = vmatpush1.bf16.msra.mxu0 0
          %4250 = vmatprep.subr.bf16.mxu0 0
          %4251 = vmatpush1.bf16.msra.mxu0 0
          %4252 = vmatprep.subr.bf16.mxu0 0
          %4253 = vmatpush1.bf16.msra.mxu0 0
          %4254 = vmatprep.subr.bf16.mxu0 0
          %4255 = vmatpush1.bf16.msra.mxu0 0
          %4256 = vmatprep.mubr.bf16.mxu0 0
          %4257 = vmatmul.mubr.bf16.gmra.mrb[0].mxu0 %v4152
          %v4258 = vpop.f32.mrb[0].mxu0
          %v4259 = vadd.f32 %v4174, %v4258
          %v4260 = vpop.f32.mrb[0].mxu0
          %v4261 = vpop.f32.mrb[0].mxu0
          %v4262 = vpop.f32.mrb[0].mxu0
          %4263 = vdwg.mxu0
          %v4264 = vmax.f32 %v4259, 0.0
          %v4265 = vld [vmem:[%s19] sm:$0x1]
          %v4266 = vld [vmem:[%s20] sm:$0x1]
          %4267 = vadd.xlane.f32.xlu0 %v4264
          %v4268 = vpop.xlane.xlu0 %4267
          %v4269 = vmul.f32 %v4268, %v2474
          %v4270 = vsub.f32 %v4264, %v4269
          %v4271 = vmul.f32 %v4270, %v4270
          %4272 = vadd.xlane.f32.xlu0 %v4271
          %v4273 = vpop.xlane.xlu0 %4272
          %v4274 = vmul.f32 %v4273, %v2474
          %v4275 = vadd.f32 %v4274, 1e-05
          %v4276 = vrsqrt.pop %v4275
          %v4277 = vmul.f32 %v4270, %v4276
          %v4279 = vlaneseq
          %v4280 = vshrl.u32 %v4279, 7
          %v4281 = vsub.s32 0, %v4280
          %v4282 = vrot.slane %v4265, %v4281
          %v4284 = vmul.f32 %v4277, %v4282
          %v4286 = vlaneseq
          %v4287 = vshrl.u32 %v4286, 7
          %v4288 = vsub.s32 0, %v4287
          %v4289 = vrot.slane %v4266, %v4288
          %v4291 = vadd.f32 %v4284, %v4289
          %4292 = vst [vmem:[%s1040] sm:$0xff] %v4291
        $region116: #{_lambda_.3} parent=107 // pred_fallthru
          _
        %p4293 = scmp.lt.s32.totalorder %s44, 1
        %s4294 = scalar_select %p4293, %s44, 1
        %s4295 = smul.addr %s4294, 8
        %s4296 = scalar_lea.vmem %s22, %s4295
        %s4297 = sand.u32 %s620, 1
        %s4298 = scalar_lea.sflag [#allocation4], %s4297
        %s4299 = sand.u32 %s620, 1
        %s4300 = smul.addr %s4299, 8
        %s4301 = scalar_lea.vmem [#allocation3], %s4300
        %p4302 = scmp.lt.s32.totalorder %s44, 1
        %s4303 = scalar_select %p4302, %s44, 1
        %s4304 = smul.addr %s4303, 8
        %s4305 = scalar_lea.vmem %s24, %s4304
        %p4306 = scmp.lt.s32.totalorder %s45, 1
        %s4307 = scalar_select %p4306, %s45, 1
        %p4308 = scmp.lt.s32.totalorder %s44, 1
        %s4309 = scalar_select %p4308, %s44, 1
        %s4310 = smul.addr %s4309, 2
        %s4311 = smul.addr %s4307, 4
        %s4312 = sadd.s32 %s4310, %s4311
        %s4313 = smul.addr %s4312, 8
        %s4314 = scalar_lea.vmem %s25, %s4313
        // Predicated region
        $region117: #{_lambda_.3} parent=107 // pred_check
          %p4315 = pneg %p604
        $region118: #{_lambda_.3} parent=107 // pred_check_branch
          %4317 = sbr.rel (%p4315) target = $region120
        $region119: #{_lambda_.3} parent=107 // pred_region
          _
        $region120: #{_lambda_.3} parent=107 // pred_fallthru
          _
        // Predicated region
        $region121: #{_lambda_.3} parent=107 // pred_check
          %p4318 = pneg %p630
        $region122: #{_lambda_.3} parent=107 // pred_check_branch
          %4320 = sbr.rel (%p4318) target = $region124
        $region123: #{_lambda_.3} parent=107 // pred_region
          %s4322 = ssub.s32 128, 128
          %4323 = vsyncadd %s4298, %s4322
          %s4324 = smul.addr %s44, 128
          %s4325 = scalar_lea.hbm %s23, %s4324
          %s4327 = sshll.u32 %s4301, 4
          %s4328 = int_to_ptr.vmem [resolvable:$true] %s4327
          %4330 = dma.vmem_to_hbm [thread:$0]  %s4328, 128, %s4325, %s4298
        $region124: #{_lambda_.3} parent=107 // pred_fallthru
          _
        // Predicated region
        $region125: #{_lambda_.3} parent=107 // pred_check
          %p4331 = pneg %p656
        $region126: #{_lambda_.3} parent=107 // pred_check_branch
          %4333 = sbr.rel (%p4331) target = $region128
        $region127: #{_lambda_.3} parent=107 // pred_region
          _
        $region128: #{_lambda_.3} parent=107 // pred_fallthru
          _
        // Predicated region
        $region129: #{_lambda_.3} parent=107 // pred_check
          %p4334 = pneg %p684
        $region130: #{_lambda_.3} parent=107 // pred_check_branch
          %4336 = sbr.rel (%p4334) target = $region132
        $region131: #{_lambda_.3} parent=107 // pred_region
          _
        $region132: #{_lambda_.3} parent=107 // pred_fallthru
          _
      $region108: #{_lambda_.3} parent=5 // pred_fallthru
        _
      %p4337 = scmp.le.s32.totalorder 2, %s35
      // Predicated region
      $region133: #{_lambda_.3} parent=5 // pred_check
        %p4338 = pneg %p4337
      $region134: #{_lambda_.3} parent=5 // pred_check_branch
        %4340 = sbr.rel (%p4338) target = $region136
      $region135: #{_lambda_.3} parent=5 // pred_region
        %s4341 = ssub.s32 %s35, 2
        // Predicated region
        $region137: #{_lambda_.3} parent=135 // pred_check
          %p4342 = pneg %p610
        $region138: #{_lambda_.3} parent=135 // pred_check_branch
          %4344 = sbr.rel (%p4342) target = $region140
        $region139: #{_lambda_.3} parent=135 // pred_region
          %p4345 = scmp.lt.s32.totalorder %s46, 1
          %s4346 = scalar_select %p4345, %s46, 1
          %s4347 = smul.addr %s4346, 8
          %s4348 = scalar_lea.vmem %s22, %s4347
        $region140: #{_lambda_.3} parent=135 // pred_fallthru
          _
        // Predicated region
        $region141: #{_lambda_.3} parent=135 // pred_check
          %p4349 = pneg %p636
        $region142: #{_lambda_.3} parent=135 // pred_check_branch
          %4351 = sbr.rel (%p4349) target = $region144
        $region143: #{_lambda_.3} parent=135 // pred_region
          %s4352 = sand.u32 %s621, 1
          %s4353 = scalar_lea.sflag [#allocation4], %s4352
          %s4354 = sand.u32 %s621, 1
          %s4355 = smul.addr %s4354, 8
          %s4356 = scalar_lea.vmem [#allocation3], %s4355
          %4357 = dma.done %s4353, 128
        $region144: #{_lambda_.3} parent=135 // pred_fallthru
          _
        // Predicated region
        $region145: #{_lambda_.3} parent=135 // pred_check
          %p4358 = pneg %p662
        $region146: #{_lambda_.3} parent=135 // pred_check_branch
          %4360 = sbr.rel (%p4358) target = $region148
        $region147: #{_lambda_.3} parent=135 // pred_region
          %p4361 = scmp.lt.s32.totalorder %s46, 1
          %s4362 = scalar_select %p4361, %s46, 1
          %s4363 = smul.addr %s4362, 8
          %s4364 = scalar_lea.vmem %s24, %s4363
        $region148: #{_lambda_.3} parent=135 // pred_fallthru
          _
        // Predicated region
        $region149: #{_lambda_.3} parent=135 // pred_check
          %p4365 = pneg %p690
        $region150: #{_lambda_.3} parent=135 // pred_check_branch
          %4367 = sbr.rel (%p4365) target = $region152
        $region151: #{_lambda_.3} parent=135 // pred_region
          %p4368 = scmp.lt.s32.totalorder %s47, 1
          %s4369 = scalar_select %p4368, %s47, 1
          %p4370 = scmp.lt.s32.totalorder %s46, 1
          %s4371 = scalar_select %p4370, %s46, 1
          %s4372 = smul.addr %s4371, 2
          %s4373 = smul.addr %s4369, 4
          %s4374 = sadd.s32 %s4372, %s4373
          %s4375 = smul.addr %s4374, 8
          %s4376 = scalar_lea.vmem %s25, %s4375
        $region152: #{_lambda_.3} parent=135 // pred_fallthru
          _
      $region136: #{_lambda_.3} parent=5 // pred_fallthru
        _
    $region6: #{_lambda_.3} parent=1 // loop_footer
      %s39 = sadd.s32 1, %s35
    $region7: #{_lambda_.3} parent=1 // loop_footer_branch
      %34 = sbr.rel target = $region3
    $region8: #{_lambda_.3} parent=1 // loop_exit
      _
    %4377 = vsyncpa [#allocation4], 1
    %s4378 = scalar_lea.sflag [#allocation4], 1
    %4379 = vsyncpa %s4378, 1

</llo_original>
